<compile_context>
chip_gen: v5e
topology: v5e:2x2
jax: 0.10.0
libtpu: 0.0.40
codegen_flags: <defaults>
</compile_context>

<pallas_src>
import jax
import jax.numpy as jnp
from jax.experimental import pallas as pl
from jax.experimental.pallas import tpu as pltpu


def _tonemapper_kernel(x_ref, w1_ref, b1_ref, w2_ref, b2_ref, w3_ref, b3_ref,
                       o_ref, s2_ref, s3_ref):
    # x_ref : (Cin, H+6, W+2) pre-padded input image (whole image, VMEM).
    # wK_ref: flat f32 weights in SMEM, layout [ci, tap(=3*dy+dx), co].
    # bK_ref: (CoutK,) f32 biases in SMEM.
    # o_ref : (Cout, T, W)    one row tile of the NCHW output.
    # s2_ref: (Ch, T+4, W+2)  padded h1 slab (VMEM scratch).
    # s3_ref: (Ch, T+2, W+2)  padded h2 slab (VMEM scratch).
    _, hp6, wp2 = x_ref.shape
    H, W = hp6 - 6, wp2 - 2
    Cin = x_ref.shape[0]
    Ch = s2_ref.shape[0]
    Cout, T, _ = o_ref.shape
    R1, R2 = T + 4, T + 2

    r0 = pl.program_id(1) * T            # first output row of this tile

    def conv3x3(read_plane, w_ref, b_ref, cin, cout, rows):
        """3x3 SAME conv as 9*cin shift-MACs; returns list of (rows, W) f32."""
        nco = 9 * cout

        def body(ci, accs):
            planes = [read_plane(ci, dy, dx, rows)
                      for dy in range(3) for dx in range(3)]
            base = ci * nco
            out = []
            for co in range(cout):
                a = accs[co]
                for tap in range(9):
                    a = a + w_ref[base + tap * cout + co] * planes[tap]
                out.append(a)
            return tuple(out)

        init = tuple(jnp.full((rows, W), b_ref[co], jnp.float32)
                     for co in range(cout))
        return list(jax.lax.fori_loop(0, cin, body, init))

    def row_mask(rows, first_img_row):
        ridx = jax.lax.broadcasted_iota(jnp.int32, (rows, 1), 0) + first_img_row
        return jnp.logical_and(ridx >= 0, ridx < H)

    def store_padded_slab(dst_ref, planes, mask):
        # ReLU + zero out-of-image halo rows, then write the full padded row
        # block (zero border columns included) with one aligned store per co.
        zcol = jnp.zeros((planes[0].shape[0], 1), jnp.float32)
        for co, p in enumerate(planes):
            v = jnp.where(mask, jnp.maximum(p, 0.0), 0.0)
            dst_ref[co] = jnp.concatenate([zcol, v, zcol], axis=1)

    # ---- layer 1: Cin -> Ch, ReLU -----------------------------------------
    def read_x(ci, dy, dx, rows):
        return x_ref[pl.ds(ci, 1), pl.ds(r0 + dy, rows), pl.ds(dx, W)][0]

    h1 = conv3x3(read_x, w1_ref, b1_ref, Cin, Ch, R1)
    store_padded_slab(s2_ref, h1, row_mask(R1, r0 - 2))

    # ---- layer 2: Ch -> Ch, ReLU ------------------------------------------
    def read_s2(ci, dy, dx, rows):
        return s2_ref[pl.ds(ci, 1), pl.ds(dy, rows), pl.ds(dx, W)][0]

    h2 = conv3x3(read_s2, w2_ref, b2_ref, Ch, Ch, R2)
    store_padded_slab(s3_ref, h2, row_mask(R2, r0 - 1))

    # ---- layer 3: Ch -> Cout (no ReLU; all rows in-image) ------------------
    def read_s3(ci, dy, dx, rows):
        return s3_ref[pl.ds(ci, 1), pl.ds(dy, rows), pl.ds(dx, W)][0]

    h3 = conv3x3(read_s3, w3_ref, b3_ref, Ch, Cout, T)
    o_ref[...] = jnp.stack(h3, axis=0).astype(o_ref.dtype)


def _pick_row_tile(H, W, Ch, max_rows=64):
    """Row tile that divides H, is sublane aligned (or == H) and keeps the
    per-tile f32 accumulators (Ch*(T+4)*W*4 B) within a vreg-friendly budget."""
    budget_rows = max(8, (160 * 1024) // max(1, Ch * W * 4) - 4)
    cap = min(max_rows, budget_rows)
    if H <= cap:
        return H
    best = None
    for t in range(8, cap + 1, 8):
        if H % t == 0:
            best = t
    return best if best is not None else H


def tonemapper_rgb_combine(x_nchw, params, *, max_tile_rows=64):
    """Fused 3-layer ToneMapper forward.  x_nchw: (B, Cin, H, W) float32."""
    w1, b1, w2, b2, w3, b3 = params          # HWIO weights, (cout,) biases
    B, Cin, H, W = x_nchw.shape
    Ch = w1.shape[-1]
    Cout = w3.shape[-1]

    T = _pick_row_tile(H, W, Ch, max_tile_rows)
    assert H % T == 0
    n_tiles = H // T

    # Single cheap pad of the 3-channel input: 3-row / 1-col halo so every row
    # tile reads its full fused receptive field with plain slices (no
    # transposes anywhere; output is written directly in NCHW).
    x_pad = jnp.pad(x_nchw, ((0, 0), (0, 0), (3, 3), (1, 1)))

    def flat_w(w):   # HWIO (3,3,ci,co) -> flat [ci, tap, co] for SMEM scalars
        return jnp.transpose(w, (2, 0, 1, 3)).reshape(-1)

    def smem_spec():
        return pl.BlockSpec(memory_space=pltpu.MemorySpace.SMEM)

    def _tile_bytes(c, r, w):    # f32 VMEM footprint incl. (8,128) tiling
        return c * (-(-r // 8) * 8) * (-(-w // 128) * 128) * 4

    vmem_need = (2 * _tile_bytes(Cin, H + 6, W + 2)     # double-buffered input
                 + 2 * _tile_bytes(Cout, T, W)          # double-buffered output
                 + _tile_bytes(Ch, T + 4, W + 2)
                 + _tile_bytes(Ch, T + 2, W + 2))
    vmem_limit = int(min(64 * 2 ** 20, max(32 * 2 ** 20, 2 * vmem_need)))

    flops = 2 * 9 * B * H * W * (Cin * Ch + Ch * Ch + Ch * Cout)
    bytes_accessed = 4 * (int(x_pad.size) + B * Cout * H * W
                          + 9 * (Cin * Ch + Ch * Ch + Ch * Cout))

    out = pl.pallas_call(
        _tonemapper_kernel,
        out_shape=jax.ShapeDtypeStruct((B, Cout, H, W), x_nchw.dtype),
        grid_spec=pl.GridSpec(
            grid=(B, n_tiles),
            in_specs=[
                pl.BlockSpec((None, Cin, H + 6, W + 2),
                             lambda b, t: (b, 0, 0, 0)),
                smem_spec(), smem_spec(),        # w1, b1
                smem_spec(), smem_spec(),        # w2, b2
                smem_spec(), smem_spec(),        # w3, b3
            ],
            out_specs=pl.BlockSpec((None, Cout, T, W),
                                   lambda b, t: (b, 0, t, 0)),
            scratch_shapes=[
                pltpu.VMEM((Ch, T + 4, W + 2), jnp.float32),
                pltpu.VMEM((Ch, T + 2, W + 2), jnp.float32),
            ],
        ),
        compiler_params=pltpu.CompilerParams(
            dimension_semantics=("parallel", "parallel"),
            vmem_limit_bytes=vmem_limit),
        cost_estimate=pl.CostEstimate(flops=flops, transcendentals=0,
                                      bytes_accessed=bytes_accessed),
    )(x_pad, flat_w(w1), b1, flat_w(w2), b2, flat_w(w3), b3)
    return out


def _ref_forward(x_nchw, params):
    """Pure-JAX reference (lax conv) for correctness checking."""
    w1, b1, w2, b2, w3, b3 = params
    x = jnp.transpose(x_nchw, (0, 2, 3, 1))  # NHWC

    def conv(h, w, b):
        y = jax.lax.conv_general_dilated(
            h, w, window_strides=(1, 1), padding="SAME",
            dimension_numbers=("NHWC", "HWIO", "NHWC"),
            precision=jax.lax.Precision.HIGHEST)
        return y + b.reshape(1, 1, 1, -1)

    h = jax.nn.relu(conv(x, w1, b1))
    h = jax.nn.relu(conv(h, w2, b2))
    y = conv(h, w3, b3)
    return jnp.transpose(y, (0, 3, 1, 2))


def make_params(key, in_channel=3, hidden_channel=16):
    """Deterministic synthetic HWIO weights + (cout,) biases for the 3 convs."""
    ks = jax.random.split(key, 6)

    def w(k, cin, cout):
        scale = 1.0 / jnp.sqrt(cin * 9.0)   # ~ PyTorch default fan_in scaling
        return jax.random.uniform(k, (3, 3, cin, cout), jnp.float32,
                                  minval=-1.0, maxval=1.0) * scale

    def b(k, cout):
        return jax.random.uniform(k, (cout,), jnp.float32,
                                  minval=-0.1, maxval=0.1)

    return (w(ks[0], in_channel, hidden_channel), b(ks[1], hidden_channel),
            w(ks[2], hidden_channel, hidden_channel), b(ks[3], hidden_channel),
            w(ks[4], hidden_channel, in_channel), b(ks[5], in_channel))


if __name__ == "__main__":
    key = jax.random.PRNGKey(0)
    k_x, k_p = jax.random.split(key)

    B, Cin, H, W = 2, 3, 16, 16
    hidden = 16
    x = jax.random.normal(k_x, (B, Cin, H, W), jnp.float32)
    params = make_params(k_p, in_channel=Cin, hidden_channel=hidden)

    out = jax.block_until_ready(tonemapper_rgb_combine(x, params))
    ref = jax.block_until_ready(_ref_forward(x, params))

    assert out.shape == (B, Cin, H, W)
    assert jnp.max(jnp.abs(out - ref)) < 1e-4, "mismatch vs JAX reference"
    print("KERNEL_OK")
</pallas_src>

<mosaic_0001>
module attributes {stable_mosaic.version = 11 : i64} {
  func.func @_tonemapper_kernel(%arg0: i32, %arg1: i32, %arg2: memref<1x3x22x18xf32, #tpu.memory_space<vmem>>, %arg3: memref<432xf32, #tpu.memory_space<smem>>, %arg4: memref<16xf32, #tpu.memory_space<smem>>, %arg5: memref<2304xf32, #tpu.memory_space<smem>>, %arg6: memref<16xf32, #tpu.memory_space<smem>>, %arg7: memref<432xf32, #tpu.memory_space<smem>>, %arg8: memref<3xf32, #tpu.memory_space<smem>>, %arg9: memref<1x3x16x16xf32, #tpu.memory_space<vmem>>, %arg10: memref<16x20x18xf32, #tpu.memory_space<vmem>>, %arg11: memref<16x18x18xf32, #tpu.memory_space<vmem>>) attributes {dimension_semantics = [#tpu.dimension_semantics<parallel>, #tpu.dimension_semantics<parallel>], iteration_bounds = array<i64: 2, 1>, scalar_prefetch = 0 : i64, scratch_operands = 2 : i64, tpu.core_type = #tpu.core_type<tc>, window_params = [{transform_indices = @transform_0, window_bounds = array<i64: 1, 3, 22, 18>}, {transform_indices = @transform_1, window_bounds = array<i64: 432>}, {transform_indices = @transform_2, window_bounds = array<i64: 16>}, {transform_indices = @transform_3, window_bounds = array<i64: 2304>}, {transform_indices = @transform_4, window_bounds = array<i64: 16>}, {transform_indices = @transform_5, window_bounds = array<i64: 432>}, {transform_indices = @transform_6, window_bounds = array<i64: 3>}, {transform_indices = @transform_7, window_bounds = array<i64: 1, 3, 16, 16>}]} {
    %c16_i32 = arith.constant 16 : i32
    %0 = arith.muli %arg1, %c16_i32 : i32
    %c0 = arith.constant 0 : index
    %1 = memref.load %arg4[%c0] : memref<16xf32, #tpu.memory_space<smem>>
    %2 = vector.broadcast %1 : f32 to vector<20x16xf32>
    %c1 = arith.constant 1 : index
    %3 = memref.load %arg4[%c1] : memref<16xf32, #tpu.memory_space<smem>>
    %4 = vector.broadcast %3 : f32 to vector<20x16xf32>
    %c2 = arith.constant 2 : index
    %5 = memref.load %arg4[%c2] : memref<16xf32, #tpu.memory_space<smem>>
    %6 = vector.broadcast %5 : f32 to vector<20x16xf32>
    %c3 = arith.constant 3 : index
    %7 = memref.load %arg4[%c3] : memref<16xf32, #tpu.memory_space<smem>>
    %8 = vector.broadcast %7 : f32 to vector<20x16xf32>
    %c4 = arith.constant 4 : index
    %9 = memref.load %arg4[%c4] : memref<16xf32, #tpu.memory_space<smem>>
    %10 = vector.broadcast %9 : f32 to vector<20x16xf32>
    %c5 = arith.constant 5 : index
    %11 = memref.load %arg4[%c5] : memref<16xf32, #tpu.memory_space<smem>>
    %12 = vector.broadcast %11 : f32 to vector<20x16xf32>
    %c6 = arith.constant 6 : index
    %13 = memref.load %arg4[%c6] : memref<16xf32, #tpu.memory_space<smem>>
    %14 = vector.broadcast %13 : f32 to vector<20x16xf32>
    %c7 = arith.constant 7 : index
    %15 = memref.load %arg4[%c7] : memref<16xf32, #tpu.memory_space<smem>>
    %16 = vector.broadcast %15 : f32 to vector<20x16xf32>
    %c8 = arith.constant 8 : index
    %17 = memref.load %arg4[%c8] : memref<16xf32, #tpu.memory_space<smem>>
    %18 = vector.broadcast %17 : f32 to vector<20x16xf32>
    %c9 = arith.constant 9 : index
    %19 = memref.load %arg4[%c9] : memref<16xf32, #tpu.memory_space<smem>>
    %20 = vector.broadcast %19 : f32 to vector<20x16xf32>
    %c10 = arith.constant 10 : index
    %21 = memref.load %arg4[%c10] : memref<16xf32, #tpu.memory_space<smem>>
    %22 = vector.broadcast %21 : f32 to vector<20x16xf32>
    %c11 = arith.constant 11 : index
    %23 = memref.load %arg4[%c11] : memref<16xf32, #tpu.memory_space<smem>>
    %24 = vector.broadcast %23 : f32 to vector<20x16xf32>
    %c12 = arith.constant 12 : index
    %25 = memref.load %arg4[%c12] : memref<16xf32, #tpu.memory_space<smem>>
    %26 = vector.broadcast %25 : f32 to vector<20x16xf32>
    %c13 = arith.constant 13 : index
    %27 = memref.load %arg4[%c13] : memref<16xf32, #tpu.memory_space<smem>>
    %28 = vector.broadcast %27 : f32 to vector<20x16xf32>
    %c14 = arith.constant 14 : index
    %29 = memref.load %arg4[%c14] : memref<16xf32, #tpu.memory_space<smem>>
    %30 = vector.broadcast %29 : f32 to vector<20x16xf32>
    %c15 = arith.constant 15 : index
    %31 = memref.load %arg4[%c15] : memref<16xf32, #tpu.memory_space<smem>>
    %32 = vector.broadcast %31 : f32 to vector<20x16xf32>
    %c0_i32 = arith.constant 0 : i32
    %c3_i32 = arith.constant 3 : i32
    %33 = arith.addi %c0_i32, %c3_i32 : i32
    %c1_i32 = arith.constant 1 : i32
    %34:16 = scf.for %arg12 = %c0_i32 to %33 step %c1_i32 iter_args(%arg13 = %2, %arg14 = %4, %arg15 = %6, %arg16 = %8, %arg17 = %10, %arg18 = %12, %arg19 = %14, %arg20 = %16, %arg21 = %18, %arg22 = %20, %arg23 = %22, %arg24 = %24, %arg25 = %26, %arg26 = %28, %arg27 = %30, %arg28 = %32) -> (vector<20x16xf32>, vector<20x16xf32>, vector<20x16xf32>, vector<20x16xf32>, vector<20x16xf32>, vector<20x16xf32>, vector<20x16xf32>, vector<20x16xf32>, vector<20x16xf32>, vector<20x16xf32>, vector<20x16xf32>, vector<20x16xf32>, vector<20x16xf32>, vector<20x16xf32>, vector<20x16xf32>, vector<20x16xf32>)  : i32 {
      %c0_i32_198 = arith.constant 0 : i32
      %424 = arith.addi %0, %c0_i32_198 : i32
      %c0_199 = arith.constant 0 : index
      %425 = arith.index_cast %arg12 : i32 to index
      %426 = arith.index_cast %424 : i32 to index
      %c0_200 = arith.constant 0 : index
      %427 = vector.load %arg2[%c0_199, %425, %426, %c0_200] : memref<1x3x22x18xf32, #tpu.memory_space<vmem>>, vector<1x1x20x16xf32>
      %428 = vector.shape_cast %427 : vector<1x1x20x16xf32> to vector<1x20x16xf32>
      %429 = vector.shape_cast %428 : vector<1x20x16xf32> to vector<20x16xf32>
      %c0_i32_201 = arith.constant 0 : i32
      %430 = arith.addi %0, %c0_i32_201 : i32
      %c0_202 = arith.constant 0 : index
      %431 = arith.index_cast %arg12 : i32 to index
      %432 = arith.index_cast %430 : i32 to index
      %c1_203 = arith.constant 1 : index
      %433 = vector.load %arg2[%c0_202, %431, %432, %c1_203] : memref<1x3x22x18xf32, #tpu.memory_space<vmem>>, vector<1x1x20x16xf32>
      %434 = vector.shape_cast %433 : vector<1x1x20x16xf32> to vector<1x20x16xf32>
      %435 = vector.shape_cast %434 : vector<1x20x16xf32> to vector<20x16xf32>
      %c0_i32_204 = arith.constant 0 : i32
      %436 = arith.addi %0, %c0_i32_204 : i32
      %c0_205 = arith.constant 0 : index
      %437 = arith.index_cast %arg12 : i32 to index
      %438 = arith.index_cast %436 : i32 to index
      %c2_206 = arith.constant 2 : index
      %439 = vector.load %arg2[%c0_205, %437, %438, %c2_206] : memref<1x3x22x18xf32, #tpu.memory_space<vmem>>, vector<1x1x20x16xf32>
      %440 = vector.shape_cast %439 : vector<1x1x20x16xf32> to vector<1x20x16xf32>
      %441 = vector.shape_cast %440 : vector<1x20x16xf32> to vector<20x16xf32>
      %c1_i32_207 = arith.constant 1 : i32
      %442 = arith.addi %0, %c1_i32_207 : i32
      %c0_208 = arith.constant 0 : index
      %443 = arith.index_cast %arg12 : i32 to index
      %444 = arith.index_cast %442 : i32 to index
      %c0_209 = arith.constant 0 : index
      %445 = vector.load %arg2[%c0_208, %443, %444, %c0_209] : memref<1x3x22x18xf32, #tpu.memory_space<vmem>>, vector<1x1x20x16xf32>
      %446 = vector.shape_cast %445 : vector<1x1x20x16xf32> to vector<1x20x16xf32>
      %447 = vector.shape_cast %446 : vector<1x20x16xf32> to vector<20x16xf32>
      %c1_i32_210 = arith.constant 1 : i32
      %448 = arith.addi %0, %c1_i32_210 : i32
      %c0_211 = arith.constant 0 : index
      %449 = arith.index_cast %arg12 : i32 to index
      %450 = arith.index_cast %448 : i32 to index
      %c1_212 = arith.constant 1 : index
      %451 = vector.load %arg2[%c0_211, %449, %450, %c1_212] : memref<1x3x22x18xf32, #tpu.memory_space<vmem>>, vector<1x1x20x16xf32>
      %452 = vector.shape_cast %451 : vector<1x1x20x16xf32> to vector<1x20x16xf32>
      %453 = vector.shape_cast %452 : vector<1x20x16xf32> to vector<20x16xf32>
      %c1_i32_213 = arith.constant 1 : i32
      %454 = arith.addi %0, %c1_i32_213 : i32
      %c0_214 = arith.constant 0 : index
      %455 = arith.index_cast %arg12 : i32 to index
      %456 = arith.index_cast %454 : i32 to index
      %c2_215 = arith.constant 2 : index
      %457 = vector.load %arg2[%c0_214, %455, %456, %c2_215] : memref<1x3x22x18xf32, #tpu.memory_space<vmem>>, vector<1x1x20x16xf32>
      %458 = vector.shape_cast %457 : vector<1x1x20x16xf32> to vector<1x20x16xf32>
      %459 = vector.shape_cast %458 : vector<1x20x16xf32> to vector<20x16xf32>
      %c2_i32_216 = arith.constant 2 : i32
      %460 = arith.addi %0, %c2_i32_216 : i32
      %c0_217 = arith.constant 0 : index
      %461 = arith.index_cast %arg12 : i32 to index
      %462 = arith.index_cast %460 : i32 to index
      %c0_218 = arith.constant 0 : index
      %463 = vector.load %arg2[%c0_217, %461, %462, %c0_218] : memref<1x3x22x18xf32, #tpu.memory_space<vmem>>, vector<1x1x20x16xf32>
      %464 = vector.shape_cast %463 : vector<1x1x20x16xf32> to vector<1x20x16xf32>
      %465 = vector.shape_cast %464 : vector<1x20x16xf32> to vector<20x16xf32>
      %c2_i32_219 = arith.constant 2 : i32
      %466 = arith.addi %0, %c2_i32_219 : i32
      %c0_220 = arith.constant 0 : index
      %467 = arith.index_cast %arg12 : i32 to index
      %468 = arith.index_cast %466 : i32 to index
      %c1_221 = arith.constant 1 : index
      %469 = vector.load %arg2[%c0_220, %467, %468, %c1_221] : memref<1x3x22x18xf32, #tpu.memory_space<vmem>>, vector<1x1x20x16xf32>
      %470 = vector.shape_cast %469 : vector<1x1x20x16xf32> to vector<1x20x16xf32>
      %471 = vector.shape_cast %470 : vector<1x20x16xf32> to vector<20x16xf32>
      %c2_i32_222 = arith.constant 2 : i32
      %472 = arith.addi %0, %c2_i32_222 : i32
      %c0_223 = arith.constant 0 : index
      %473 = arith.index_cast %arg12 : i32 to index
      %474 = arith.index_cast %472 : i32 to index
      %c2_224 = arith.constant 2 : index
      %475 = vector.load %arg2[%c0_223, %473, %474, %c2_224] : memref<1x3x22x18xf32, #tpu.memory_space<vmem>>, vector<1x1x20x16xf32>
      %476 = vector.shape_cast %475 : vector<1x1x20x16xf32> to vector<1x20x16xf32>
      %477 = vector.shape_cast %476 : vector<1x20x16xf32> to vector<20x16xf32>
      %c144_i32 = arith.constant 144 : i32
      %478 = arith.muli %arg12, %c144_i32 : i32
      %c0_i32_225 = arith.constant 0 : i32
      %479 = arith.addi %478, %c0_i32_225 : i32
      %c0_i32_226 = arith.constant 0 : i32
      %480 = arith.addi %479, %c0_i32_226 : i32
      %481 = arith.index_cast %480 : i32 to index
      %482 = memref.load %arg3[%481] : memref<432xf32, #tpu.memory_space<smem>>
      %483 = vector.broadcast %482 : f32 to vector<20x16xf32>
      %484 = arith.mulf %483, %429 : vector<20x16xf32>
      %485 = arith.addf %arg13, %484 : vector<20x16xf32>
      %c16_i32_227 = arith.constant 16 : i32
      %486 = arith.addi %478, %c16_i32_227 : i32
      %c0_i32_228 = arith.constant 0 : i32
      %487 = arith.addi %486, %c0_i32_228 : i32
      %488 = arith.index_cast %487 : i32 to index
      %489 = memref.load %arg3[%488] : memref<432xf32, #tpu.memory_space<smem>>
      %490 = vector.broadcast %489 : f32 to vector<20x16xf32>
      %491 = arith.mulf %490, %435 : vector<20x16xf32>
      %492 = arith.addf %485, %491 : vector<20x16xf32>
      %c32_i32 = arith.constant 32 : i32
      %493 = arith.addi %478, %c32_i32 : i32
      %c0_i32_229 = arith.constant 0 : i32
      %494 = arith.addi %493, %c0_i32_229 : i32
      %495 = arith.index_cast %494 : i32 to index
      %496 = memref.load %arg3[%495] : memref<432xf32, #tpu.memory_space<smem>>
      %497 = vector.broadcast %496 : f32 to vector<20x16xf32>
      %498 = arith.mulf %497, %441 : vector<20x16xf32>
      %499 = arith.addf %492, %498 : vector<20x16xf32>
      %c48_i32 = arith.constant 48 : i32
      %500 = arith.addi %478, %c48_i32 : i32
      %c0_i32_230 = arith.constant 0 : i32
      %501 = arith.addi %500, %c0_i32_230 : i32
      %502 = arith.index_cast %501 : i32 to index
      %503 = memref.load %arg3[%502] : memref<432xf32, #tpu.memory_space<smem>>
      %504 = vector.broadcast %503 : f32 to vector<20x16xf32>
      %505 = arith.mulf %504, %447 : vector<20x16xf32>
      %506 = arith.addf %499, %505 : vector<20x16xf32>
      %c64_i32 = arith.constant 64 : i32
      %507 = arith.addi %478, %c64_i32 : i32
      %c0_i32_231 = arith.constant 0 : i32
      %508 = arith.addi %507, %c0_i32_231 : i32
      %509 = arith.index_cast %508 : i32 to index
      %510 = memref.load %arg3[%509] : memref<432xf32, #tpu.memory_space<smem>>
      %511 = vector.broadcast %510 : f32 to vector<20x16xf32>
      %512 = arith.mulf %511, %453 : vector<20x16xf32>
      %513 = arith.addf %506, %512 : vector<20x16xf32>
      %c80_i32 = arith.constant 80 : i32
      %514 = arith.addi %478, %c80_i32 : i32
      %c0_i32_232 = arith.constant 0 : i32
      %515 = arith.addi %514, %c0_i32_232 : i32
      %516 = arith.index_cast %515 : i32 to index
      %517 = memref.load %arg3[%516] : memref<432xf32, #tpu.memory_space<smem>>
      %518 = vector.broadcast %517 : f32 to vector<20x16xf32>
      %519 = arith.mulf %518, %459 : vector<20x16xf32>
      %520 = arith.addf %513, %519 : vector<20x16xf32>
      %c96_i32 = arith.constant 96 : i32
      %521 = arith.addi %478, %c96_i32 : i32
      %c0_i32_233 = arith.constant 0 : i32
      %522 = arith.addi %521, %c0_i32_233 : i32
      %523 = arith.index_cast %522 : i32 to index
      %524 = memref.load %arg3[%523] : memref<432xf32, #tpu.memory_space<smem>>
      %525 = vector.broadcast %524 : f32 to vector<20x16xf32>
      %526 = arith.mulf %525, %465 : vector<20x16xf32>
      %527 = arith.addf %520, %526 : vector<20x16xf32>
      %c112_i32 = arith.constant 112 : i32
      %528 = arith.addi %478, %c112_i32 : i32
      %c0_i32_234 = arith.constant 0 : i32
      %529 = arith.addi %528, %c0_i32_234 : i32
      %530 = arith.index_cast %529 : i32 to index
      %531 = memref.load %arg3[%530] : memref<432xf32, #tpu.memory_space<smem>>
      %532 = vector.broadcast %531 : f32 to vector<20x16xf32>
      %533 = arith.mulf %532, %471 : vector<20x16xf32>
      %534 = arith.addf %527, %533 : vector<20x16xf32>
      %c128_i32 = arith.constant 128 : i32
      %535 = arith.addi %478, %c128_i32 : i32
      %c0_i32_235 = arith.constant 0 : i32
      %536 = arith.addi %535, %c0_i32_235 : i32
      %537 = arith.index_cast %536 : i32 to index
      %538 = memref.load %arg3[%537] : memref<432xf32, #tpu.memory_space<smem>>
      %539 = vector.broadcast %538 : f32 to vector<20x16xf32>
      %540 = arith.mulf %539, %477 : vector<20x16xf32>
      %541 = arith.addf %534, %540 : vector<20x16xf32>
      %c0_i32_236 = arith.constant 0 : i32
      %542 = arith.addi %478, %c0_i32_236 : i32
      %c1_i32_237 = arith.constant 1 : i32
      %543 = arith.addi %542, %c1_i32_237 : i32
      %544 = arith.index_cast %543 : i32 to index
      %545 = memref.load %arg3[%544] : memref<432xf32, #tpu.memory_space<smem>>
      %546 = vector.broadcast %545 : f32 to vector<20x16xf32>
      %547 = arith.mulf %546, %429 : vector<20x16xf32>
      %548 = arith.addf %arg14, %547 : vector<20x16xf32>
      %c16_i32_238 = arith.constant 16 : i32
      %549 = arith.addi %478, %c16_i32_238 : i32
      %c1_i32_239 = arith.constant 1 : i32
      %550 = arith.addi %549, %c1_i32_239 : i32
      %551 = arith.index_cast %550 : i32 to index
      %552 = memref.load %arg3[%551] : memref<432xf32, #tpu.memory_space<smem>>
      %553 = vector.broadcast %552 : f32 to vector<20x16xf32>
      %554 = arith.mulf %553, %435 : vector<20x16xf32>
      %555 = arith.addf %548, %554 : vector<20x16xf32>
      %c32_i32_240 = arith.constant 32 : i32
      %556 = arith.addi %478, %c32_i32_240 : i32
      %c1_i32_241 = arith.constant 1 : i32
      %557 = arith.addi %556, %c1_i32_241 : i32
      %558 = arith.index_cast %557 : i32 to index
      %559 = memref.load %arg3[%558] : memref<432xf32, #tpu.memory_space<smem>>
      %560 = vector.broadcast %559 : f32 to vector<20x16xf32>
      %561 = arith.mulf %560, %441 : vector<20x16xf32>
      %562 = arith.addf %555, %561 : vector<20x16xf32>
      %c48_i32_242 = arith.constant 48 : i32
      %563 = arith.addi %478, %c48_i32_242 : i32
      %c1_i32_243 = arith.constant 1 : i32
      %564 = arith.addi %563, %c1_i32_243 : i32
      %565 = arith.index_cast %564 : i32 to index
      %566 = memref.load %arg3[%565] : memref<432xf32, #tpu.memory_space<smem>>
      %567 = vector.broadcast %566 : f32 to vector<20x16xf32>
      %568 = arith.mulf %567, %447 : vector<20x16xf32>
      %569 = arith.addf %562, %568 : vector<20x16xf32>
      %c64_i32_244 = arith.constant 64 : i32
      %570 = arith.addi %478, %c64_i32_244 : i32
      %c1_i32_245 = arith.constant 1 : i32
      %571 = arith.addi %570, %c1_i32_245 : i32
      %572 = arith.index_cast %571 : i32 to index
      %573 = memref.load %arg3[%572] : memref<432xf32, #tpu.memory_space<smem>>
      %574 = vector.broadcast %573 : f32 to vector<20x16xf32>
      %575 = arith.mulf %574, %453 : vector<20x16xf32>
      %576 = arith.addf %569, %575 : vector<20x16xf32>
      %c80_i32_246 = arith.constant 80 : i32
      %577 = arith.addi %478, %c80_i32_246 : i32
      %c1_i32_247 = arith.constant 1 : i32
      %578 = arith.addi %577, %c1_i32_247 : i32
      %579 = arith.index_cast %578 : i32 to index
      %580 = memref.load %arg3[%579] : memref<432xf32, #tpu.memory_space<smem>>
      %581 = vector.broadcast %580 : f32 to vector<20x16xf32>
      %582 = arith.mulf %581, %459 : vector<20x16xf32>
      %583 = arith.addf %576, %582 : vector<20x16xf32>
      %c96_i32_248 = arith.constant 96 : i32
      %584 = arith.addi %478, %c96_i32_248 : i32
      %c1_i32_249 = arith.constant 1 : i32
      %585 = arith.addi %584, %c1_i32_249 : i32
      %586 = arith.index_cast %585 : i32 to index
      %587 = memref.load %arg3[%586] : memref<432xf32, #tpu.memory_space<smem>>
      %588 = vector.broadcast %587 : f32 to vector<20x16xf32>
      %589 = arith.mulf %588, %465 : vector<20x16xf32>
      %590 = arith.addf %583, %589 : vector<20x16xf32>
      %c112_i32_250 = arith.constant 112 : i32
      %591 = arith.addi %478, %c112_i32_250 : i32
      %c1_i32_251 = arith.constant 1 : i32
      %592 = arith.addi %591, %c1_i32_251 : i32
      %593 = arith.index_cast %592 : i32 to index
      %594 = memref.load %arg3[%593] : memref<432xf32, #tpu.memory_space<smem>>
      %595 = vector.broadcast %594 : f32 to vector<20x16xf32>
      %596 = arith.mulf %595, %471 : vector<20x16xf32>
      %597 = arith.addf %590, %596 : vector<20x16xf32>
      %c128_i32_252 = arith.constant 128 : i32
      %598 = arith.addi %478, %c128_i32_252 : i32
      %c1_i32_253 = arith.constant 1 : i32
      %599 = arith.addi %598, %c1_i32_253 : i32
      %600 = arith.index_cast %599 : i32 to index
      %601 = memref.load %arg3[%600] : memref<432xf32, #tpu.memory_space<smem>>
      %602 = vector.broadcast %601 : f32 to vector<20x16xf32>
      %603 = arith.mulf %602, %477 : vector<20x16xf32>
      %604 = arith.addf %597, %603 : vector<20x16xf32>
      %c0_i32_254 = arith.constant 0 : i32
      %605 = arith.addi %478, %c0_i32_254 : i32
      %c2_i32_255 = arith.constant 2 : i32
      %606 = arith.addi %605, %c2_i32_255 : i32
      %607 = arith.index_cast %606 : i32 to index
      %608 = memref.load %arg3[%607] : memref<432xf32, #tpu.memory_space<smem>>
      %609 = vector.broadcast %608 : f32 to vector<20x16xf32>
      %610 = arith.mulf %609, %429 : vector<20x16xf32>
      %611 = arith.addf %arg15, %610 : vector<20x16xf32>
      %c16_i32_256 = arith.constant 16 : i32
      %612 = arith.addi %478, %c16_i32_256 : i32
      %c2_i32_257 = arith.constant 2 : i32
      %613 = arith.addi %612, %c2_i32_257 : i32
      %614 = arith.index_cast %613 : i32 to index
      %615 = memref.load %arg3[%614] : memref<432xf32, #tpu.memory_space<smem>>
      %616 = vector.broadcast %615 : f32 to vector<20x16xf32>
      %617 = arith.mulf %616, %435 : vector<20x16xf32>
      %618 = arith.addf %611, %617 : vector<20x16xf32>
      %c32_i32_258 = arith.constant 32 : i32
      %619 = arith.addi %478, %c32_i32_258 : i32
      %c2_i32_259 = arith.constant 2 : i32
      %620 = arith.addi %619, %c2_i32_259 : i32
      %621 = arith.index_cast %620 : i32 to index
      %622 = memref.load %arg3[%621] : memref<432xf32, #tpu.memory_space<smem>>
      %623 = vector.broadcast %622 : f32 to vector<20x16xf32>
      %624 = arith.mulf %623, %441 : vector<20x16xf32>
      %625 = arith.addf %618, %624 : vector<20x16xf32>
      %c48_i32_260 = arith.constant 48 : i32
      %626 = arith.addi %478, %c48_i32_260 : i32
      %c2_i32_261 = arith.constant 2 : i32
      %627 = arith.addi %626, %c2_i32_261 : i32
      %628 = arith.index_cast %627 : i32 to index
      %629 = memref.load %arg3[%628] : memref<432xf32, #tpu.memory_space<smem>>
      %630 = vector.broadcast %629 : f32 to vector<20x16xf32>
      %631 = arith.mulf %630, %447 : vector<20x16xf32>
      %632 = arith.addf %625, %631 : vector<20x16xf32>
      %c64_i32_262 = arith.constant 64 : i32
      %633 = arith.addi %478, %c64_i32_262 : i32
      %c2_i32_263 = arith.constant 2 : i32
      %634 = arith.addi %633, %c2_i32_263 : i32
      %635 = arith.index_cast %634 : i32 to index
      %636 = memref.load %arg3[%635] : memref<432xf32, #tpu.memory_space<smem>>
      %637 = vector.broadcast %636 : f32 to vector<20x16xf32>
      %638 = arith.mulf %637, %453 : vector<20x16xf32>
      %639 = arith.addf %632, %638 : vector<20x16xf32>
      %c80_i32_264 = arith.constant 80 : i32
      %640 = arith.addi %478, %c80_i32_264 : i32
      %c2_i32_265 = arith.constant 2 : i32
      %641 = arith.addi %640, %c2_i32_265 : i32
      %642 = arith.index_cast %641 : i32 to index
      %643 = memref.load %arg3[%642] : memref<432xf32, #tpu.memory_space<smem>>
      %644 = vector.broadcast %643 : f32 to vector<20x16xf32>
      %645 = arith.mulf %644, %459 : vector<20x16xf32>
      %646 = arith.addf %639, %645 : vector<20x16xf32>
      %c96_i32_266 = arith.constant 96 : i32
      %647 = arith.addi %478, %c96_i32_266 : i32
      %c2_i32_267 = arith.constant 2 : i32
      %648 = arith.addi %647, %c2_i32_267 : i32
      %649 = arith.index_cast %648 : i32 to index
      %650 = memref.load %arg3[%649] : memref<432xf32, #tpu.memory_space<smem>>
      %651 = vector.broadcast %650 : f32 to vector<20x16xf32>
      %652 = arith.mulf %651, %465 : vector<20x16xf32>
      %653 = arith.addf %646, %652 : vector<20x16xf32>
      %c112_i32_268 = arith.constant 112 : i32
      %654 = arith.addi %478, %c112_i32_268 : i32
      %c2_i32_269 = arith.constant 2 : i32
      %655 = arith.addi %654, %c2_i32_269 : i32
      %656 = arith.index_cast %655 : i32 to index
      %657 = memref.load %arg3[%656] : memref<432xf32, #tpu.memory_space<smem>>
      %658 = vector.broadcast %657 : f32 to vector<20x16xf32>
      %659 = arith.mulf %658, %471 : vector<20x16xf32>
      %660 = arith.addf %653, %659 : vector<20x16xf32>
      %c128_i32_270 = arith.constant 128 : i32
      %661 = arith.addi %478, %c128_i32_270 : i32
      %c2_i32_271 = arith.constant 2 : i32
      %662 = arith.addi %661, %c2_i32_271 : i32
      %663 = arith.index_cast %662 : i32 to index
      %664 = memref.load %arg3[%663] : memref<432xf32, #tpu.memory_space<smem>>
      %665 = vector.broadcast %664 : f32 to vector<20x16xf32>
      %666 = arith.mulf %665, %477 : vector<20x16xf32>
      %667 = arith.addf %660, %666 : vector<20x16xf32>
      %c0_i32_272 = arith.constant 0 : i32
      %668 = arith.addi %478, %c0_i32_272 : i32
      %c3_i32_273 = arith.constant 3 : i32
      %669 = arith.addi %668, %c3_i32_273 : i32
      %670 = arith.index_cast %669 : i32 to index
      %671 = memref.load %arg3[%670] : memref<432xf32, #tpu.memory_space<smem>>
      %672 = vector.broadcast %671 : f32 to vector<20x16xf32>
      %673 = arith.mulf %672, %429 : vector<20x16xf32>
      %674 = arith.addf %arg16, %673 : vector<20x16xf32>
      %c16_i32_274 = arith.constant 16 : i32
      %675 = arith.addi %478, %c16_i32_274 : i32
      %c3_i32_275 = arith.constant 3 : i32
      %676 = arith.addi %675, %c3_i32_275 : i32
      %677 = arith.index_cast %676 : i32 to index
      %678 = memref.load %arg3[%677] : memref<432xf32, #tpu.memory_space<smem>>
      %679 = vector.broadcast %678 : f32 to vector<20x16xf32>
      %680 = arith.mulf %679, %435 : vector<20x16xf32>
      %681 = arith.addf %674, %680 : vector<20x16xf32>
      %c32_i32_276 = arith.constant 32 : i32
      %682 = arith.addi %478, %c32_i32_276 : i32
      %c3_i32_277 = arith.constant 3 : i32
      %683 = arith.addi %682, %c3_i32_277 : i32
      %684 = arith.index_cast %683 : i32 to index
      %685 = memref.load %arg3[%684] : memref<432xf32, #tpu.memory_space<smem>>
      %686 = vector.broadcast %685 : f32 to vector<20x16xf32>
      %687 = arith.mulf %686, %441 : vector<20x16xf32>
      %688 = arith.addf %681, %687 : vector<20x16xf32>
      %c48_i32_278 = arith.constant 48 : i32
      %689 = arith.addi %478, %c48_i32_278 : i32
      %c3_i32_279 = arith.constant 3 : i32
      %690 = arith.addi %689, %c3_i32_279 : i32
      %691 = arith.index_cast %690 : i32 to index
      %692 = memref.load %arg3[%691] : memref<432xf32, #tpu.memory_space<smem>>
      %693 = vector.broadcast %692 : f32 to vector<20x16xf32>
      %694 = arith.mulf %693, %447 : vector<20x16xf32>
      %695 = arith.addf %688, %694 : vector<20x16xf32>
      %c64_i32_280 = arith.constant 64 : i32
      %696 = arith.addi %478, %c64_i32_280 : i32
      %c3_i32_281 = arith.constant 3 : i32
      %697 = arith.addi %696, %c3_i32_281 : i32
      %698 = arith.index_cast %697 : i32 to index
      %699 = memref.load %arg3[%698] : memref<432xf32, #tpu.memory_space<smem>>
      %700 = vector.broadcast %699 : f32 to vector<20x16xf32>
      %701 = arith.mulf %700, %453 : vector<20x16xf32>
      %702 = arith.addf %695, %701 : vector<20x16xf32>
      %c80_i32_282 = arith.constant 80 : i32
      %703 = arith.addi %478, %c80_i32_282 : i32
      %c3_i32_283 = arith.constant 3 : i32
      %704 = arith.addi %703, %c3_i32_283 : i32
      %705 = arith.index_cast %704 : i32 to index
      %706 = memref.load %arg3[%705] : memref<432xf32, #tpu.memory_space<smem>>
      %707 = vector.broadcast %706 : f32 to vector<20x16xf32>
      %708 = arith.mulf %707, %459 : vector<20x16xf32>
      %709 = arith.addf %702, %708 : vector<20x16xf32>
      %c96_i32_284 = arith.constant 96 : i32
      %710 = arith.addi %478, %c96_i32_284 : i32
      %c3_i32_285 = arith.constant 3 : i32
      %711 = arith.addi %710, %c3_i32_285 : i32
      %712 = arith.index_cast %711 : i32 to index
      %713 = memref.load %arg3[%712] : memref<432xf32, #tpu.memory_space<smem>>
      %714 = vector.broadcast %713 : f32 to vector<20x16xf32>
      %715 = arith.mulf %714, %465 : vector<20x16xf32>
      %716 = arith.addf %709, %715 : vector<20x16xf32>
      %c112_i32_286 = arith.constant 112 : i32
      %717 = arith.addi %478, %c112_i32_286 : i32
      %c3_i32_287 = arith.constant 3 : i32
      %718 = arith.addi %717, %c3_i32_287 : i32
      %719 = arith.index_cast %718 : i32 to index
      %720 = memref.load %arg3[%719] : memref<432xf32, #tpu.memory_space<smem>>
      %721 = vector.broadcast %720 : f32 to vector<20x16xf32>
      %722 = arith.mulf %721, %471 : vector<20x16xf32>
      %723 = arith.addf %716, %722 : vector<20x16xf32>
      %c128_i32_288 = arith.constant 128 : i32
      %724 = arith.addi %478, %c128_i32_288 : i32
      %c3_i32_289 = arith.constant 3 : i32
      %725 = arith.addi %724, %c3_i32_289 : i32
      %726 = arith.index_cast %725 : i32 to index
      %727 = memref.load %arg3[%726] : memref<432xf32, #tpu.memory_space<smem>>
      %728 = vector.broadcast %727 : f32 to vector<20x16xf32>
      %729 = arith.mulf %728, %477 : vector<20x16xf32>
      %730 = arith.addf %723, %729 : vector<20x16xf32>
      %c0_i32_290 = arith.constant 0 : i32
      %731 = arith.addi %478, %c0_i32_290 : i32
      %c4_i32 = arith.constant 4 : i32
      %732 = arith.addi %731, %c4_i32 : i32
      %733 = arith.index_cast %732 : i32 to index
      %734 = memref.load %arg3[%733] : memref<432xf32, #tpu.memory_space<smem>>
      %735 = vector.broadcast %734 : f32 to vector<20x16xf32>
      %736 = arith.mulf %735, %429 : vector<20x16xf32>
      %737 = arith.addf %arg17, %736 : vector<20x16xf32>
      %c16_i32_291 = arith.constant 16 : i32
      %738 = arith.addi %478, %c16_i32_291 : i32
      %c4_i32_292 = arith.constant 4 : i32
      %739 = arith.addi %738, %c4_i32_292 : i32
      %740 = arith.index_cast %739 : i32 to index
      %741 = memref.load %arg3[%740] : memref<432xf32, #tpu.memory_space<smem>>
      %742 = vector.broadcast %741 : f32 to vector<20x16xf32>
      %743 = arith.mulf %742, %435 : vector<20x16xf32>
      %744 = arith.addf %737, %743 : vector<20x16xf32>
      %c32_i32_293 = arith.constant 32 : i32
      %745 = arith.addi %478, %c32_i32_293 : i32
      %c4_i32_294 = arith.constant 4 : i32
      %746 = arith.addi %745, %c4_i32_294 : i32
      %747 = arith.index_cast %746 : i32 to index
      %748 = memref.load %arg3[%747] : memref<432xf32, #tpu.memory_space<smem>>
      %749 = vector.broadcast %748 : f32 to vector<20x16xf32>
      %750 = arith.mulf %749, %441 : vector<20x16xf32>
      %751 = arith.addf %744, %750 : vector<20x16xf32>
      %c48_i32_295 = arith.constant 48 : i32
      %752 = arith.addi %478, %c48_i32_295 : i32
      %c4_i32_296 = arith.constant 4 : i32
      %753 = arith.addi %752, %c4_i32_296 : i32
      %754 = arith.index_cast %753 : i32 to index
      %755 = memref.load %arg3[%754] : memref<432xf32, #tpu.memory_space<smem>>
      %756 = vector.broadcast %755 : f32 to vector<20x16xf32>
      %757 = arith.mulf %756, %447 : vector<20x16xf32>
      %758 = arith.addf %751, %757 : vector<20x16xf32>
      %c64_i32_297 = arith.constant 64 : i32
      %759 = arith.addi %478, %c64_i32_297 : i32
      %c4_i32_298 = arith.constant 4 : i32
      %760 = arith.addi %759, %c4_i32_298 : i32
      %761 = arith.index_cast %760 : i32 to index
      %762 = memref.load %arg3[%761] : memref<432xf32, #tpu.memory_space<smem>>
      %763 = vector.broadcast %762 : f32 to vector<20x16xf32>
      %764 = arith.mulf %763, %453 : vector<20x16xf32>
      %765 = arith.addf %758, %764 : vector<20x16xf32>
      %c80_i32_299 = arith.constant 80 : i32
      %766 = arith.addi %478, %c80_i32_299 : i32
      %c4_i32_300 = arith.constant 4 : i32
      %767 = arith.addi %766, %c4_i32_300 : i32
      %768 = arith.index_cast %767 : i32 to index
      %769 = memref.load %arg3[%768] : memref<432xf32, #tpu.memory_space<smem>>
      %770 = vector.broadcast %769 : f32 to vector<20x16xf32>
      %771 = arith.mulf %770, %459 : vector<20x16xf32>
      %772 = arith.addf %765, %771 : vector<20x16xf32>
      %c96_i32_301 = arith.constant 96 : i32
      %773 = arith.addi %478, %c96_i32_301 : i32
      %c4_i32_302 = arith.constant 4 : i32
      %774 = arith.addi %773, %c4_i32_302 : i32
      %775 = arith.index_cast %774 : i32 to index
      %776 = memref.load %arg3[%775] : memref<432xf32, #tpu.memory_space<smem>>
      %777 = vector.broadcast %776 : f32 to vector<20x16xf32>
      %778 = arith.mulf %777, %465 : vector<20x16xf32>
      %779 = arith.addf %772, %778 : vector<20x16xf32>
      %c112_i32_303 = arith.constant 112 : i32
      %780 = arith.addi %478, %c112_i32_303 : i32
      %c4_i32_304 = arith.constant 4 : i32
      %781 = arith.addi %780, %c4_i32_304 : i32
      %782 = arith.index_cast %781 : i32 to index
      %783 = memref.load %arg3[%782] : memref<432xf32, #tpu.memory_space<smem>>
      %784 = vector.broadcast %783 : f32 to vector<20x16xf32>
      %785 = arith.mulf %784, %471 : vector<20x16xf32>
      %786 = arith.addf %779, %785 : vector<20x16xf32>
      %c128_i32_305 = arith.constant 128 : i32
      %787 = arith.addi %478, %c128_i32_305 : i32
      %c4_i32_306 = arith.constant 4 : i32
      %788 = arith.addi %787, %c4_i32_306 : i32
      %789 = arith.index_cast %788 : i32 to index
      %790 = memref.load %arg3[%789] : memref<432xf32, #tpu.memory_space<smem>>
      %791 = vector.broadcast %790 : f32 to vector<20x16xf32>
      %792 = arith.mulf %791, %477 : vector<20x16xf32>
      %793 = arith.addf %786, %792 : vector<20x16xf32>
      %c0_i32_307 = arith.constant 0 : i32
      %794 = arith.addi %478, %c0_i32_307 : i32
      %c5_i32 = arith.constant 5 : i32
      %795 = arith.addi %794, %c5_i32 : i32
      %796 = arith.index_cast %795 : i32 to index
      %797 = memref.load %arg3[%796] : memref<432xf32, #tpu.memory_space<smem>>
      %798 = vector.broadcast %797 : f32 to vector<20x16xf32>
      %799 = arith.mulf %798, %429 : vector<20x16xf32>
      %800 = arith.addf %arg18, %799 : vector<20x16xf32>
      %c16_i32_308 = arith.constant 16 : i32
      %801 = arith.addi %478, %c16_i32_308 : i32
      %c5_i32_309 = arith.constant 5 : i32
      %802 = arith.addi %801, %c5_i32_309 : i32
      %803 = arith.index_cast %802 : i32 to index
      %804 = memref.load %arg3[%803] : memref<432xf32, #tpu.memory_space<smem>>
      %805 = vector.broadcast %804 : f32 to vector<20x16xf32>
      %806 = arith.mulf %805, %435 : vector<20x16xf32>
      %807 = arith.addf %800, %806 : vector<20x16xf32>
      %c32_i32_310 = arith.constant 32 : i32
      %808 = arith.addi %478, %c32_i32_310 : i32
      %c5_i32_311 = arith.constant 5 : i32
      %809 = arith.addi %808, %c5_i32_311 : i32
      %810 = arith.index_cast %809 : i32 to index
      %811 = memref.load %arg3[%810] : memref<432xf32, #tpu.memory_space<smem>>
      %812 = vector.broadcast %811 : f32 to vector<20x16xf32>
      %813 = arith.mulf %812, %441 : vector<20x16xf32>
      %814 = arith.addf %807, %813 : vector<20x16xf32>
      %c48_i32_312 = arith.constant 48 : i32
      %815 = arith.addi %478, %c48_i32_312 : i32
      %c5_i32_313 = arith.constant 5 : i32
      %816 = arith.addi %815, %c5_i32_313 : i32
      %817 = arith.index_cast %816 : i32 to index
      %818 = memref.load %arg3[%817] : memref<432xf32, #tpu.memory_space<smem>>
      %819 = vector.broadcast %818 : f32 to vector<20x16xf32>
      %820 = arith.mulf %819, %447 : vector<20x16xf32>
      %821 = arith.addf %814, %820 : vector<20x16xf32>
      %c64_i32_314 = arith.constant 64 : i32
      %822 = arith.addi %478, %c64_i32_314 : i32
      %c5_i32_315 = arith.constant 5 : i32
      %823 = arith.addi %822, %c5_i32_315 : i32
      %824 = arith.index_cast %823 : i32 to index
      %825 = memref.load %arg3[%824] : memref<432xf32, #tpu.memory_space<smem>>
      %826 = vector.broadcast %825 : f32 to vector<20x16xf32>
      %827 = arith.mulf %826, %453 : vector<20x16xf32>
      %828 = arith.addf %821, %827 : vector<20x16xf32>
      %c80_i32_316 = arith.constant 80 : i32
      %829 = arith.addi %478, %c80_i32_316 : i32
      %c5_i32_317 = arith.constant 5 : i32
      %830 = arith.addi %829, %c5_i32_317 : i32
      %831 = arith.index_cast %830 : i32 to index
      %832 = memref.load %arg3[%831] : memref<432xf32, #tpu.memory_space<smem>>
      %833 = vector.broadcast %832 : f32 to vector<20x16xf32>
      %834 = arith.mulf %833, %459 : vector<20x16xf32>
      %835 = arith.addf %828, %834 : vector<20x16xf32>
      %c96_i32_318 = arith.constant 96 : i32
      %836 = arith.addi %478, %c96_i32_318 : i32
      %c5_i32_319 = arith.constant 5 : i32
      %837 = arith.addi %836, %c5_i32_319 : i32
      %838 = arith.index_cast %837 : i32 to index
      %839 = memref.load %arg3[%838] : memref<432xf32, #tpu.memory_space<smem>>
      %840 = vector.broadcast %839 : f32 to vector<20x16xf32>
      %841 = arith.mulf %840, %465 : vector<20x16xf32>
      %842 = arith.addf %835, %841 : vector<20x16xf32>
      %c112_i32_320 = arith.constant 112 : i32
      %843 = arith.addi %478, %c112_i32_320 : i32
      %c5_i32_321 = arith.constant 5 : i32
      %844 = arith.addi %843, %c5_i32_321 : i32
      %845 = arith.index_cast %844 : i32 to index
      %846 = memref.load %arg3[%845] : memref<432xf32, #tpu.memory_space<smem>>
      %847 = vector.broadcast %846 : f32 to vector<20x16xf32>
      %848 = arith.mulf %847, %471 : vector<20x16xf32>
      %849 = arith.addf %842, %848 : vector<20x16xf32>
      %c128_i32_322 = arith.constant 128 : i32
      %850 = arith.addi %478, %c128_i32_322 : i32
      %c5_i32_323 = arith.constant 5 : i32
      %851 = arith.addi %850, %c5_i32_323 : i32
      %852 = arith.index_cast %851 : i32 to index
      %853 = memref.load %arg3[%852] : memref<432xf32, #tpu.memory_space<smem>>
      %854 = vector.broadcast %853 : f32 to vector<20x16xf32>
      %855 = arith.mulf %854, %477 : vector<20x16xf32>
      %856 = arith.addf %849, %855 : vector<20x16xf32>
      %c0_i32_324 = arith.constant 0 : i32
      %857 = arith.addi %478, %c0_i32_324 : i32
      %c6_i32 = arith.constant 6 : i32
      %858 = arith.addi %857, %c6_i32 : i32
      %859 = arith.index_cast %858 : i32 to index
      %860 = memref.load %arg3[%859] : memref<432xf32, #tpu.memory_space<smem>>
      %861 = vector.broadcast %860 : f32 to vector<20x16xf32>
      %862 = arith.mulf %861, %429 : vector<20x16xf32>
      %863 = arith.addf %arg19, %862 : vector<20x16xf32>
      %c16_i32_325 = arith.constant 16 : i32
      %864 = arith.addi %478, %c16_i32_325 : i32
      %c6_i32_326 = arith.constant 6 : i32
      %865 = arith.addi %864, %c6_i32_326 : i32
      %866 = arith.index_cast %865 : i32 to index
      %867 = memref.load %arg3[%866] : memref<432xf32, #tpu.memory_space<smem>>
      %868 = vector.broadcast %867 : f32 to vector<20x16xf32>
      %869 = arith.mulf %868, %435 : vector<20x16xf32>
      %870 = arith.addf %863, %869 : vector<20x16xf32>
      %c32_i32_327 = arith.constant 32 : i32
      %871 = arith.addi %478, %c32_i32_327 : i32
      %c6_i32_328 = arith.constant 6 : i32
      %872 = arith.addi %871, %c6_i32_328 : i32
      %873 = arith.index_cast %872 : i32 to index
      %874 = memref.load %arg3[%873] : memref<432xf32, #tpu.memory_space<smem>>
      %875 = vector.broadcast %874 : f32 to vector<20x16xf32>
      %876 = arith.mulf %875, %441 : vector<20x16xf32>
      %877 = arith.addf %870, %876 : vector<20x16xf32>
      %c48_i32_329 = arith.constant 48 : i32
      %878 = arith.addi %478, %c48_i32_329 : i32
      %c6_i32_330 = arith.constant 6 : i32
      %879 = arith.addi %878, %c6_i32_330 : i32
      %880 = arith.index_cast %879 : i32 to index
      %881 = memref.load %arg3[%880] : memref<432xf32, #tpu.memory_space<smem>>
      %882 = vector.broadcast %881 : f32 to vector<20x16xf32>
      %883 = arith.mulf %882, %447 : vector<20x16xf32>
      %884 = arith.addf %877, %883 : vector<20x16xf32>
      %c64_i32_331 = arith.constant 64 : i32
      %885 = arith.addi %478, %c64_i32_331 : i32
      %c6_i32_332 = arith.constant 6 : i32
      %886 = arith.addi %885, %c6_i32_332 : i32
      %887 = arith.index_cast %886 : i32 to index
      %888 = memref.load %arg3[%887] : memref<432xf32, #tpu.memory_space<smem>>
      %889 = vector.broadcast %888 : f32 to vector<20x16xf32>
      %890 = arith.mulf %889, %453 : vector<20x16xf32>
      %891 = arith.addf %884, %890 : vector<20x16xf32>
      %c80_i32_333 = arith.constant 80 : i32
      %892 = arith.addi %478, %c80_i32_333 : i32
      %c6_i32_334 = arith.constant 6 : i32
      %893 = arith.addi %892, %c6_i32_334 : i32
      %894 = arith.index_cast %893 : i32 to index
      %895 = memref.load %arg3[%894] : memref<432xf32, #tpu.memory_space<smem>>
      %896 = vector.broadcast %895 : f32 to vector<20x16xf32>
      %897 = arith.mulf %896, %459 : vector<20x16xf32>
      %898 = arith.addf %891, %897 : vector<20x16xf32>
      %c96_i32_335 = arith.constant 96 : i32
      %899 = arith.addi %478, %c96_i32_335 : i32
      %c6_i32_336 = arith.constant 6 : i32
      %900 = arith.addi %899, %c6_i32_336 : i32
      %901 = arith.index_cast %900 : i32 to index
      %902 = memref.load %arg3[%901] : memref<432xf32, #tpu.memory_space<smem>>
      %903 = vector.broadcast %902 : f32 to vector<20x16xf32>
      %904 = arith.mulf %903, %465 : vector<20x16xf32>
      %905 = arith.addf %898, %904 : vector<20x16xf32>
      %c112_i32_337 = arith.constant 112 : i32
      %906 = arith.addi %478, %c112_i32_337 : i32
      %c6_i32_338 = arith.constant 6 : i32
      %907 = arith.addi %906, %c6_i32_338 : i32
      %908 = arith.index_cast %907 : i32 to index
      %909 = memref.load %arg3[%908] : memref<432xf32, #tpu.memory_space<smem>>
      %910 = vector.broadcast %909 : f32 to vector<20x16xf32>
      %911 = arith.mulf %910, %471 : vector<20x16xf32>
      %912 = arith.addf %905, %911 : vector<20x16xf32>
      %c128_i32_339 = arith.constant 128 : i32
      %913 = arith.addi %478, %c128_i32_339 : i32
      %c6_i32_340 = arith.constant 6 : i32
      %914 = arith.addi %913, %c6_i32_340 : i32
      %915 = arith.index_cast %914 : i32 to index
      %916 = memref.load %arg3[%915] : memref<432xf32, #tpu.memory_space<smem>>
      %917 = vector.broadcast %916 : f32 to vector<20x16xf32>
      %918 = arith.mulf %917, %477 : vector<20x16xf32>
      %919 = arith.addf %912, %918 : vector<20x16xf32>
      %c0_i32_341 = arith.constant 0 : i32
      %920 = arith.addi %478, %c0_i32_341 : i32
      %c7_i32 = arith.constant 7 : i32
      %921 = arith.addi %920, %c7_i32 : i32
      %922 = arith.index_cast %921 : i32 to index
      %923 = memref.load %arg3[%922] : memref<432xf32, #tpu.memory_space<smem>>
      %924 = vector.broadcast %923 : f32 to vector<20x16xf32>
      %925 = arith.mulf %924, %429 : vector<20x16xf32>
      %926 = arith.addf %arg20, %925 : vector<20x16xf32>
      %c16_i32_342 = arith.constant 16 : i32
      %927 = arith.addi %478, %c16_i32_342 : i32
      %c7_i32_343 = arith.constant 7 : i32
      %928 = arith.addi %927, %c7_i32_343 : i32
      %929 = arith.index_cast %928 : i32 to index
      %930 = memref.load %arg3[%929] : memref<432xf32, #tpu.memory_space<smem>>
      %931 = vector.broadcast %930 : f32 to vector<20x16xf32>
      %932 = arith.mulf %931, %435 : vector<20x16xf32>
      %933 = arith.addf %926, %932 : vector<20x16xf32>
      %c32_i32_344 = arith.constant 32 : i32
      %934 = arith.addi %478, %c32_i32_344 : i32
      %c7_i32_345 = arith.constant 7 : i32
      %935 = arith.addi %934, %c7_i32_345 : i32
      %936 = arith.index_cast %935 : i32 to index
      %937 = memref.load %arg3[%936] : memref<432xf32, #tpu.memory_space<smem>>
      %938 = vector.broadcast %937 : f32 to vector<20x16xf32>
      %939 = arith.mulf %938, %441 : vector<20x16xf32>
      %940 = arith.addf %933, %939 : vector<20x16xf32>
      %c48_i32_346 = arith.constant 48 : i32
      %941 = arith.addi %478, %c48_i32_346 : i32
      %c7_i32_347 = arith.constant 7 : i32
      %942 = arith.addi %941, %c7_i32_347 : i32
      %943 = arith.index_cast %942 : i32 to index
      %944 = memref.load %arg3[%943] : memref<432xf32, #tpu.memory_space<smem>>
      %945 = vector.broadcast %944 : f32 to vector<20x16xf32>
      %946 = arith.mulf %945, %447 : vector<20x16xf32>
      %947 = arith.addf %940, %946 : vector<20x16xf32>
      %c64_i32_348 = arith.constant 64 : i32
      %948 = arith.addi %478, %c64_i32_348 : i32
      %c7_i32_349 = arith.constant 7 : i32
      %949 = arith.addi %948, %c7_i32_349 : i32
      %950 = arith.index_cast %949 : i32 to index
      %951 = memref.load %arg3[%950] : memref<432xf32, #tpu.memory_space<smem>>
      %952 = vector.broadcast %951 : f32 to vector<20x16xf32>
      %953 = arith.mulf %952, %453 : vector<20x16xf32>
      %954 = arith.addf %947, %953 : vector<20x16xf32>
      %c80_i32_350 = arith.constant 80 : i32
      %955 = arith.addi %478, %c80_i32_350 : i32
      %c7_i32_351 = arith.constant 7 : i32
      %956 = arith.addi %955, %c7_i32_351 : i32
      %957 = arith.index_cast %956 : i32 to index
      %958 = memref.load %arg3[%957] : memref<432xf32, #tpu.memory_space<smem>>
      %959 = vector.broadcast %958 : f32 to vector<20x16xf32>
      %960 = arith.mulf %959, %459 : vector<20x16xf32>
      %961 = arith.addf %954, %960 : vector<20x16xf32>
      %c96_i32_352 = arith.constant 96 : i32
      %962 = arith.addi %478, %c96_i32_352 : i32
      %c7_i32_353 = arith.constant 7 : i32
      %963 = arith.addi %962, %c7_i32_353 : i32
      %964 = arith.index_cast %963 : i32 to index
      %965 = memref.load %arg3[%964] : memref<432xf32, #tpu.memory_space<smem>>
      %966 = vector.broadcast %965 : f32 to vector<20x16xf32>
      %967 = arith.mulf %966, %465 : vector<20x16xf32>
      %968 = arith.addf %961, %967 : vector<20x16xf32>
      %c112_i32_354 = arith.constant 112 : i32
      %969 = arith.addi %478, %c112_i32_354 : i32
      %c7_i32_355 = arith.constant 7 : i32
      %970 = arith.addi %969, %c7_i32_355 : i32
      %971 = arith.index_cast %970 : i32 to index
      %972 = memref.load %arg3[%971] : memref<432xf32, #tpu.memory_space<smem>>
      %973 = vector.broadcast %972 : f32 to vector<20x16xf32>
      %974 = arith.mulf %973, %471 : vector<20x16xf32>
      %975 = arith.addf %968, %974 : vector<20x16xf32>
      %c128_i32_356 = arith.constant 128 : i32
      %976 = arith.addi %478, %c128_i32_356 : i32
      %c7_i32_357 = arith.constant 7 : i32
      %977 = arith.addi %976, %c7_i32_357 : i32
      %978 = arith.index_cast %977 : i32 to index
      %979 = memref.load %arg3[%978] : memref<432xf32, #tpu.memory_space<smem>>
      %980 = vector.broadcast %979 : f32 to vector<20x16xf32>
      %981 = arith.mulf %980, %477 : vector<20x16xf32>
      %982 = arith.addf %975, %981 : vector<20x16xf32>
      %c0_i32_358 = arith.constant 0 : i32
      %983 = arith.addi %478, %c0_i32_358 : i32
      %c8_i32 = arith.constant 8 : i32
      %984 = arith.addi %983, %c8_i32 : i32
      %985 = arith.index_cast %984 : i32 to index
      %986 = memref.load %arg3[%985] : memref<432xf32, #tpu.memory_space<smem>>
      %987 = vector.broadcast %986 : f32 to vector<20x16xf32>
      %988 = arith.mulf %987, %429 : vector<20x16xf32>
      %989 = arith.addf %arg21, %988 : vector<20x16xf32>
      %c16_i32_359 = arith.constant 16 : i32
      %990 = arith.addi %478, %c16_i32_359 : i32
      %c8_i32_360 = arith.constant 8 : i32
      %991 = arith.addi %990, %c8_i32_360 : i32
      %992 = arith.index_cast %991 : i32 to index
      %993 = memref.load %arg3[%992] : memref<432xf32, #tpu.memory_space<smem>>
      %994 = vector.broadcast %993 : f32 to vector<20x16xf32>
      %995 = arith.mulf %994, %435 : vector<20x16xf32>
      %996 = arith.addf %989, %995 : vector<20x16xf32>
      %c32_i32_361 = arith.constant 32 : i32
      %997 = arith.addi %478, %c32_i32_361 : i32
      %c8_i32_362 = arith.constant 8 : i32
      %998 = arith.addi %997, %c8_i32_362 : i32
      %999 = arith.index_cast %998 : i32 to index
      %1000 = memref.load %arg3[%999] : memref<432xf32, #tpu.memory_space<smem>>
      %1001 = vector.broadcast %1000 : f32 to vector<20x16xf32>
      %1002 = arith.mulf %1001, %441 : vector<20x16xf32>
      %1003 = arith.addf %996, %1002 : vector<20x16xf32>
      %c48_i32_363 = arith.constant 48 : i32
      %1004 = arith.addi %478, %c48_i32_363 : i32
      %c8_i32_364 = arith.constant 8 : i32
      %1005 = arith.addi %1004, %c8_i32_364 : i32
      %1006 = arith.index_cast %1005 : i32 to index
      %1007 = memref.load %arg3[%1006] : memref<432xf32, #tpu.memory_space<smem>>
      %1008 = vector.broadcast %1007 : f32 to vector<20x16xf32>
      %1009 = arith.mulf %1008, %447 : vector<20x16xf32>
      %1010 = arith.addf %1003, %1009 : vector<20x16xf32>
      %c64_i32_365 = arith.constant 64 : i32
      %1011 = arith.addi %478, %c64_i32_365 : i32
      %c8_i32_366 = arith.constant 8 : i32
      %1012 = arith.addi %1011, %c8_i32_366 : i32
      %1013 = arith.index_cast %1012 : i32 to index
      %1014 = memref.load %arg3[%1013] : memref<432xf32, #tpu.memory_space<smem>>
      %1015 = vector.broadcast %1014 : f32 to vector<20x16xf32>
      %1016 = arith.mulf %1015, %453 : vector<20x16xf32>
      %1017 = arith.addf %1010, %1016 : vector<20x16xf32>
      %c80_i32_367 = arith.constant 80 : i32
      %1018 = arith.addi %478, %c80_i32_367 : i32
      %c8_i32_368 = arith.constant 8 : i32
      %1019 = arith.addi %1018, %c8_i32_368 : i32
      %1020 = arith.index_cast %1019 : i32 to index
      %1021 = memref.load %arg3[%1020] : memref<432xf32, #tpu.memory_space<smem>>
      %1022 = vector.broadcast %1021 : f32 to vector<20x16xf32>
      %1023 = arith.mulf %1022, %459 : vector<20x16xf32>
      %1024 = arith.addf %1017, %1023 : vector<20x16xf32>
      %c96_i32_369 = arith.constant 96 : i32
      %1025 = arith.addi %478, %c96_i32_369 : i32
      %c8_i32_370 = arith.constant 8 : i32
      %1026 = arith.addi %1025, %c8_i32_370 : i32
      %1027 = arith.index_cast %1026 : i32 to index
      %1028 = memref.load %arg3[%1027] : memref<432xf32, #tpu.memory_space<smem>>
      %1029 = vector.broadcast %1028 : f32 to vector<20x16xf32>
      %1030 = arith.mulf %1029, %465 : vector<20x16xf32>
      %1031 = arith.addf %1024, %1030 : vector<20x16xf32>
      %c112_i32_371 = arith.constant 112 : i32
      %1032 = arith.addi %478, %c112_i32_371 : i32
      %c8_i32_372 = arith.constant 8 : i32
      %1033 = arith.addi %1032, %c8_i32_372 : i32
      %1034 = arith.index_cast %1033 : i32 to index
      %1035 = memref.load %arg3[%1034] : memref<432xf32, #tpu.memory_space<smem>>
      %1036 = vector.broadcast %1035 : f32 to vector<20x16xf32>
      %1037 = arith.mulf %1036, %471 : vector<20x16xf32>
      %1038 = arith.addf %1031, %1037 : vector<20x16xf32>
      %c128_i32_373 = arith.constant 128 : i32
      %1039 = arith.addi %478, %c128_i32_373 : i32
      %c8_i32_374 = arith.constant 8 : i32
      %1040 = arith.addi %1039, %c8_i32_374 : i32
      %1041 = arith.index_cast %1040 : i32 to index
      %1042 = memref.load %arg3[%1041] : memref<432xf32, #tpu.memory_space<smem>>
      %1043 = vector.broadcast %1042 : f32 to vector<20x16xf32>
      %1044 = arith.mulf %1043, %477 : vector<20x16xf32>
      %1045 = arith.addf %1038, %1044 : vector<20x16xf32>
      %c0_i32_375 = arith.constant 0 : i32
      %1046 = arith.addi %478, %c0_i32_375 : i32
      %c9_i32 = arith.constant 9 : i32
      %1047 = arith.addi %1046, %c9_i32 : i32
      %1048 = arith.index_cast %1047 : i32 to index
      %1049 = memref.load %arg3[%1048] : memref<432xf32, #tpu.memory_space<smem>>
      %1050 = vector.broadcast %1049 : f32 to vector<20x16xf32>
      %1051 = arith.mulf %1050, %429 : vector<20x16xf32>
      %1052 = arith.addf %arg22, %1051 : vector<20x16xf32>
      %c16_i32_376 = arith.constant 16 : i32
      %1053 = arith.addi %478, %c16_i32_376 : i32
      %c9_i32_377 = arith.constant 9 : i32
      %1054 = arith.addi %1053, %c9_i32_377 : i32
      %1055 = arith.index_cast %1054 : i32 to index
      %1056 = memref.load %arg3[%1055] : memref<432xf32, #tpu.memory_space<smem>>
      %1057 = vector.broadcast %1056 : f32 to vector<20x16xf32>
      %1058 = arith.mulf %1057, %435 : vector<20x16xf32>
      %1059 = arith.addf %1052, %1058 : vector<20x16xf32>
      %c32_i32_378 = arith.constant 32 : i32
      %1060 = arith.addi %478, %c32_i32_378 : i32
      %c9_i32_379 = arith.constant 9 : i32
      %1061 = arith.addi %1060, %c9_i32_379 : i32
      %1062 = arith.index_cast %1061 : i32 to index
      %1063 = memref.load %arg3[%1062] : memref<432xf32, #tpu.memory_space<smem>>
      %1064 = vector.broadcast %1063 : f32 to vector<20x16xf32>
      %1065 = arith.mulf %1064, %441 : vector<20x16xf32>
      %1066 = arith.addf %1059, %1065 : vector<20x16xf32>
      %c48_i32_380 = arith.constant 48 : i32
      %1067 = arith.addi %478, %c48_i32_380 : i32
      %c9_i32_381 = arith.constant 9 : i32
      %1068 = arith.addi %1067, %c9_i32_381 : i32
      %1069 = arith.index_cast %1068 : i32 to index
      %1070 = memref.load %arg3[%1069] : memref<432xf32, #tpu.memory_space<smem>>
      %1071 = vector.broadcast %1070 : f32 to vector<20x16xf32>
      %1072 = arith.mulf %1071, %447 : vector<20x16xf32>
      %1073 = arith.addf %1066, %1072 : vector<20x16xf32>
      %c64_i32_382 = arith.constant 64 : i32
      %1074 = arith.addi %478, %c64_i32_382 : i32
      %c9_i32_383 = arith.constant 9 : i32
      %1075 = arith.addi %1074, %c9_i32_383 : i32
      %1076 = arith.index_cast %1075 : i32 to index
      %1077 = memref.load %arg3[%1076] : memref<432xf32, #tpu.memory_space<smem>>
      %1078 = vector.broadcast %1077 : f32 to vector<20x16xf32>
      %1079 = arith.mulf %1078, %453 : vector<20x16xf32>
      %1080 = arith.addf %1073, %1079 : vector<20x16xf32>
      %c80_i32_384 = arith.constant 80 : i32
      %1081 = arith.addi %478, %c80_i32_384 : i32
      %c9_i32_385 = arith.constant 9 : i32
      %1082 = arith.addi %1081, %c9_i32_385 : i32
      %1083 = arith.index_cast %1082 : i32 to index
      %1084 = memref.load %arg3[%1083] : memref<432xf32, #tpu.memory_space<smem>>
      %1085 = vector.broadcast %1084 : f32 to vector<20x16xf32>
      %1086 = arith.mulf %1085, %459 : vector<20x16xf32>
      %1087 = arith.addf %1080, %1086 : vector<20x16xf32>
      %c96_i32_386 = arith.constant 96 : i32
      %1088 = arith.addi %478, %c96_i32_386 : i32
      %c9_i32_387 = arith.constant 9 : i32
      %1089 = arith.addi %1088, %c9_i32_387 : i32
      %1090 = arith.index_cast %1089 : i32 to index
      %1091 = memref.load %arg3[%1090] : memref<432xf32, #tpu.memory_space<smem>>
      %1092 = vector.broadcast %1091 : f32 to vector<20x16xf32>
      %1093 = arith.mulf %1092, %465 : vector<20x16xf32>
      %1094 = arith.addf %1087, %1093 : vector<20x16xf32>
      %c112_i32_388 = arith.constant 112 : i32
      %1095 = arith.addi %478, %c112_i32_388 : i32
      %c9_i32_389 = arith.constant 9 : i32
      %1096 = arith.addi %1095, %c9_i32_389 : i32
      %1097 = arith.index_cast %1096 : i32 to index
      %1098 = memref.load %arg3[%1097] : memref<432xf32, #tpu.memory_space<smem>>
      %1099 = vector.broadcast %1098 : f32 to vector<20x16xf32>
      %1100 = arith.mulf %1099, %471 : vector<20x16xf32>
      %1101 = arith.addf %1094, %1100 : vector<20x16xf32>
      %c128_i32_390 = arith.constant 128 : i32
      %1102 = arith.addi %478, %c128_i32_390 : i32
      %c9_i32_391 = arith.constant 9 : i32
      %1103 = arith.addi %1102, %c9_i32_391 : i32
      %1104 = arith.index_cast %1103 : i32 to index
      %1105 = memref.load %arg3[%1104] : memref<432xf32, #tpu.memory_space<smem>>
      %1106 = vector.broadcast %1105 : f32 to vector<20x16xf32>
      %1107 = arith.mulf %1106, %477 : vector<20x16xf32>
      %1108 = arith.addf %1101, %1107 : vector<20x16xf32>
      %c0_i32_392 = arith.constant 0 : i32
      %1109 = arith.addi %478, %c0_i32_392 : i32
      %c10_i32 = arith.constant 10 : i32
      %1110 = arith.addi %1109, %c10_i32 : i32
      %1111 = arith.index_cast %1110 : i32 to index
      %1112 = memref.load %arg3[%1111] : memref<432xf32, #tpu.memory_space<smem>>
      %1113 = vector.broadcast %1112 : f32 to vector<20x16xf32>
      %1114 = arith.mulf %1113, %429 : vector<20x16xf32>
      %1115 = arith.addf %arg23, %1114 : vector<20x16xf32>
      %c16_i32_393 = arith.constant 16 : i32
      %1116 = arith.addi %478, %c16_i32_393 : i32
      %c10_i32_394 = arith.constant 10 : i32
      %1117 = arith.addi %1116, %c10_i32_394 : i32
      %1118 = arith.index_cast %1117 : i32 to index
      %1119 = memref.load %arg3[%1118] : memref<432xf32, #tpu.memory_space<smem>>
      %1120 = vector.broadcast %1119 : f32 to vector<20x16xf32>
      %1121 = arith.mulf %1120, %435 : vector<20x16xf32>
      %1122 = arith.addf %1115, %1121 : vector<20x16xf32>
      %c32_i32_395 = arith.constant 32 : i32
      %1123 = arith.addi %478, %c32_i32_395 : i32
      %c10_i32_396 = arith.constant 10 : i32
      %1124 = arith.addi %1123, %c10_i32_396 : i32
      %1125 = arith.index_cast %1124 : i32 to index
      %1126 = memref.load %arg3[%1125] : memref<432xf32, #tpu.memory_space<smem>>
      %1127 = vector.broadcast %1126 : f32 to vector<20x16xf32>
      %1128 = arith.mulf %1127, %441 : vector<20x16xf32>
      %1129 = arith.addf %1122, %1128 : vector<20x16xf32>
      %c48_i32_397 = arith.constant 48 : i32
      %1130 = arith.addi %478, %c48_i32_397 : i32
      %c10_i32_398 = arith.constant 10 : i32
      %1131 = arith.addi %1130, %c10_i32_398 : i32
      %1132 = arith.index_cast %1131 : i32 to index
      %1133 = memref.load %arg3[%1132] : memref<432xf32, #tpu.memory_space<smem>>
      %1134 = vector.broadcast %1133 : f32 to vector<20x16xf32>
      %1135 = arith.mulf %1134, %447 : vector<20x16xf32>
      %1136 = arith.addf %1129, %1135 : vector<20x16xf32>
      %c64_i32_399 = arith.constant 64 : i32
      %1137 = arith.addi %478, %c64_i32_399 : i32
      %c10_i32_400 = arith.constant 10 : i32
      %1138 = arith.addi %1137, %c10_i32_400 : i32
      %1139 = arith.index_cast %1138 : i32 to index
      %1140 = memref.load %arg3[%1139] : memref<432xf32, #tpu.memory_space<smem>>
      %1141 = vector.broadcast %1140 : f32 to vector<20x16xf32>
      %1142 = arith.mulf %1141, %453 : vector<20x16xf32>
      %1143 = arith.addf %1136, %1142 : vector<20x16xf32>
      %c80_i32_401 = arith.constant 80 : i32
      %1144 = arith.addi %478, %c80_i32_401 : i32
      %c10_i32_402 = arith.constant 10 : i32
      %1145 = arith.addi %1144, %c10_i32_402 : i32
      %1146 = arith.index_cast %1145 : i32 to index
      %1147 = memref.load %arg3[%1146] : memref<432xf32, #tpu.memory_space<smem>>
      %1148 = vector.broadcast %1147 : f32 to vector<20x16xf32>
      %1149 = arith.mulf %1148, %459 : vector<20x16xf32>
      %1150 = arith.addf %1143, %1149 : vector<20x16xf32>
      %c96_i32_403 = arith.constant 96 : i32
      %1151 = arith.addi %478, %c96_i32_403 : i32
      %c10_i32_404 = arith.constant 10 : i32
      %1152 = arith.addi %1151, %c10_i32_404 : i32
      %1153 = arith.index_cast %1152 : i32 to index
      %1154 = memref.load %arg3[%1153] : memref<432xf32, #tpu.memory_space<smem>>
      %1155 = vector.broadcast %1154 : f32 to vector<20x16xf32>
      %1156 = arith.mulf %1155, %465 : vector<20x16xf32>
      %1157 = arith.addf %1150, %1156 : vector<20x16xf32>
      %c112_i32_405 = arith.constant 112 : i32
      %1158 = arith.addi %478, %c112_i32_405 : i32
      %c10_i32_406 = arith.constant 10 : i32
      %1159 = arith.addi %1158, %c10_i32_406 : i32
      %1160 = arith.index_cast %1159 : i32 to index
      %1161 = memref.load %arg3[%1160] : memref<432xf32, #tpu.memory_space<smem>>
      %1162 = vector.broadcast %1161 : f32 to vector<20x16xf32>
      %1163 = arith.mulf %1162, %471 : vector<20x16xf32>
      %1164 = arith.addf %1157, %1163 : vector<20x16xf32>
      %c128_i32_407 = arith.constant 128 : i32
      %1165 = arith.addi %478, %c128_i32_407 : i32
      %c10_i32_408 = arith.constant 10 : i32
      %1166 = arith.addi %1165, %c10_i32_408 : i32
      %1167 = arith.index_cast %1166 : i32 to index
      %1168 = memref.load %arg3[%1167] : memref<432xf32, #tpu.memory_space<smem>>
      %1169 = vector.broadcast %1168 : f32 to vector<20x16xf32>
      %1170 = arith.mulf %1169, %477 : vector<20x16xf32>
      %1171 = arith.addf %1164, %1170 : vector<20x16xf32>
      %c0_i32_409 = arith.constant 0 : i32
      %1172 = arith.addi %478, %c0_i32_409 : i32
      %c11_i32 = arith.constant 11 : i32
      %1173 = arith.addi %1172, %c11_i32 : i32
      %1174 = arith.index_cast %1173 : i32 to index
      %1175 = memref.load %arg3[%1174] : memref<432xf32, #tpu.memory_space<smem>>
      %1176 = vector.broadcast %1175 : f32 to vector<20x16xf32>
      %1177 = arith.mulf %1176, %429 : vector<20x16xf32>
      %1178 = arith.addf %arg24, %1177 : vector<20x16xf32>
      %c16_i32_410 = arith.constant 16 : i32
      %1179 = arith.addi %478, %c16_i32_410 : i32
      %c11_i32_411 = arith.constant 11 : i32
      %1180 = arith.addi %1179, %c11_i32_411 : i32
      %1181 = arith.index_cast %1180 : i32 to index
      %1182 = memref.load %arg3[%1181] : memref<432xf32, #tpu.memory_space<smem>>
      %1183 = vector.broadcast %1182 : f32 to vector<20x16xf32>
      %1184 = arith.mulf %1183, %435 : vector<20x16xf32>
      %1185 = arith.addf %1178, %1184 : vector<20x16xf32>
      %c32_i32_412 = arith.constant 32 : i32
      %1186 = arith.addi %478, %c32_i32_412 : i32
      %c11_i32_413 = arith.constant 11 : i32
      %1187 = arith.addi %1186, %c11_i32_413 : i32
      %1188 = arith.index_cast %1187 : i32 to index
      %1189 = memref.load %arg3[%1188] : memref<432xf32, #tpu.memory_space<smem>>
      %1190 = vector.broadcast %1189 : f32 to vector<20x16xf32>
      %1191 = arith.mulf %1190, %441 : vector<20x16xf32>
      %1192 = arith.addf %1185, %1191 : vector<20x16xf32>
      %c48_i32_414 = arith.constant 48 : i32
      %1193 = arith.addi %478, %c48_i32_414 : i32
      %c11_i32_415 = arith.constant 11 : i32
      %1194 = arith.addi %1193, %c11_i32_415 : i32
      %1195 = arith.index_cast %1194 : i32 to index
      %1196 = memref.load %arg3[%1195] : memref<432xf32, #tpu.memory_space<smem>>
      %1197 = vector.broadcast %1196 : f32 to vector<20x16xf32>
      %1198 = arith.mulf %1197, %447 : vector<20x16xf32>
      %1199 = arith.addf %1192, %1198 : vector<20x16xf32>
      %c64_i32_416 = arith.constant 64 : i32
      %1200 = arith.addi %478, %c64_i32_416 : i32
      %c11_i32_417 = arith.constant 11 : i32
      %1201 = arith.addi %1200, %c11_i32_417 : i32
      %1202 = arith.index_cast %1201 : i32 to index
      %1203 = memref.load %arg3[%1202] : memref<432xf32, #tpu.memory_space<smem>>
      %1204 = vector.broadcast %1203 : f32 to vector<20x16xf32>
      %1205 = arith.mulf %1204, %453 : vector<20x16xf32>
      %1206 = arith.addf %1199, %1205 : vector<20x16xf32>
      %c80_i32_418 = arith.constant 80 : i32
      %1207 = arith.addi %478, %c80_i32_418 : i32
      %c11_i32_419 = arith.constant 11 : i32
      %1208 = arith.addi %1207, %c11_i32_419 : i32
      %1209 = arith.index_cast %1208 : i32 to index
      %1210 = memref.load %arg3[%1209] : memref<432xf32, #tpu.memory_space<smem>>
      %1211 = vector.broadcast %1210 : f32 to vector<20x16xf32>
      %1212 = arith.mulf %1211, %459 : vector<20x16xf32>
      %1213 = arith.addf %1206, %1212 : vector<20x16xf32>
      %c96_i32_420 = arith.constant 96 : i32
      %1214 = arith.addi %478, %c96_i32_420 : i32
      %c11_i32_421 = arith.constant 11 : i32
      %1215 = arith.addi %1214, %c11_i32_421 : i32
      %1216 = arith.index_cast %1215 : i32 to index
      %1217 = memref.load %arg3[%1216] : memref<432xf32, #tpu.memory_space<smem>>
      %1218 = vector.broadcast %1217 : f32 to vector<20x16xf32>
      %1219 = arith.mulf %1218, %465 : vector<20x16xf32>
      %1220 = arith.addf %1213, %1219 : vector<20x16xf32>
      %c112_i32_422 = arith.constant 112 : i32
      %1221 = arith.addi %478, %c112_i32_422 : i32
      %c11_i32_423 = arith.constant 11 : i32
      %1222 = arith.addi %1221, %c11_i32_423 : i32
      %1223 = arith.index_cast %1222 : i32 to index
      %1224 = memref.load %arg3[%1223] : memref<432xf32, #tpu.memory_space<smem>>
      %1225 = vector.broadcast %1224 : f32 to vector<20x16xf32>
      %1226 = arith.mulf %1225, %471 : vector<20x16xf32>
      %1227 = arith.addf %1220, %1226 : vector<20x16xf32>
      %c128_i32_424 = arith.constant 128 : i32
      %1228 = arith.addi %478, %c128_i32_424 : i32
      %c11_i32_425 = arith.constant 11 : i32
      %1229 = arith.addi %1228, %c11_i32_425 : i32
      %1230 = arith.index_cast %1229 : i32 to index
      %1231 = memref.load %arg3[%1230] : memref<432xf32, #tpu.memory_space<smem>>
      %1232 = vector.broadcast %1231 : f32 to vector<20x16xf32>
      %1233 = arith.mulf %1232, %477 : vector<20x16xf32>
      %1234 = arith.addf %1227, %1233 : vector<20x16xf32>
      %c0_i32_426 = arith.constant 0 : i32
      %1235 = arith.addi %478, %c0_i32_426 : i32
      %c12_i32 = arith.constant 12 : i32
      %1236 = arith.addi %1235, %c12_i32 : i32
      %1237 = arith.index_cast %1236 : i32 to index
      %1238 = memref.load %arg3[%1237] : memref<432xf32, #tpu.memory_space<smem>>
      %1239 = vector.broadcast %1238 : f32 to vector<20x16xf32>
      %1240 = arith.mulf %1239, %429 : vector<20x16xf32>
      %1241 = arith.addf %arg25, %1240 : vector<20x16xf32>
      %c16_i32_427 = arith.constant 16 : i32
      %1242 = arith.addi %478, %c16_i32_427 : i32
      %c12_i32_428 = arith.constant 12 : i32
      %1243 = arith.addi %1242, %c12_i32_428 : i32
      %1244 = arith.index_cast %1243 : i32 to index
      %1245 = memref.load %arg3[%1244] : memref<432xf32, #tpu.memory_space<smem>>
      %1246 = vector.broadcast %1245 : f32 to vector<20x16xf32>
      %1247 = arith.mulf %1246, %435 : vector<20x16xf32>
      %1248 = arith.addf %1241, %1247 : vector<20x16xf32>
      %c32_i32_429 = arith.constant 32 : i32
      %1249 = arith.addi %478, %c32_i32_429 : i32
      %c12_i32_430 = arith.constant 12 : i32
      %1250 = arith.addi %1249, %c12_i32_430 : i32
      %1251 = arith.index_cast %1250 : i32 to index
      %1252 = memref.load %arg3[%1251] : memref<432xf32, #tpu.memory_space<smem>>
      %1253 = vector.broadcast %1252 : f32 to vector<20x16xf32>
      %1254 = arith.mulf %1253, %441 : vector<20x16xf32>
      %1255 = arith.addf %1248, %1254 : vector<20x16xf32>
      %c48_i32_431 = arith.constant 48 : i32
      %1256 = arith.addi %478, %c48_i32_431 : i32
      %c12_i32_432 = arith.constant 12 : i32
      %1257 = arith.addi %1256, %c12_i32_432 : i32
      %1258 = arith.index_cast %1257 : i32 to index
      %1259 = memref.load %arg3[%1258] : memref<432xf32, #tpu.memory_space<smem>>
      %1260 = vector.broadcast %1259 : f32 to vector<20x16xf32>
      %1261 = arith.mulf %1260, %447 : vector<20x16xf32>
      %1262 = arith.addf %1255, %1261 : vector<20x16xf32>
      %c64_i32_433 = arith.constant 64 : i32
      %1263 = arith.addi %478, %c64_i32_433 : i32
      %c12_i32_434 = arith.constant 12 : i32
      %1264 = arith.addi %1263, %c12_i32_434 : i32
      %1265 = arith.index_cast %1264 : i32 to index
      %1266 = memref.load %arg3[%1265] : memref<432xf32, #tpu.memory_space<smem>>
      %1267 = vector.broadcast %1266 : f32 to vector<20x16xf32>
      %1268 = arith.mulf %1267, %453 : vector<20x16xf32>
      %1269 = arith.addf %1262, %1268 : vector<20x16xf32>
      %c80_i32_435 = arith.constant 80 : i32
      %1270 = arith.addi %478, %c80_i32_435 : i32
      %c12_i32_436 = arith.constant 12 : i32
      %1271 = arith.addi %1270, %c12_i32_436 : i32
      %1272 = arith.index_cast %1271 : i32 to index
      %1273 = memref.load %arg3[%1272] : memref<432xf32, #tpu.memory_space<smem>>
      %1274 = vector.broadcast %1273 : f32 to vector<20x16xf32>
      %1275 = arith.mulf %1274, %459 : vector<20x16xf32>
      %1276 = arith.addf %1269, %1275 : vector<20x16xf32>
      %c96_i32_437 = arith.constant 96 : i32
      %1277 = arith.addi %478, %c96_i32_437 : i32
      %c12_i32_438 = arith.constant 12 : i32
      %1278 = arith.addi %1277, %c12_i32_438 : i32
      %1279 = arith.index_cast %1278 : i32 to index
      %1280 = memref.load %arg3[%1279] : memref<432xf32, #tpu.memory_space<smem>>
      %1281 = vector.broadcast %1280 : f32 to vector<20x16xf32>
      %1282 = arith.mulf %1281, %465 : vector<20x16xf32>
      %1283 = arith.addf %1276, %1282 : vector<20x16xf32>
      %c112_i32_439 = arith.constant 112 : i32
      %1284 = arith.addi %478, %c112_i32_439 : i32
      %c12_i32_440 = arith.constant 12 : i32
      %1285 = arith.addi %1284, %c12_i32_440 : i32
      %1286 = arith.index_cast %1285 : i32 to index
      %1287 = memref.load %arg3[%1286] : memref<432xf32, #tpu.memory_space<smem>>
      %1288 = vector.broadcast %1287 : f32 to vector<20x16xf32>
      %1289 = arith.mulf %1288, %471 : vector<20x16xf32>
      %1290 = arith.addf %1283, %1289 : vector<20x16xf32>
      %c128_i32_441 = arith.constant 128 : i32
      %1291 = arith.addi %478, %c128_i32_441 : i32
      %c12_i32_442 = arith.constant 12 : i32
      %1292 = arith.addi %1291, %c12_i32_442 : i32
      %1293 = arith.index_cast %1292 : i32 to index
      %1294 = memref.load %arg3[%1293] : memref<432xf32, #tpu.memory_space<smem>>
      %1295 = vector.broadcast %1294 : f32 to vector<20x16xf32>
      %1296 = arith.mulf %1295, %477 : vector<20x16xf32>
      %1297 = arith.addf %1290, %1296 : vector<20x16xf32>
      %c0_i32_443 = arith.constant 0 : i32
      %1298 = arith.addi %478, %c0_i32_443 : i32
      %c13_i32 = arith.constant 13 : i32
      %1299 = arith.addi %1298, %c13_i32 : i32
      %1300 = arith.index_cast %1299 : i32 to index
      %1301 = memref.load %arg3[%1300] : memref<432xf32, #tpu.memory_space<smem>>
      %1302 = vector.broadcast %1301 : f32 to vector<20x16xf32>
      %1303 = arith.mulf %1302, %429 : vector<20x16xf32>
      %1304 = arith.addf %arg26, %1303 : vector<20x16xf32>
      %c16_i32_444 = arith.constant 16 : i32
      %1305 = arith.addi %478, %c16_i32_444 : i32
      %c13_i32_445 = arith.constant 13 : i32
      %1306 = arith.addi %1305, %c13_i32_445 : i32
      %1307 = arith.index_cast %1306 : i32 to index
      %1308 = memref.load %arg3[%1307] : memref<432xf32, #tpu.memory_space<smem>>
      %1309 = vector.broadcast %1308 : f32 to vector<20x16xf32>
      %1310 = arith.mulf %1309, %435 : vector<20x16xf32>
      %1311 = arith.addf %1304, %1310 : vector<20x16xf32>
      %c32_i32_446 = arith.constant 32 : i32
      %1312 = arith.addi %478, %c32_i32_446 : i32
      %c13_i32_447 = arith.constant 13 : i32
      %1313 = arith.addi %1312, %c13_i32_447 : i32
      %1314 = arith.index_cast %1313 : i32 to index
      %1315 = memref.load %arg3[%1314] : memref<432xf32, #tpu.memory_space<smem>>
      %1316 = vector.broadcast %1315 : f32 to vector<20x16xf32>
      %1317 = arith.mulf %1316, %441 : vector<20x16xf32>
      %1318 = arith.addf %1311, %1317 : vector<20x16xf32>
      %c48_i32_448 = arith.constant 48 : i32
      %1319 = arith.addi %478, %c48_i32_448 : i32
      %c13_i32_449 = arith.constant 13 : i32
      %1320 = arith.addi %1319, %c13_i32_449 : i32
      %1321 = arith.index_cast %1320 : i32 to index
      %1322 = memref.load %arg3[%1321] : memref<432xf32, #tpu.memory_space<smem>>
      %1323 = vector.broadcast %1322 : f32 to vector<20x16xf32>
      %1324 = arith.mulf %1323, %447 : vector<20x16xf32>
      %1325 = arith.addf %1318, %1324 : vector<20x16xf32>
      %c64_i32_450 = arith.constant 64 : i32
      %1326 = arith.addi %478, %c64_i32_450 : i32
      %c13_i32_451 = arith.constant 13 : i32
      %1327 = arith.addi %1326, %c13_i32_451 : i32
      %1328 = arith.index_cast %1327 : i32 to index
      %1329 = memref.load %arg3[%1328] : memref<432xf32, #tpu.memory_space<smem>>
      %1330 = vector.broadcast %1329 : f32 to vector<20x16xf32>
      %1331 = arith.mulf %1330, %453 : vector<20x16xf32>
      %1332 = arith.addf %1325, %1331 : vector<20x16xf32>
      %c80_i32_452 = arith.constant 80 : i32
      %1333 = arith.addi %478, %c80_i32_452 : i32
      %c13_i32_453 = arith.constant 13 : i32
      %1334 = arith.addi %1333, %c13_i32_453 : i32
      %1335 = arith.index_cast %1334 : i32 to index
      %1336 = memref.load %arg3[%1335] : memref<432xf32, #tpu.memory_space<smem>>
      %1337 = vector.broadcast %1336 : f32 to vector<20x16xf32>
      %1338 = arith.mulf %1337, %459 : vector<20x16xf32>
      %1339 = arith.addf %1332, %1338 : vector<20x16xf32>
      %c96_i32_454 = arith.constant 96 : i32
      %1340 = arith.addi %478, %c96_i32_454 : i32
      %c13_i32_455 = arith.constant 13 : i32
      %1341 = arith.addi %1340, %c13_i32_455 : i32
      %1342 = arith.index_cast %1341 : i32 to index
      %1343 = memref.load %arg3[%1342] : memref<432xf32, #tpu.memory_space<smem>>
      %1344 = vector.broadcast %1343 : f32 to vector<20x16xf32>
      %1345 = arith.mulf %1344, %465 : vector<20x16xf32>
      %1346 = arith.addf %1339, %1345 : vector<20x16xf32>
      %c112_i32_456 = arith.constant 112 : i32
      %1347 = arith.addi %478, %c112_i32_456 : i32
      %c13_i32_457 = arith.constant 13 : i32
      %1348 = arith.addi %1347, %c13_i32_457 : i32
      %1349 = arith.index_cast %1348 : i32 to index
      %1350 = memref.load %arg3[%1349] : memref<432xf32, #tpu.memory_space<smem>>
      %1351 = vector.broadcast %1350 : f32 to vector<20x16xf32>
      %1352 = arith.mulf %1351, %471 : vector<20x16xf32>
      %1353 = arith.addf %1346, %1352 : vector<20x16xf32>
      %c128_i32_458 = arith.constant 128 : i32
      %1354 = arith.addi %478, %c128_i32_458 : i32
      %c13_i32_459 = arith.constant 13 : i32
      %1355 = arith.addi %1354, %c13_i32_459 : i32
      %1356 = arith.index_cast %1355 : i32 to index
      %1357 = memref.load %arg3[%1356] : memref<432xf32, #tpu.memory_space<smem>>
      %1358 = vector.broadcast %1357 : f32 to vector<20x16xf32>
      %1359 = arith.mulf %1358, %477 : vector<20x16xf32>
      %1360 = arith.addf %1353, %1359 : vector<20x16xf32>
      %c0_i32_460 = arith.constant 0 : i32
      %1361 = arith.addi %478, %c0_i32_460 : i32
      %c14_i32 = arith.constant 14 : i32
      %1362 = arith.addi %1361, %c14_i32 : i32
      %1363 = arith.index_cast %1362 : i32 to index
      %1364 = memref.load %arg3[%1363] : memref<432xf32, #tpu.memory_space<smem>>
      %1365 = vector.broadcast %1364 : f32 to vector<20x16xf32>
      %1366 = arith.mulf %1365, %429 : vector<20x16xf32>
      %1367 = arith.addf %arg27, %1366 : vector<20x16xf32>
      %c16_i32_461 = arith.constant 16 : i32
      %1368 = arith.addi %478, %c16_i32_461 : i32
      %c14_i32_462 = arith.constant 14 : i32
      %1369 = arith.addi %1368, %c14_i32_462 : i32
      %1370 = arith.index_cast %1369 : i32 to index
      %1371 = memref.load %arg3[%1370] : memref<432xf32, #tpu.memory_space<smem>>
      %1372 = vector.broadcast %1371 : f32 to vector<20x16xf32>
      %1373 = arith.mulf %1372, %435 : vector<20x16xf32>
      %1374 = arith.addf %1367, %1373 : vector<20x16xf32>
      %c32_i32_463 = arith.constant 32 : i32
      %1375 = arith.addi %478, %c32_i32_463 : i32
      %c14_i32_464 = arith.constant 14 : i32
      %1376 = arith.addi %1375, %c14_i32_464 : i32
      %1377 = arith.index_cast %1376 : i32 to index
      %1378 = memref.load %arg3[%1377] : memref<432xf32, #tpu.memory_space<smem>>
      %1379 = vector.broadcast %1378 : f32 to vector<20x16xf32>
      %1380 = arith.mulf %1379, %441 : vector<20x16xf32>
      %1381 = arith.addf %1374, %1380 : vector<20x16xf32>
      %c48_i32_465 = arith.constant 48 : i32
      %1382 = arith.addi %478, %c48_i32_465 : i32
      %c14_i32_466 = arith.constant 14 : i32
      %1383 = arith.addi %1382, %c14_i32_466 : i32
      %1384 = arith.index_cast %1383 : i32 to index
      %1385 = memref.load %arg3[%1384] : memref<432xf32, #tpu.memory_space<smem>>
      %1386 = vector.broadcast %1385 : f32 to vector<20x16xf32>
      %1387 = arith.mulf %1386, %447 : vector<20x16xf32>
      %1388 = arith.addf %1381, %1387 : vector<20x16xf32>
      %c64_i32_467 = arith.constant 64 : i32
      %1389 = arith.addi %478, %c64_i32_467 : i32
      %c14_i32_468 = arith.constant 14 : i32
      %1390 = arith.addi %1389, %c14_i32_468 : i32
      %1391 = arith.index_cast %1390 : i32 to index
      %1392 = memref.load %arg3[%1391] : memref<432xf32, #tpu.memory_space<smem>>
      %1393 = vector.broadcast %1392 : f32 to vector<20x16xf32>
      %1394 = arith.mulf %1393, %453 : vector<20x16xf32>
      %1395 = arith.addf %1388, %1394 : vector<20x16xf32>
      %c80_i32_469 = arith.constant 80 : i32
      %1396 = arith.addi %478, %c80_i32_469 : i32
      %c14_i32_470 = arith.constant 14 : i32
      %1397 = arith.addi %1396, %c14_i32_470 : i32
      %1398 = arith.index_cast %1397 : i32 to index
      %1399 = memref.load %arg3[%1398] : memref<432xf32, #tpu.memory_space<smem>>
      %1400 = vector.broadcast %1399 : f32 to vector<20x16xf32>
      %1401 = arith.mulf %1400, %459 : vector<20x16xf32>
      %1402 = arith.addf %1395, %1401 : vector<20x16xf32>
      %c96_i32_471 = arith.constant 96 : i32
      %1403 = arith.addi %478, %c96_i32_471 : i32
      %c14_i32_472 = arith.constant 14 : i32
      %1404 = arith.addi %1403, %c14_i32_472 : i32
      %1405 = arith.index_cast %1404 : i32 to index
      %1406 = memref.load %arg3[%1405] : memref<432xf32, #tpu.memory_space<smem>>
      %1407 = vector.broadcast %1406 : f32 to vector<20x16xf32>
      %1408 = arith.mulf %1407, %465 : vector<20x16xf32>
      %1409 = arith.addf %1402, %1408 : vector<20x16xf32>
      %c112_i32_473 = arith.constant 112 : i32
      %1410 = arith.addi %478, %c112_i32_473 : i32
      %c14_i32_474 = arith.constant 14 : i32
      %1411 = arith.addi %1410, %c14_i32_474 : i32
      %1412 = arith.index_cast %1411 : i32 to index
      %1413 = memref.load %arg3[%1412] : memref<432xf32, #tpu.memory_space<smem>>
      %1414 = vector.broadcast %1413 : f32 to vector<20x16xf32>
      %1415 = arith.mulf %1414, %471 : vector<20x16xf32>
      %1416 = arith.addf %1409, %1415 : vector<20x16xf32>
      %c128_i32_475 = arith.constant 128 : i32
      %1417 = arith.addi %478, %c128_i32_475 : i32
      %c14_i32_476 = arith.constant 14 : i32
      %1418 = arith.addi %1417, %c14_i32_476 : i32
      %1419 = arith.index_cast %1418 : i32 to index
      %1420 = memref.load %arg3[%1419] : memref<432xf32, #tpu.memory_space<smem>>
      %1421 = vector.broadcast %1420 : f32 to vector<20x16xf32>
      %1422 = arith.mulf %1421, %477 : vector<20x16xf32>
      %1423 = arith.addf %1416, %1422 : vector<20x16xf32>
      %c0_i32_477 = arith.constant 0 : i32
      %1424 = arith.addi %478, %c0_i32_477 : i32
      %c15_i32 = arith.constant 15 : i32
      %1425 = arith.addi %1424, %c15_i32 : i32
      %1426 = arith.index_cast %1425 : i32 to index
      %1427 = memref.load %arg3[%1426] : memref<432xf32, #tpu.memory_space<smem>>
      %1428 = vector.broadcast %1427 : f32 to vector<20x16xf32>
      %1429 = arith.mulf %1428, %429 : vector<20x16xf32>
      %1430 = arith.addf %arg28, %1429 : vector<20x16xf32>
      %c16_i32_478 = arith.constant 16 : i32
      %1431 = arith.addi %478, %c16_i32_478 : i32
      %c15_i32_479 = arith.constant 15 : i32
      %1432 = arith.addi %1431, %c15_i32_479 : i32
      %1433 = arith.index_cast %1432 : i32 to index
      %1434 = memref.load %arg3[%1433] : memref<432xf32, #tpu.memory_space<smem>>
      %1435 = vector.broadcast %1434 : f32 to vector<20x16xf32>
      %1436 = arith.mulf %1435, %435 : vector<20x16xf32>
      %1437 = arith.addf %1430, %1436 : vector<20x16xf32>
      %c32_i32_480 = arith.constant 32 : i32
      %1438 = arith.addi %478, %c32_i32_480 : i32
      %c15_i32_481 = arith.constant 15 : i32
      %1439 = arith.addi %1438, %c15_i32_481 : i32
      %1440 = arith.index_cast %1439 : i32 to index
      %1441 = memref.load %arg3[%1440] : memref<432xf32, #tpu.memory_space<smem>>
      %1442 = vector.broadcast %1441 : f32 to vector<20x16xf32>
      %1443 = arith.mulf %1442, %441 : vector<20x16xf32>
      %1444 = arith.addf %1437, %1443 : vector<20x16xf32>
      %c48_i32_482 = arith.constant 48 : i32
      %1445 = arith.addi %478, %c48_i32_482 : i32
      %c15_i32_483 = arith.constant 15 : i32
      %1446 = arith.addi %1445, %c15_i32_483 : i32
      %1447 = arith.index_cast %1446 : i32 to index
      %1448 = memref.load %arg3[%1447] : memref<432xf32, #tpu.memory_space<smem>>
      %1449 = vector.broadcast %1448 : f32 to vector<20x16xf32>
      %1450 = arith.mulf %1449, %447 : vector<20x16xf32>
      %1451 = arith.addf %1444, %1450 : vector<20x16xf32>
      %c64_i32_484 = arith.constant 64 : i32
      %1452 = arith.addi %478, %c64_i32_484 : i32
      %c15_i32_485 = arith.constant 15 : i32
      %1453 = arith.addi %1452, %c15_i32_485 : i32
      %1454 = arith.index_cast %1453 : i32 to index
      %1455 = memref.load %arg3[%1454] : memref<432xf32, #tpu.memory_space<smem>>
      %1456 = vector.broadcast %1455 : f32 to vector<20x16xf32>
      %1457 = arith.mulf %1456, %453 : vector<20x16xf32>
      %1458 = arith.addf %1451, %1457 : vector<20x16xf32>
      %c80_i32_486 = arith.constant 80 : i32
      %1459 = arith.addi %478, %c80_i32_486 : i32
      %c15_i32_487 = arith.constant 15 : i32
      %1460 = arith.addi %1459, %c15_i32_487 : i32
      %1461 = arith.index_cast %1460 : i32 to index
      %1462 = memref.load %arg3[%1461] : memref<432xf32, #tpu.memory_space<smem>>
      %1463 = vector.broadcast %1462 : f32 to vector<20x16xf32>
      %1464 = arith.mulf %1463, %459 : vector<20x16xf32>
      %1465 = arith.addf %1458, %1464 : vector<20x16xf32>
      %c96_i32_488 = arith.constant 96 : i32
      %1466 = arith.addi %478, %c96_i32_488 : i32
      %c15_i32_489 = arith.constant 15 : i32
      %1467 = arith.addi %1466, %c15_i32_489 : i32
      %1468 = arith.index_cast %1467 : i32 to index
      %1469 = memref.load %arg3[%1468] : memref<432xf32, #tpu.memory_space<smem>>
      %1470 = vector.broadcast %1469 : f32 to vector<20x16xf32>
      %1471 = arith.mulf %1470, %465 : vector<20x16xf32>
      %1472 = arith.addf %1465, %1471 : vector<20x16xf32>
      %c112_i32_490 = arith.constant 112 : i32
      %1473 = arith.addi %478, %c112_i32_490 : i32
      %c15_i32_491 = arith.constant 15 : i32
      %1474 = arith.addi %1473, %c15_i32_491 : i32
      %1475 = arith.index_cast %1474 : i32 to index
      %1476 = memref.load %arg3[%1475] : memref<432xf32, #tpu.memory_space<smem>>
      %1477 = vector.broadcast %1476 : f32 to vector<20x16xf32>
      %1478 = arith.mulf %1477, %471 : vector<20x16xf32>
      %1479 = arith.addf %1472, %1478 : vector<20x16xf32>
      %c128_i32_492 = arith.constant 128 : i32
      %1480 = arith.addi %478, %c128_i32_492 : i32
      %c15_i32_493 = arith.constant 15 : i32
      %1481 = arith.addi %1480, %c15_i32_493 : i32
      %1482 = arith.index_cast %1481 : i32 to index
      %1483 = memref.load %arg3[%1482] : memref<432xf32, #tpu.memory_space<smem>>
      %1484 = vector.broadcast %1483 : f32 to vector<20x16xf32>
      %1485 = arith.mulf %1484, %477 : vector<20x16xf32>
      %1486 = arith.addf %1479, %1485 : vector<20x16xf32>
      scf.yield %541, %604, %667, %730, %793, %856, %919, %982, %1045, %1108, %1171, %1234, %1297, %1360, %1423, %1486 : vector<20x16xf32>, vector<20x16xf32>, vector<20x16xf32>, vector<20x16xf32>, vector<20x16xf32>, vector<20x16xf32>, vector<20x16xf32>, vector<20x16xf32>, vector<20x16xf32>, vector<20x16xf32>, vector<20x16xf32>, vector<20x16xf32>, vector<20x16xf32>, vector<20x16xf32>, vector<20x16xf32>, vector<20x16xf32>
    }
    %c3_i32_0 = arith.constant 3 : i32
    %c2_i32 = arith.constant 2 : i32
    %35 = arith.subi %0, %c2_i32 : i32
    %36 = tpu.iota {dimensions = array<i32: 0>} : vector<20x1xi32>
    %37 = vector.broadcast %35 : i32 to vector<20x1xi32>
    %38 = arith.addi %36, %37 : vector<20x1xi32>
    %c0_i32_1 = arith.constant 0 : i32
    %39 = vector.broadcast %c0_i32_1 : i32 to vector<20x1xi32>
    %40 = arith.cmpi sge, %38, %39 : vector<20x1xi32>
    %c16_i32_2 = arith.constant 16 : i32
    %41 = vector.broadcast %c16_i32_2 : i32 to vector<20x1xi32>
    %42 = arith.cmpi slt, %38, %41 : vector<20x1xi32>
    %43 = arith.andi %40, %42 : vector<20x1xi1>
    %cst = arith.constant 0.000000e+00 : f32
    %44 = vector.broadcast %cst : f32 to vector<20x1xf32>
    %cst_3 = arith.constant 0.000000e+00 : f32
    %45 = vector.broadcast %cst_3 : f32 to vector<20x16xf32>
    %46 = arith.maximumf %34#0, %45 : vector<20x16xf32>
    %cst_4 = arith.constant 0.000000e+00 : f32
    %47 = vector.shape_cast %43 : vector<20x1xi1> to vector<20x1xi1>
    %48 = vector.broadcast %47 : vector<20x1xi1> to vector<20x16xi1>
    %49 = vector.broadcast %cst_4 : f32 to vector<20x16xf32>
    %50 = arith.select %48, %46, %49 : vector<20x16xi1>, vector<20x16xf32>
    %51 = tpu.concatenate %44, %50, %44 in 1 : vector<20x1xf32>, vector<20x16xf32>, vector<20x1xf32> -> vector<20x18xf32>
    %c0_5 = arith.constant 0 : index
    %c0_6 = arith.constant 0 : index
    %c0_7 = arith.constant 0 : index
    %52 = vector.load %arg10[%c0_5, %c0_6, %c0_7] : memref<16x20x18xf32, #tpu.memory_space<vmem>>, vector<1x20x18xf32>
    %53 = vector.shape_cast %52 : vector<1x20x18xf32> to vector<20x18xf32>
    %54 = vector.shape_cast %51 : vector<20x18xf32> to vector<1x20x18xf32>
    tpu.vector_store %arg10[%c0_5, %c0_6, %c0_7], %54 {strides = array<i32>} : memref<16x20x18xf32, #tpu.memory_space<vmem>>, vector<1x20x18xf32>,
    %cst_8 = arith.constant 0.000000e+00 : f32
    %55 = vector.broadcast %cst_8 : f32 to vector<20x16xf32>
    %56 = arith.maximumf %34#1, %55 : vector<20x16xf32>
    %cst_9 = arith.constant 0.000000e+00 : f32
    %57 = vector.shape_cast %43 : vector<20x1xi1> to vector<20x1xi1>
    %58 = vector.broadcast %57 : vector<20x1xi1> to vector<20x16xi1>
    %59 = vector.broadcast %cst_9 : f32 to vector<20x16xf32>
    %60 = arith.select %58, %56, %59 : vector<20x16xi1>, vector<20x16xf32>
    %61 = tpu.concatenate %44, %60, %44 in 1 : vector<20x1xf32>, vector<20x16xf32>, vector<20x1xf32> -> vector<20x18xf32>
    %c1_10 = arith.constant 1 : index
    %c0_11 = arith.constant 0 : index
    %c0_12 = arith.constant 0 : index
    %62 = vector.load %arg10[%c1_10, %c0_11, %c0_12] : memref<16x20x18xf32, #tpu.memory_space<vmem>>, vector<1x20x18xf32>
    %63 = vector.shape_cast %62 : vector<1x20x18xf32> to vector<20x18xf32>
    %64 = vector.shape_cast %61 : vector<20x18xf32> to vector<1x20x18xf32>
    tpu.vector_store %arg10[%c1_10, %c0_11, %c0_12], %64 {strides = array<i32>} : memref<16x20x18xf32, #tpu.memory_space<vmem>>, vector<1x20x18xf32>,
    %cst_13 = arith.constant 0.000000e+00 : f32
    %65 = vector.broadcast %cst_13 : f32 to vector<20x16xf32>
    %66 = arith.maximumf %34#2, %65 : vector<20x16xf32>
    %cst_14 = arith.constant 0.000000e+00 : f32
    %67 = vector.shape_cast %43 : vector<20x1xi1> to vector<20x1xi1>
    %68 = vector.broadcast %67 : vector<20x1xi1> to vector<20x16xi1>
    %69 = vector.broadcast %cst_14 : f32 to vector<20x16xf32>
    %70 = arith.select %68, %66, %69 : vector<20x16xi1>, vector<20x16xf32>
    %71 = tpu.concatenate %44, %70, %44 in 1 : vector<20x1xf32>, vector<20x16xf32>, vector<20x1xf32> -> vector<20x18xf32>
    %c2_15 = arith.constant 2 : index
    %c0_16 = arith.constant 0 : index
    %c0_17 = arith.constant 0 : index
    %72 = vector.load %arg10[%c2_15, %c0_16, %c0_17] : memref<16x20x18xf32, #tpu.memory_space<vmem>>, vector<1x20x18xf32>
    %73 = vector.shape_cast %72 : vector<1x20x18xf32> to vector<20x18xf32>
    %74 = vector.shape_cast %71 : vector<20x18xf32> to vector<1x20x18xf32>
    tpu.vector_store %arg10[%c2_15, %c0_16, %c0_17], %74 {strides = array<i32>} : memref<16x20x18xf32, #tpu.memory_space<vmem>>, vector<1x20x18xf32>,
    %cst_18 = arith.constant 0.000000e+00 : f32
    %75 = vector.broadcast %cst_18 : f32 to vector<20x16xf32>
    %76 = arith.maximumf %34#3, %75 : vector<20x16xf32>
    %cst_19 = arith.constant 0.000000e+00 : f32
    %77 = vector.shape_cast %43 : vector<20x1xi1> to vector<20x1xi1>
    %78 = vector.broadcast %77 : vector<20x1xi1> to vector<20x16xi1>
    %79 = vector.broadcast %cst_19 : f32 to vector<20x16xf32>
    %80 = arith.select %78, %76, %79 : vector<20x16xi1>, vector<20x16xf32>
    %81 = tpu.concatenate %44, %80, %44 in 1 : vector<20x1xf32>, vector<20x16xf32>, vector<20x1xf32> -> vector<20x18xf32>
    %c3_20 = arith.constant 3 : index
    %c0_21 = arith.constant 0 : index
    %c0_22 = arith.constant 0 : index
    %82 = vector.load %arg10[%c3_20, %c0_21, %c0_22] : memref<16x20x18xf32, #tpu.memory_space<vmem>>, vector<1x20x18xf32>
    %83 = vector.shape_cast %82 : vector<1x20x18xf32> to vector<20x18xf32>
    %84 = vector.shape_cast %81 : vector<20x18xf32> to vector<1x20x18xf32>
    tpu.vector_store %arg10[%c3_20, %c0_21, %c0_22], %84 {strides = array<i32>} : memref<16x20x18xf32, #tpu.memory_space<vmem>>, vector<1x20x18xf32>,
    %cst_23 = arith.constant 0.000000e+00 : f32
    %85 = vector.broadcast %cst_23 : f32 to vector<20x16xf32>
    %86 = arith.maximumf %34#4, %85 : vector<20x16xf32>
    %cst_24 = arith.constant 0.000000e+00 : f32
    %87 = vector.shape_cast %43 : vector<20x1xi1> to vector<20x1xi1>
    %88 = vector.broadcast %87 : vector<20x1xi1> to vector<20x16xi1>
    %89 = vector.broadcast %cst_24 : f32 to vector<20x16xf32>
    %90 = arith.select %88, %86, %89 : vector<20x16xi1>, vector<20x16xf32>
    %91 = tpu.concatenate %44, %90, %44 in 1 : vector<20x1xf32>, vector<20x16xf32>, vector<20x1xf32> -> vector<20x18xf32>
    %c4_25 = arith.constant 4 : index
    %c0_26 = arith.constant 0 : index
    %c0_27 = arith.constant 0 : index
    %92 = vector.load %arg10[%c4_25, %c0_26, %c0_27] : memref<16x20x18xf32, #tpu.memory_space<vmem>>, vector<1x20x18xf32>
    %93 = vector.shape_cast %92 : vector<1x20x18xf32> to vector<20x18xf32>
    %94 = vector.shape_cast %91 : vector<20x18xf32> to vector<1x20x18xf32>
    tpu.vector_store %arg10[%c4_25, %c0_26, %c0_27], %94 {strides = array<i32>} : memref<16x20x18xf32, #tpu.memory_space<vmem>>, vector<1x20x18xf32>,
    %cst_28 = arith.constant 0.000000e+00 : f32
    %95 = vector.broadcast %cst_28 : f32 to vector<20x16xf32>
    %96 = arith.maximumf %34#5, %95 : vector<20x16xf32>
    %cst_29 = arith.constant 0.000000e+00 : f32
    %97 = vector.shape_cast %43 : vector<20x1xi1> to vector<20x1xi1>
    %98 = vector.broadcast %97 : vector<20x1xi1> to vector<20x16xi1>
    %99 = vector.broadcast %cst_29 : f32 to vector<20x16xf32>
    %100 = arith.select %98, %96, %99 : vector<20x16xi1>, vector<20x16xf32>
    %101 = tpu.concatenate %44, %100, %44 in 1 : vector<20x1xf32>, vector<20x16xf32>, vector<20x1xf32> -> vector<20x18xf32>
    %c5_30 = arith.constant 5 : index
    %c0_31 = arith.constant 0 : index
    %c0_32 = arith.constant 0 : index
    %102 = vector.load %arg10[%c5_30, %c0_31, %c0_32] : memref<16x20x18xf32, #tpu.memory_space<vmem>>, vector<1x20x18xf32>
    %103 = vector.shape_cast %102 : vector<1x20x18xf32> to vector<20x18xf32>
    %104 = vector.shape_cast %101 : vector<20x18xf32> to vector<1x20x18xf32>
    tpu.vector_store %arg10[%c5_30, %c0_31, %c0_32], %104 {strides = array<i32>} : memref<16x20x18xf32, #tpu.memory_space<vmem>>, vector<1x20x18xf32>,
    %cst_33 = arith.constant 0.000000e+00 : f32
    %105 = vector.broadcast %cst_33 : f32 to vector<20x16xf32>
    %106 = arith.maximumf %34#6, %105 : vector<20x16xf32>
    %cst_34 = arith.constant 0.000000e+00 : f32
    %107 = vector.shape_cast %43 : vector<20x1xi1> to vector<20x1xi1>
    %108 = vector.broadcast %107 : vector<20x1xi1> to vector<20x16xi1>
    %109 = vector.broadcast %cst_34 : f32 to vector<20x16xf32>
    %110 = arith.select %108, %106, %109 : vector<20x16xi1>, vector<20x16xf32>
    %111 = tpu.concatenate %44, %110, %44 in 1 : vector<20x1xf32>, vector<20x16xf32>, vector<20x1xf32> -> vector<20x18xf32>
    %c6_35 = arith.constant 6 : index
    %c0_36 = arith.constant 0 : index
    %c0_37 = arith.constant 0 : index
    %112 = vector.load %arg10[%c6_35, %c0_36, %c0_37] : memref<16x20x18xf32, #tpu.memory_space<vmem>>, vector<1x20x18xf32>
    %113 = vector.shape_cast %112 : vector<1x20x18xf32> to vector<20x18xf32>
    %114 = vector.shape_cast %111 : vector<20x18xf32> to vector<1x20x18xf32>
    tpu.vector_store %arg10[%c6_35, %c0_36, %c0_37], %114 {strides = array<i32>} : memref<16x20x18xf32, #tpu.memory_space<vmem>>, vector<1x20x18xf32>,
    %cst_38 = arith.constant 0.000000e+00 : f32
    %115 = vector.broadcast %cst_38 : f32 to vector<20x16xf32>
    %116 = arith.maximumf %34#7, %115 : vector<20x16xf32>
    %cst_39 = arith.constant 0.000000e+00 : f32
    %117 = vector.shape_cast %43 : vector<20x1xi1> to vector<20x1xi1>
    %118 = vector.broadcast %117 : vector<20x1xi1> to vector<20x16xi1>
    %119 = vector.broadcast %cst_39 : f32 to vector<20x16xf32>
    %120 = arith.select %118, %116, %119 : vector<20x16xi1>, vector<20x16xf32>
    %121 = tpu.concatenate %44, %120, %44 in 1 : vector<20x1xf32>, vector<20x16xf32>, vector<20x1xf32> -> vector<20x18xf32>
    %c7_40 = arith.constant 7 : index
    %c0_41 = arith.constant 0 : index
    %c0_42 = arith.constant 0 : index
    %122 = vector.load %arg10[%c7_40, %c0_41, %c0_42] : memref<16x20x18xf32, #tpu.memory_space<vmem>>, vector<1x20x18xf32>
    %123 = vector.shape_cast %122 : vector<1x20x18xf32> to vector<20x18xf32>
    %124 = vector.shape_cast %121 : vector<20x18xf32> to vector<1x20x18xf32>
    tpu.vector_store %arg10[%c7_40, %c0_41, %c0_42], %124 {strides = array<i32>} : memref<16x20x18xf32, #tpu.memory_space<vmem>>, vector<1x20x18xf32>,
    %cst_43 = arith.constant 0.000000e+00 : f32
    %125 = vector.broadcast %cst_43 : f32 to vector<20x16xf32>
    %126 = arith.maximumf %34#8, %125 : vector<20x16xf32>
    %cst_44 = arith.constant 0.000000e+00 : f32
    %127 = vector.shape_cast %43 : vector<20x1xi1> to vector<20x1xi1>
    %128 = vector.broadcast %127 : vector<20x1xi1> to vector<20x16xi1>
    %129 = vector.broadcast %cst_44 : f32 to vector<20x16xf32>
    %130 = arith.select %128, %126, %129 : vector<20x16xi1>, vector<20x16xf32>
    %131 = tpu.concatenate %44, %130, %44 in 1 : vector<20x1xf32>, vector<20x16xf32>, vector<20x1xf32> -> vector<20x18xf32>
    %c8_45 = arith.constant 8 : index
    %c0_46 = arith.constant 0 : index
    %c0_47 = arith.constant 0 : index
    %132 = vector.load %arg10[%c8_45, %c0_46, %c0_47] : memref<16x20x18xf32, #tpu.memory_space<vmem>>, vector<1x20x18xf32>
    %133 = vector.shape_cast %132 : vector<1x20x18xf32> to vector<20x18xf32>
    %134 = vector.shape_cast %131 : vector<20x18xf32> to vector<1x20x18xf32>
    tpu.vector_store %arg10[%c8_45, %c0_46, %c0_47], %134 {strides = array<i32>} : memref<16x20x18xf32, #tpu.memory_space<vmem>>, vector<1x20x18xf32>,
    %cst_48 = arith.constant 0.000000e+00 : f32
    %135 = vector.broadcast %cst_48 : f32 to vector<20x16xf32>
    %136 = arith.maximumf %34#9, %135 : vector<20x16xf32>
    %cst_49 = arith.constant 0.000000e+00 : f32
    %137 = vector.shape_cast %43 : vector<20x1xi1> to vector<20x1xi1>
    %138 = vector.broadcast %137 : vector<20x1xi1> to vector<20x16xi1>
    %139 = vector.broadcast %cst_49 : f32 to vector<20x16xf32>
    %140 = arith.select %138, %136, %139 : vector<20x16xi1>, vector<20x16xf32>
    %141 = tpu.concatenate %44, %140, %44 in 1 : vector<20x1xf32>, vector<20x16xf32>, vector<20x1xf32> -> vector<20x18xf32>
    %c9_50 = arith.constant 9 : index
    %c0_51 = arith.constant 0 : index
    %c0_52 = arith.constant 0 : index
    %142 = vector.load %arg10[%c9_50, %c0_51, %c0_52] : memref<16x20x18xf32, #tpu.memory_space<vmem>>, vector<1x20x18xf32>
    %143 = vector.shape_cast %142 : vector<1x20x18xf32> to vector<20x18xf32>
    %144 = vector.shape_cast %141 : vector<20x18xf32> to vector<1x20x18xf32>
    tpu.vector_store %arg10[%c9_50, %c0_51, %c0_52], %144 {strides = array<i32>} : memref<16x20x18xf32, #tpu.memory_space<vmem>>, vector<1x20x18xf32>,
    %cst_53 = arith.constant 0.000000e+00 : f32
    %145 = vector.broadcast %cst_53 : f32 to vector<20x16xf32>
    %146 = arith.maximumf %34#10, %145 : vector<20x16xf32>
    %cst_54 = arith.constant 0.000000e+00 : f32
    %147 = vector.shape_cast %43 : vector<20x1xi1> to vector<20x1xi1>
    %148 = vector.broadcast %147 : vector<20x1xi1> to vector<20x16xi1>
    %149 = vector.broadcast %cst_54 : f32 to vector<20x16xf32>
    %150 = arith.select %148, %146, %149 : vector<20x16xi1>, vector<20x16xf32>
    %151 = tpu.concatenate %44, %150, %44 in 1 : vector<20x1xf32>, vector<20x16xf32>, vector<20x1xf32> -> vector<20x18xf32>
    %c10_55 = arith.constant 10 : index
    %c0_56 = arith.constant 0 : index
    %c0_57 = arith.constant 0 : index
    %152 = vector.load %arg10[%c10_55, %c0_56, %c0_57] : memref<16x20x18xf32, #tpu.memory_space<vmem>>, vector<1x20x18xf32>
    %153 = vector.shape_cast %152 : vector<1x20x18xf32> to vector<20x18xf32>
    %154 = vector.shape_cast %151 : vector<20x18xf32> to vector<1x20x18xf32>
    tpu.vector_store %arg10[%c10_55, %c0_56, %c0_57], %154 {strides = array<i32>} : memref<16x20x18xf32, #tpu.memory_space<vmem>>, vector<1x20x18xf32>,
    %cst_58 = arith.constant 0.000000e+00 : f32
    %155 = vector.broadcast %cst_58 : f32 to vector<20x16xf32>
    %156 = arith.maximumf %34#11, %155 : vector<20x16xf32>
    %cst_59 = arith.constant 0.000000e+00 : f32
    %157 = vector.shape_cast %43 : vector<20x1xi1> to vector<20x1xi1>
    %158 = vector.broadcast %157 : vector<20x1xi1> to vector<20x16xi1>
    %159 = vector.broadcast %cst_59 : f32 to vector<20x16xf32>
    %160 = arith.select %158, %156, %159 : vector<20x16xi1>, vector<20x16xf32>
    %161 = tpu.concatenate %44, %160, %44 in 1 : vector<20x1xf32>, vector<20x16xf32>, vector<20x1xf32> -> vector<20x18xf32>
    %c11_60 = arith.constant 11 : index
    %c0_61 = arith.constant 0 : index
    %c0_62 = arith.constant 0 : index
    %162 = vector.load %arg10[%c11_60, %c0_61, %c0_62] : memref<16x20x18xf32, #tpu.memory_space<vmem>>, vector<1x20x18xf32>
    %163 = vector.shape_cast %162 : vector<1x20x18xf32> to vector<20x18xf32>
    %164 = vector.shape_cast %161 : vector<20x18xf32> to vector<1x20x18xf32>
    tpu.vector_store %arg10[%c11_60, %c0_61, %c0_62], %164 {strides = array<i32>} : memref<16x20x18xf32, #tpu.memory_space<vmem>>, vector<1x20x18xf32>,
    %cst_63 = arith.constant 0.000000e+00 : f32
    %165 = vector.broadcast %cst_63 : f32 to vector<20x16xf32>
    %166 = arith.maximumf %34#12, %165 : vector<20x16xf32>
    %cst_64 = arith.constant 0.000000e+00 : f32
    %167 = vector.shape_cast %43 : vector<20x1xi1> to vector<20x1xi1>
    %168 = vector.broadcast %167 : vector<20x1xi1> to vector<20x16xi1>
    %169 = vector.broadcast %cst_64 : f32 to vector<20x16xf32>
    %170 = arith.select %168, %166, %169 : vector<20x16xi1>, vector<20x16xf32>
    %171 = tpu.concatenate %44, %170, %44 in 1 : vector<20x1xf32>, vector<20x16xf32>, vector<20x1xf32> -> vector<20x18xf32>
    %c12_65 = arith.constant 12 : index
    %c0_66 = arith.constant 0 : index
    %c0_67 = arith.constant 0 : index
    %172 = vector.load %arg10[%c12_65, %c0_66, %c0_67] : memref<16x20x18xf32, #tpu.memory_space<vmem>>, vector<1x20x18xf32>
    %173 = vector.shape_cast %172 : vector<1x20x18xf32> to vector<20x18xf32>
    %174 = vector.shape_cast %171 : vector<20x18xf32> to vector<1x20x18xf32>
    tpu.vector_store %arg10[%c12_65, %c0_66, %c0_67], %174 {strides = array<i32>} : memref<16x20x18xf32, #tpu.memory_space<vmem>>, vector<1x20x18xf32>,
    %cst_68 = arith.constant 0.000000e+00 : f32
    %175 = vector.broadcast %cst_68 : f32 to vector<20x16xf32>
    %176 = arith.maximumf %34#13, %175 : vector<20x16xf32>
    %cst_69 = arith.constant 0.000000e+00 : f32
    %177 = vector.shape_cast %43 : vector<20x1xi1> to vector<20x1xi1>
    %178 = vector.broadcast %177 : vector<20x1xi1> to vector<20x16xi1>
    %179 = vector.broadcast %cst_69 : f32 to vector<20x16xf32>
    %180 = arith.select %178, %176, %179 : vector<20x16xi1>, vector<20x16xf32>
    %181 = tpu.concatenate %44, %180, %44 in 1 : vector<20x1xf32>, vector<20x16xf32>, vector<20x1xf32> -> vector<20x18xf32>
    %c13_70 = arith.constant 13 : index
    %c0_71 = arith.constant 0 : index
    %c0_72 = arith.constant 0 : index
    %182 = vector.load %arg10[%c13_70, %c0_71, %c0_72] : memref<16x20x18xf32, #tpu.memory_space<vmem>>, vector<1x20x18xf32>
    %183 = vector.shape_cast %182 : vector<1x20x18xf32> to vector<20x18xf32>
    %184 = vector.shape_cast %181 : vector<20x18xf32> to vector<1x20x18xf32>
    tpu.vector_store %arg10[%c13_70, %c0_71, %c0_72], %184 {strides = array<i32>} : memref<16x20x18xf32, #tpu.memory_space<vmem>>, vector<1x20x18xf32>,
    %cst_73 = arith.constant 0.000000e+00 : f32
    %185 = vector.broadcast %cst_73 : f32 to vector<20x16xf32>
    %186 = arith.maximumf %34#14, %185 : vector<20x16xf32>
    %cst_74 = arith.constant 0.000000e+00 : f32
    %187 = vector.shape_cast %43 : vector<20x1xi1> to vector<20x1xi1>
    %188 = vector.broadcast %187 : vector<20x1xi1> to vector<20x16xi1>
    %189 = vector.broadcast %cst_74 : f32 to vector<20x16xf32>
    %190 = arith.select %188, %186, %189 : vector<20x16xi1>, vector<20x16xf32>
    %191 = tpu.concatenate %44, %190, %44 in 1 : vector<20x1xf32>, vector<20x16xf32>, vector<20x1xf32> -> vector<20x18xf32>
    %c14_75 = arith.constant 14 : index
    %c0_76 = arith.constant 0 : index
    %c0_77 = arith.constant 0 : index
    %192 = vector.load %arg10[%c14_75, %c0_76, %c0_77] : memref<16x20x18xf32, #tpu.memory_space<vmem>>, vector<1x20x18xf32>
    %193 = vector.shape_cast %192 : vector<1x20x18xf32> to vector<20x18xf32>
    %194 = vector.shape_cast %191 : vector<20x18xf32> to vector<1x20x18xf32>
    tpu.vector_store %arg10[%c14_75, %c0_76, %c0_77], %194 {strides = array<i32>} : memref<16x20x18xf32, #tpu.memory_space<vmem>>, vector<1x20x18xf32>,
    %cst_78 = arith.constant 0.000000e+00 : f32
    %195 = vector.broadcast %cst_78 : f32 to vector<20x16xf32>
    %196 = arith.maximumf %34#15, %195 : vector<20x16xf32>
    %cst_79 = arith.constant 0.000000e+00 : f32
    %197 = vector.shape_cast %43 : vector<20x1xi1> to vector<20x1xi1>
    %198 = vector.broadcast %197 : vector<20x1xi1> to vector<20x16xi1>
    %199 = vector.broadcast %cst_79 : f32 to vector<20x16xf32>
    %200 = arith.select %198, %196, %199 : vector<20x16xi1>, vector<20x16xf32>
    %201 = tpu.concatenate %44, %200, %44 in 1 : vector<20x1xf32>, vector<20x16xf32>, vector<20x1xf32> -> vector<20x18xf32>
    %c15_80 = arith.constant 15 : index
    %c0_81 = arith.constant 0 : index
    %c0_82 = arith.constant 0 : index
    %202 = vector.load %arg10[%c15_80, %c0_81, %c0_82] : memref<16x20x18xf32, #tpu.memory_space<vmem>>, vector<1x20x18xf32>
    %203 = vector.shape_cast %202 : vector<1x20x18xf32> to vector<20x18xf32>
    %204 = vector.shape_cast %201 : vector<20x18xf32> to vector<1x20x18xf32>
    tpu.vector_store %arg10[%c15_80, %c0_81, %c0_82], %204 {strides = array<i32>} : memref<16x20x18xf32, #tpu.memory_space<vmem>>, vector<1x20x18xf32>,
    %c0_83 = arith.constant 0 : index
    %205 = memref.load %arg6[%c0_83] : memref<16xf32, #tpu.memory_space<smem>>
    %206 = vector.broadcast %205 : f32 to vector<18x16xf32>
    %c1_84 = arith.constant 1 : index
    %207 = memref.load %arg6[%c1_84] : memref<16xf32, #tpu.memory_space<smem>>
    %208 = vector.broadcast %207 : f32 to vector<18x16xf32>
    %c2_85 = arith.constant 2 : index
    %209 = memref.load %arg6[%c2_85] : memref<16xf32, #tpu.memory_space<smem>>
    %210 = vector.broadcast %209 : f32 to vector<18x16xf32>
    %c3_86 = arith.constant 3 : index
    %211 = memref.load %arg6[%c3_86] : memref<16xf32, #tpu.memory_space<smem>>
    %212 = vector.broadcast %211 : f32 to vector<18x16xf32>
    %c4_87 = arith.constant 4 : index
    %213 = memref.load %arg6[%c4_87] : memref<16xf32, #tpu.memory_space<smem>>
    %214 = vector.broadcast %213 : f32 to vector<18x16xf32>
    %c5_88 = arith.constant 5 : index
    %215 = memref.load %arg6[%c5_88] : memref<16xf32, #tpu.memory_space<smem>>
    %216 = vector.broadcast %215 : f32 to vector<18x16xf32>
    %c6_89 = arith.constant 6 : index
    %217 = memref.load %arg6[%c6_89] : memref<16xf32, #tpu.memory_space<smem>>
    %218 = vector.broadcast %217 : f32 to vector<18x16xf32>
    %c7_90 = arith.constant 7 : index
    %219 = memref.load %arg6[%c7_90] : memref<16xf32, #tpu.memory_space<smem>>
    %220 = vector.broadcast %219 : f32 to vector<18x16xf32>
    %c8_91 = arith.constant 8 : index
    %221 = memref.load %arg6[%c8_91] : memref<16xf32, #tpu.memory_space<smem>>
    %222 = vector.broadcast %221 : f32 to vector<18x16xf32>
    %c9_92 = arith.constant 9 : index
    %223 = memref.load %arg6[%c9_92] : memref<16xf32, #tpu.memory_space<smem>>
    %224 = vector.broadcast %223 : f32 to vector<18x16xf32>
    %c10_93 = arith.constant 10 : index
    %225 = memref.load %arg6[%c10_93] : memref<16xf32, #tpu.memory_space<smem>>
    %226 = vector.broadcast %225 : f32 to vector<18x16xf32>
    %c11_94 = arith.constant 11 : index
    %227 = memref.load %arg6[%c11_94] : memref<16xf32, #tpu.memory_space<smem>>
    %228 = vector.broadcast %227 : f32 to vector<18x16xf32>
    %c12_95 = arith.constant 12 : index
    %229 = memref.load %arg6[%c12_95] : memref<16xf32, #tpu.memory_space<smem>>
    %230 = vector.broadcast %229 : f32 to vector<18x16xf32>
    %c13_96 = arith.constant 13 : index
    %231 = memref.load %arg6[%c13_96] : memref<16xf32, #tpu.memory_space<smem>>
    %232 = vector.broadcast %231 : f32 to vector<18x16xf32>
    %c14_97 = arith.constant 14 : index
    %233 = memref.load %arg6[%c14_97] : memref<16xf32, #tpu.memory_space<smem>>
    %234 = vector.broadcast %233 : f32 to vector<18x16xf32>
    %c15_98 = arith.constant 15 : index
    %235 = memref.load %arg6[%c15_98] : memref<16xf32, #tpu.memory_space<smem>>
    %236 = vector.broadcast %235 : f32 to vector<18x16xf32>
    %c0_i32_99 = arith.constant 0 : i32
    %c16_i32_100 = arith.constant 16 : i32
    %237 = arith.addi %c0_i32_99, %c16_i32_100 : i32
    %c1_i32_101 = arith.constant 1 : i32
    %238:16 = scf.for %arg12 = %c0_i32_99 to %237 step %c1_i32_101 iter_args(%arg13 = %206, %arg14 = %208, %arg15 = %210, %arg16 = %212, %arg17 = %214, %arg18 = %216, %arg19 = %218, %arg20 = %220, %arg21 = %222, %arg22 = %224, %arg23 = %226, %arg24 = %228, %arg25 = %230, %arg26 = %232, %arg27 = %234, %arg28 = %236) -> (vector<18x16xf32>, vector<18x16xf32>, vector<18x16xf32>, vector<18x16xf32>, vector<18x16xf32>, vector<18x16xf32>, vector<18x16xf32>, vector<18x16xf32>, vector<18x16xf32>, vector<18x16xf32>, vector<18x16xf32>, vector<18x16xf32>, vector<18x16xf32>, vector<18x16xf32>, vector<18x16xf32>, vector<18x16xf32>)  : i32 {
      %424 = arith.index_cast %arg12 : i32 to index
      %c0_198 = arith.constant 0 : index
      %c0_199 = arith.constant 0 : index
      %425 = vector.load %arg10[%424, %c0_198, %c0_199] : memref<16x20x18xf32, #tpu.memory_space<vmem>>, vector<1x18x16xf32>
      %426 = vector.shape_cast %425 : vector<1x18x16xf32> to vector<18x16xf32>
      %427 = arith.index_cast %arg12 : i32 to index
      %c0_200 = arith.constant 0 : index
      %c1_201 = arith.constant 1 : index
      %428 = vector.load %arg10[%427, %c0_200, %c1_201] : memref<16x20x18xf32, #tpu.memory_space<vmem>>, vector<1x18x16xf32>
      %429 = vector.shape_cast %428 : vector<1x18x16xf32> to vector<18x16xf32>
      %430 = arith.index_cast %arg12 : i32 to index
      %c0_202 = arith.constant 0 : index
      %c2_203 = arith.constant 2 : index
      %431 = vector.load %arg10[%430, %c0_202, %c2_203] : memref<16x20x18xf32, #tpu.memory_space<vmem>>, vector<1x18x16xf32>
      %432 = vector.shape_cast %431 : vector<1x18x16xf32> to vector<18x16xf32>
      %433 = arith.index_cast %arg12 : i32 to index
      %c1_204 = arith.constant 1 : index
      %c0_205 = arith.constant 0 : index
      %434 = vector.load %arg10[%433, %c1_204, %c0_205] : memref<16x20x18xf32, #tpu.memory_space<vmem>>, vector<1x18x16xf32>
      %435 = vector.shape_cast %434 : vector<1x18x16xf32> to vector<18x16xf32>
      %436 = arith.index_cast %arg12 : i32 to index
      %c1_206 = arith.constant 1 : index
      %c1_207 = arith.constant 1 : index
      %437 = vector.load %arg10[%436, %c1_206, %c1_207] : memref<16x20x18xf32, #tpu.memory_space<vmem>>, vector<1x18x16xf32>
      %438 = vector.shape_cast %437 : vector<1x18x16xf32> to vector<18x16xf32>
      %439 = arith.index_cast %arg12 : i32 to index
      %c1_208 = arith.constant 1 : index
      %c2_209 = arith.constant 2 : index
      %440 = vector.load %arg10[%439, %c1_208, %c2_209] : memref<16x20x18xf32, #tpu.memory_space<vmem>>, vector<1x18x16xf32>
      %441 = vector.shape_cast %440 : vector<1x18x16xf32> to vector<18x16xf32>
      %442 = arith.index_cast %arg12 : i32 to index
      %c2_210 = arith.constant 2 : index
      %c0_211 = arith.constant 0 : index
      %443 = vector.load %arg10[%442, %c2_210, %c0_211] : memref<16x20x18xf32, #tpu.memory_space<vmem>>, vector<1x18x16xf32>
      %444 = vector.shape_cast %443 : vector<1x18x16xf32> to vector<18x16xf32>
      %445 = arith.index_cast %arg12 : i32 to index
      %c2_212 = arith.constant 2 : index
      %c1_213 = arith.constant 1 : index
      %446 = vector.load %arg10[%445, %c2_212, %c1_213] : memref<16x20x18xf32, #tpu.memory_space<vmem>>, vector<1x18x16xf32>
      %447 = vector.shape_cast %446 : vector<1x18x16xf32> to vector<18x16xf32>
      %448 = arith.index_cast %arg12 : i32 to index
      %c2_214 = arith.constant 2 : index
      %c2_215 = arith.constant 2 : index
      %449 = vector.load %arg10[%448, %c2_214, %c2_215] : memref<16x20x18xf32, #tpu.memory_space<vmem>>, vector<1x18x16xf32>
      %450 = vector.shape_cast %449 : vector<1x18x16xf32> to vector<18x16xf32>
      %c144_i32 = arith.constant 144 : i32
      %451 = arith.muli %arg12, %c144_i32 : i32
      %c0_i32_216 = arith.constant 0 : i32
      %452 = arith.addi %451, %c0_i32_216 : i32
      %c0_i32_217 = arith.constant 0 : i32
      %453 = arith.addi %452, %c0_i32_217 : i32
      %454 = arith.index_cast %453 : i32 to index
      %455 = memref.load %arg5[%454] : memref<2304xf32, #tpu.memory_space<smem>>
      %456 = vector.broadcast %455 : f32 to vector<18x16xf32>
      %457 = arith.mulf %456, %426 : vector<18x16xf32>
      %458 = arith.addf %arg13, %457 : vector<18x16xf32>
      %c16_i32_218 = arith.constant 16 : i32
      %459 = arith.addi %451, %c16_i32_218 : i32
      %c0_i32_219 = arith.constant 0 : i32
      %460 = arith.addi %459, %c0_i32_219 : i32
      %461 = arith.index_cast %460 : i32 to index
      %462 = memref.load %arg5[%461] : memref<2304xf32, #tpu.memory_space<smem>>
      %463 = vector.broadcast %462 : f32 to vector<18x16xf32>
      %464 = arith.mulf %463, %429 : vector<18x16xf32>
      %465 = arith.addf %458, %464 : vector<18x16xf32>
      %c32_i32 = arith.constant 32 : i32
      %466 = arith.addi %451, %c32_i32 : i32
      %c0_i32_220 = arith.constant 0 : i32
      %467 = arith.addi %466, %c0_i32_220 : i32
      %468 = arith.index_cast %467 : i32 to index
      %469 = memref.load %arg5[%468] : memref<2304xf32, #tpu.memory_space<smem>>
      %470 = vector.broadcast %469 : f32 to vector<18x16xf32>
      %471 = arith.mulf %470, %432 : vector<18x16xf32>
      %472 = arith.addf %465, %471 : vector<18x16xf32>
      %c48_i32 = arith.constant 48 : i32
      %473 = arith.addi %451, %c48_i32 : i32
      %c0_i32_221 = arith.constant 0 : i32
      %474 = arith.addi %473, %c0_i32_221 : i32
      %475 = arith.index_cast %474 : i32 to index
      %476 = memref.load %arg5[%475] : memref<2304xf32, #tpu.memory_space<smem>>
      %477 = vector.broadcast %476 : f32 to vector<18x16xf32>
      %478 = arith.mulf %477, %435 : vector<18x16xf32>
      %479 = arith.addf %472, %478 : vector<18x16xf32>
      %c64_i32 = arith.constant 64 : i32
      %480 = arith.addi %451, %c64_i32 : i32
      %c0_i32_222 = arith.constant 0 : i32
      %481 = arith.addi %480, %c0_i32_222 : i32
      %482 = arith.index_cast %481 : i32 to index
      %483 = memref.load %arg5[%482] : memref<2304xf32, #tpu.memory_space<smem>>
      %484 = vector.broadcast %483 : f32 to vector<18x16xf32>
      %485 = arith.mulf %484, %438 : vector<18x16xf32>
      %486 = arith.addf %479, %485 : vector<18x16xf32>
      %c80_i32 = arith.constant 80 : i32
      %487 = arith.addi %451, %c80_i32 : i32
      %c0_i32_223 = arith.constant 0 : i32
      %488 = arith.addi %487, %c0_i32_223 : i32
      %489 = arith.index_cast %488 : i32 to index
      %490 = memref.load %arg5[%489] : memref<2304xf32, #tpu.memory_space<smem>>
      %491 = vector.broadcast %490 : f32 to vector<18x16xf32>
      %492 = arith.mulf %491, %441 : vector<18x16xf32>
      %493 = arith.addf %486, %492 : vector<18x16xf32>
      %c96_i32 = arith.constant 96 : i32
      %494 = arith.addi %451, %c96_i32 : i32
      %c0_i32_224 = arith.constant 0 : i32
      %495 = arith.addi %494, %c0_i32_224 : i32
      %496 = arith.index_cast %495 : i32 to index
      %497 = memref.load %arg5[%496] : memref<2304xf32, #tpu.memory_space<smem>>
      %498 = vector.broadcast %497 : f32 to vector<18x16xf32>
      %499 = arith.mulf %498, %444 : vector<18x16xf32>
      %500 = arith.addf %493, %499 : vector<18x16xf32>
      %c112_i32 = arith.constant 112 : i32
      %501 = arith.addi %451, %c112_i32 : i32
      %c0_i32_225 = arith.constant 0 : i32
      %502 = arith.addi %501, %c0_i32_225 : i32
      %503 = arith.index_cast %502 : i32 to index
      %504 = memref.load %arg5[%503] : memref<2304xf32, #tpu.memory_space<smem>>
      %505 = vector.broadcast %504 : f32 to vector<18x16xf32>
      %506 = arith.mulf %505, %447 : vector<18x16xf32>
      %507 = arith.addf %500, %506 : vector<18x16xf32>
      %c128_i32 = arith.constant 128 : i32
      %508 = arith.addi %451, %c128_i32 : i32
      %c0_i32_226 = arith.constant 0 : i32
      %509 = arith.addi %508, %c0_i32_226 : i32
      %510 = arith.index_cast %509 : i32 to index
      %511 = memref.load %arg5[%510] : memref<2304xf32, #tpu.memory_space<smem>>
      %512 = vector.broadcast %511 : f32 to vector<18x16xf32>
      %513 = arith.mulf %512, %450 : vector<18x16xf32>
      %514 = arith.addf %507, %513 : vector<18x16xf32>
      %c0_i32_227 = arith.constant 0 : i32
      %515 = arith.addi %451, %c0_i32_227 : i32
      %c1_i32_228 = arith.constant 1 : i32
      %516 = arith.addi %515, %c1_i32_228 : i32
      %517 = arith.index_cast %516 : i32 to index
      %518 = memref.load %arg5[%517] : memref<2304xf32, #tpu.memory_space<smem>>
      %519 = vector.broadcast %518 : f32 to vector<18x16xf32>
      %520 = arith.mulf %519, %426 : vector<18x16xf32>
      %521 = arith.addf %arg14, %520 : vector<18x16xf32>
      %c16_i32_229 = arith.constant 16 : i32
      %522 = arith.addi %451, %c16_i32_229 : i32
      %c1_i32_230 = arith.constant 1 : i32
      %523 = arith.addi %522, %c1_i32_230 : i32
      %524 = arith.index_cast %523 : i32 to index
      %525 = memref.load %arg5[%524] : memref<2304xf32, #tpu.memory_space<smem>>
      %526 = vector.broadcast %525 : f32 to vector<18x16xf32>
      %527 = arith.mulf %526, %429 : vector<18x16xf32>
      %528 = arith.addf %521, %527 : vector<18x16xf32>
      %c32_i32_231 = arith.constant 32 : i32
      %529 = arith.addi %451, %c32_i32_231 : i32
      %c1_i32_232 = arith.constant 1 : i32
      %530 = arith.addi %529, %c1_i32_232 : i32
      %531 = arith.index_cast %530 : i32 to index
      %532 = memref.load %arg5[%531] : memref<2304xf32, #tpu.memory_space<smem>>
      %533 = vector.broadcast %532 : f32 to vector<18x16xf32>
      %534 = arith.mulf %533, %432 : vector<18x16xf32>
      %535 = arith.addf %528, %534 : vector<18x16xf32>
      %c48_i32_233 = arith.constant 48 : i32
      %536 = arith.addi %451, %c48_i32_233 : i32
      %c1_i32_234 = arith.constant 1 : i32
      %537 = arith.addi %536, %c1_i32_234 : i32
      %538 = arith.index_cast %537 : i32 to index
      %539 = memref.load %arg5[%538] : memref<2304xf32, #tpu.memory_space<smem>>
      %540 = vector.broadcast %539 : f32 to vector<18x16xf32>
      %541 = arith.mulf %540, %435 : vector<18x16xf32>
      %542 = arith.addf %535, %541 : vector<18x16xf32>
      %c64_i32_235 = arith.constant 64 : i32
      %543 = arith.addi %451, %c64_i32_235 : i32
      %c1_i32_236 = arith.constant 1 : i32
      %544 = arith.addi %543, %c1_i32_236 : i32
      %545 = arith.index_cast %544 : i32 to index
      %546 = memref.load %arg5[%545] : memref<2304xf32, #tpu.memory_space<smem>>
      %547 = vector.broadcast %546 : f32 to vector<18x16xf32>
      %548 = arith.mulf %547, %438 : vector<18x16xf32>
      %549 = arith.addf %542, %548 : vector<18x16xf32>
      %c80_i32_237 = arith.constant 80 : i32
      %550 = arith.addi %451, %c80_i32_237 : i32
      %c1_i32_238 = arith.constant 1 : i32
      %551 = arith.addi %550, %c1_i32_238 : i32
      %552 = arith.index_cast %551 : i32 to index
      %553 = memref.load %arg5[%552] : memref<2304xf32, #tpu.memory_space<smem>>
      %554 = vector.broadcast %553 : f32 to vector<18x16xf32>
      %555 = arith.mulf %554, %441 : vector<18x16xf32>
      %556 = arith.addf %549, %555 : vector<18x16xf32>
      %c96_i32_239 = arith.constant 96 : i32
      %557 = arith.addi %451, %c96_i32_239 : i32
      %c1_i32_240 = arith.constant 1 : i32
      %558 = arith.addi %557, %c1_i32_240 : i32
      %559 = arith.index_cast %558 : i32 to index
      %560 = memref.load %arg5[%559] : memref<2304xf32, #tpu.memory_space<smem>>
      %561 = vector.broadcast %560 : f32 to vector<18x16xf32>
      %562 = arith.mulf %561, %444 : vector<18x16xf32>
      %563 = arith.addf %556, %562 : vector<18x16xf32>
      %c112_i32_241 = arith.constant 112 : i32
      %564 = arith.addi %451, %c112_i32_241 : i32
      %c1_i32_242 = arith.constant 1 : i32
      %565 = arith.addi %564, %c1_i32_242 : i32
      %566 = arith.index_cast %565 : i32 to index
      %567 = memref.load %arg5[%566] : memref<2304xf32, #tpu.memory_space<smem>>
      %568 = vector.broadcast %567 : f32 to vector<18x16xf32>
      %569 = arith.mulf %568, %447 : vector<18x16xf32>
      %570 = arith.addf %563, %569 : vector<18x16xf32>
      %c128_i32_243 = arith.constant 128 : i32
      %571 = arith.addi %451, %c128_i32_243 : i32
      %c1_i32_244 = arith.constant 1 : i32
      %572 = arith.addi %571, %c1_i32_244 : i32
      %573 = arith.index_cast %572 : i32 to index
      %574 = memref.load %arg5[%573] : memref<2304xf32, #tpu.memory_space<smem>>
      %575 = vector.broadcast %574 : f32 to vector<18x16xf32>
      %576 = arith.mulf %575, %450 : vector<18x16xf32>
      %577 = arith.addf %570, %576 : vector<18x16xf32>
      %c0_i32_245 = arith.constant 0 : i32
      %578 = arith.addi %451, %c0_i32_245 : i32
      %c2_i32_246 = arith.constant 2 : i32
      %579 = arith.addi %578, %c2_i32_246 : i32
      %580 = arith.index_cast %579 : i32 to index
      %581 = memref.load %arg5[%580] : memref<2304xf32, #tpu.memory_space<smem>>
      %582 = vector.broadcast %581 : f32 to vector<18x16xf32>
      %583 = arith.mulf %582, %426 : vector<18x16xf32>
      %584 = arith.addf %arg15, %583 : vector<18x16xf32>
      %c16_i32_247 = arith.constant 16 : i32
      %585 = arith.addi %451, %c16_i32_247 : i32
      %c2_i32_248 = arith.constant 2 : i32
      %586 = arith.addi %585, %c2_i32_248 : i32
      %587 = arith.index_cast %586 : i32 to index
      %588 = memref.load %arg5[%587] : memref<2304xf32, #tpu.memory_space<smem>>
      %589 = vector.broadcast %588 : f32 to vector<18x16xf32>
      %590 = arith.mulf %589, %429 : vector<18x16xf32>
      %591 = arith.addf %584, %590 : vector<18x16xf32>
      %c32_i32_249 = arith.constant 32 : i32
      %592 = arith.addi %451, %c32_i32_249 : i32
      %c2_i32_250 = arith.constant 2 : i32
      %593 = arith.addi %592, %c2_i32_250 : i32
      %594 = arith.index_cast %593 : i32 to index
      %595 = memref.load %arg5[%594] : memref<2304xf32, #tpu.memory_space<smem>>
      %596 = vector.broadcast %595 : f32 to vector<18x16xf32>
      %597 = arith.mulf %596, %432 : vector<18x16xf32>
      %598 = arith.addf %591, %597 : vector<18x16xf32>
      %c48_i32_251 = arith.constant 48 : i32
      %599 = arith.addi %451, %c48_i32_251 : i32
      %c2_i32_252 = arith.constant 2 : i32
      %600 = arith.addi %599, %c2_i32_252 : i32
      %601 = arith.index_cast %600 : i32 to index
      %602 = memref.load %arg5[%601] : memref<2304xf32, #tpu.memory_space<smem>>
      %603 = vector.broadcast %602 : f32 to vector<18x16xf32>
      %604 = arith.mulf %603, %435 : vector<18x16xf32>
      %605 = arith.addf %598, %604 : vector<18x16xf32>
      %c64_i32_253 = arith.constant 64 : i32
      %606 = arith.addi %451, %c64_i32_253 : i32
      %c2_i32_254 = arith.constant 2 : i32
      %607 = arith.addi %606, %c2_i32_254 : i32
      %608 = arith.index_cast %607 : i32 to index
      %609 = memref.load %arg5[%608] : memref<2304xf32, #tpu.memory_space<smem>>
      %610 = vector.broadcast %609 : f32 to vector<18x16xf32>
      %611 = arith.mulf %610, %438 : vector<18x16xf32>
      %612 = arith.addf %605, %611 : vector<18x16xf32>
      %c80_i32_255 = arith.constant 80 : i32
      %613 = arith.addi %451, %c80_i32_255 : i32
      %c2_i32_256 = arith.constant 2 : i32
      %614 = arith.addi %613, %c2_i32_256 : i32
      %615 = arith.index_cast %614 : i32 to index
      %616 = memref.load %arg5[%615] : memref<2304xf32, #tpu.memory_space<smem>>
      %617 = vector.broadcast %616 : f32 to vector<18x16xf32>
      %618 = arith.mulf %617, %441 : vector<18x16xf32>
      %619 = arith.addf %612, %618 : vector<18x16xf32>
      %c96_i32_257 = arith.constant 96 : i32
      %620 = arith.addi %451, %c96_i32_257 : i32
      %c2_i32_258 = arith.constant 2 : i32
      %621 = arith.addi %620, %c2_i32_258 : i32
      %622 = arith.index_cast %621 : i32 to index
      %623 = memref.load %arg5[%622] : memref<2304xf32, #tpu.memory_space<smem>>
      %624 = vector.broadcast %623 : f32 to vector<18x16xf32>
      %625 = arith.mulf %624, %444 : vector<18x16xf32>
      %626 = arith.addf %619, %625 : vector<18x16xf32>
      %c112_i32_259 = arith.constant 112 : i32
      %627 = arith.addi %451, %c112_i32_259 : i32
      %c2_i32_260 = arith.constant 2 : i32
      %628 = arith.addi %627, %c2_i32_260 : i32
      %629 = arith.index_cast %628 : i32 to index
      %630 = memref.load %arg5[%629] : memref<2304xf32, #tpu.memory_space<smem>>
      %631 = vector.broadcast %630 : f32 to vector<18x16xf32>
      %632 = arith.mulf %631, %447 : vector<18x16xf32>
      %633 = arith.addf %626, %632 : vector<18x16xf32>
      %c128_i32_261 = arith.constant 128 : i32
      %634 = arith.addi %451, %c128_i32_261 : i32
      %c2_i32_262 = arith.constant 2 : i32
      %635 = arith.addi %634, %c2_i32_262 : i32
      %636 = arith.index_cast %635 : i32 to index
      %637 = memref.load %arg5[%636] : memref<2304xf32, #tpu.memory_space<smem>>
      %638 = vector.broadcast %637 : f32 to vector<18x16xf32>
      %639 = arith.mulf %638, %450 : vector<18x16xf32>
      %640 = arith.addf %633, %639 : vector<18x16xf32>
      %c0_i32_263 = arith.constant 0 : i32
      %641 = arith.addi %451, %c0_i32_263 : i32
      %c3_i32_264 = arith.constant 3 : i32
      %642 = arith.addi %641, %c3_i32_264 : i32
      %643 = arith.index_cast %642 : i32 to index
      %644 = memref.load %arg5[%643] : memref<2304xf32, #tpu.memory_space<smem>>
      %645 = vector.broadcast %644 : f32 to vector<18x16xf32>
      %646 = arith.mulf %645, %426 : vector<18x16xf32>
      %647 = arith.addf %arg16, %646 : vector<18x16xf32>
      %c16_i32_265 = arith.constant 16 : i32
      %648 = arith.addi %451, %c16_i32_265 : i32
      %c3_i32_266 = arith.constant 3 : i32
      %649 = arith.addi %648, %c3_i32_266 : i32
      %650 = arith.index_cast %649 : i32 to index
      %651 = memref.load %arg5[%650] : memref<2304xf32, #tpu.memory_space<smem>>
      %652 = vector.broadcast %651 : f32 to vector<18x16xf32>
      %653 = arith.mulf %652, %429 : vector<18x16xf32>
      %654 = arith.addf %647, %653 : vector<18x16xf32>
      %c32_i32_267 = arith.constant 32 : i32
      %655 = arith.addi %451, %c32_i32_267 : i32
      %c3_i32_268 = arith.constant 3 : i32
      %656 = arith.addi %655, %c3_i32_268 : i32
      %657 = arith.index_cast %656 : i32 to index
      %658 = memref.load %arg5[%657] : memref<2304xf32, #tpu.memory_space<smem>>
      %659 = vector.broadcast %658 : f32 to vector<18x16xf32>
      %660 = arith.mulf %659, %432 : vector<18x16xf32>
      %661 = arith.addf %654, %660 : vector<18x16xf32>
      %c48_i32_269 = arith.constant 48 : i32
      %662 = arith.addi %451, %c48_i32_269 : i32
      %c3_i32_270 = arith.constant 3 : i32
      %663 = arith.addi %662, %c3_i32_270 : i32
      %664 = arith.index_cast %663 : i32 to index
      %665 = memref.load %arg5[%664] : memref<2304xf32, #tpu.memory_space<smem>>
      %666 = vector.broadcast %665 : f32 to vector<18x16xf32>
      %667 = arith.mulf %666, %435 : vector<18x16xf32>
      %668 = arith.addf %661, %667 : vector<18x16xf32>
      %c64_i32_271 = arith.constant 64 : i32
      %669 = arith.addi %451, %c64_i32_271 : i32
      %c3_i32_272 = arith.constant 3 : i32
      %670 = arith.addi %669, %c3_i32_272 : i32
      %671 = arith.index_cast %670 : i32 to index
      %672 = memref.load %arg5[%671] : memref<2304xf32, #tpu.memory_space<smem>>
      %673 = vector.broadcast %672 : f32 to vector<18x16xf32>
      %674 = arith.mulf %673, %438 : vector<18x16xf32>
      %675 = arith.addf %668, %674 : vector<18x16xf32>
      %c80_i32_273 = arith.constant 80 : i32
      %676 = arith.addi %451, %c80_i32_273 : i32
      %c3_i32_274 = arith.constant 3 : i32
      %677 = arith.addi %676, %c3_i32_274 : i32
      %678 = arith.index_cast %677 : i32 to index
      %679 = memref.load %arg5[%678] : memref<2304xf32, #tpu.memory_space<smem>>
      %680 = vector.broadcast %679 : f32 to vector<18x16xf32>
      %681 = arith.mulf %680, %441 : vector<18x16xf32>
      %682 = arith.addf %675, %681 : vector<18x16xf32>
      %c96_i32_275 = arith.constant 96 : i32
      %683 = arith.addi %451, %c96_i32_275 : i32
      %c3_i32_276 = arith.constant 3 : i32
      %684 = arith.addi %683, %c3_i32_276 : i32
      %685 = arith.index_cast %684 : i32 to index
      %686 = memref.load %arg5[%685] : memref<2304xf32, #tpu.memory_space<smem>>
      %687 = vector.broadcast %686 : f32 to vector<18x16xf32>
      %688 = arith.mulf %687, %444 : vector<18x16xf32>
      %689 = arith.addf %682, %688 : vector<18x16xf32>
      %c112_i32_277 = arith.constant 112 : i32
      %690 = arith.addi %451, %c112_i32_277 : i32
      %c3_i32_278 = arith.constant 3 : i32
      %691 = arith.addi %690, %c3_i32_278 : i32
      %692 = arith.index_cast %691 : i32 to index
      %693 = memref.load %arg5[%692] : memref<2304xf32, #tpu.memory_space<smem>>
      %694 = vector.broadcast %693 : f32 to vector<18x16xf32>
      %695 = arith.mulf %694, %447 : vector<18x16xf32>
      %696 = arith.addf %689, %695 : vector<18x16xf32>
      %c128_i32_279 = arith.constant 128 : i32
      %697 = arith.addi %451, %c128_i32_279 : i32
      %c3_i32_280 = arith.constant 3 : i32
      %698 = arith.addi %697, %c3_i32_280 : i32
      %699 = arith.index_cast %698 : i32 to index
      %700 = memref.load %arg5[%699] : memref<2304xf32, #tpu.memory_space<smem>>
      %701 = vector.broadcast %700 : f32 to vector<18x16xf32>
      %702 = arith.mulf %701, %450 : vector<18x16xf32>
      %703 = arith.addf %696, %702 : vector<18x16xf32>
      %c0_i32_281 = arith.constant 0 : i32
      %704 = arith.addi %451, %c0_i32_281 : i32
      %c4_i32 = arith.constant 4 : i32
      %705 = arith.addi %704, %c4_i32 : i32
      %706 = arith.index_cast %705 : i32 to index
      %707 = memref.load %arg5[%706] : memref<2304xf32, #tpu.memory_space<smem>>
      %708 = vector.broadcast %707 : f32 to vector<18x16xf32>
      %709 = arith.mulf %708, %426 : vector<18x16xf32>
      %710 = arith.addf %arg17, %709 : vector<18x16xf32>
      %c16_i32_282 = arith.constant 16 : i32
      %711 = arith.addi %451, %c16_i32_282 : i32
      %c4_i32_283 = arith.constant 4 : i32
      %712 = arith.addi %711, %c4_i32_283 : i32
      %713 = arith.index_cast %712 : i32 to index
      %714 = memref.load %arg5[%713] : memref<2304xf32, #tpu.memory_space<smem>>
      %715 = vector.broadcast %714 : f32 to vector<18x16xf32>
      %716 = arith.mulf %715, %429 : vector<18x16xf32>
      %717 = arith.addf %710, %716 : vector<18x16xf32>
      %c32_i32_284 = arith.constant 32 : i32
      %718 = arith.addi %451, %c32_i32_284 : i32
      %c4_i32_285 = arith.constant 4 : i32
      %719 = arith.addi %718, %c4_i32_285 : i32
      %720 = arith.index_cast %719 : i32 to index
      %721 = memref.load %arg5[%720] : memref<2304xf32, #tpu.memory_space<smem>>
      %722 = vector.broadcast %721 : f32 to vector<18x16xf32>
      %723 = arith.mulf %722, %432 : vector<18x16xf32>
      %724 = arith.addf %717, %723 : vector<18x16xf32>
      %c48_i32_286 = arith.constant 48 : i32
      %725 = arith.addi %451, %c48_i32_286 : i32
      %c4_i32_287 = arith.constant 4 : i32
      %726 = arith.addi %725, %c4_i32_287 : i32
      %727 = arith.index_cast %726 : i32 to index
      %728 = memref.load %arg5[%727] : memref<2304xf32, #tpu.memory_space<smem>>
      %729 = vector.broadcast %728 : f32 to vector<18x16xf32>
      %730 = arith.mulf %729, %435 : vector<18x16xf32>
      %731 = arith.addf %724, %730 : vector<18x16xf32>
      %c64_i32_288 = arith.constant 64 : i32
      %732 = arith.addi %451, %c64_i32_288 : i32
      %c4_i32_289 = arith.constant 4 : i32
      %733 = arith.addi %732, %c4_i32_289 : i32
      %734 = arith.index_cast %733 : i32 to index
      %735 = memref.load %arg5[%734] : memref<2304xf32, #tpu.memory_space<smem>>
      %736 = vector.broadcast %735 : f32 to vector<18x16xf32>
      %737 = arith.mulf %736, %438 : vector<18x16xf32>
      %738 = arith.addf %731, %737 : vector<18x16xf32>
      %c80_i32_290 = arith.constant 80 : i32
      %739 = arith.addi %451, %c80_i32_290 : i32
      %c4_i32_291 = arith.constant 4 : i32
      %740 = arith.addi %739, %c4_i32_291 : i32
      %741 = arith.index_cast %740 : i32 to index
      %742 = memref.load %arg5[%741] : memref<2304xf32, #tpu.memory_space<smem>>
      %743 = vector.broadcast %742 : f32 to vector<18x16xf32>
      %744 = arith.mulf %743, %441 : vector<18x16xf32>
      %745 = arith.addf %738, %744 : vector<18x16xf32>
      %c96_i32_292 = arith.constant 96 : i32
      %746 = arith.addi %451, %c96_i32_292 : i32
      %c4_i32_293 = arith.constant 4 : i32
      %747 = arith.addi %746, %c4_i32_293 : i32
      %748 = arith.index_cast %747 : i32 to index
      %749 = memref.load %arg5[%748] : memref<2304xf32, #tpu.memory_space<smem>>
      %750 = vector.broadcast %749 : f32 to vector<18x16xf32>
      %751 = arith.mulf %750, %444 : vector<18x16xf32>
      %752 = arith.addf %745, %751 : vector<18x16xf32>
      %c112_i32_294 = arith.constant 112 : i32
      %753 = arith.addi %451, %c112_i32_294 : i32
      %c4_i32_295 = arith.constant 4 : i32
      %754 = arith.addi %753, %c4_i32_295 : i32
      %755 = arith.index_cast %754 : i32 to index
      %756 = memref.load %arg5[%755] : memref<2304xf32, #tpu.memory_space<smem>>
      %757 = vector.broadcast %756 : f32 to vector<18x16xf32>
      %758 = arith.mulf %757, %447 : vector<18x16xf32>
      %759 = arith.addf %752, %758 : vector<18x16xf32>
      %c128_i32_296 = arith.constant 128 : i32
      %760 = arith.addi %451, %c128_i32_296 : i32
      %c4_i32_297 = arith.constant 4 : i32
      %761 = arith.addi %760, %c4_i32_297 : i32
      %762 = arith.index_cast %761 : i32 to index
      %763 = memref.load %arg5[%762] : memref<2304xf32, #tpu.memory_space<smem>>
      %764 = vector.broadcast %763 : f32 to vector<18x16xf32>
      %765 = arith.mulf %764, %450 : vector<18x16xf32>
      %766 = arith.addf %759, %765 : vector<18x16xf32>
      %c0_i32_298 = arith.constant 0 : i32
      %767 = arith.addi %451, %c0_i32_298 : i32
      %c5_i32 = arith.constant 5 : i32
      %768 = arith.addi %767, %c5_i32 : i32
      %769 = arith.index_cast %768 : i32 to index
      %770 = memref.load %arg5[%769] : memref<2304xf32, #tpu.memory_space<smem>>
      %771 = vector.broadcast %770 : f32 to vector<18x16xf32>
      %772 = arith.mulf %771, %426 : vector<18x16xf32>
      %773 = arith.addf %arg18, %772 : vector<18x16xf32>
      %c16_i32_299 = arith.constant 16 : i32
      %774 = arith.addi %451, %c16_i32_299 : i32
      %c5_i32_300 = arith.constant 5 : i32
      %775 = arith.addi %774, %c5_i32_300 : i32
      %776 = arith.index_cast %775 : i32 to index
      %777 = memref.load %arg5[%776] : memref<2304xf32, #tpu.memory_space<smem>>
      %778 = vector.broadcast %777 : f32 to vector<18x16xf32>
      %779 = arith.mulf %778, %429 : vector<18x16xf32>
      %780 = arith.addf %773, %779 : vector<18x16xf32>
      %c32_i32_301 = arith.constant 32 : i32
      %781 = arith.addi %451, %c32_i32_301 : i32
      %c5_i32_302 = arith.constant 5 : i32
      %782 = arith.addi %781, %c5_i32_302 : i32
      %783 = arith.index_cast %782 : i32 to index
      %784 = memref.load %arg5[%783] : memref<2304xf32, #tpu.memory_space<smem>>
      %785 = vector.broadcast %784 : f32 to vector<18x16xf32>
      %786 = arith.mulf %785, %432 : vector<18x16xf32>
      %787 = arith.addf %780, %786 : vector<18x16xf32>
      %c48_i32_303 = arith.constant 48 : i32
      %788 = arith.addi %451, %c48_i32_303 : i32
      %c5_i32_304 = arith.constant 5 : i32
      %789 = arith.addi %788, %c5_i32_304 : i32
      %790 = arith.index_cast %789 : i32 to index
      %791 = memref.load %arg5[%790] : memref<2304xf32, #tpu.memory_space<smem>>
      %792 = vector.broadcast %791 : f32 to vector<18x16xf32>
      %793 = arith.mulf %792, %435 : vector<18x16xf32>
      %794 = arith.addf %787, %793 : vector<18x16xf32>
      %c64_i32_305 = arith.constant 64 : i32
      %795 = arith.addi %451, %c64_i32_305 : i32
      %c5_i32_306 = arith.constant 5 : i32
      %796 = arith.addi %795, %c5_i32_306 : i32
      %797 = arith.index_cast %796 : i32 to index
      %798 = memref.load %arg5[%797] : memref<2304xf32, #tpu.memory_space<smem>>
      %799 = vector.broadcast %798 : f32 to vector<18x16xf32>
      %800 = arith.mulf %799, %438 : vector<18x16xf32>
      %801 = arith.addf %794, %800 : vector<18x16xf32>
      %c80_i32_307 = arith.constant 80 : i32
      %802 = arith.addi %451, %c80_i32_307 : i32
      %c5_i32_308 = arith.constant 5 : i32
      %803 = arith.addi %802, %c5_i32_308 : i32
      %804 = arith.index_cast %803 : i32 to index
      %805 = memref.load %arg5[%804] : memref<2304xf32, #tpu.memory_space<smem>>
      %806 = vector.broadcast %805 : f32 to vector<18x16xf32>
      %807 = arith.mulf %806, %441 : vector<18x16xf32>
      %808 = arith.addf %801, %807 : vector<18x16xf32>
      %c96_i32_309 = arith.constant 96 : i32
      %809 = arith.addi %451, %c96_i32_309 : i32
      %c5_i32_310 = arith.constant 5 : i32
      %810 = arith.addi %809, %c5_i32_310 : i32
      %811 = arith.index_cast %810 : i32 to index
      %812 = memref.load %arg5[%811] : memref<2304xf32, #tpu.memory_space<smem>>
      %813 = vector.broadcast %812 : f32 to vector<18x16xf32>
      %814 = arith.mulf %813, %444 : vector<18x16xf32>
      %815 = arith.addf %808, %814 : vector<18x16xf32>
      %c112_i32_311 = arith.constant 112 : i32
      %816 = arith.addi %451, %c112_i32_311 : i32
      %c5_i32_312 = arith.constant 5 : i32
      %817 = arith.addi %816, %c5_i32_312 : i32
      %818 = arith.index_cast %817 : i32 to index
      %819 = memref.load %arg5[%818] : memref<2304xf32, #tpu.memory_space<smem>>
      %820 = vector.broadcast %819 : f32 to vector<18x16xf32>
      %821 = arith.mulf %820, %447 : vector<18x16xf32>
      %822 = arith.addf %815, %821 : vector<18x16xf32>
      %c128_i32_313 = arith.constant 128 : i32
      %823 = arith.addi %451, %c128_i32_313 : i32
      %c5_i32_314 = arith.constant 5 : i32
      %824 = arith.addi %823, %c5_i32_314 : i32
      %825 = arith.index_cast %824 : i32 to index
      %826 = memref.load %arg5[%825] : memref<2304xf32, #tpu.memory_space<smem>>
      %827 = vector.broadcast %826 : f32 to vector<18x16xf32>
      %828 = arith.mulf %827, %450 : vector<18x16xf32>
      %829 = arith.addf %822, %828 : vector<18x16xf32>
      %c0_i32_315 = arith.constant 0 : i32
      %830 = arith.addi %451, %c0_i32_315 : i32
      %c6_i32 = arith.constant 6 : i32
      %831 = arith.addi %830, %c6_i32 : i32
      %832 = arith.index_cast %831 : i32 to index
      %833 = memref.load %arg5[%832] : memref<2304xf32, #tpu.memory_space<smem>>
      %834 = vector.broadcast %833 : f32 to vector<18x16xf32>
      %835 = arith.mulf %834, %426 : vector<18x16xf32>
      %836 = arith.addf %arg19, %835 : vector<18x16xf32>
      %c16_i32_316 = arith.constant 16 : i32
      %837 = arith.addi %451, %c16_i32_316 : i32
      %c6_i32_317 = arith.constant 6 : i32
      %838 = arith.addi %837, %c6_i32_317 : i32
      %839 = arith.index_cast %838 : i32 to index
      %840 = memref.load %arg5[%839] : memref<2304xf32, #tpu.memory_space<smem>>
      %841 = vector.broadcast %840 : f32 to vector<18x16xf32>
      %842 = arith.mulf %841, %429 : vector<18x16xf32>
      %843 = arith.addf %836, %842 : vector<18x16xf32>
      %c32_i32_318 = arith.constant 32 : i32
      %844 = arith.addi %451, %c32_i32_318 : i32
      %c6_i32_319 = arith.constant 6 : i32
      %845 = arith.addi %844, %c6_i32_319 : i32
      %846 = arith.index_cast %845 : i32 to index
      %847 = memref.load %arg5[%846] : memref<2304xf32, #tpu.memory_space<smem>>
      %848 = vector.broadcast %847 : f32 to vector<18x16xf32>
      %849 = arith.mulf %848, %432 : vector<18x16xf32>
      %850 = arith.addf %843, %849 : vector<18x16xf32>
      %c48_i32_320 = arith.constant 48 : i32
      %851 = arith.addi %451, %c48_i32_320 : i32
      %c6_i32_321 = arith.constant 6 : i32
      %852 = arith.addi %851, %c6_i32_321 : i32
      %853 = arith.index_cast %852 : i32 to index
      %854 = memref.load %arg5[%853] : memref<2304xf32, #tpu.memory_space<smem>>
      %855 = vector.broadcast %854 : f32 to vector<18x16xf32>
      %856 = arith.mulf %855, %435 : vector<18x16xf32>
      %857 = arith.addf %850, %856 : vector<18x16xf32>
      %c64_i32_322 = arith.constant 64 : i32
      %858 = arith.addi %451, %c64_i32_322 : i32
      %c6_i32_323 = arith.constant 6 : i32
      %859 = arith.addi %858, %c6_i32_323 : i32
      %860 = arith.index_cast %859 : i32 to index
      %861 = memref.load %arg5[%860] : memref<2304xf32, #tpu.memory_space<smem>>
      %862 = vector.broadcast %861 : f32 to vector<18x16xf32>
      %863 = arith.mulf %862, %438 : vector<18x16xf32>
      %864 = arith.addf %857, %863 : vector<18x16xf32>
      %c80_i32_324 = arith.constant 80 : i32
      %865 = arith.addi %451, %c80_i32_324 : i32
      %c6_i32_325 = arith.constant 6 : i32
      %866 = arith.addi %865, %c6_i32_325 : i32
      %867 = arith.index_cast %866 : i32 to index
      %868 = memref.load %arg5[%867] : memref<2304xf32, #tpu.memory_space<smem>>
      %869 = vector.broadcast %868 : f32 to vector<18x16xf32>
      %870 = arith.mulf %869, %441 : vector<18x16xf32>
      %871 = arith.addf %864, %870 : vector<18x16xf32>
      %c96_i32_326 = arith.constant 96 : i32
      %872 = arith.addi %451, %c96_i32_326 : i32
      %c6_i32_327 = arith.constant 6 : i32
      %873 = arith.addi %872, %c6_i32_327 : i32
      %874 = arith.index_cast %873 : i32 to index
      %875 = memref.load %arg5[%874] : memref<2304xf32, #tpu.memory_space<smem>>
      %876 = vector.broadcast %875 : f32 to vector<18x16xf32>
      %877 = arith.mulf %876, %444 : vector<18x16xf32>
      %878 = arith.addf %871, %877 : vector<18x16xf32>
      %c112_i32_328 = arith.constant 112 : i32
      %879 = arith.addi %451, %c112_i32_328 : i32
      %c6_i32_329 = arith.constant 6 : i32
      %880 = arith.addi %879, %c6_i32_329 : i32
      %881 = arith.index_cast %880 : i32 to index
      %882 = memref.load %arg5[%881] : memref<2304xf32, #tpu.memory_space<smem>>
      %883 = vector.broadcast %882 : f32 to vector<18x16xf32>
      %884 = arith.mulf %883, %447 : vector<18x16xf32>
      %885 = arith.addf %878, %884 : vector<18x16xf32>
      %c128_i32_330 = arith.constant 128 : i32
      %886 = arith.addi %451, %c128_i32_330 : i32
      %c6_i32_331 = arith.constant 6 : i32
      %887 = arith.addi %886, %c6_i32_331 : i32
      %888 = arith.index_cast %887 : i32 to index
      %889 = memref.load %arg5[%888] : memref<2304xf32, #tpu.memory_space<smem>>
      %890 = vector.broadcast %889 : f32 to vector<18x16xf32>
      %891 = arith.mulf %890, %450 : vector<18x16xf32>
      %892 = arith.addf %885, %891 : vector<18x16xf32>
      %c0_i32_332 = arith.constant 0 : i32
      %893 = arith.addi %451, %c0_i32_332 : i32
      %c7_i32 = arith.constant 7 : i32
      %894 = arith.addi %893, %c7_i32 : i32
      %895 = arith.index_cast %894 : i32 to index
      %896 = memref.load %arg5[%895] : memref<2304xf32, #tpu.memory_space<smem>>
      %897 = vector.broadcast %896 : f32 to vector<18x16xf32>
      %898 = arith.mulf %897, %426 : vector<18x16xf32>
      %899 = arith.addf %arg20, %898 : vector<18x16xf32>
      %c16_i32_333 = arith.constant 16 : i32
      %900 = arith.addi %451, %c16_i32_333 : i32
      %c7_i32_334 = arith.constant 7 : i32
      %901 = arith.addi %900, %c7_i32_334 : i32
      %902 = arith.index_cast %901 : i32 to index
      %903 = memref.load %arg5[%902] : memref<2304xf32, #tpu.memory_space<smem>>
      %904 = vector.broadcast %903 : f32 to vector<18x16xf32>
      %905 = arith.mulf %904, %429 : vector<18x16xf32>
      %906 = arith.addf %899, %905 : vector<18x16xf32>
      %c32_i32_335 = arith.constant 32 : i32
      %907 = arith.addi %451, %c32_i32_335 : i32
      %c7_i32_336 = arith.constant 7 : i32
      %908 = arith.addi %907, %c7_i32_336 : i32
      %909 = arith.index_cast %908 : i32 to index
      %910 = memref.load %arg5[%909] : memref<2304xf32, #tpu.memory_space<smem>>
      %911 = vector.broadcast %910 : f32 to vector<18x16xf32>
      %912 = arith.mulf %911, %432 : vector<18x16xf32>
      %913 = arith.addf %906, %912 : vector<18x16xf32>
      %c48_i32_337 = arith.constant 48 : i32
      %914 = arith.addi %451, %c48_i32_337 : i32
      %c7_i32_338 = arith.constant 7 : i32
      %915 = arith.addi %914, %c7_i32_338 : i32
      %916 = arith.index_cast %915 : i32 to index
      %917 = memref.load %arg5[%916] : memref<2304xf32, #tpu.memory_space<smem>>
      %918 = vector.broadcast %917 : f32 to vector<18x16xf32>
      %919 = arith.mulf %918, %435 : vector<18x16xf32>
      %920 = arith.addf %913, %919 : vector<18x16xf32>
      %c64_i32_339 = arith.constant 64 : i32
      %921 = arith.addi %451, %c64_i32_339 : i32
      %c7_i32_340 = arith.constant 7 : i32
      %922 = arith.addi %921, %c7_i32_340 : i32
      %923 = arith.index_cast %922 : i32 to index
      %924 = memref.load %arg5[%923] : memref<2304xf32, #tpu.memory_space<smem>>
      %925 = vector.broadcast %924 : f32 to vector<18x16xf32>
      %926 = arith.mulf %925, %438 : vector<18x16xf32>
      %927 = arith.addf %920, %926 : vector<18x16xf32>
      %c80_i32_341 = arith.constant 80 : i32
      %928 = arith.addi %451, %c80_i32_341 : i32
      %c7_i32_342 = arith.constant 7 : i32
      %929 = arith.addi %928, %c7_i32_342 : i32
      %930 = arith.index_cast %929 : i32 to index
      %931 = memref.load %arg5[%930] : memref<2304xf32, #tpu.memory_space<smem>>
      %932 = vector.broadcast %931 : f32 to vector<18x16xf32>
      %933 = arith.mulf %932, %441 : vector<18x16xf32>
      %934 = arith.addf %927, %933 : vector<18x16xf32>
      %c96_i32_343 = arith.constant 96 : i32
      %935 = arith.addi %451, %c96_i32_343 : i32
      %c7_i32_344 = arith.constant 7 : i32
      %936 = arith.addi %935, %c7_i32_344 : i32
      %937 = arith.index_cast %936 : i32 to index
      %938 = memref.load %arg5[%937] : memref<2304xf32, #tpu.memory_space<smem>>
      %939 = vector.broadcast %938 : f32 to vector<18x16xf32>
      %940 = arith.mulf %939, %444 : vector<18x16xf32>
      %941 = arith.addf %934, %940 : vector<18x16xf32>
      %c112_i32_345 = arith.constant 112 : i32
      %942 = arith.addi %451, %c112_i32_345 : i32
      %c7_i32_346 = arith.constant 7 : i32
      %943 = arith.addi %942, %c7_i32_346 : i32
      %944 = arith.index_cast %943 : i32 to index
      %945 = memref.load %arg5[%944] : memref<2304xf32, #tpu.memory_space<smem>>
      %946 = vector.broadcast %945 : f32 to vector<18x16xf32>
      %947 = arith.mulf %946, %447 : vector<18x16xf32>
      %948 = arith.addf %941, %947 : vector<18x16xf32>
      %c128_i32_347 = arith.constant 128 : i32
      %949 = arith.addi %451, %c128_i32_347 : i32
      %c7_i32_348 = arith.constant 7 : i32
      %950 = arith.addi %949, %c7_i32_348 : i32
      %951 = arith.index_cast %950 : i32 to index
      %952 = memref.load %arg5[%951] : memref<2304xf32, #tpu.memory_space<smem>>
      %953 = vector.broadcast %952 : f32 to vector<18x16xf32>
      %954 = arith.mulf %953, %450 : vector<18x16xf32>
      %955 = arith.addf %948, %954 : vector<18x16xf32>
      %c0_i32_349 = arith.constant 0 : i32
      %956 = arith.addi %451, %c0_i32_349 : i32
      %c8_i32 = arith.constant 8 : i32
      %957 = arith.addi %956, %c8_i32 : i32
      %958 = arith.index_cast %957 : i32 to index
      %959 = memref.load %arg5[%958] : memref<2304xf32, #tpu.memory_space<smem>>
      %960 = vector.broadcast %959 : f32 to vector<18x16xf32>
      %961 = arith.mulf %960, %426 : vector<18x16xf32>
      %962 = arith.addf %arg21, %961 : vector<18x16xf32>
      %c16_i32_350 = arith.constant 16 : i32
      %963 = arith.addi %451, %c16_i32_350 : i32
      %c8_i32_351 = arith.constant 8 : i32
      %964 = arith.addi %963, %c8_i32_351 : i32
      %965 = arith.index_cast %964 : i32 to index
      %966 = memref.load %arg5[%965] : memref<2304xf32, #tpu.memory_space<smem>>
      %967 = vector.broadcast %966 : f32 to vector<18x16xf32>
      %968 = arith.mulf %967, %429 : vector<18x16xf32>
      %969 = arith.addf %962, %968 : vector<18x16xf32>
      %c32_i32_352 = arith.constant 32 : i32
      %970 = arith.addi %451, %c32_i32_352 : i32
      %c8_i32_353 = arith.constant 8 : i32
      %971 = arith.addi %970, %c8_i32_353 : i32
      %972 = arith.index_cast %971 : i32 to index
      %973 = memref.load %arg5[%972] : memref<2304xf32, #tpu.memory_space<smem>>
      %974 = vector.broadcast %973 : f32 to vector<18x16xf32>
      %975 = arith.mulf %974, %432 : vector<18x16xf32>
      %976 = arith.addf %969, %975 : vector<18x16xf32>
      %c48_i32_354 = arith.constant 48 : i32
      %977 = arith.addi %451, %c48_i32_354 : i32
      %c8_i32_355 = arith.constant 8 : i32
      %978 = arith.addi %977, %c8_i32_355 : i32
      %979 = arith.index_cast %978 : i32 to index
      %980 = memref.load %arg5[%979] : memref<2304xf32, #tpu.memory_space<smem>>
      %981 = vector.broadcast %980 : f32 to vector<18x16xf32>
      %982 = arith.mulf %981, %435 : vector<18x16xf32>
      %983 = arith.addf %976, %982 : vector<18x16xf32>
      %c64_i32_356 = arith.constant 64 : i32
      %984 = arith.addi %451, %c64_i32_356 : i32
      %c8_i32_357 = arith.constant 8 : i32
      %985 = arith.addi %984, %c8_i32_357 : i32
      %986 = arith.index_cast %985 : i32 to index
      %987 = memref.load %arg5[%986] : memref<2304xf32, #tpu.memory_space<smem>>
      %988 = vector.broadcast %987 : f32 to vector<18x16xf32>
      %989 = arith.mulf %988, %438 : vector<18x16xf32>
      %990 = arith.addf %983, %989 : vector<18x16xf32>
      %c80_i32_358 = arith.constant 80 : i32
      %991 = arith.addi %451, %c80_i32_358 : i32
      %c8_i32_359 = arith.constant 8 : i32
      %992 = arith.addi %991, %c8_i32_359 : i32
      %993 = arith.index_cast %992 : i32 to index
      %994 = memref.load %arg5[%993] : memref<2304xf32, #tpu.memory_space<smem>>
      %995 = vector.broadcast %994 : f32 to vector<18x16xf32>
      %996 = arith.mulf %995, %441 : vector<18x16xf32>
      %997 = arith.addf %990, %996 : vector<18x16xf32>
      %c96_i32_360 = arith.constant 96 : i32
      %998 = arith.addi %451, %c96_i32_360 : i32
      %c8_i32_361 = arith.constant 8 : i32
      %999 = arith.addi %998, %c8_i32_361 : i32
      %1000 = arith.index_cast %999 : i32 to index
      %1001 = memref.load %arg5[%1000] : memref<2304xf32, #tpu.memory_space<smem>>
      %1002 = vector.broadcast %1001 : f32 to vector<18x16xf32>
      %1003 = arith.mulf %1002, %444 : vector<18x16xf32>
      %1004 = arith.addf %997, %1003 : vector<18x16xf32>
      %c112_i32_362 = arith.constant 112 : i32
      %1005 = arith.addi %451, %c112_i32_362 : i32
      %c8_i32_363 = arith.constant 8 : i32
      %1006 = arith.addi %1005, %c8_i32_363 : i32
      %1007 = arith.index_cast %1006 : i32 to index
      %1008 = memref.load %arg5[%1007] : memref<2304xf32, #tpu.memory_space<smem>>
      %1009 = vector.broadcast %1008 : f32 to vector<18x16xf32>
      %1010 = arith.mulf %1009, %447 : vector<18x16xf32>
      %1011 = arith.addf %1004, %1010 : vector<18x16xf32>
      %c128_i32_364 = arith.constant 128 : i32
      %1012 = arith.addi %451, %c128_i32_364 : i32
      %c8_i32_365 = arith.constant 8 : i32
      %1013 = arith.addi %1012, %c8_i32_365 : i32
      %1014 = arith.index_cast %1013 : i32 to index
      %1015 = memref.load %arg5[%1014] : memref<2304xf32, #tpu.memory_space<smem>>
      %1016 = vector.broadcast %1015 : f32 to vector<18x16xf32>
      %1017 = arith.mulf %1016, %450 : vector<18x16xf32>
      %1018 = arith.addf %1011, %1017 : vector<18x16xf32>
      %c0_i32_366 = arith.constant 0 : i32
      %1019 = arith.addi %451, %c0_i32_366 : i32
      %c9_i32 = arith.constant 9 : i32
      %1020 = arith.addi %1019, %c9_i32 : i32
      %1021 = arith.index_cast %1020 : i32 to index
      %1022 = memref.load %arg5[%1021] : memref<2304xf32, #tpu.memory_space<smem>>
      %1023 = vector.broadcast %1022 : f32 to vector<18x16xf32>
      %1024 = arith.mulf %1023, %426 : vector<18x16xf32>
      %1025 = arith.addf %arg22, %1024 : vector<18x16xf32>
      %c16_i32_367 = arith.constant 16 : i32
      %1026 = arith.addi %451, %c16_i32_367 : i32
      %c9_i32_368 = arith.constant 9 : i32
      %1027 = arith.addi %1026, %c9_i32_368 : i32
      %1028 = arith.index_cast %1027 : i32 to index
      %1029 = memref.load %arg5[%1028] : memref<2304xf32, #tpu.memory_space<smem>>
      %1030 = vector.broadcast %1029 : f32 to vector<18x16xf32>
      %1031 = arith.mulf %1030, %429 : vector<18x16xf32>
      %1032 = arith.addf %1025, %1031 : vector<18x16xf32>
      %c32_i32_369 = arith.constant 32 : i32
      %1033 = arith.addi %451, %c32_i32_369 : i32
      %c9_i32_370 = arith.constant 9 : i32
      %1034 = arith.addi %1033, %c9_i32_370 : i32
      %1035 = arith.index_cast %1034 : i32 to index
      %1036 = memref.load %arg5[%1035] : memref<2304xf32, #tpu.memory_space<smem>>
      %1037 = vector.broadcast %1036 : f32 to vector<18x16xf32>
      %1038 = arith.mulf %1037, %432 : vector<18x16xf32>
      %1039 = arith.addf %1032, %1038 : vector<18x16xf32>
      %c48_i32_371 = arith.constant 48 : i32
      %1040 = arith.addi %451, %c48_i32_371 : i32
      %c9_i32_372 = arith.constant 9 : i32
      %1041 = arith.addi %1040, %c9_i32_372 : i32
      %1042 = arith.index_cast %1041 : i32 to index
      %1043 = memref.load %arg5[%1042] : memref<2304xf32, #tpu.memory_space<smem>>
      %1044 = vector.broadcast %1043 : f32 to vector<18x16xf32>
      %1045 = arith.mulf %1044, %435 : vector<18x16xf32>
      %1046 = arith.addf %1039, %1045 : vector<18x16xf32>
      %c64_i32_373 = arith.constant 64 : i32
      %1047 = arith.addi %451, %c64_i32_373 : i32
      %c9_i32_374 = arith.constant 9 : i32
      %1048 = arith.addi %1047, %c9_i32_374 : i32
      %1049 = arith.index_cast %1048 : i32 to index
      %1050 = memref.load %arg5[%1049] : memref<2304xf32, #tpu.memory_space<smem>>
      %1051 = vector.broadcast %1050 : f32 to vector<18x16xf32>
      %1052 = arith.mulf %1051, %438 : vector<18x16xf32>
      %1053 = arith.addf %1046, %1052 : vector<18x16xf32>
      %c80_i32_375 = arith.constant 80 : i32
      %1054 = arith.addi %451, %c80_i32_375 : i32
      %c9_i32_376 = arith.constant 9 : i32
      %1055 = arith.addi %1054, %c9_i32_376 : i32
      %1056 = arith.index_cast %1055 : i32 to index
      %1057 = memref.load %arg5[%1056] : memref<2304xf32, #tpu.memory_space<smem>>
      %1058 = vector.broadcast %1057 : f32 to vector<18x16xf32>
      %1059 = arith.mulf %1058, %441 : vector<18x16xf32>
      %1060 = arith.addf %1053, %1059 : vector<18x16xf32>
      %c96_i32_377 = arith.constant 96 : i32
      %1061 = arith.addi %451, %c96_i32_377 : i32
      %c9_i32_378 = arith.constant 9 : i32
      %1062 = arith.addi %1061, %c9_i32_378 : i32
      %1063 = arith.index_cast %1062 : i32 to index
      %1064 = memref.load %arg5[%1063] : memref<2304xf32, #tpu.memory_space<smem>>
      %1065 = vector.broadcast %1064 : f32 to vector<18x16xf32>
      %1066 = arith.mulf %1065, %444 : vector<18x16xf32>
      %1067 = arith.addf %1060, %1066 : vector<18x16xf32>
      %c112_i32_379 = arith.constant 112 : i32
      %1068 = arith.addi %451, %c112_i32_379 : i32
      %c9_i32_380 = arith.constant 9 : i32
      %1069 = arith.addi %1068, %c9_i32_380 : i32
      %1070 = arith.index_cast %1069 : i32 to index
      %1071 = memref.load %arg5[%1070] : memref<2304xf32, #tpu.memory_space<smem>>
      %1072 = vector.broadcast %1071 : f32 to vector<18x16xf32>
      %1073 = arith.mulf %1072, %447 : vector<18x16xf32>
      %1074 = arith.addf %1067, %1073 : vector<18x16xf32>
      %c128_i32_381 = arith.constant 128 : i32
      %1075 = arith.addi %451, %c128_i32_381 : i32
      %c9_i32_382 = arith.constant 9 : i32
      %1076 = arith.addi %1075, %c9_i32_382 : i32
      %1077 = arith.index_cast %1076 : i32 to index
      %1078 = memref.load %arg5[%1077] : memref<2304xf32, #tpu.memory_space<smem>>
      %1079 = vector.broadcast %1078 : f32 to vector<18x16xf32>
      %1080 = arith.mulf %1079, %450 : vector<18x16xf32>
      %1081 = arith.addf %1074, %1080 : vector<18x16xf32>
      %c0_i32_383 = arith.constant 0 : i32
      %1082 = arith.addi %451, %c0_i32_383 : i32
      %c10_i32 = arith.constant 10 : i32
      %1083 = arith.addi %1082, %c10_i32 : i32
      %1084 = arith.index_cast %1083 : i32 to index
      %1085 = memref.load %arg5[%1084] : memref<2304xf32, #tpu.memory_space<smem>>
      %1086 = vector.broadcast %1085 : f32 to vector<18x16xf32>
      %1087 = arith.mulf %1086, %426 : vector<18x16xf32>
      %1088 = arith.addf %arg23, %1087 : vector<18x16xf32>
      %c16_i32_384 = arith.constant 16 : i32
      %1089 = arith.addi %451, %c16_i32_384 : i32
      %c10_i32_385 = arith.constant 10 : i32
      %1090 = arith.addi %1089, %c10_i32_385 : i32
      %1091 = arith.index_cast %1090 : i32 to index
      %1092 = memref.load %arg5[%1091] : memref<2304xf32, #tpu.memory_space<smem>>
      %1093 = vector.broadcast %1092 : f32 to vector<18x16xf32>
      %1094 = arith.mulf %1093, %429 : vector<18x16xf32>
      %1095 = arith.addf %1088, %1094 : vector<18x16xf32>
      %c32_i32_386 = arith.constant 32 : i32
      %1096 = arith.addi %451, %c32_i32_386 : i32
      %c10_i32_387 = arith.constant 10 : i32
      %1097 = arith.addi %1096, %c10_i32_387 : i32
      %1098 = arith.index_cast %1097 : i32 to index
      %1099 = memref.load %arg5[%1098] : memref<2304xf32, #tpu.memory_space<smem>>
      %1100 = vector.broadcast %1099 : f32 to vector<18x16xf32>
      %1101 = arith.mulf %1100, %432 : vector<18x16xf32>
      %1102 = arith.addf %1095, %1101 : vector<18x16xf32>
      %c48_i32_388 = arith.constant 48 : i32
      %1103 = arith.addi %451, %c48_i32_388 : i32
      %c10_i32_389 = arith.constant 10 : i32
      %1104 = arith.addi %1103, %c10_i32_389 : i32
      %1105 = arith.index_cast %1104 : i32 to index
      %1106 = memref.load %arg5[%1105] : memref<2304xf32, #tpu.memory_space<smem>>
      %1107 = vector.broadcast %1106 : f32 to vector<18x16xf32>
      %1108 = arith.mulf %1107, %435 : vector<18x16xf32>
      %1109 = arith.addf %1102, %1108 : vector<18x16xf32>
      %c64_i32_390 = arith.constant 64 : i32
      %1110 = arith.addi %451, %c64_i32_390 : i32
      %c10_i32_391 = arith.constant 10 : i32
      %1111 = arith.addi %1110, %c10_i32_391 : i32
      %1112 = arith.index_cast %1111 : i32 to index
      %1113 = memref.load %arg5[%1112] : memref<2304xf32, #tpu.memory_space<smem>>
      %1114 = vector.broadcast %1113 : f32 to vector<18x16xf32>
      %1115 = arith.mulf %1114, %438 : vector<18x16xf32>
      %1116 = arith.addf %1109, %1115 : vector<18x16xf32>
      %c80_i32_392 = arith.constant 80 : i32
      %1117 = arith.addi %451, %c80_i32_392 : i32
      %c10_i32_393 = arith.constant 10 : i32
      %1118 = arith.addi %1117, %c10_i32_393 : i32
      %1119 = arith.index_cast %1118 : i32 to index
      %1120 = memref.load %arg5[%1119] : memref<2304xf32, #tpu.memory_space<smem>>
      %1121 = vector.broadcast %1120 : f32 to vector<18x16xf32>
      %1122 = arith.mulf %1121, %441 : vector<18x16xf32>
      %1123 = arith.addf %1116, %1122 : vector<18x16xf32>
      %c96_i32_394 = arith.constant 96 : i32
      %1124 = arith.addi %451, %c96_i32_394 : i32
      %c10_i32_395 = arith.constant 10 : i32
      %1125 = arith.addi %1124, %c10_i32_395 : i32
      %1126 = arith.index_cast %1125 : i32 to index
      %1127 = memref.load %arg5[%1126] : memref<2304xf32, #tpu.memory_space<smem>>
      %1128 = vector.broadcast %1127 : f32 to vector<18x16xf32>
      %1129 = arith.mulf %1128, %444 : vector<18x16xf32>
      %1130 = arith.addf %1123, %1129 : vector<18x16xf32>
      %c112_i32_396 = arith.constant 112 : i32
      %1131 = arith.addi %451, %c112_i32_396 : i32
      %c10_i32_397 = arith.constant 10 : i32
      %1132 = arith.addi %1131, %c10_i32_397 : i32
      %1133 = arith.index_cast %1132 : i32 to index
      %1134 = memref.load %arg5[%1133] : memref<2304xf32, #tpu.memory_space<smem>>
      %1135 = vector.broadcast %1134 : f32 to vector<18x16xf32>
      %1136 = arith.mulf %1135, %447 : vector<18x16xf32>
      %1137 = arith.addf %1130, %1136 : vector<18x16xf32>
      %c128_i32_398 = arith.constant 128 : i32
      %1138 = arith.addi %451, %c128_i32_398 : i32
      %c10_i32_399 = arith.constant 10 : i32
      %1139 = arith.addi %1138, %c10_i32_399 : i32
      %1140 = arith.index_cast %1139 : i32 to index
      %1141 = memref.load %arg5[%1140] : memref<2304xf32, #tpu.memory_space<smem>>
      %1142 = vector.broadcast %1141 : f32 to vector<18x16xf32>
      %1143 = arith.mulf %1142, %450 : vector<18x16xf32>
      %1144 = arith.addf %1137, %1143 : vector<18x16xf32>
      %c0_i32_400 = arith.constant 0 : i32
      %1145 = arith.addi %451, %c0_i32_400 : i32
      %c11_i32 = arith.constant 11 : i32
      %1146 = arith.addi %1145, %c11_i32 : i32
      %1147 = arith.index_cast %1146 : i32 to index
      %1148 = memref.load %arg5[%1147] : memref<2304xf32, #tpu.memory_space<smem>>
      %1149 = vector.broadcast %1148 : f32 to vector<18x16xf32>
      %1150 = arith.mulf %1149, %426 : vector<18x16xf32>
      %1151 = arith.addf %arg24, %1150 : vector<18x16xf32>
      %c16_i32_401 = arith.constant 16 : i32
      %1152 = arith.addi %451, %c16_i32_401 : i32
      %c11_i32_402 = arith.constant 11 : i32
      %1153 = arith.addi %1152, %c11_i32_402 : i32
      %1154 = arith.index_cast %1153 : i32 to index
      %1155 = memref.load %arg5[%1154] : memref<2304xf32, #tpu.memory_space<smem>>
      %1156 = vector.broadcast %1155 : f32 to vector<18x16xf32>
      %1157 = arith.mulf %1156, %429 : vector<18x16xf32>
      %1158 = arith.addf %1151, %1157 : vector<18x16xf32>
      %c32_i32_403 = arith.constant 32 : i32
      %1159 = arith.addi %451, %c32_i32_403 : i32
      %c11_i32_404 = arith.constant 11 : i32
      %1160 = arith.addi %1159, %c11_i32_404 : i32
      %1161 = arith.index_cast %1160 : i32 to index
      %1162 = memref.load %arg5[%1161] : memref<2304xf32, #tpu.memory_space<smem>>
      %1163 = vector.broadcast %1162 : f32 to vector<18x16xf32>
      %1164 = arith.mulf %1163, %432 : vector<18x16xf32>
      %1165 = arith.addf %1158, %1164 : vector<18x16xf32>
      %c48_i32_405 = arith.constant 48 : i32
      %1166 = arith.addi %451, %c48_i32_405 : i32
      %c11_i32_406 = arith.constant 11 : i32
      %1167 = arith.addi %1166, %c11_i32_406 : i32
      %1168 = arith.index_cast %1167 : i32 to index
      %1169 = memref.load %arg5[%1168] : memref<2304xf32, #tpu.memory_space<smem>>
      %1170 = vector.broadcast %1169 : f32 to vector<18x16xf32>
      %1171 = arith.mulf %1170, %435 : vector<18x16xf32>
      %1172 = arith.addf %1165, %1171 : vector<18x16xf32>
      %c64_i32_407 = arith.constant 64 : i32
      %1173 = arith.addi %451, %c64_i32_407 : i32
      %c11_i32_408 = arith.constant 11 : i32
      %1174 = arith.addi %1173, %c11_i32_408 : i32
      %1175 = arith.index_cast %1174 : i32 to index
      %1176 = memref.load %arg5[%1175] : memref<2304xf32, #tpu.memory_space<smem>>
      %1177 = vector.broadcast %1176 : f32 to vector<18x16xf32>
      %1178 = arith.mulf %1177, %438 : vector<18x16xf32>
      %1179 = arith.addf %1172, %1178 : vector<18x16xf32>
      %c80_i32_409 = arith.constant 80 : i32
      %1180 = arith.addi %451, %c80_i32_409 : i32
      %c11_i32_410 = arith.constant 11 : i32
      %1181 = arith.addi %1180, %c11_i32_410 : i32
      %1182 = arith.index_cast %1181 : i32 to index
      %1183 = memref.load %arg5[%1182] : memref<2304xf32, #tpu.memory_space<smem>>
      %1184 = vector.broadcast %1183 : f32 to vector<18x16xf32>
      %1185 = arith.mulf %1184, %441 : vector<18x16xf32>
      %1186 = arith.addf %1179, %1185 : vector<18x16xf32>
      %c96_i32_411 = arith.constant 96 : i32
      %1187 = arith.addi %451, %c96_i32_411 : i32
      %c11_i32_412 = arith.constant 11 : i32
      %1188 = arith.addi %1187, %c11_i32_412 : i32
      %1189 = arith.index_cast %1188 : i32 to index
      %1190 = memref.load %arg5[%1189] : memref<2304xf32, #tpu.memory_space<smem>>
      %1191 = vector.broadcast %1190 : f32 to vector<18x16xf32>
      %1192 = arith.mulf %1191, %444 : vector<18x16xf32>
      %1193 = arith.addf %1186, %1192 : vector<18x16xf32>
      %c112_i32_413 = arith.constant 112 : i32
      %1194 = arith.addi %451, %c112_i32_413 : i32
      %c11_i32_414 = arith.constant 11 : i32
      %1195 = arith.addi %1194, %c11_i32_414 : i32
      %1196 = arith.index_cast %1195 : i32 to index
      %1197 = memref.load %arg5[%1196] : memref<2304xf32, #tpu.memory_space<smem>>
      %1198 = vector.broadcast %1197 : f32 to vector<18x16xf32>
      %1199 = arith.mulf %1198, %447 : vector<18x16xf32>
      %1200 = arith.addf %1193, %1199 : vector<18x16xf32>
      %c128_i32_415 = arith.constant 128 : i32
      %1201 = arith.addi %451, %c128_i32_415 : i32
      %c11_i32_416 = arith.constant 11 : i32
      %1202 = arith.addi %1201, %c11_i32_416 : i32
      %1203 = arith.index_cast %1202 : i32 to index
      %1204 = memref.load %arg5[%1203] : memref<2304xf32, #tpu.memory_space<smem>>
      %1205 = vector.broadcast %1204 : f32 to vector<18x16xf32>
      %1206 = arith.mulf %1205, %450 : vector<18x16xf32>
      %1207 = arith.addf %1200, %1206 : vector<18x16xf32>
      %c0_i32_417 = arith.constant 0 : i32
      %1208 = arith.addi %451, %c0_i32_417 : i32
      %c12_i32 = arith.constant 12 : i32
      %1209 = arith.addi %1208, %c12_i32 : i32
      %1210 = arith.index_cast %1209 : i32 to index
      %1211 = memref.load %arg5[%1210] : memref<2304xf32, #tpu.memory_space<smem>>
      %1212 = vector.broadcast %1211 : f32 to vector<18x16xf32>
      %1213 = arith.mulf %1212, %426 : vector<18x16xf32>
      %1214 = arith.addf %arg25, %1213 : vector<18x16xf32>
      %c16_i32_418 = arith.constant 16 : i32
      %1215 = arith.addi %451, %c16_i32_418 : i32
      %c12_i32_419 = arith.constant 12 : i32
      %1216 = arith.addi %1215, %c12_i32_419 : i32
      %1217 = arith.index_cast %1216 : i32 to index
      %1218 = memref.load %arg5[%1217] : memref<2304xf32, #tpu.memory_space<smem>>
      %1219 = vector.broadcast %1218 : f32 to vector<18x16xf32>
      %1220 = arith.mulf %1219, %429 : vector<18x16xf32>
      %1221 = arith.addf %1214, %1220 : vector<18x16xf32>
      %c32_i32_420 = arith.constant 32 : i32
      %1222 = arith.addi %451, %c32_i32_420 : i32
      %c12_i32_421 = arith.constant 12 : i32
      %1223 = arith.addi %1222, %c12_i32_421 : i32
      %1224 = arith.index_cast %1223 : i32 to index
      %1225 = memref.load %arg5[%1224] : memref<2304xf32, #tpu.memory_space<smem>>
      %1226 = vector.broadcast %1225 : f32 to vector<18x16xf32>
      %1227 = arith.mulf %1226, %432 : vector<18x16xf32>
      %1228 = arith.addf %1221, %1227 : vector<18x16xf32>
      %c48_i32_422 = arith.constant 48 : i32
      %1229 = arith.addi %451, %c48_i32_422 : i32
      %c12_i32_423 = arith.constant 12 : i32
      %1230 = arith.addi %1229, %c12_i32_423 : i32
      %1231 = arith.index_cast %1230 : i32 to index
      %1232 = memref.load %arg5[%1231] : memref<2304xf32, #tpu.memory_space<smem>>
      %1233 = vector.broadcast %1232 : f32 to vector<18x16xf32>
      %1234 = arith.mulf %1233, %435 : vector<18x16xf32>
      %1235 = arith.addf %1228, %1234 : vector<18x16xf32>
      %c64_i32_424 = arith.constant 64 : i32
      %1236 = arith.addi %451, %c64_i32_424 : i32
      %c12_i32_425 = arith.constant 12 : i32
      %1237 = arith.addi %1236, %c12_i32_425 : i32
      %1238 = arith.index_cast %1237 : i32 to index
      %1239 = memref.load %arg5[%1238] : memref<2304xf32, #tpu.memory_space<smem>>
      %1240 = vector.broadcast %1239 : f32 to vector<18x16xf32>
      %1241 = arith.mulf %1240, %438 : vector<18x16xf32>
      %1242 = arith.addf %1235, %1241 : vector<18x16xf32>
      %c80_i32_426 = arith.constant 80 : i32
      %1243 = arith.addi %451, %c80_i32_426 : i32
      %c12_i32_427 = arith.constant 12 : i32
      %1244 = arith.addi %1243, %c12_i32_427 : i32
      %1245 = arith.index_cast %1244 : i32 to index
      %1246 = memref.load %arg5[%1245] : memref<2304xf32, #tpu.memory_space<smem>>
      %1247 = vector.broadcast %1246 : f32 to vector<18x16xf32>
      %1248 = arith.mulf %1247, %441 : vector<18x16xf32>
      %1249 = arith.addf %1242, %1248 : vector<18x16xf32>
      %c96_i32_428 = arith.constant 96 : i32
      %1250 = arith.addi %451, %c96_i32_428 : i32
      %c12_i32_429 = arith.constant 12 : i32
      %1251 = arith.addi %1250, %c12_i32_429 : i32
      %1252 = arith.index_cast %1251 : i32 to index
      %1253 = memref.load %arg5[%1252] : memref<2304xf32, #tpu.memory_space<smem>>
      %1254 = vector.broadcast %1253 : f32 to vector<18x16xf32>
      %1255 = arith.mulf %1254, %444 : vector<18x16xf32>
      %1256 = arith.addf %1249, %1255 : vector<18x16xf32>
      %c112_i32_430 = arith.constant 112 : i32
      %1257 = arith.addi %451, %c112_i32_430 : i32
      %c12_i32_431 = arith.constant 12 : i32
      %1258 = arith.addi %1257, %c12_i32_431 : i32
      %1259 = arith.index_cast %1258 : i32 to index
      %1260 = memref.load %arg5[%1259] : memref<2304xf32, #tpu.memory_space<smem>>
      %1261 = vector.broadcast %1260 : f32 to vector<18x16xf32>
      %1262 = arith.mulf %1261, %447 : vector<18x16xf32>
      %1263 = arith.addf %1256, %1262 : vector<18x16xf32>
      %c128_i32_432 = arith.constant 128 : i32
      %1264 = arith.addi %451, %c128_i32_432 : i32
      %c12_i32_433 = arith.constant 12 : i32
      %1265 = arith.addi %1264, %c12_i32_433 : i32
      %1266 = arith.index_cast %1265 : i32 to index
      %1267 = memref.load %arg5[%1266] : memref<2304xf32, #tpu.memory_space<smem>>
      %1268 = vector.broadcast %1267 : f32 to vector<18x16xf32>
      %1269 = arith.mulf %1268, %450 : vector<18x16xf32>
      %1270 = arith.addf %1263, %1269 : vector<18x16xf32>
      %c0_i32_434 = arith.constant 0 : i32
      %1271 = arith.addi %451, %c0_i32_434 : i32
      %c13_i32 = arith.constant 13 : i32
      %1272 = arith.addi %1271, %c13_i32 : i32
      %1273 = arith.index_cast %1272 : i32 to index
      %1274 = memref.load %arg5[%1273] : memref<2304xf32, #tpu.memory_space<smem>>
      %1275 = vector.broadcast %1274 : f32 to vector<18x16xf32>
      %1276 = arith.mulf %1275, %426 : vector<18x16xf32>
      %1277 = arith.addf %arg26, %1276 : vector<18x16xf32>
      %c16_i32_435 = arith.constant 16 : i32
      %1278 = arith.addi %451, %c16_i32_435 : i32
      %c13_i32_436 = arith.constant 13 : i32
      %1279 = arith.addi %1278, %c13_i32_436 : i32
      %1280 = arith.index_cast %1279 : i32 to index
      %1281 = memref.load %arg5[%1280] : memref<2304xf32, #tpu.memory_space<smem>>
      %1282 = vector.broadcast %1281 : f32 to vector<18x16xf32>
      %1283 = arith.mulf %1282, %429 : vector<18x16xf32>
      %1284 = arith.addf %1277, %1283 : vector<18x16xf32>
      %c32_i32_437 = arith.constant 32 : i32
      %1285 = arith.addi %451, %c32_i32_437 : i32
      %c13_i32_438 = arith.constant 13 : i32
      %1286 = arith.addi %1285, %c13_i32_438 : i32
      %1287 = arith.index_cast %1286 : i32 to index
      %1288 = memref.load %arg5[%1287] : memref<2304xf32, #tpu.memory_space<smem>>
      %1289 = vector.broadcast %1288 : f32 to vector<18x16xf32>
      %1290 = arith.mulf %1289, %432 : vector<18x16xf32>
      %1291 = arith.addf %1284, %1290 : vector<18x16xf32>
      %c48_i32_439 = arith.constant 48 : i32
      %1292 = arith.addi %451, %c48_i32_439 : i32
      %c13_i32_440 = arith.constant 13 : i32
      %1293 = arith.addi %1292, %c13_i32_440 : i32
      %1294 = arith.index_cast %1293 : i32 to index
      %1295 = memref.load %arg5[%1294] : memref<2304xf32, #tpu.memory_space<smem>>
      %1296 = vector.broadcast %1295 : f32 to vector<18x16xf32>
      %1297 = arith.mulf %1296, %435 : vector<18x16xf32>
      %1298 = arith.addf %1291, %1297 : vector<18x16xf32>
      %c64_i32_441 = arith.constant 64 : i32
      %1299 = arith.addi %451, %c64_i32_441 : i32
      %c13_i32_442 = arith.constant 13 : i32
      %1300 = arith.addi %1299, %c13_i32_442 : i32
      %1301 = arith.index_cast %1300 : i32 to index
      %1302 = memref.load %arg5[%1301] : memref<2304xf32, #tpu.memory_space<smem>>
      %1303 = vector.broadcast %1302 : f32 to vector<18x16xf32>
      %1304 = arith.mulf %1303, %438 : vector<18x16xf32>
      %1305 = arith.addf %1298, %1304 : vector<18x16xf32>
      %c80_i32_443 = arith.constant 80 : i32
      %1306 = arith.addi %451, %c80_i32_443 : i32
      %c13_i32_444 = arith.constant 13 : i32
      %1307 = arith.addi %1306, %c13_i32_444 : i32
      %1308 = arith.index_cast %1307 : i32 to index
      %1309 = memref.load %arg5[%1308] : memref<2304xf32, #tpu.memory_space<smem>>
      %1310 = vector.broadcast %1309 : f32 to vector<18x16xf32>
      %1311 = arith.mulf %1310, %441 : vector<18x16xf32>
      %1312 = arith.addf %1305, %1311 : vector<18x16xf32>
      %c96_i32_445 = arith.constant 96 : i32
      %1313 = arith.addi %451, %c96_i32_445 : i32
      %c13_i32_446 = arith.constant 13 : i32
      %1314 = arith.addi %1313, %c13_i32_446 : i32
      %1315 = arith.index_cast %1314 : i32 to index
      %1316 = memref.load %arg5[%1315] : memref<2304xf32, #tpu.memory_space<smem>>
      %1317 = vector.broadcast %1316 : f32 to vector<18x16xf32>
      %1318 = arith.mulf %1317, %444 : vector<18x16xf32>
      %1319 = arith.addf %1312, %1318 : vector<18x16xf32>
      %c112_i32_447 = arith.constant 112 : i32
      %1320 = arith.addi %451, %c112_i32_447 : i32
      %c13_i32_448 = arith.constant 13 : i32
      %1321 = arith.addi %1320, %c13_i32_448 : i32
      %1322 = arith.index_cast %1321 : i32 to index
      %1323 = memref.load %arg5[%1322] : memref<2304xf32, #tpu.memory_space<smem>>
      %1324 = vector.broadcast %1323 : f32 to vector<18x16xf32>
      %1325 = arith.mulf %1324, %447 : vector<18x16xf32>
      %1326 = arith.addf %1319, %1325 : vector<18x16xf32>
      %c128_i32_449 = arith.constant 128 : i32
      %1327 = arith.addi %451, %c128_i32_449 : i32
      %c13_i32_450 = arith.constant 13 : i32
      %1328 = arith.addi %1327, %c13_i32_450 : i32
      %1329 = arith.index_cast %1328 : i32 to index
      %1330 = memref.load %arg5[%1329] : memref<2304xf32, #tpu.memory_space<smem>>
      %1331 = vector.broadcast %1330 : f32 to vector<18x16xf32>
      %1332 = arith.mulf %1331, %450 : vector<18x16xf32>
      %1333 = arith.addf %1326, %1332 : vector<18x16xf32>
      %c0_i32_451 = arith.constant 0 : i32
      %1334 = arith.addi %451, %c0_i32_451 : i32
      %c14_i32 = arith.constant 14 : i32
      %1335 = arith.addi %1334, %c14_i32 : i32
      %1336 = arith.index_cast %1335 : i32 to index
      %1337 = memref.load %arg5[%1336] : memref<2304xf32, #tpu.memory_space<smem>>
      %1338 = vector.broadcast %1337 : f32 to vector<18x16xf32>
      %1339 = arith.mulf %1338, %426 : vector<18x16xf32>
      %1340 = arith.addf %arg27, %1339 : vector<18x16xf32>
      %c16_i32_452 = arith.constant 16 : i32
      %1341 = arith.addi %451, %c16_i32_452 : i32
      %c14_i32_453 = arith.constant 14 : i32
      %1342 = arith.addi %1341, %c14_i32_453 : i32
      %1343 = arith.index_cast %1342 : i32 to index
      %1344 = memref.load %arg5[%1343] : memref<2304xf32, #tpu.memory_space<smem>>
      %1345 = vector.broadcast %1344 : f32 to vector<18x16xf32>
      %1346 = arith.mulf %1345, %429 : vector<18x16xf32>
      %1347 = arith.addf %1340, %1346 : vector<18x16xf32>
      %c32_i32_454 = arith.constant 32 : i32
      %1348 = arith.addi %451, %c32_i32_454 : i32
      %c14_i32_455 = arith.constant 14 : i32
      %1349 = arith.addi %1348, %c14_i32_455 : i32
      %1350 = arith.index_cast %1349 : i32 to index
      %1351 = memref.load %arg5[%1350] : memref<2304xf32, #tpu.memory_space<smem>>
      %1352 = vector.broadcast %1351 : f32 to vector<18x16xf32>
      %1353 = arith.mulf %1352, %432 : vector<18x16xf32>
      %1354 = arith.addf %1347, %1353 : vector<18x16xf32>
      %c48_i32_456 = arith.constant 48 : i32
      %1355 = arith.addi %451, %c48_i32_456 : i32
      %c14_i32_457 = arith.constant 14 : i32
      %1356 = arith.addi %1355, %c14_i32_457 : i32
      %1357 = arith.index_cast %1356 : i32 to index
      %1358 = memref.load %arg5[%1357] : memref<2304xf32, #tpu.memory_space<smem>>
      %1359 = vector.broadcast %1358 : f32 to vector<18x16xf32>
      %1360 = arith.mulf %1359, %435 : vector<18x16xf32>
      %1361 = arith.addf %1354, %1360 : vector<18x16xf32>
      %c64_i32_458 = arith.constant 64 : i32
      %1362 = arith.addi %451, %c64_i32_458 : i32
      %c14_i32_459 = arith.constant 14 : i32
      %1363 = arith.addi %1362, %c14_i32_459 : i32
      %1364 = arith.index_cast %1363 : i32 to index
      %1365 = memref.load %arg5[%1364] : memref<2304xf32, #tpu.memory_space<smem>>
      %1366 = vector.broadcast %1365 : f32 to vector<18x16xf32>
      %1367 = arith.mulf %1366, %438 : vector<18x16xf32>
      %1368 = arith.addf %1361, %1367 : vector<18x16xf32>
      %c80_i32_460 = arith.constant 80 : i32
      %1369 = arith.addi %451, %c80_i32_460 : i32
      %c14_i32_461 = arith.constant 14 : i32
      %1370 = arith.addi %1369, %c14_i32_461 : i32
      %1371 = arith.index_cast %1370 : i32 to index
      %1372 = memref.load %arg5[%1371] : memref<2304xf32, #tpu.memory_space<smem>>
      %1373 = vector.broadcast %1372 : f32 to vector<18x16xf32>
      %1374 = arith.mulf %1373, %441 : vector<18x16xf32>
      %1375 = arith.addf %1368, %1374 : vector<18x16xf32>
      %c96_i32_462 = arith.constant 96 : i32
      %1376 = arith.addi %451, %c96_i32_462 : i32
      %c14_i32_463 = arith.constant 14 : i32
      %1377 = arith.addi %1376, %c14_i32_463 : i32
      %1378 = arith.index_cast %1377 : i32 to index
      %1379 = memref.load %arg5[%1378] : memref<2304xf32, #tpu.memory_space<smem>>
      %1380 = vector.broadcast %1379 : f32 to vector<18x16xf32>
      %1381 = arith.mulf %1380, %444 : vector<18x16xf32>
      %1382 = arith.addf %1375, %1381 : vector<18x16xf32>
      %c112_i32_464 = arith.constant 112 : i32
      %1383 = arith.addi %451, %c112_i32_464 : i32
      %c14_i32_465 = arith.constant 14 : i32
      %1384 = arith.addi %1383, %c14_i32_465 : i32
      %1385 = arith.index_cast %1384 : i32 to index
      %1386 = memref.load %arg5[%1385] : memref<2304xf32, #tpu.memory_space<smem>>
      %1387 = vector.broadcast %1386 : f32 to vector<18x16xf32>
      %1388 = arith.mulf %1387, %447 : vector<18x16xf32>
      %1389 = arith.addf %1382, %1388 : vector<18x16xf32>
      %c128_i32_466 = arith.constant 128 : i32
      %1390 = arith.addi %451, %c128_i32_466 : i32
      %c14_i32_467 = arith.constant 14 : i32
      %1391 = arith.addi %1390, %c14_i32_467 : i32
      %1392 = arith.index_cast %1391 : i32 to index
      %1393 = memref.load %arg5[%1392] : memref<2304xf32, #tpu.memory_space<smem>>
      %1394 = vector.broadcast %1393 : f32 to vector<18x16xf32>
      %1395 = arith.mulf %1394, %450 : vector<18x16xf32>
      %1396 = arith.addf %1389, %1395 : vector<18x16xf32>
      %c0_i32_468 = arith.constant 0 : i32
      %1397 = arith.addi %451, %c0_i32_468 : i32
      %c15_i32 = arith.constant 15 : i32
      %1398 = arith.addi %1397, %c15_i32 : i32
      %1399 = arith.index_cast %1398 : i32 to index
      %1400 = memref.load %arg5[%1399] : memref<2304xf32, #tpu.memory_space<smem>>
      %1401 = vector.broadcast %1400 : f32 to vector<18x16xf32>
      %1402 = arith.mulf %1401, %426 : vector<18x16xf32>
      %1403 = arith.addf %arg28, %1402 : vector<18x16xf32>
      %c16_i32_469 = arith.constant 16 : i32
      %1404 = arith.addi %451, %c16_i32_469 : i32
      %c15_i32_470 = arith.constant 15 : i32
      %1405 = arith.addi %1404, %c15_i32_470 : i32
      %1406 = arith.index_cast %1405 : i32 to index
      %1407 = memref.load %arg5[%1406] : memref<2304xf32, #tpu.memory_space<smem>>
      %1408 = vector.broadcast %1407 : f32 to vector<18x16xf32>
      %1409 = arith.mulf %1408, %429 : vector<18x16xf32>
      %1410 = arith.addf %1403, %1409 : vector<18x16xf32>
      %c32_i32_471 = arith.constant 32 : i32
      %1411 = arith.addi %451, %c32_i32_471 : i32
      %c15_i32_472 = arith.constant 15 : i32
      %1412 = arith.addi %1411, %c15_i32_472 : i32
      %1413 = arith.index_cast %1412 : i32 to index
      %1414 = memref.load %arg5[%1413] : memref<2304xf32, #tpu.memory_space<smem>>
      %1415 = vector.broadcast %1414 : f32 to vector<18x16xf32>
      %1416 = arith.mulf %1415, %432 : vector<18x16xf32>
      %1417 = arith.addf %1410, %1416 : vector<18x16xf32>
      %c48_i32_473 = arith.constant 48 : i32
      %1418 = arith.addi %451, %c48_i32_473 : i32
      %c15_i32_474 = arith.constant 15 : i32
      %1419 = arith.addi %1418, %c15_i32_474 : i32
      %1420 = arith.index_cast %1419 : i32 to index
      %1421 = memref.load %arg5[%1420] : memref<2304xf32, #tpu.memory_space<smem>>
      %1422 = vector.broadcast %1421 : f32 to vector<18x16xf32>
      %1423 = arith.mulf %1422, %435 : vector<18x16xf32>
      %1424 = arith.addf %1417, %1423 : vector<18x16xf32>
      %c64_i32_475 = arith.constant 64 : i32
      %1425 = arith.addi %451, %c64_i32_475 : i32
      %c15_i32_476 = arith.constant 15 : i32
      %1426 = arith.addi %1425, %c15_i32_476 : i32
      %1427 = arith.index_cast %1426 : i32 to index
      %1428 = memref.load %arg5[%1427] : memref<2304xf32, #tpu.memory_space<smem>>
      %1429 = vector.broadcast %1428 : f32 to vector<18x16xf32>
      %1430 = arith.mulf %1429, %438 : vector<18x16xf32>
      %1431 = arith.addf %1424, %1430 : vector<18x16xf32>
      %c80_i32_477 = arith.constant 80 : i32
      %1432 = arith.addi %451, %c80_i32_477 : i32
      %c15_i32_478 = arith.constant 15 : i32
      %1433 = arith.addi %1432, %c15_i32_478 : i32
      %1434 = arith.index_cast %1433 : i32 to index
      %1435 = memref.load %arg5[%1434] : memref<2304xf32, #tpu.memory_space<smem>>
      %1436 = vector.broadcast %1435 : f32 to vector<18x16xf32>
      %1437 = arith.mulf %1436, %441 : vector<18x16xf32>
      %1438 = arith.addf %1431, %1437 : vector<18x16xf32>
      %c96_i32_479 = arith.constant 96 : i32
      %1439 = arith.addi %451, %c96_i32_479 : i32
      %c15_i32_480 = arith.constant 15 : i32
      %1440 = arith.addi %1439, %c15_i32_480 : i32
      %1441 = arith.index_cast %1440 : i32 to index
      %1442 = memref.load %arg5[%1441] : memref<2304xf32, #tpu.memory_space<smem>>
      %1443 = vector.broadcast %1442 : f32 to vector<18x16xf32>
      %1444 = arith.mulf %1443, %444 : vector<18x16xf32>
      %1445 = arith.addf %1438, %1444 : vector<18x16xf32>
      %c112_i32_481 = arith.constant 112 : i32
      %1446 = arith.addi %451, %c112_i32_481 : i32
      %c15_i32_482 = arith.constant 15 : i32
      %1447 = arith.addi %1446, %c15_i32_482 : i32
      %1448 = arith.index_cast %1447 : i32 to index
      %1449 = memref.load %arg5[%1448] : memref<2304xf32, #tpu.memory_space<smem>>
      %1450 = vector.broadcast %1449 : f32 to vector<18x16xf32>
      %1451 = arith.mulf %1450, %447 : vector<18x16xf32>
      %1452 = arith.addf %1445, %1451 : vector<18x16xf32>
      %c128_i32_483 = arith.constant 128 : i32
      %1453 = arith.addi %451, %c128_i32_483 : i32
      %c15_i32_484 = arith.constant 15 : i32
      %1454 = arith.addi %1453, %c15_i32_484 : i32
      %1455 = arith.index_cast %1454 : i32 to index
      %1456 = memref.load %arg5[%1455] : memref<2304xf32, #tpu.memory_space<smem>>
      %1457 = vector.broadcast %1456 : f32 to vector<18x16xf32>
      %1458 = arith.mulf %1457, %450 : vector<18x16xf32>
      %1459 = arith.addf %1452, %1458 : vector<18x16xf32>
      scf.yield %514, %577, %640, %703, %766, %829, %892, %955, %1018, %1081, %1144, %1207, %1270, %1333, %1396, %1459 : vector<18x16xf32>, vector<18x16xf32>, vector<18x16xf32>, vector<18x16xf32>, vector<18x16xf32>, vector<18x16xf32>, vector<18x16xf32>, vector<18x16xf32>, vector<18x16xf32>, vector<18x16xf32>, vector<18x16xf32>, vector<18x16xf32>, vector<18x16xf32>, vector<18x16xf32>, vector<18x16xf32>, vector<18x16xf32>
    }
    %c16_i32_102 = arith.constant 16 : i32
    %c1_i32_103 = arith.constant 1 : i32
    %239 = arith.subi %0, %c1_i32_103 : i32
    %240 = tpu.iota {dimensions = array<i32: 0>} : vector<18x1xi32>
    %241 = vector.broadcast %239 : i32 to vector<18x1xi32>
    %242 = arith.addi %240, %241 : vector<18x1xi32>
    %c0_i32_104 = arith.constant 0 : i32
    %243 = vector.broadcast %c0_i32_104 : i32 to vector<18x1xi32>
    %244 = arith.cmpi sge, %242, %243 : vector<18x1xi32>
    %c16_i32_105 = arith.constant 16 : i32
    %245 = vector.broadcast %c16_i32_105 : i32 to vector<18x1xi32>
    %246 = arith.cmpi slt, %242, %245 : vector<18x1xi32>
    %247 = arith.andi %244, %246 : vector<18x1xi1>
    %cst_106 = arith.constant 0.000000e+00 : f32
    %248 = vector.broadcast %cst_106 : f32 to vector<18x1xf32>
    %cst_107 = arith.constant 0.000000e+00 : f32
    %249 = vector.broadcast %cst_107 : f32 to vector<18x16xf32>
    %250 = arith.maximumf %238#0, %249 : vector<18x16xf32>
    %cst_108 = arith.constant 0.000000e+00 : f32
    %251 = vector.shape_cast %247 : vector<18x1xi1> to vector<18x1xi1>
    %252 = vector.broadcast %251 : vector<18x1xi1> to vector<18x16xi1>
    %253 = vector.broadcast %cst_108 : f32 to vector<18x16xf32>
    %254 = arith.select %252, %250, %253 : vector<18x16xi1>, vector<18x16xf32>
    %255 = tpu.concatenate %248, %254, %248 in 1 : vector<18x1xf32>, vector<18x16xf32>, vector<18x1xf32> -> vector<18x18xf32>
    %c0_109 = arith.constant 0 : index
    %c0_110 = arith.constant 0 : index
    %c0_111 = arith.constant 0 : index
    %256 = vector.load %arg11[%c0_109, %c0_110, %c0_111] : memref<16x18x18xf32, #tpu.memory_space<vmem>>, vector<1x18x18xf32>
    %257 = vector.shape_cast %256 : vector<1x18x18xf32> to vector<18x18xf32>
    %258 = vector.shape_cast %255 : vector<18x18xf32> to vector<1x18x18xf32>
    tpu.vector_store %arg11[%c0_109, %c0_110, %c0_111], %258 {strides = array<i32>} : memref<16x18x18xf32, #tpu.memory_space<vmem>>, vector<1x18x18xf32>,
    %cst_112 = arith.constant 0.000000e+00 : f32
    %259 = vector.broadcast %cst_112 : f32 to vector<18x16xf32>
    %260 = arith.maximumf %238#1, %259 : vector<18x16xf32>
    %cst_113 = arith.constant 0.000000e+00 : f32
    %261 = vector.shape_cast %247 : vector<18x1xi1> to vector<18x1xi1>
    %262 = vector.broadcast %261 : vector<18x1xi1> to vector<18x16xi1>
    %263 = vector.broadcast %cst_113 : f32 to vector<18x16xf32>
    %264 = arith.select %262, %260, %263 : vector<18x16xi1>, vector<18x16xf32>
    %265 = tpu.concatenate %248, %264, %248 in 1 : vector<18x1xf32>, vector<18x16xf32>, vector<18x1xf32> -> vector<18x18xf32>
    %c1_114 = arith.constant 1 : index
    %c0_115 = arith.constant 0 : index
    %c0_116 = arith.constant 0 : index
    %266 = vector.load %arg11[%c1_114, %c0_115, %c0_116] : memref<16x18x18xf32, #tpu.memory_space<vmem>>, vector<1x18x18xf32>
    %267 = vector.shape_cast %266 : vector<1x18x18xf32> to vector<18x18xf32>
    %268 = vector.shape_cast %265 : vector<18x18xf32> to vector<1x18x18xf32>
    tpu.vector_store %arg11[%c1_114, %c0_115, %c0_116], %268 {strides = array<i32>} : memref<16x18x18xf32, #tpu.memory_space<vmem>>, vector<1x18x18xf32>,
    %cst_117 = arith.constant 0.000000e+00 : f32
    %269 = vector.broadcast %cst_117 : f32 to vector<18x16xf32>
    %270 = arith.maximumf %238#2, %269 : vector<18x16xf32>
    %cst_118 = arith.constant 0.000000e+00 : f32
    %271 = vector.shape_cast %247 : vector<18x1xi1> to vector<18x1xi1>
    %272 = vector.broadcast %271 : vector<18x1xi1> to vector<18x16xi1>
    %273 = vector.broadcast %cst_118 : f32 to vector<18x16xf32>
    %274 = arith.select %272, %270, %273 : vector<18x16xi1>, vector<18x16xf32>
    %275 = tpu.concatenate %248, %274, %248 in 1 : vector<18x1xf32>, vector<18x16xf32>, vector<18x1xf32> -> vector<18x18xf32>
    %c2_119 = arith.constant 2 : index
    %c0_120 = arith.constant 0 : index
    %c0_121 = arith.constant 0 : index
    %276 = vector.load %arg11[%c2_119, %c0_120, %c0_121] : memref<16x18x18xf32, #tpu.memory_space<vmem>>, vector<1x18x18xf32>
    %277 = vector.shape_cast %276 : vector<1x18x18xf32> to vector<18x18xf32>
    %278 = vector.shape_cast %275 : vector<18x18xf32> to vector<1x18x18xf32>
    tpu.vector_store %arg11[%c2_119, %c0_120, %c0_121], %278 {strides = array<i32>} : memref<16x18x18xf32, #tpu.memory_space<vmem>>, vector<1x18x18xf32>,
    %cst_122 = arith.constant 0.000000e+00 : f32
    %279 = vector.broadcast %cst_122 : f32 to vector<18x16xf32>
    %280 = arith.maximumf %238#3, %279 : vector<18x16xf32>
    %cst_123 = arith.constant 0.000000e+00 : f32
    %281 = vector.shape_cast %247 : vector<18x1xi1> to vector<18x1xi1>
    %282 = vector.broadcast %281 : vector<18x1xi1> to vector<18x16xi1>
    %283 = vector.broadcast %cst_123 : f32 to vector<18x16xf32>
    %284 = arith.select %282, %280, %283 : vector<18x16xi1>, vector<18x16xf32>
    %285 = tpu.concatenate %248, %284, %248 in 1 : vector<18x1xf32>, vector<18x16xf32>, vector<18x1xf32> -> vector<18x18xf32>
    %c3_124 = arith.constant 3 : index
    %c0_125 = arith.constant 0 : index
    %c0_126 = arith.constant 0 : index
    %286 = vector.load %arg11[%c3_124, %c0_125, %c0_126] : memref<16x18x18xf32, #tpu.memory_space<vmem>>, vector<1x18x18xf32>
    %287 = vector.shape_cast %286 : vector<1x18x18xf32> to vector<18x18xf32>
    %288 = vector.shape_cast %285 : vector<18x18xf32> to vector<1x18x18xf32>
    tpu.vector_store %arg11[%c3_124, %c0_125, %c0_126], %288 {strides = array<i32>} : memref<16x18x18xf32, #tpu.memory_space<vmem>>, vector<1x18x18xf32>,
    %cst_127 = arith.constant 0.000000e+00 : f32
    %289 = vector.broadcast %cst_127 : f32 to vector<18x16xf32>
    %290 = arith.maximumf %238#4, %289 : vector<18x16xf32>
    %cst_128 = arith.constant 0.000000e+00 : f32
    %291 = vector.shape_cast %247 : vector<18x1xi1> to vector<18x1xi1>
    %292 = vector.broadcast %291 : vector<18x1xi1> to vector<18x16xi1>
    %293 = vector.broadcast %cst_128 : f32 to vector<18x16xf32>
    %294 = arith.select %292, %290, %293 : vector<18x16xi1>, vector<18x16xf32>
    %295 = tpu.concatenate %248, %294, %248 in 1 : vector<18x1xf32>, vector<18x16xf32>, vector<18x1xf32> -> vector<18x18xf32>
    %c4_129 = arith.constant 4 : index
    %c0_130 = arith.constant 0 : index
    %c0_131 = arith.constant 0 : index
    %296 = vector.load %arg11[%c4_129, %c0_130, %c0_131] : memref<16x18x18xf32, #tpu.memory_space<vmem>>, vector<1x18x18xf32>
    %297 = vector.shape_cast %296 : vector<1x18x18xf32> to vector<18x18xf32>
    %298 = vector.shape_cast %295 : vector<18x18xf32> to vector<1x18x18xf32>
    tpu.vector_store %arg11[%c4_129, %c0_130, %c0_131], %298 {strides = array<i32>} : memref<16x18x18xf32, #tpu.memory_space<vmem>>, vector<1x18x18xf32>,
    %cst_132 = arith.constant 0.000000e+00 : f32
    %299 = vector.broadcast %cst_132 : f32 to vector<18x16xf32>
    %300 = arith.maximumf %238#5, %299 : vector<18x16xf32>
    %cst_133 = arith.constant 0.000000e+00 : f32
    %301 = vector.shape_cast %247 : vector<18x1xi1> to vector<18x1xi1>
    %302 = vector.broadcast %301 : vector<18x1xi1> to vector<18x16xi1>
    %303 = vector.broadcast %cst_133 : f32 to vector<18x16xf32>
    %304 = arith.select %302, %300, %303 : vector<18x16xi1>, vector<18x16xf32>
    %305 = tpu.concatenate %248, %304, %248 in 1 : vector<18x1xf32>, vector<18x16xf32>, vector<18x1xf32> -> vector<18x18xf32>
    %c5_134 = arith.constant 5 : index
    %c0_135 = arith.constant 0 : index
    %c0_136 = arith.constant 0 : index
    %306 = vector.load %arg11[%c5_134, %c0_135, %c0_136] : memref<16x18x18xf32, #tpu.memory_space<vmem>>, vector<1x18x18xf32>
    %307 = vector.shape_cast %306 : vector<1x18x18xf32> to vector<18x18xf32>
    %308 = vector.shape_cast %305 : vector<18x18xf32> to vector<1x18x18xf32>
    tpu.vector_store %arg11[%c5_134, %c0_135, %c0_136], %308 {strides = array<i32>} : memref<16x18x18xf32, #tpu.memory_space<vmem>>, vector<1x18x18xf32>,
    %cst_137 = arith.constant 0.000000e+00 : f32
    %309 = vector.broadcast %cst_137 : f32 to vector<18x16xf32>
    %310 = arith.maximumf %238#6, %309 : vector<18x16xf32>
    %cst_138 = arith.constant 0.000000e+00 : f32
    %311 = vector.shape_cast %247 : vector<18x1xi1> to vector<18x1xi1>
    %312 = vector.broadcast %311 : vector<18x1xi1> to vector<18x16xi1>
    %313 = vector.broadcast %cst_138 : f32 to vector<18x16xf32>
    %314 = arith.select %312, %310, %313 : vector<18x16xi1>, vector<18x16xf32>
    %315 = tpu.concatenate %248, %314, %248 in 1 : vector<18x1xf32>, vector<18x16xf32>, vector<18x1xf32> -> vector<18x18xf32>
    %c6_139 = arith.constant 6 : index
    %c0_140 = arith.constant 0 : index
    %c0_141 = arith.constant 0 : index
    %316 = vector.load %arg11[%c6_139, %c0_140, %c0_141] : memref<16x18x18xf32, #tpu.memory_space<vmem>>, vector<1x18x18xf32>
    %317 = vector.shape_cast %316 : vector<1x18x18xf32> to vector<18x18xf32>
    %318 = vector.shape_cast %315 : vector<18x18xf32> to vector<1x18x18xf32>
    tpu.vector_store %arg11[%c6_139, %c0_140, %c0_141], %318 {strides = array<i32>} : memref<16x18x18xf32, #tpu.memory_space<vmem>>, vector<1x18x18xf32>,
    %cst_142 = arith.constant 0.000000e+00 : f32
    %319 = vector.broadcast %cst_142 : f32 to vector<18x16xf32>
    %320 = arith.maximumf %238#7, %319 : vector<18x16xf32>
    %cst_143 = arith.constant 0.000000e+00 : f32
    %321 = vector.shape_cast %247 : vector<18x1xi1> to vector<18x1xi1>
    %322 = vector.broadcast %321 : vector<18x1xi1> to vector<18x16xi1>
    %323 = vector.broadcast %cst_143 : f32 to vector<18x16xf32>
    %324 = arith.select %322, %320, %323 : vector<18x16xi1>, vector<18x16xf32>
    %325 = tpu.concatenate %248, %324, %248 in 1 : vector<18x1xf32>, vector<18x16xf32>, vector<18x1xf32> -> vector<18x18xf32>
    %c7_144 = arith.constant 7 : index
    %c0_145 = arith.constant 0 : index
    %c0_146 = arith.constant 0 : index
    %326 = vector.load %arg11[%c7_144, %c0_145, %c0_146] : memref<16x18x18xf32, #tpu.memory_space<vmem>>, vector<1x18x18xf32>
    %327 = vector.shape_cast %326 : vector<1x18x18xf32> to vector<18x18xf32>
    %328 = vector.shape_cast %325 : vector<18x18xf32> to vector<1x18x18xf32>
    tpu.vector_store %arg11[%c7_144, %c0_145, %c0_146], %328 {strides = array<i32>} : memref<16x18x18xf32, #tpu.memory_space<vmem>>, vector<1x18x18xf32>,
    %cst_147 = arith.constant 0.000000e+00 : f32
    %329 = vector.broadcast %cst_147 : f32 to vector<18x16xf32>
    %330 = arith.maximumf %238#8, %329 : vector<18x16xf32>
    %cst_148 = arith.constant 0.000000e+00 : f32
    %331 = vector.shape_cast %247 : vector<18x1xi1> to vector<18x1xi1>
    %332 = vector.broadcast %331 : vector<18x1xi1> to vector<18x16xi1>
    %333 = vector.broadcast %cst_148 : f32 to vector<18x16xf32>
    %334 = arith.select %332, %330, %333 : vector<18x16xi1>, vector<18x16xf32>
    %335 = tpu.concatenate %248, %334, %248 in 1 : vector<18x1xf32>, vector<18x16xf32>, vector<18x1xf32> -> vector<18x18xf32>
    %c8_149 = arith.constant 8 : index
    %c0_150 = arith.constant 0 : index
    %c0_151 = arith.constant 0 : index
    %336 = vector.load %arg11[%c8_149, %c0_150, %c0_151] : memref<16x18x18xf32, #tpu.memory_space<vmem>>, vector<1x18x18xf32>
    %337 = vector.shape_cast %336 : vector<1x18x18xf32> to vector<18x18xf32>
    %338 = vector.shape_cast %335 : vector<18x18xf32> to vector<1x18x18xf32>
    tpu.vector_store %arg11[%c8_149, %c0_150, %c0_151], %338 {strides = array<i32>} : memref<16x18x18xf32, #tpu.memory_space<vmem>>, vector<1x18x18xf32>,
    %cst_152 = arith.constant 0.000000e+00 : f32
    %339 = vector.broadcast %cst_152 : f32 to vector<18x16xf32>
    %340 = arith.maximumf %238#9, %339 : vector<18x16xf32>
    %cst_153 = arith.constant 0.000000e+00 : f32
    %341 = vector.shape_cast %247 : vector<18x1xi1> to vector<18x1xi1>
    %342 = vector.broadcast %341 : vector<18x1xi1> to vector<18x16xi1>
    %343 = vector.broadcast %cst_153 : f32 to vector<18x16xf32>
    %344 = arith.select %342, %340, %343 : vector<18x16xi1>, vector<18x16xf32>
    %345 = tpu.concatenate %248, %344, %248 in 1 : vector<18x1xf32>, vector<18x16xf32>, vector<18x1xf32> -> vector<18x18xf32>
    %c9_154 = arith.constant 9 : index
    %c0_155 = arith.constant 0 : index
    %c0_156 = arith.constant 0 : index
    %346 = vector.load %arg11[%c9_154, %c0_155, %c0_156] : memref<16x18x18xf32, #tpu.memory_space<vmem>>, vector<1x18x18xf32>
    %347 = vector.shape_cast %346 : vector<1x18x18xf32> to vector<18x18xf32>
    %348 = vector.shape_cast %345 : vector<18x18xf32> to vector<1x18x18xf32>
    tpu.vector_store %arg11[%c9_154, %c0_155, %c0_156], %348 {strides = array<i32>} : memref<16x18x18xf32, #tpu.memory_space<vmem>>, vector<1x18x18xf32>,
    %cst_157 = arith.constant 0.000000e+00 : f32
    %349 = vector.broadcast %cst_157 : f32 to vector<18x16xf32>
    %350 = arith.maximumf %238#10, %349 : vector<18x16xf32>
    %cst_158 = arith.constant 0.000000e+00 : f32
    %351 = vector.shape_cast %247 : vector<18x1xi1> to vector<18x1xi1>
    %352 = vector.broadcast %351 : vector<18x1xi1> to vector<18x16xi1>
    %353 = vector.broadcast %cst_158 : f32 to vector<18x16xf32>
    %354 = arith.select %352, %350, %353 : vector<18x16xi1>, vector<18x16xf32>
    %355 = tpu.concatenate %248, %354, %248 in 1 : vector<18x1xf32>, vector<18x16xf32>, vector<18x1xf32> -> vector<18x18xf32>
    %c10_159 = arith.constant 10 : index
    %c0_160 = arith.constant 0 : index
    %c0_161 = arith.constant 0 : index
    %356 = vector.load %arg11[%c10_159, %c0_160, %c0_161] : memref<16x18x18xf32, #tpu.memory_space<vmem>>, vector<1x18x18xf32>
    %357 = vector.shape_cast %356 : vector<1x18x18xf32> to vector<18x18xf32>
    %358 = vector.shape_cast %355 : vector<18x18xf32> to vector<1x18x18xf32>
    tpu.vector_store %arg11[%c10_159, %c0_160, %c0_161], %358 {strides = array<i32>} : memref<16x18x18xf32, #tpu.memory_space<vmem>>, vector<1x18x18xf32>,
    %cst_162 = arith.constant 0.000000e+00 : f32
    %359 = vector.broadcast %cst_162 : f32 to vector<18x16xf32>
    %360 = arith.maximumf %238#11, %359 : vector<18x16xf32>
    %cst_163 = arith.constant 0.000000e+00 : f32
    %361 = vector.shape_cast %247 : vector<18x1xi1> to vector<18x1xi1>
    %362 = vector.broadcast %361 : vector<18x1xi1> to vector<18x16xi1>
    %363 = vector.broadcast %cst_163 : f32 to vector<18x16xf32>
    %364 = arith.select %362, %360, %363 : vector<18x16xi1>, vector<18x16xf32>
    %365 = tpu.concatenate %248, %364, %248 in 1 : vector<18x1xf32>, vector<18x16xf32>, vector<18x1xf32> -> vector<18x18xf32>
    %c11_164 = arith.constant 11 : index
    %c0_165 = arith.constant 0 : index
    %c0_166 = arith.constant 0 : index
    %366 = vector.load %arg11[%c11_164, %c0_165, %c0_166] : memref<16x18x18xf32, #tpu.memory_space<vmem>>, vector<1x18x18xf32>
    %367 = vector.shape_cast %366 : vector<1x18x18xf32> to vector<18x18xf32>
    %368 = vector.shape_cast %365 : vector<18x18xf32> to vector<1x18x18xf32>
    tpu.vector_store %arg11[%c11_164, %c0_165, %c0_166], %368 {strides = array<i32>} : memref<16x18x18xf32, #tpu.memory_space<vmem>>, vector<1x18x18xf32>,
    %cst_167 = arith.constant 0.000000e+00 : f32
    %369 = vector.broadcast %cst_167 : f32 to vector<18x16xf32>
    %370 = arith.maximumf %238#12, %369 : vector<18x16xf32>
    %cst_168 = arith.constant 0.000000e+00 : f32
    %371 = vector.shape_cast %247 : vector<18x1xi1> to vector<18x1xi1>
    %372 = vector.broadcast %371 : vector<18x1xi1> to vector<18x16xi1>
    %373 = vector.broadcast %cst_168 : f32 to vector<18x16xf32>
    %374 = arith.select %372, %370, %373 : vector<18x16xi1>, vector<18x16xf32>
    %375 = tpu.concatenate %248, %374, %248 in 1 : vector<18x1xf32>, vector<18x16xf32>, vector<18x1xf32> -> vector<18x18xf32>
    %c12_169 = arith.constant 12 : index
    %c0_170 = arith.constant 0 : index
    %c0_171 = arith.constant 0 : index
    %376 = vector.load %arg11[%c12_169, %c0_170, %c0_171] : memref<16x18x18xf32, #tpu.memory_space<vmem>>, vector<1x18x18xf32>
    %377 = vector.shape_cast %376 : vector<1x18x18xf32> to vector<18x18xf32>
    %378 = vector.shape_cast %375 : vector<18x18xf32> to vector<1x18x18xf32>
    tpu.vector_store %arg11[%c12_169, %c0_170, %c0_171], %378 {strides = array<i32>} : memref<16x18x18xf32, #tpu.memory_space<vmem>>, vector<1x18x18xf32>,
    %cst_172 = arith.constant 0.000000e+00 : f32
    %379 = vector.broadcast %cst_172 : f32 to vector<18x16xf32>
    %380 = arith.maximumf %238#13, %379 : vector<18x16xf32>
    %cst_173 = arith.constant 0.000000e+00 : f32
    %381 = vector.shape_cast %247 : vector<18x1xi1> to vector<18x1xi1>
    %382 = vector.broadcast %381 : vector<18x1xi1> to vector<18x16xi1>
    %383 = vector.broadcast %cst_173 : f32 to vector<18x16xf32>
    %384 = arith.select %382, %380, %383 : vector<18x16xi1>, vector<18x16xf32>
    %385 = tpu.concatenate %248, %384, %248 in 1 : vector<18x1xf32>, vector<18x16xf32>, vector<18x1xf32> -> vector<18x18xf32>
    %c13_174 = arith.constant 13 : index
    %c0_175 = arith.constant 0 : index
    %c0_176 = arith.constant 0 : index
    %386 = vector.load %arg11[%c13_174, %c0_175, %c0_176] : memref<16x18x18xf32, #tpu.memory_space<vmem>>, vector<1x18x18xf32>
    %387 = vector.shape_cast %386 : vector<1x18x18xf32> to vector<18x18xf32>
    %388 = vector.shape_cast %385 : vector<18x18xf32> to vector<1x18x18xf32>
    tpu.vector_store %arg11[%c13_174, %c0_175, %c0_176], %388 {strides = array<i32>} : memref<16x18x18xf32, #tpu.memory_space<vmem>>, vector<1x18x18xf32>,
    %cst_177 = arith.constant 0.000000e+00 : f32
    %389 = vector.broadcast %cst_177 : f32 to vector<18x16xf32>
    %390 = arith.maximumf %238#14, %389 : vector<18x16xf32>
    %cst_178 = arith.constant 0.000000e+00 : f32
    %391 = vector.shape_cast %247 : vector<18x1xi1> to vector<18x1xi1>
    %392 = vector.broadcast %391 : vector<18x1xi1> to vector<18x16xi1>
    %393 = vector.broadcast %cst_178 : f32 to vector<18x16xf32>
    %394 = arith.select %392, %390, %393 : vector<18x16xi1>, vector<18x16xf32>
    %395 = tpu.concatenate %248, %394, %248 in 1 : vector<18x1xf32>, vector<18x16xf32>, vector<18x1xf32> -> vector<18x18xf32>
    %c14_179 = arith.constant 14 : index
    %c0_180 = arith.constant 0 : index
    %c0_181 = arith.constant 0 : index
    %396 = vector.load %arg11[%c14_179, %c0_180, %c0_181] : memref<16x18x18xf32, #tpu.memory_space<vmem>>, vector<1x18x18xf32>
    %397 = vector.shape_cast %396 : vector<1x18x18xf32> to vector<18x18xf32>
    %398 = vector.shape_cast %395 : vector<18x18xf32> to vector<1x18x18xf32>
    tpu.vector_store %arg11[%c14_179, %c0_180, %c0_181], %398 {strides = array<i32>} : memref<16x18x18xf32, #tpu.memory_space<vmem>>, vector<1x18x18xf32>,
    %cst_182 = arith.constant 0.000000e+00 : f32
    %399 = vector.broadcast %cst_182 : f32 to vector<18x16xf32>
    %400 = arith.maximumf %238#15, %399 : vector<18x16xf32>
    %cst_183 = arith.constant 0.000000e+00 : f32
    %401 = vector.shape_cast %247 : vector<18x1xi1> to vector<18x1xi1>
    %402 = vector.broadcast %401 : vector<18x1xi1> to vector<18x16xi1>
    %403 = vector.broadcast %cst_183 : f32 to vector<18x16xf32>
    %404 = arith.select %402, %400, %403 : vector<18x16xi1>, vector<18x16xf32>
    %405 = tpu.concatenate %248, %404, %248 in 1 : vector<18x1xf32>, vector<18x16xf32>, vector<18x1xf32> -> vector<18x18xf32>
    %c15_184 = arith.constant 15 : index
    %c0_185 = arith.constant 0 : index
    %c0_186 = arith.constant 0 : index
    %406 = vector.load %arg11[%c15_184, %c0_185, %c0_186] : memref<16x18x18xf32, #tpu.memory_space<vmem>>, vector<1x18x18xf32>
    %407 = vector.shape_cast %406 : vector<1x18x18xf32> to vector<18x18xf32>
    %408 = vector.shape_cast %405 : vector<18x18xf32> to vector<1x18x18xf32>
    tpu.vector_store %arg11[%c15_184, %c0_185, %c0_186], %408 {strides = array<i32>} : memref<16x18x18xf32, #tpu.memory_space<vmem>>, vector<1x18x18xf32>,
    %c0_187 = arith.constant 0 : index
    %409 = memref.load %arg8[%c0_187] : memref<3xf32, #tpu.memory_space<smem>>
    %410 = vector.broadcast %409 : f32 to vector<16x16xf32>
    %c1_188 = arith.constant 1 : index
    %411 = memref.load %arg8[%c1_188] : memref<3xf32, #tpu.memory_space<smem>>
    %412 = vector.broadcast %411 : f32 to vector<16x16xf32>
    %c2_189 = arith.constant 2 : index
    %413 = memref.load %arg8[%c2_189] : memref<3xf32, #tpu.memory_space<smem>>
    %414 = vector.broadcast %413 : f32 to vector<16x16xf32>
    %c0_i32_190 = arith.constant 0 : i32
    %c16_i32_191 = arith.constant 16 : i32
    %415 = arith.addi %c0_i32_190, %c16_i32_191 : i32
    %c1_i32_192 = arith.constant 1 : i32
    %416:3 = scf.for %arg12 = %c0_i32_190 to %415 step %c1_i32_192 iter_args(%arg13 = %410, %arg14 = %412, %arg15 = %414) -> (vector<16x16xf32>, vector<16x16xf32>, vector<16x16xf32>)  : i32 {
      %424 = arith.index_cast %arg12 : i32 to index
      %c0_198 = arith.constant 0 : index
      %c0_199 = arith.constant 0 : index
      %425 = vector.load %arg11[%424, %c0_198, %c0_199] : memref<16x18x18xf32, #tpu.memory_space<vmem>>, vector<1x16x16xf32>
      %426 = vector.shape_cast %425 : vector<1x16x16xf32> to vector<16x16xf32>
      %427 = arith.index_cast %arg12 : i32 to index
      %c0_200 = arith.constant 0 : index
      %c1_201 = arith.constant 1 : index
      %428 = vector.load %arg11[%427, %c0_200, %c1_201] : memref<16x18x18xf32, #tpu.memory_space<vmem>>, vector<1x16x16xf32>
      %429 = vector.shape_cast %428 : vector<1x16x16xf32> to vector<16x16xf32>
      %430 = arith.index_cast %arg12 : i32 to index
      %c0_202 = arith.constant 0 : index
      %c2_203 = arith.constant 2 : index
      %431 = vector.load %arg11[%430, %c0_202, %c2_203] : memref<16x18x18xf32, #tpu.memory_space<vmem>>, vector<1x16x16xf32>
      %432 = vector.shape_cast %431 : vector<1x16x16xf32> to vector<16x16xf32>
      %433 = arith.index_cast %arg12 : i32 to index
      %c1_204 = arith.constant 1 : index
      %c0_205 = arith.constant 0 : index
      %434 = vector.load %arg11[%433, %c1_204, %c0_205] : memref<16x18x18xf32, #tpu.memory_space<vmem>>, vector<1x16x16xf32>
      %435 = vector.shape_cast %434 : vector<1x16x16xf32> to vector<16x16xf32>
      %436 = arith.index_cast %arg12 : i32 to index
      %c1_206 = arith.constant 1 : index
      %c1_207 = arith.constant 1 : index
      %437 = vector.load %arg11[%436, %c1_206, %c1_207] : memref<16x18x18xf32, #tpu.memory_space<vmem>>, vector<1x16x16xf32>
      %438 = vector.shape_cast %437 : vector<1x16x16xf32> to vector<16x16xf32>
      %439 = arith.index_cast %arg12 : i32 to index
      %c1_208 = arith.constant 1 : index
      %c2_209 = arith.constant 2 : index
      %440 = vector.load %arg11[%439, %c1_208, %c2_209] : memref<16x18x18xf32, #tpu.memory_space<vmem>>, vector<1x16x16xf32>
      %441 = vector.shape_cast %440 : vector<1x16x16xf32> to vector<16x16xf32>
      %442 = arith.index_cast %arg12 : i32 to index
      %c2_210 = arith.constant 2 : index
      %c0_211 = arith.constant 0 : index
      %443 = vector.load %arg11[%442, %c2_210, %c0_211] : memref<16x18x18xf32, #tpu.memory_space<vmem>>, vector<1x16x16xf32>
      %444 = vector.shape_cast %443 : vector<1x16x16xf32> to vector<16x16xf32>
      %445 = arith.index_cast %arg12 : i32 to index
      %c2_212 = arith.constant 2 : index
      %c1_213 = arith.constant 1 : index
      %446 = vector.load %arg11[%445, %c2_212, %c1_213] : memref<16x18x18xf32, #tpu.memory_space<vmem>>, vector<1x16x16xf32>
      %447 = vector.shape_cast %446 : vector<1x16x16xf32> to vector<16x16xf32>
      %448 = arith.index_cast %arg12 : i32 to index
      %c2_214 = arith.constant 2 : index
      %c2_215 = arith.constant 2 : index
      %449 = vector.load %arg11[%448, %c2_214, %c2_215] : memref<16x18x18xf32, #tpu.memory_space<vmem>>, vector<1x16x16xf32>
      %450 = vector.shape_cast %449 : vector<1x16x16xf32> to vector<16x16xf32>
      %c27_i32 = arith.constant 27 : i32
      %451 = arith.muli %arg12, %c27_i32 : i32
      %c0_i32_216 = arith.constant 0 : i32
      %452 = arith.addi %451, %c0_i32_216 : i32
      %c0_i32_217 = arith.constant 0 : i32
      %453 = arith.addi %452, %c0_i32_217 : i32
      %454 = arith.index_cast %453 : i32 to index
      %455 = memref.load %arg7[%454] : memref<432xf32, #tpu.memory_space<smem>>
      %456 = vector.broadcast %455 : f32 to vector<16x16xf32>
      %457 = arith.mulf %456, %426 : vector<16x16xf32>
      %458 = arith.addf %arg13, %457 : vector<16x16xf32>
      %c3_i32_218 = arith.constant 3 : i32
      %459 = arith.addi %451, %c3_i32_218 : i32
      %c0_i32_219 = arith.constant 0 : i32
      %460 = arith.addi %459, %c0_i32_219 : i32
      %461 = arith.index_cast %460 : i32 to index
      %462 = memref.load %arg7[%461] : memref<432xf32, #tpu.memory_space<smem>>
      %463 = vector.broadcast %462 : f32 to vector<16x16xf32>
      %464 = arith.mulf %463, %429 : vector<16x16xf32>
      %465 = arith.addf %458, %464 : vector<16x16xf32>
      %c6_i32 = arith.constant 6 : i32
      %466 = arith.addi %451, %c6_i32 : i32
      %c0_i32_220 = arith.constant 0 : i32
      %467 = arith.addi %466, %c0_i32_220 : i32
      %468 = arith.index_cast %467 : i32 to index
      %469 = memref.load %arg7[%468] : memref<432xf32, #tpu.memory_space<smem>>
      %470 = vector.broadcast %469 : f32 to vector<16x16xf32>
      %471 = arith.mulf %470, %432 : vector<16x16xf32>
      %472 = arith.addf %465, %471 : vector<16x16xf32>
      %c9_i32 = arith.constant 9 : i32
      %473 = arith.addi %451, %c9_i32 : i32
      %c0_i32_221 = arith.constant 0 : i32
      %474 = arith.addi %473, %c0_i32_221 : i32
      %475 = arith.index_cast %474 : i32 to index
      %476 = memref.load %arg7[%475] : memref<432xf32, #tpu.memory_space<smem>>
      %477 = vector.broadcast %476 : f32 to vector<16x16xf32>
      %478 = arith.mulf %477, %435 : vector<16x16xf32>
      %479 = arith.addf %472, %478 : vector<16x16xf32>
      %c12_i32 = arith.constant 12 : i32
      %480 = arith.addi %451, %c12_i32 : i32
      %c0_i32_222 = arith.constant 0 : i32
      %481 = arith.addi %480, %c0_i32_222 : i32
      %482 = arith.index_cast %481 : i32 to index
      %483 = memref.load %arg7[%482] : memref<432xf32, #tpu.memory_space<smem>>
      %484 = vector.broadcast %483 : f32 to vector<16x16xf32>
      %485 = arith.mulf %484, %438 : vector<16x16xf32>
      %486 = arith.addf %479, %485 : vector<16x16xf32>
      %c15_i32 = arith.constant 15 : i32
      %487 = arith.addi %451, %c15_i32 : i32
      %c0_i32_223 = arith.constant 0 : i32
      %488 = arith.addi %487, %c0_i32_223 : i32
      %489 = arith.index_cast %488 : i32 to index
      %490 = memref.load %arg7[%489] : memref<432xf32, #tpu.memory_space<smem>>
      %491 = vector.broadcast %490 : f32 to vector<16x16xf32>
      %492 = arith.mulf %491, %441 : vector<16x16xf32>
      %493 = arith.addf %486, %492 : vector<16x16xf32>
      %c18_i32 = arith.constant 18 : i32
      %494 = arith.addi %451, %c18_i32 : i32
      %c0_i32_224 = arith.constant 0 : i32
      %495 = arith.addi %494, %c0_i32_224 : i32
      %496 = arith.index_cast %495 : i32 to index
      %497 = memref.load %arg7[%496] : memref<432xf32, #tpu.memory_space<smem>>
      %498 = vector.broadcast %497 : f32 to vector<16x16xf32>
      %499 = arith.mulf %498, %444 : vector<16x16xf32>
      %500 = arith.addf %493, %499 : vector<16x16xf32>
      %c21_i32 = arith.constant 21 : i32
      %501 = arith.addi %451, %c21_i32 : i32
      %c0_i32_225 = arith.constant 0 : i32
      %502 = arith.addi %501, %c0_i32_225 : i32
      %503 = arith.index_cast %502 : i32 to index
      %504 = memref.load %arg7[%503] : memref<432xf32, #tpu.memory_space<smem>>
      %505 = vector.broadcast %504 : f32 to vector<16x16xf32>
      %506 = arith.mulf %505, %447 : vector<16x16xf32>
      %507 = arith.addf %500, %506 : vector<16x16xf32>
      %c24_i32 = arith.constant 24 : i32
      %508 = arith.addi %451, %c24_i32 : i32
      %c0_i32_226 = arith.constant 0 : i32
      %509 = arith.addi %508, %c0_i32_226 : i32
      %510 = arith.index_cast %509 : i32 to index
      %511 = memref.load %arg7[%510] : memref<432xf32, #tpu.memory_space<smem>>
      %512 = vector.broadcast %511 : f32 to vector<16x16xf32>
      %513 = arith.mulf %512, %450 : vector<16x16xf32>
      %514 = arith.addf %507, %513 : vector<16x16xf32>
      %c0_i32_227 = arith.constant 0 : i32
      %515 = arith.addi %451, %c0_i32_227 : i32
      %c1_i32_228 = arith.constant 1 : i32
      %516 = arith.addi %515, %c1_i32_228 : i32
      %517 = arith.index_cast %516 : i32 to index
      %518 = memref.load %arg7[%517] : memref<432xf32, #tpu.memory_space<smem>>
      %519 = vector.broadcast %518 : f32 to vector<16x16xf32>
      %520 = arith.mulf %519, %426 : vector<16x16xf32>
      %521 = arith.addf %arg14, %520 : vector<16x16xf32>
      %c3_i32_229 = arith.constant 3 : i32
      %522 = arith.addi %451, %c3_i32_229 : i32
      %c1_i32_230 = arith.constant 1 : i32
      %523 = arith.addi %522, %c1_i32_230 : i32
      %524 = arith.index_cast %523 : i32 to index
      %525 = memref.load %arg7[%524] : memref<432xf32, #tpu.memory_space<smem>>
      %526 = vector.broadcast %525 : f32 to vector<16x16xf32>
      %527 = arith.mulf %526, %429 : vector<16x16xf32>
      %528 = arith.addf %521, %527 : vector<16x16xf32>
      %c6_i32_231 = arith.constant 6 : i32
      %529 = arith.addi %451, %c6_i32_231 : i32
      %c1_i32_232 = arith.constant 1 : i32
      %530 = arith.addi %529, %c1_i32_232 : i32
      %531 = arith.index_cast %530 : i32 to index
      %532 = memref.load %arg7[%531] : memref<432xf32, #tpu.memory_space<smem>>
      %533 = vector.broadcast %532 : f32 to vector<16x16xf32>
      %534 = arith.mulf %533, %432 : vector<16x16xf32>
      %535 = arith.addf %528, %534 : vector<16x16xf32>
      %c9_i32_233 = arith.constant 9 : i32
      %536 = arith.addi %451, %c9_i32_233 : i32
      %c1_i32_234 = arith.constant 1 : i32
      %537 = arith.addi %536, %c1_i32_234 : i32
      %538 = arith.index_cast %537 : i32 to index
      %539 = memref.load %arg7[%538] : memref<432xf32, #tpu.memory_space<smem>>
      %540 = vector.broadcast %539 : f32 to vector<16x16xf32>
      %541 = arith.mulf %540, %435 : vector<16x16xf32>
      %542 = arith.addf %535, %541 : vector<16x16xf32>
      %c12_i32_235 = arith.constant 12 : i32
      %543 = arith.addi %451, %c12_i32_235 : i32
      %c1_i32_236 = arith.constant 1 : i32
      %544 = arith.addi %543, %c1_i32_236 : i32
      %545 = arith.index_cast %544 : i32 to index
      %546 = memref.load %arg7[%545] : memref<432xf32, #tpu.memory_space<smem>>
      %547 = vector.broadcast %546 : f32 to vector<16x16xf32>
      %548 = arith.mulf %547, %438 : vector<16x16xf32>
      %549 = arith.addf %542, %548 : vector<16x16xf32>
      %c15_i32_237 = arith.constant 15 : i32
      %550 = arith.addi %451, %c15_i32_237 : i32
      %c1_i32_238 = arith.constant 1 : i32
      %551 = arith.addi %550, %c1_i32_238 : i32
      %552 = arith.index_cast %551 : i32 to index
      %553 = memref.load %arg7[%552] : memref<432xf32, #tpu.memory_space<smem>>
      %554 = vector.broadcast %553 : f32 to vector<16x16xf32>
      %555 = arith.mulf %554, %441 : vector<16x16xf32>
      %556 = arith.addf %549, %555 : vector<16x16xf32>
      %c18_i32_239 = arith.constant 18 : i32
      %557 = arith.addi %451, %c18_i32_239 : i32
      %c1_i32_240 = arith.constant 1 : i32
      %558 = arith.addi %557, %c1_i32_240 : i32
      %559 = arith.index_cast %558 : i32 to index
      %560 = memref.load %arg7[%559] : memref<432xf32, #tpu.memory_space<smem>>
      %561 = vector.broadcast %560 : f32 to vector<16x16xf32>
      %562 = arith.mulf %561, %444 : vector<16x16xf32>
      %563 = arith.addf %556, %562 : vector<16x16xf32>
      %c21_i32_241 = arith.constant 21 : i32
      %564 = arith.addi %451, %c21_i32_241 : i32
      %c1_i32_242 = arith.constant 1 : i32
      %565 = arith.addi %564, %c1_i32_242 : i32
      %566 = arith.index_cast %565 : i32 to index
      %567 = memref.load %arg7[%566] : memref<432xf32, #tpu.memory_space<smem>>
      %568 = vector.broadcast %567 : f32 to vector<16x16xf32>
      %569 = arith.mulf %568, %447 : vector<16x16xf32>
      %570 = arith.addf %563, %569 : vector<16x16xf32>
      %c24_i32_243 = arith.constant 24 : i32
      %571 = arith.addi %451, %c24_i32_243 : i32
      %c1_i32_244 = arith.constant 1 : i32
      %572 = arith.addi %571, %c1_i32_244 : i32
      %573 = arith.index_cast %572 : i32 to index
      %574 = memref.load %arg7[%573] : memref<432xf32, #tpu.memory_space<smem>>
      %575 = vector.broadcast %574 : f32 to vector<16x16xf32>
      %576 = arith.mulf %575, %450 : vector<16x16xf32>
      %577 = arith.addf %570, %576 : vector<16x16xf32>
      %c0_i32_245 = arith.constant 0 : i32
      %578 = arith.addi %451, %c0_i32_245 : i32
      %c2_i32_246 = arith.constant 2 : i32
      %579 = arith.addi %578, %c2_i32_246 : i32
      %580 = arith.index_cast %579 : i32 to index
      %581 = memref.load %arg7[%580] : memref<432xf32, #tpu.memory_space<smem>>
      %582 = vector.broadcast %581 : f32 to vector<16x16xf32>
      %583 = arith.mulf %582, %426 : vector<16x16xf32>
      %584 = arith.addf %arg15, %583 : vector<16x16xf32>
      %c3_i32_247 = arith.constant 3 : i32
      %585 = arith.addi %451, %c3_i32_247 : i32
      %c2_i32_248 = arith.constant 2 : i32
      %586 = arith.addi %585, %c2_i32_248 : i32
      %587 = arith.index_cast %586 : i32 to index
      %588 = memref.load %arg7[%587] : memref<432xf32, #tpu.memory_space<smem>>
      %589 = vector.broadcast %588 : f32 to vector<16x16xf32>
      %590 = arith.mulf %589, %429 : vector<16x16xf32>
      %591 = arith.addf %584, %590 : vector<16x16xf32>
      %c6_i32_249 = arith.constant 6 : i32
      %592 = arith.addi %451, %c6_i32_249 : i32
      %c2_i32_250 = arith.constant 2 : i32
      %593 = arith.addi %592, %c2_i32_250 : i32
      %594 = arith.index_cast %593 : i32 to index
      %595 = memref.load %arg7[%594] : memref<432xf32, #tpu.memory_space<smem>>
      %596 = vector.broadcast %595 : f32 to vector<16x16xf32>
      %597 = arith.mulf %596, %432 : vector<16x16xf32>
      %598 = arith.addf %591, %597 : vector<16x16xf32>
      %c9_i32_251 = arith.constant 9 : i32
      %599 = arith.addi %451, %c9_i32_251 : i32
      %c2_i32_252 = arith.constant 2 : i32
      %600 = arith.addi %599, %c2_i32_252 : i32
      %601 = arith.index_cast %600 : i32 to index
      %602 = memref.load %arg7[%601] : memref<432xf32, #tpu.memory_space<smem>>
      %603 = vector.broadcast %602 : f32 to vector<16x16xf32>
      %604 = arith.mulf %603, %435 : vector<16x16xf32>
      %605 = arith.addf %598, %604 : vector<16x16xf32>
      %c12_i32_253 = arith.constant 12 : i32
      %606 = arith.addi %451, %c12_i32_253 : i32
      %c2_i32_254 = arith.constant 2 : i32
      %607 = arith.addi %606, %c2_i32_254 : i32
      %608 = arith.index_cast %607 : i32 to index
      %609 = memref.load %arg7[%608] : memref<432xf32, #tpu.memory_space<smem>>
      %610 = vector.broadcast %609 : f32 to vector<16x16xf32>
      %611 = arith.mulf %610, %438 : vector<16x16xf32>
      %612 = arith.addf %605, %611 : vector<16x16xf32>
      %c15_i32_255 = arith.constant 15 : i32
      %613 = arith.addi %451, %c15_i32_255 : i32
      %c2_i32_256 = arith.constant 2 : i32
      %614 = arith.addi %613, %c2_i32_256 : i32
      %615 = arith.index_cast %614 : i32 to index
      %616 = memref.load %arg7[%615] : memref<432xf32, #tpu.memory_space<smem>>
      %617 = vector.broadcast %616 : f32 to vector<16x16xf32>
      %618 = arith.mulf %617, %441 : vector<16x16xf32>
      %619 = arith.addf %612, %618 : vector<16x16xf32>
      %c18_i32_257 = arith.constant 18 : i32
      %620 = arith.addi %451, %c18_i32_257 : i32
      %c2_i32_258 = arith.constant 2 : i32
      %621 = arith.addi %620, %c2_i32_258 : i32
      %622 = arith.index_cast %621 : i32 to index
      %623 = memref.load %arg7[%622] : memref<432xf32, #tpu.memory_space<smem>>
      %624 = vector.broadcast %623 : f32 to vector<16x16xf32>
      %625 = arith.mulf %624, %444 : vector<16x16xf32>
      %626 = arith.addf %619, %625 : vector<16x16xf32>
      %c21_i32_259 = arith.constant 21 : i32
      %627 = arith.addi %451, %c21_i32_259 : i32
      %c2_i32_260 = arith.constant 2 : i32
      %628 = arith.addi %627, %c2_i32_260 : i32
      %629 = arith.index_cast %628 : i32 to index
      %630 = memref.load %arg7[%629] : memref<432xf32, #tpu.memory_space<smem>>
      %631 = vector.broadcast %630 : f32 to vector<16x16xf32>
      %632 = arith.mulf %631, %447 : vector<16x16xf32>
      %633 = arith.addf %626, %632 : vector<16x16xf32>
      %c24_i32_261 = arith.constant 24 : i32
      %634 = arith.addi %451, %c24_i32_261 : i32
      %c2_i32_262 = arith.constant 2 : i32
      %635 = arith.addi %634, %c2_i32_262 : i32
      %636 = arith.index_cast %635 : i32 to index
      %637 = memref.load %arg7[%636] : memref<432xf32, #tpu.memory_space<smem>>
      %638 = vector.broadcast %637 : f32 to vector<16x16xf32>
      %639 = arith.mulf %638, %450 : vector<16x16xf32>
      %640 = arith.addf %633, %639 : vector<16x16xf32>
      scf.yield %514, %577, %640 : vector<16x16xf32>, vector<16x16xf32>, vector<16x16xf32>
    }
    %c16_i32_193 = arith.constant 16 : i32
    %417 = vector.shape_cast %416#0 : vector<16x16xf32> to vector<1x16x16xf32>
    %418 = vector.shape_cast %416#1 : vector<16x16xf32> to vector<1x16x16xf32>
    %419 = vector.shape_cast %416#2 : vector<16x16xf32> to vector<1x16x16xf32>
    %420 = tpu.concatenate %417, %418, %419 in 0 : vector<1x16x16xf32>, vector<1x16x16xf32>, vector<1x16x16xf32> -> vector<3x16x16xf32>
    %c0_194 = arith.constant 0 : index
    %c0_195 = arith.constant 0 : index
    %c0_196 = arith.constant 0 : index
    %c0_197 = arith.constant 0 : index
    %421 = vector.load %arg9[%c0_194, %c0_195, %c0_196, %c0_197] : memref<1x3x16x16xf32, #tpu.memory_space<vmem>>, vector<1x3x16x16xf32>
    %422 = vector.shape_cast %421 : vector<1x3x16x16xf32> to vector<3x16x16xf32>
    %423 = vector.shape_cast %420 : vector<3x16x16xf32> to vector<1x3x16x16xf32>
    tpu.vector_store %arg9[%c0_194, %c0_195, %c0_196, %c0_197], %423 {strides = array<i32>} : memref<1x3x16x16xf32, #tpu.memory_space<vmem>>, vector<1x3x16x16xf32>,
    return
  }
  func.func @transform_0(%arg0: i32, %arg1: i32) -> (i32, i32, i32, i32) {
    %c0_i32 = arith.constant 0 : i32
    %c0_i32_0 = arith.constant 0 : i32
    %c0_i32_1 = arith.constant 0 : i32
    %c0_i32_2 = arith.constant 0 : i32
    return %arg0, %c0_i32, %c0_i32_0, %c0_i32_1 : i32, i32, i32, i32
  }
  func.func @transform_1(%arg0: i32, %arg1: i32) -> i32 {
    %c0_i32 = arith.constant 0 : i32
    %c0_i32_0 = arith.constant 0 : i32
    return %c0_i32 : i32
  }
  func.func @transform_2(%arg0: i32, %arg1: i32) -> i32 {
    %c0_i32 = arith.constant 0 : i32
    %c0_i32_0 = arith.constant 0 : i32
    return %c0_i32 : i32
  }
  func.func @transform_3(%arg0: i32, %arg1: i32) -> i32 {
    %c0_i32 = arith.constant 0 : i32
    %c0_i32_0 = arith.constant 0 : i32
    return %c0_i32 : i32
  }
  func.func @transform_4(%arg0: i32, %arg1: i32) -> i32 {
    %c0_i32 = arith.constant 0 : i32
    %c0_i32_0 = arith.constant 0 : i32
    return %c0_i32 : i32
  }
  func.func @transform_5(%arg0: i32, %arg1: i32) -> i32 {
    %c0_i32 = arith.constant 0 : i32
    %c0_i32_0 = arith.constant 0 : i32
    return %c0_i32 : i32
  }
  func.func @transform_6(%arg0: i32, %arg1: i32) -> i32 {
    %c0_i32 = arith.constant 0 : i32
    %c0_i32_0 = arith.constant 0 : i32
    return %c0_i32 : i32
  }
  func.func @transform_7(%arg0: i32, %arg1: i32) -> (i32, i32, i32, i32) {
    %c0_i32 = arith.constant 0 : i32
    %c0_i32_0 = arith.constant 0 : i32
    %c0_i32_1 = arith.constant 0 : i32
    return %arg0, %c0_i32, %arg1, %c0_i32_0 : i32, i32, i32, i32
  }
}

</mosaic_0001>

<llo_original>
// kernel: tpu_custom_call.1
$region0: #{tpu_custom_call.1}
  #allocation0 [shape = 'u32[]', space=smem, size = 0x4, offset = 0x4, fixed_abs, tag = 'smem constant byte address 0x4 - core index']
  #allocation1 [shape = 'u32[72,128]{1,0:T(1,128)}', space=vmem, size = 0x9000, scoped, tag = 'internal scratch']
  #allocation2 [shape = 'f32[16,20,18]{2,1,0:T(8,128)}', space=vmem, size = 0x30000, scoped, tag = 'scratch operand']
  #allocation3 [shape = 'f32[16,18,18]{2,1,0:T(8,128)}', space=vmem, size = 0x30000, scoped, tag = 'scratch operand']
  %s0 = inlined_call_operand.vmem [shape: f32[2,3,22,18], index: 0, kind: input, shape index: {}]
  %s1 = inlined_call_operand.vmem [shape: f32[432], index: 1, kind: input, shape index: {}]
  %s2 = inlined_call_operand.vmem [shape: f32[16], index: 2, kind: input, shape index: {}]
  %s3 = inlined_call_operand.vmem [shape: f32[2304], index: 3, kind: input, shape index: {}]
  %s4 = inlined_call_operand.vmem [shape: f32[16], index: 4, kind: input, shape index: {}]
  %s5 = inlined_call_operand.vmem [shape: f32[432], index: 5, kind: input, shape index: {}]
  %s6 = inlined_call_operand.vmem [shape: f32[3], index: 6, kind: input, shape index: {}]
  %s7 = inlined_call_operand.hbm [shape: f32[2,3,16,16], index: 7, kind: output, shape index: {}]
  %s8 = sld [smem:[#allocation0]]
  $region106: #{tpu_custom_call.1} parent=0
    _
  %s10 = ssub.s32 1, %s8
  %s11 = scalar_select 0, %s10, %s8
  $region1: #{tpu_custom_call.1} parent=0
    #allocation4 [shape = 'u8[2048]{0}', space=smem, size = 0x800, scoped, tag = 'input window, operand 1, single buffered']
    #allocation5 [shape = 's32[2]{0}', space=sflag, size = 0x8, scoped, tag = 'scoped memory for tpu_custom_call.1']
    #allocation6 [shape = 's32[2]{0}', space=sflag, size = 0x8, scoped, tag = 'scoped memory for tpu_custom_call.1']
    #allocation7 [shape = 'u8[512]{0}', space=smem, size = 0x200, scoped, tag = 'input window, operand 2, single buffered']
    #allocation8 [shape = 's32[1]{0}', space=sflag, size = 0x4, scoped, tag = 'scoped memory for tpu_custom_call.1']
    #allocation9 [shape = 'u8[9216]{0}', space=smem, size = 0x2400, scoped, tag = 'input window, operand 3, single buffered']
    #allocation10 [shape = 'u8[512]{0}', space=smem, size = 0x200, scoped, tag = 'input window, operand 4, single buffered']
    #allocation11 [shape = 's32[1]{0}', space=sflag, size = 0x4, scoped, tag = 'scoped memory for tpu_custom_call.1']
    #allocation12 [shape = 'u8[2048]{0}', space=smem, size = 0x800, scoped, tag = 'input window, operand 5, single buffered']
    #allocation13 [shape = 'u8[512]{0}', space=smem, size = 0x200, scoped, tag = 'input window, operand 6, single buffered']
    #allocation14 [shape = 's32[1]{0}', space=sflag, size = 0x4, scoped, tag = 'scoped memory for tpu_custom_call.1']
    #allocation15 [shape = 'u8[49152]{0}', space=vmem, size = 0xc000, scoped, tag = 'output window, operand 0']
    %12 = vsyncpa [#allocation6], 0
    %13 = vsyncpa [#allocation8], 0
    %14 = vsyncpa [#allocation11], 0
    %15 = vsyncpa [#allocation14], 0
    %16 = vsyncpa [#allocation5], 0
    %s17 = scalar_lea.sflag [#allocation5], 1
    %18 = vsyncpa %s17, 0
    loop: start=0, step=1, limit=4
    $region2: #{tpu_custom_call.1} parent=1 // loop_pre_header
      _
    $region3: #{tpu_custom_call.1} parent=1 // loop_header
      %s20 = sphi 0, %s24
      %p21 = scmp.ge.s32.totalorder %s20, 4
      %s27 = sphi 0, %s39
      %s28 = sphi 0, %s35
      %s29 = sphi 0, %s27
      %s30 = sphi 0, %s28
      %s31 = sphi 0, %s29
      %s32 = sphi 0, %s30
      %s42 = sphi 0, %s44
      %s45 = sphi 0, %s42
      %s46 = sphi 0, %s45
      %s62 = sphi 0, %s46
      %s66 = sphi 0, %s66
      %s68 = sphi 0, %s66
      %s69 = sphi 0, %s68
      %s83 = sphi 0, %s69
      %s87 = sphi 0, %s87
      %s89 = sphi 0, %s87
      %s90 = sphi 0, %s89
      %s104 = sphi 0, %s90
      %s108 = sphi 0, %s108
      %s110 = sphi 0, %s108
      %s111 = sphi 0, %s110
      %s125 = sphi 0, %s111
      %s129 = sphi 0, %s129
      %s131 = sphi 0, %s129
      %s132 = sphi 0, %s131
      %s146 = sphi 0, %s132
      %s150 = sphi 0, %s150
      %s152 = sphi 0, %s150
      %s153 = sphi 0, %s152
      %s167 = sphi 0, %s153
      %s171 = sphi 0, %s171
      %s173 = sphi 0, %s171
      %s174 = sphi 0, %s173
      %s188 = sphi 0, %s174
      %s196 = sphi 0, %s198
      %s199 = sphi 0, %s196
      %s200 = sphi 0, %s199
      %s216 = sphi 0, %s200
    $region4: #{tpu_custom_call.1} parent=1 // loop_header_branch
      %23 = sbr.rel (%p21) target = $region8
    $region5: #{tpu_custom_call.1} parent=1 // loop_body
      %s25 = ssub.s32 %s20, 1
      %s26 = ssub.s32 %s20, 2
      %s33 = sadd.s32 1, %s28
      %p34 = scmp.ge.s32.totalorder %s33, 1
      %s35 = scalar_select %p34, 0, %s33
      %s36 = sadd.s32 1, %s27
      %s37 = scalar_select %p34, %s36, %s27
      %p38 = scmp.ge.s32.totalorder %s37, 2
      %s39 = scalar_select %p38, 0, %s37
      %s40 = ssub.s32 %s27, %s39
      %p41 = scmp.eq.s32.totalorder %s40, 0
      %s43 = sadd.s32 %s42, 1
      %s44 = scalar_select %p41, %s42, %s43
      %p47 = pneg %p41
      %p48 = scmp.eq.s32.totalorder %s20, 1
      %p49 = por %p47, %p48
      %p50 = scmp.ne.s32.totalorder %s42, %s45
      %p51 = scmp.eq.s32.totalorder %s20, 0
      %p52 = por %p50, %p51
      %p53 = scmp.ne.s32.totalorder %s42, %s45
      %p54 = scmp.eq.s32.totalorder %s25, 1
      %p55 = por %p53, %p54
      %p56 = scmp.ne.s32.totalorder %s45, %s46
      %p57 = scmp.eq.s32.totalorder %s25, 0
      %p58 = por %p56, %p57
      %p59 = scmp.ne.s32.totalorder %s45, %s46
      %p60 = scmp.eq.s32.totalorder %s26, 1
      %p61 = por %p59, %p60
      %p63 = scmp.ne.s32.totalorder %s46, %s62
      %p64 = scmp.eq.s32.totalorder %s26, 0
      %p65 = por %p63, %p64
      %s67 = sadd.s32 %s66, 1
      %p70 = scmp.eq.s32.totalorder %s20, 1
      %p71 = scmp.ne.s32.totalorder %s66, %s68
      %p72 = scmp.eq.s32.totalorder %s20, 0
      %p73 = por %p71, %p72
      %p74 = scmp.ne.s32.totalorder %s66, %s68
      %p75 = scmp.eq.s32.totalorder %s25, 1
      %p76 = por %p74, %p75
      %p77 = scmp.ne.s32.totalorder %s68, %s69
      %p78 = scmp.eq.s32.totalorder %s25, 0
      %p79 = por %p77, %p78
      %p80 = scmp.ne.s32.totalorder %s68, %s69
      %p81 = scmp.eq.s32.totalorder %s26, 1
      %p82 = por %p80, %p81
      %p84 = scmp.ne.s32.totalorder %s69, %s83
      %p85 = scmp.eq.s32.totalorder %s26, 0
      %p86 = por %p84, %p85
      %s88 = sadd.s32 %s87, 1
      %p91 = scmp.eq.s32.totalorder %s20, 1
      %p92 = scmp.ne.s32.totalorder %s87, %s89
      %p93 = scmp.eq.s32.totalorder %s20, 0
      %p94 = por %p92, %p93
      %p95 = scmp.ne.s32.totalorder %s87, %s89
      %p96 = scmp.eq.s32.totalorder %s25, 1
      %p97 = por %p95, %p96
      %p98 = scmp.ne.s32.totalorder %s89, %s90
      %p99 = scmp.eq.s32.totalorder %s25, 0
      %p100 = por %p98, %p99
      %p101 = scmp.ne.s32.totalorder %s89, %s90
      %p102 = scmp.eq.s32.totalorder %s26, 1
      %p103 = por %p101, %p102
      %p105 = scmp.ne.s32.totalorder %s90, %s104
      %p106 = scmp.eq.s32.totalorder %s26, 0
      %p107 = por %p105, %p106
      %s109 = sadd.s32 %s108, 1
      %p112 = scmp.eq.s32.totalorder %s20, 1
      %p113 = scmp.ne.s32.totalorder %s108, %s110
      %p114 = scmp.eq.s32.totalorder %s20, 0
      %p115 = por %p113, %p114
      %p116 = scmp.ne.s32.totalorder %s108, %s110
      %p117 = scmp.eq.s32.totalorder %s25, 1
      %p118 = por %p116, %p117
      %p119 = scmp.ne.s32.totalorder %s110, %s111
      %p120 = scmp.eq.s32.totalorder %s25, 0
      %p121 = por %p119, %p120
      %p122 = scmp.ne.s32.totalorder %s110, %s111
      %p123 = scmp.eq.s32.totalorder %s26, 1
      %p124 = por %p122, %p123
      %p126 = scmp.ne.s32.totalorder %s111, %s125
      %p127 = scmp.eq.s32.totalorder %s26, 0
      %p128 = por %p126, %p127
      %s130 = sadd.s32 %s129, 1
      %p133 = scmp.eq.s32.totalorder %s20, 1
      %p134 = scmp.ne.s32.totalorder %s129, %s131
      %p135 = scmp.eq.s32.totalorder %s20, 0
      %p136 = por %p134, %p135
      %p137 = scmp.ne.s32.totalorder %s129, %s131
      %p138 = scmp.eq.s32.totalorder %s25, 1
      %p139 = por %p137, %p138
      %p140 = scmp.ne.s32.totalorder %s131, %s132
      %p141 = scmp.eq.s32.totalorder %s25, 0
      %p142 = por %p140, %p141
      %p143 = scmp.ne.s32.totalorder %s131, %s132
      %p144 = scmp.eq.s32.totalorder %s26, 1
      %p145 = por %p143, %p144
      %p147 = scmp.ne.s32.totalorder %s132, %s146
      %p148 = scmp.eq.s32.totalorder %s26, 0
      %p149 = por %p147, %p148
      %s151 = sadd.s32 %s150, 1
      %p154 = scmp.eq.s32.totalorder %s20, 1
      %p155 = scmp.ne.s32.totalorder %s150, %s152
      %p156 = scmp.eq.s32.totalorder %s20, 0
      %p157 = por %p155, %p156
      %p158 = scmp.ne.s32.totalorder %s150, %s152
      %p159 = scmp.eq.s32.totalorder %s25, 1
      %p160 = por %p158, %p159
      %p161 = scmp.ne.s32.totalorder %s152, %s153
      %p162 = scmp.eq.s32.totalorder %s25, 0
      %p163 = por %p161, %p162
      %p164 = scmp.ne.s32.totalorder %s152, %s153
      %p165 = scmp.eq.s32.totalorder %s26, 1
      %p166 = por %p164, %p165
      %p168 = scmp.ne.s32.totalorder %s153, %s167
      %p169 = scmp.eq.s32.totalorder %s26, 0
      %p170 = por %p168, %p169
      %s172 = sadd.s32 %s171, 1
      %p175 = scmp.eq.s32.totalorder %s20, 1
      %p176 = scmp.ne.s32.totalorder %s171, %s173
      %p177 = scmp.eq.s32.totalorder %s20, 0
      %p178 = por %p176, %p177
      %p179 = scmp.ne.s32.totalorder %s171, %s173
      %p180 = scmp.eq.s32.totalorder %s25, 1
      %p181 = por %p179, %p180
      %p182 = scmp.ne.s32.totalorder %s173, %s174
      %p183 = scmp.eq.s32.totalorder %s25, 0
      %p184 = por %p182, %p183
      %p185 = scmp.ne.s32.totalorder %s173, %s174
      %p186 = scmp.eq.s32.totalorder %s26, 1
      %p187 = por %p185, %p186
      %p189 = scmp.ne.s32.totalorder %s174, %s188
      %p190 = scmp.eq.s32.totalorder %s26, 0
      %p191 = por %p189, %p190
      %s192 = ssub.s32 %s27, %s39
      %s193 = ssub.s32 %s28, %s35
      %s194 = sor.u32 %s192, %s193
      %p195 = scmp.eq.s32.totalorder %s194, 0
      %s197 = sadd.s32 %s196, 1
      %s198 = scalar_select %p195, %s196, %s197
      %p201 = pneg %p195
      %p202 = scmp.eq.s32.totalorder %s20, 1
      %p203 = por %p201, %p202
      %p204 = scmp.ne.s32.totalorder %s196, %s199
      %p205 = scmp.eq.s32.totalorder %s20, 0
      %p206 = por %p204, %p205
      %p207 = scmp.ne.s32.totalorder %s196, %s199
      %p208 = scmp.eq.s32.totalorder %s25, 1
      %p209 = por %p207, %p208
      %p210 = scmp.ne.s32.totalorder %s199, %s200
      %p211 = scmp.eq.s32.totalorder %s25, 0
      %p212 = por %p210, %p211
      %p213 = scmp.ne.s32.totalorder %s199, %s200
      %p214 = scmp.eq.s32.totalorder %s26, 1
      %p215 = por %p213, %p214
      %p217 = scmp.ne.s32.totalorder %s200, %s216
      %p218 = scmp.eq.s32.totalorder %s26, 0
      %p219 = por %p217, %p218
      %p220 = scmp.le.s32.totalorder 1, %s20
      %p221 = scmp.lt.s32.totalorder %s20, 3
      %p222 = pnand %p220, %p221
      %p223 = pneg %p222
      // Predicated region
      $region9: #{tpu_custom_call.1} parent=5 // pred_check
        _
      $region10: #{tpu_custom_call.1} parent=5 // pred_check_branch
        %225 = sbr.rel (%p222) target = $region12
      $region11: #{tpu_custom_call.1} parent=5 // pred_region
        %s226 = ssub.s32 %s20, 1
        // Predicated region
        $region13: #{tpu_custom_call.1} parent=11 // pred_check
          %p227 = pneg %p79
        $region14: #{tpu_custom_call.1} parent=11 // pred_check_branch
          %229 = sbr.rel (%p227) target = $region16
        $region15: #{tpu_custom_call.1} parent=11 // pred_region
          %231 = vsyncadd [#allocation6], 0
          %s233 = sshll.u32 %s1, 4
          %s234 = int_to_ptr.vmem [resolvable:$true] %s233
          %236 = dma.vmem_to_smem %s234, 64, [#allocation4], [#allocation6]
        $region16: #{tpu_custom_call.1} parent=11 // pred_fallthru
          _
        // Predicated region
        $region17: #{tpu_custom_call.1} parent=11 // pred_check
          %p237 = pneg %p100
        $region18: #{tpu_custom_call.1} parent=11 // pred_check_branch
          %239 = sbr.rel (%p237) target = $region20
        $region19: #{tpu_custom_call.1} parent=11 // pred_region
          %241 = vsyncadd [#allocation8], 0
          %s243 = sshll.u32 %s2, 4
          %s244 = int_to_ptr.vmem [resolvable:$true] %s243
          %246 = dma.vmem_to_smem %s244, 16, [#allocation7], [#allocation8]
        $region20: #{tpu_custom_call.1} parent=11 // pred_fallthru
          _
        // Predicated region
        $region21: #{tpu_custom_call.1} parent=11 // pred_check
          %p247 = pneg %p121
        $region22: #{tpu_custom_call.1} parent=11 // pred_check_branch
          %249 = sbr.rel (%p247) target = $region24
        $region23: #{tpu_custom_call.1} parent=11 // pred_region
          %251 = vsyncadd [#allocation8], 0
          %s253 = sshll.u32 %s3, 4
          %s254 = int_to_ptr.vmem [resolvable:$true] %s253
          %256 = dma.vmem_to_smem %s254, 288, [#allocation9], [#allocation8]
        $region24: #{tpu_custom_call.1} parent=11 // pred_fallthru
          _
        // Predicated region
        $region25: #{tpu_custom_call.1} parent=11 // pred_check
          %p257 = pneg %p142
        $region26: #{tpu_custom_call.1} parent=11 // pred_check_branch
          %259 = sbr.rel (%p257) target = $region28
        $region27: #{tpu_custom_call.1} parent=11 // pred_region
          %261 = vsyncadd [#allocation11], 0
          %s263 = sshll.u32 %s4, 4
          %s264 = int_to_ptr.vmem [resolvable:$true] %s263
          %266 = dma.vmem_to_smem %s264, 16, [#allocation10], [#allocation11]
        $region28: #{tpu_custom_call.1} parent=11 // pred_fallthru
          _
        // Predicated region
        $region29: #{tpu_custom_call.1} parent=11 // pred_check
          %p267 = pneg %p163
        $region30: #{tpu_custom_call.1} parent=11 // pred_check_branch
          %269 = sbr.rel (%p267) target = $region32
        $region31: #{tpu_custom_call.1} parent=11 // pred_region
          %271 = vsyncadd [#allocation11], 0
          %s273 = sshll.u32 %s5, 4
          %s274 = int_to_ptr.vmem [resolvable:$true] %s273
          %276 = dma.vmem_to_smem %s274, 64, [#allocation12], [#allocation11]
        $region32: #{tpu_custom_call.1} parent=11 // pred_fallthru
          _
        // Predicated region
        $region33: #{tpu_custom_call.1} parent=11 // pred_check
          %p277 = pneg %p184
        $region34: #{tpu_custom_call.1} parent=11 // pred_check_branch
          %279 = sbr.rel (%p277) target = $region36
        $region35: #{tpu_custom_call.1} parent=11 // pred_region
          %281 = vsyncadd [#allocation14], 0
          %s283 = sshll.u32 %s6, 4
          %s284 = int_to_ptr.vmem [resolvable:$true] %s283
          %286 = dma.vmem_to_smem %s284, 16, [#allocation13], [#allocation14]
        $region36: #{tpu_custom_call.1} parent=11 // pred_fallthru
          _
      $region12: #{tpu_custom_call.1} parent=5 // pred_fallthru
        _
      %p287 = scmp.lt.s32.totalorder %s20, 2
      // Predicated region
      $region37: #{tpu_custom_call.1} parent=5 // pred_check
        %p288 = pneg %p287
      $region38: #{tpu_custom_call.1} parent=5 // pred_check_branch
        %290 = sbr.rel (%p288) target = $region40
      $region39: #{tpu_custom_call.1} parent=5 // pred_region
        // Predicated region
        $region41: #{tpu_custom_call.1} parent=39 // pred_check
          %p291 = pneg %p52
        $region42: #{tpu_custom_call.1} parent=39 // pred_check_branch
          %293 = sbr.rel (%p291) target = $region44
        $region43: #{tpu_custom_call.1} parent=39 // pred_region
          %p294 = scmp.lt.s32.totalorder %s27, 1
          %s295 = scalar_select %p294, %s27, 1
          %s296 = smul.addr %s295, 9
          %s297 = smul.addr %s296, 8
          %s298 = scalar_lea.vmem %s0, %s297
        $region44: #{tpu_custom_call.1} parent=39 // pred_fallthru
          _
      $region40: #{tpu_custom_call.1} parent=5 // pred_fallthru
        _
      %p299 = scmp.le.s32.totalorder 1, %s20
      %p300 = scmp.lt.s32.totalorder %s20, 3
      %p301 = pnand %p299, %p300
      %p302 = pneg %p301
      // Predicated region
      $region45: #{tpu_custom_call.1} parent=5 // pred_check
        _
      $region46: #{tpu_custom_call.1} parent=5 // pred_check_branch
        %304 = sbr.rel (%p301) target = $region48
      $region47: #{tpu_custom_call.1} parent=5 // pred_region
        %s305 = ssub.s32 %s20, 1
        // Predicated region
        $region49: #{tpu_custom_call.1} parent=47 // pred_check
          %p306 = pneg %p79
        $region50: #{tpu_custom_call.1} parent=47 // pred_check_branch
          %308 = sbr.rel (%p306) target = $region52
        $region51: #{tpu_custom_call.1} parent=47 // pred_region
          %310 = dma.done [#allocation6], 64
        $region52: #{tpu_custom_call.1} parent=47 // pred_fallthru
          _
        // Predicated region
        $region53: #{tpu_custom_call.1} parent=47 // pred_check
          %p311 = pneg %p100
        $region54: #{tpu_custom_call.1} parent=47 // pred_check_branch
          %313 = sbr.rel (%p311) target = $region56
        $region55: #{tpu_custom_call.1} parent=47 // pred_region
          %315 = dma.done [#allocation8], 16
        $region56: #{tpu_custom_call.1} parent=47 // pred_fallthru
          _
        // Predicated region
        $region57: #{tpu_custom_call.1} parent=47 // pred_check
          %p316 = pneg %p121
        $region58: #{tpu_custom_call.1} parent=47 // pred_check_branch
          %318 = sbr.rel (%p316) target = $region60
        $region59: #{tpu_custom_call.1} parent=47 // pred_region
          %320 = dma.done [#allocation8], 288
        $region60: #{tpu_custom_call.1} parent=47 // pred_fallthru
          _
        // Predicated region
        $region61: #{tpu_custom_call.1} parent=47 // pred_check
          %p321 = pneg %p142
        $region62: #{tpu_custom_call.1} parent=47 // pred_check_branch
          %323 = sbr.rel (%p321) target = $region64
        $region63: #{tpu_custom_call.1} parent=47 // pred_region
          %325 = dma.done [#allocation11], 16
        $region64: #{tpu_custom_call.1} parent=47 // pred_fallthru
          _
        // Predicated region
        $region65: #{tpu_custom_call.1} parent=47 // pred_check
          %p326 = pneg %p163
        $region66: #{tpu_custom_call.1} parent=47 // pred_check_branch
          %328 = sbr.rel (%p326) target = $region68
        $region67: #{tpu_custom_call.1} parent=47 // pred_region
          %330 = dma.done [#allocation11], 64
        $region68: #{tpu_custom_call.1} parent=47 // pred_fallthru
          _
        // Predicated region
        $region69: #{tpu_custom_call.1} parent=47 // pred_check
          %p331 = pneg %p184
        $region70: #{tpu_custom_call.1} parent=47 // pred_check_branch
          %333 = sbr.rel (%p331) target = $region72
        $region71: #{tpu_custom_call.1} parent=47 // pred_region
          %335 = dma.done [#allocation14], 16
        $region72: #{tpu_custom_call.1} parent=47 // pred_fallthru
          _
        %336 = sfence
        %p337 = scmp.lt.s32.totalorder %s29, 1
        %s338 = scalar_select %p337, %s29, 1
        %s339 = smul.addr %s338, 9
        %s340 = smul.addr %s339, 8
        %s341 = scalar_lea.vmem %s0, %s340
        %p342 = pneg %p58
        %p343 = pneg %p55
        %p344 = pneg %p79
        %p345 = pneg %p76
        %p346 = pneg %p100
        %p347 = pneg %p97
        %p348 = pneg %p121
        %p349 = pneg %p118
        %p350 = pneg %p142
        %p351 = pneg %p139
        %p352 = pneg %p163
        %p353 = pneg %p160
        %p354 = pneg %p184
        %p355 = pneg %p181
        %p356 = pneg %p212
        %p357 = pneg %p209
        %s358 = sand.u32 %s199, 1
        %s359 = scalar_lea.sflag [#allocation5], %s358
        %s360 = sand.u32 %s199, 1
        %s361 = smul.addr %s360, 48
        %s362 = scalar_lea.vmem [#allocation15], %s361
        %p363 = scmp.lt.s32.totalorder %s29, 1
        %s364 = scalar_select %p363, %s29, 1
        %s365 = smul.addr %s364, 9
        %s366 = smul.addr %s365, 8
        %s367 = scalar_lea.vmem %s0, %s366
        %s368 = smul.u32 2, %s30
        %s369 = smul.u32 %s30, 16
        %s370 = sld [smem:[#allocation7]]
        %v371 = vstv %s370
        %s372 = sld [smem:[#allocation7 + $0x1]]
        %v373 = vstv %s372
        %s374 = sld [smem:[#allocation7 + $0x2]]
        %v375 = vstv %s374
        %s376 = sld [smem:[#allocation7 + $0x3]]
        %v377 = vstv %s376
        %s378 = sld [smem:[#allocation7 + $0x4]]
        %v379 = vstv %s378
        %s380 = sld [smem:[#allocation7 + $0x5]]
        %v381 = vstv %s380
        %s382 = sld [smem:[#allocation7 + $0x6]]
        %v383 = vstv %s382
        %s384 = sld [smem:[#allocation7 + $0x7]]
        %v385 = vstv %s384
        %s386 = sld [smem:[#allocation7 + $0x8]]
        %v387 = vstv %s386
        %s388 = sld [smem:[#allocation7 + $0x9]]
        %v389 = vstv %s388
        %s390 = sld [smem:[#allocation7 + $0xa]]
        %v391 = vstv %s390
        %s392 = sld [smem:[#allocation7 + $0xb]]
        %v393 = vstv %s392
        %s394 = sld [smem:[#allocation7 + $0xc]]
        %v395 = vstv %s394
        %s396 = sld [smem:[#allocation7 + $0xd]]
        %v397 = vstv %s396
        %s398 = sld [smem:[#allocation7 + $0xe]]
        %v399 = vstv %s398
        %s400 = sld [smem:[#allocation7 + $0xf]]
        %v401 = vstv %s400
        loop: start=0, step=1, limit=3
        $region73: #{tpu_custom_call.1} parent=47 // loop_pre_header
          _
        $region74: #{tpu_custom_call.1} parent=47 // loop_header
          %s403 = sphi 0, %s407
          %p404 = scmp.ge.s32.totalorder %s403, 3
          %v408 = vphi %v371, %v624
          %v409 = vphi %v371, %v625
          %v410 = vphi %v371, %v626
          %v411 = vphi %v373, %v777
          %v412 = vphi %v373, %v778
          %v413 = vphi %v373, %v779
          %v414 = vphi %v375, %v930
          %v415 = vphi %v375, %v931
          %v416 = vphi %v375, %v932
          %v417 = vphi %v377, %v1083
          %v418 = vphi %v377, %v1084
          %v419 = vphi %v377, %v1085
          %v420 = vphi %v379, %v1236
          %v421 = vphi %v379, %v1237
          %v422 = vphi %v379, %v1238
          %v423 = vphi %v381, %v1389
          %v424 = vphi %v381, %v1390
          %v425 = vphi %v381, %v1391
          %v426 = vphi %v383, %v1542
          %v427 = vphi %v383, %v1543
          %v428 = vphi %v383, %v1544
          %v429 = vphi %v385, %v1695
          %v430 = vphi %v385, %v1696
          %v431 = vphi %v385, %v1697
          %v432 = vphi %v387, %v1848
          %v433 = vphi %v387, %v1849
          %v434 = vphi %v387, %v1850
          %v435 = vphi %v389, %v2001
          %v436 = vphi %v389, %v2002
          %v437 = vphi %v389, %v2003
          %v438 = vphi %v391, %v2154
          %v439 = vphi %v391, %v2155
          %v440 = vphi %v391, %v2156
          %v441 = vphi %v393, %v2307
          %v442 = vphi %v393, %v2308
          %v443 = vphi %v393, %v2309
          %v444 = vphi %v395, %v2460
          %v445 = vphi %v395, %v2461
          %v446 = vphi %v395, %v2462
          %v447 = vphi %v397, %v2613
          %v448 = vphi %v397, %v2614
          %v449 = vphi %v397, %v2615
          %v450 = vphi %v399, %v2766
          %v451 = vphi %v399, %v2767
          %v452 = vphi %v399, %v2768
          %v453 = vphi %v401, %v2919
          %v454 = vphi %v401, %v2920
          %v455 = vphi %v401, %v2921
        $region75: #{tpu_custom_call.1} parent=47 // loop_header_branch
          %406 = sbr.rel (%p404) target = $region79
        $region76: #{tpu_custom_call.1} parent=47 // loop_body
          %s456 = smul.u32 %s403, 24
          %s457 = sadd.s32 %s369, %s456
          %s458 = scalar_lea.vmem %s367, %s457
          %v459 = vld [vmem:[%s458] sm:$0xff]
          %v460 = vld [vmem:[%s458 + $0x8] sm:$0xff]
          %v461 = vld [vmem:[%s458 + $0x10] sm:$0xf]
          %s462 = sadd.s32 %s369, 1
          %s463 = sadd.s32 %s462, %s456
          %s464 = scalar_lea.vmem %s367, %s463
          %v465 = vld [vmem:[%s464] sm:$0xff]
          %v466 = vld [vmem:[%s464 + $0x8] sm:$0xff]
          %v467 = vld [vmem:[%s464 + $0x10] sm:$0xf]
          %s468 = sadd.s32 %s369, 2
          %s469 = sadd.s32 %s468, %s456
          %s470 = scalar_lea.vmem %s367, %s469
          %v471 = vld [vmem:[%s470] sm:$0xff]
          %v472 = vld [vmem:[%s470 + $0x8] sm:$0xff]
          %v473 = vld [vmem:[%s470 + $0x10] sm:$0xf]
          %s474 = smul.u32 %s403, 144
          %s475 = sld [smem:[#allocation4 + %s474]]
          %v476 = vstv %s475
          %v477 = vmul.f32 %v476, %v459
          %v478 = vmul.f32 %v476, %v460
          %v479 = vmul.f32 %v476, %v461
          %v480 = vadd.f32 %v408, %v477
          %v481 = vadd.f32 %v409, %v478
          %v482 = vadd.f32 %v410, %v479
          %s483 = sadd.s32 %s474, 16
          %s484 = sld [smem:[#allocation4 + %s483]]
          %v485 = vstv %s484
          %v486 = vmul.f32 %v485, %v459
          %v487 = vmul.f32 %v485, %v460
          %v488 = vmul.f32 %v485, %v461
          %492 = vrot.lane.b32.xlu0 %v486, 127
          %v493 = vpop.permute.xlu0 %492
          %494 = vrot.lane.b32.xlu0 %v487, 127
          %v495 = vpop.permute.xlu0 %494
          %496 = vrot.lane.b32.xlu0 %v488, 127
          %v497 = vpop.permute.xlu0 %496
          %v501 = vadd.f32 %v480, %v493
          %v502 = vadd.f32 %v481, %v495
          %v503 = vadd.f32 %v482, %v497
          %s504 = sadd.s32 %s474, 32
          %s505 = sld [smem:[#allocation4 + %s504]]
          %v506 = vstv %s505
          %v507 = vmul.f32 %v506, %v459
          %v508 = vmul.f32 %v506, %v460
          %v509 = vmul.f32 %v506, %v461
          %513 = vrot.lane.b32.xlu0 %v507, 126
          %v514 = vpop.permute.xlu0 %513
          %515 = vrot.lane.b32.xlu0 %v508, 126
          %v516 = vpop.permute.xlu0 %515
          %517 = vrot.lane.b32.xlu0 %v509, 126
          %v518 = vpop.permute.xlu0 %517
          %v522 = vadd.f32 %v501, %v514
          %v523 = vadd.f32 %v502, %v516
          %v524 = vadd.f32 %v503, %v518
          %s525 = sadd.s32 %s474, 48
          %s526 = sld [smem:[#allocation4 + %s525]]
          %v527 = vstv %s526
          %v528 = vmul.f32 %v527, %v465
          %v529 = vmul.f32 %v527, %v466
          %v530 = vmul.f32 %v527, %v467
          %v531 = vadd.f32 %v522, %v528
          %v532 = vadd.f32 %v523, %v529
          %v533 = vadd.f32 %v524, %v530
          %s534 = sadd.s32 %s474, 64
          %s535 = sld [smem:[#allocation4 + %s534]]
          %v536 = vstv %s535
          %v537 = vmul.f32 %v536, %v465
          %v538 = vmul.f32 %v536, %v466
          %v539 = vmul.f32 %v536, %v467
          %543 = vrot.lane.b32.xlu0 %v537, 127
          %v544 = vpop.permute.xlu0 %543
          %545 = vrot.lane.b32.xlu0 %v538, 127
          %v546 = vpop.permute.xlu0 %545
          %547 = vrot.lane.b32.xlu0 %v539, 127
          %v548 = vpop.permute.xlu0 %547
          %v552 = vadd.f32 %v531, %v544
          %v553 = vadd.f32 %v532, %v546
          %v554 = vadd.f32 %v533, %v548
          %s555 = sadd.s32 %s474, 80
          %s556 = sld [smem:[#allocation4 + %s555]]
          %v557 = vstv %s556
          %v558 = vmul.f32 %v557, %v465
          %v559 = vmul.f32 %v557, %v466
          %v560 = vmul.f32 %v557, %v467
          %564 = vrot.lane.b32.xlu0 %v558, 126
          %v565 = vpop.permute.xlu0 %564
          %566 = vrot.lane.b32.xlu0 %v559, 126
          %v567 = vpop.permute.xlu0 %566
          %568 = vrot.lane.b32.xlu0 %v560, 126
          %v569 = vpop.permute.xlu0 %568
          %v573 = vadd.f32 %v552, %v565
          %v574 = vadd.f32 %v553, %v567
          %v575 = vadd.f32 %v554, %v569
          %s576 = sadd.s32 %s474, 96
          %s577 = sld [smem:[#allocation4 + %s576]]
          %v578 = vstv %s577
          %v579 = vmul.f32 %v578, %v471
          %v580 = vmul.f32 %v578, %v472
          %v581 = vmul.f32 %v578, %v473
          %v582 = vadd.f32 %v573, %v579
          %v583 = vadd.f32 %v574, %v580
          %v584 = vadd.f32 %v575, %v581
          %s585 = sadd.s32 %s474, 112
          %s586 = sld [smem:[#allocation4 + %s585]]
          %v587 = vstv %s586
          %v588 = vmul.f32 %v587, %v471
          %v589 = vmul.f32 %v587, %v472
          %v590 = vmul.f32 %v587, %v473
          %594 = vrot.lane.b32.xlu0 %v588, 127
          %v595 = vpop.permute.xlu0 %594
          %596 = vrot.lane.b32.xlu0 %v589, 127
          %v597 = vpop.permute.xlu0 %596
          %598 = vrot.lane.b32.xlu0 %v590, 127
          %v599 = vpop.permute.xlu0 %598
          %v603 = vadd.f32 %v582, %v595
          %v604 = vadd.f32 %v583, %v597
          %v605 = vadd.f32 %v584, %v599
          %s606 = sadd.s32 %s474, 128
          %s607 = sld [smem:[#allocation4 + %s606]]
          %v608 = vstv %s607
          %v609 = vmul.f32 %v608, %v471
          %v610 = vmul.f32 %v608, %v472
          %v611 = vmul.f32 %v608, %v473
          %615 = vrot.lane.b32.xlu0 %v609, 126
          %v616 = vpop.permute.xlu0 %615
          %617 = vrot.lane.b32.xlu0 %v610, 126
          %v618 = vpop.permute.xlu0 %617
          %619 = vrot.lane.b32.xlu0 %v611, 126
          %v620 = vpop.permute.xlu0 %619
          %v624 = vadd.f32 %v603, %v616
          %v625 = vadd.f32 %v604, %v618
          %v626 = vadd.f32 %v605, %v620
          %s627 = sadd.s32 %s474, 1
          %s628 = sld [smem:[#allocation4 + %s627]]
          %v629 = vstv %s628
          %v630 = vmul.f32 %v629, %v459
          %v631 = vmul.f32 %v629, %v460
          %v632 = vmul.f32 %v629, %v461
          %v633 = vadd.f32 %v411, %v630
          %v634 = vadd.f32 %v412, %v631
          %v635 = vadd.f32 %v413, %v632
          %s636 = sadd.s32 %s474, 17
          %s637 = sld [smem:[#allocation4 + %s636]]
          %v638 = vstv %s637
          %v639 = vmul.f32 %v638, %v459
          %v640 = vmul.f32 %v638, %v460
          %v641 = vmul.f32 %v638, %v461
          %645 = vrot.lane.b32.xlu0 %v639, 127
          %v646 = vpop.permute.xlu0 %645
          %647 = vrot.lane.b32.xlu0 %v640, 127
          %v648 = vpop.permute.xlu0 %647
          %649 = vrot.lane.b32.xlu0 %v641, 127
          %v650 = vpop.permute.xlu0 %649
          %v654 = vadd.f32 %v633, %v646
          %v655 = vadd.f32 %v634, %v648
          %v656 = vadd.f32 %v635, %v650
          %s657 = sadd.s32 %s474, 33
          %s658 = sld [smem:[#allocation4 + %s657]]
          %v659 = vstv %s658
          %v660 = vmul.f32 %v659, %v459
          %v661 = vmul.f32 %v659, %v460
          %v662 = vmul.f32 %v659, %v461
          %666 = vrot.lane.b32.xlu0 %v660, 126
          %v667 = vpop.permute.xlu0 %666
          %668 = vrot.lane.b32.xlu0 %v661, 126
          %v669 = vpop.permute.xlu0 %668
          %670 = vrot.lane.b32.xlu0 %v662, 126
          %v671 = vpop.permute.xlu0 %670
          %v675 = vadd.f32 %v654, %v667
          %v676 = vadd.f32 %v655, %v669
          %v677 = vadd.f32 %v656, %v671
          %s678 = sadd.s32 %s474, 49
          %s679 = sld [smem:[#allocation4 + %s678]]
          %v680 = vstv %s679
          %v681 = vmul.f32 %v680, %v465
          %v682 = vmul.f32 %v680, %v466
          %v683 = vmul.f32 %v680, %v467
          %v684 = vadd.f32 %v675, %v681
          %v685 = vadd.f32 %v676, %v682
          %v686 = vadd.f32 %v677, %v683
          %s687 = sadd.s32 %s474, 65
          %s688 = sld [smem:[#allocation4 + %s687]]
          %v689 = vstv %s688
          %v690 = vmul.f32 %v689, %v465
          %v691 = vmul.f32 %v689, %v466
          %v692 = vmul.f32 %v689, %v467
          %696 = vrot.lane.b32.xlu0 %v690, 127
          %v697 = vpop.permute.xlu0 %696
          %698 = vrot.lane.b32.xlu0 %v691, 127
          %v699 = vpop.permute.xlu0 %698
          %700 = vrot.lane.b32.xlu0 %v692, 127
          %v701 = vpop.permute.xlu0 %700
          %v705 = vadd.f32 %v684, %v697
          %v706 = vadd.f32 %v685, %v699
          %v707 = vadd.f32 %v686, %v701
          %s708 = sadd.s32 %s474, 81
          %s709 = sld [smem:[#allocation4 + %s708]]
          %v710 = vstv %s709
          %v711 = vmul.f32 %v710, %v465
          %v712 = vmul.f32 %v710, %v466
          %v713 = vmul.f32 %v710, %v467
          %717 = vrot.lane.b32.xlu0 %v711, 126
          %v718 = vpop.permute.xlu0 %717
          %719 = vrot.lane.b32.xlu0 %v712, 126
          %v720 = vpop.permute.xlu0 %719
          %721 = vrot.lane.b32.xlu0 %v713, 126
          %v722 = vpop.permute.xlu0 %721
          %v726 = vadd.f32 %v705, %v718
          %v727 = vadd.f32 %v706, %v720
          %v728 = vadd.f32 %v707, %v722
          %s729 = sadd.s32 %s474, 97
          %s730 = sld [smem:[#allocation4 + %s729]]
          %v731 = vstv %s730
          %v732 = vmul.f32 %v731, %v471
          %v733 = vmul.f32 %v731, %v472
          %v734 = vmul.f32 %v731, %v473
          %v735 = vadd.f32 %v726, %v732
          %v736 = vadd.f32 %v727, %v733
          %v737 = vadd.f32 %v728, %v734
          %s738 = sadd.s32 %s474, 113
          %s739 = sld [smem:[#allocation4 + %s738]]
          %v740 = vstv %s739
          %v741 = vmul.f32 %v740, %v471
          %v742 = vmul.f32 %v740, %v472
          %v743 = vmul.f32 %v740, %v473
          %747 = vrot.lane.b32.xlu0 %v741, 127
          %v748 = vpop.permute.xlu0 %747
          %749 = vrot.lane.b32.xlu0 %v742, 127
          %v750 = vpop.permute.xlu0 %749
          %751 = vrot.lane.b32.xlu0 %v743, 127
          %v752 = vpop.permute.xlu0 %751
          %v756 = vadd.f32 %v735, %v748
          %v757 = vadd.f32 %v736, %v750
          %v758 = vadd.f32 %v737, %v752
          %s759 = sadd.s32 %s474, 129
          %s760 = sld [smem:[#allocation4 + %s759]]
          %v761 = vstv %s760
          %v762 = vmul.f32 %v761, %v471
          %v763 = vmul.f32 %v761, %v472
          %v764 = vmul.f32 %v761, %v473
          %768 = vrot.lane.b32.xlu0 %v762, 126
          %v769 = vpop.permute.xlu0 %768
          %770 = vrot.lane.b32.xlu0 %v763, 126
          %v771 = vpop.permute.xlu0 %770
          %772 = vrot.lane.b32.xlu0 %v764, 126
          %v773 = vpop.permute.xlu0 %772
          %v777 = vadd.f32 %v756, %v769
          %v778 = vadd.f32 %v757, %v771
          %v779 = vadd.f32 %v758, %v773
          %s780 = sadd.s32 %s474, 2
          %s781 = sld [smem:[#allocation4 + %s780]]
          %v782 = vstv %s781
          %v783 = vmul.f32 %v782, %v459
          %v784 = vmul.f32 %v782, %v460
          %v785 = vmul.f32 %v782, %v461
          %v786 = vadd.f32 %v414, %v783
          %v787 = vadd.f32 %v415, %v784
          %v788 = vadd.f32 %v416, %v785
          %s789 = sadd.s32 %s474, 18
          %s790 = sld [smem:[#allocation4 + %s789]]
          %v791 = vstv %s790
          %v792 = vmul.f32 %v791, %v459
          %v793 = vmul.f32 %v791, %v460
          %v794 = vmul.f32 %v791, %v461
          %798 = vrot.lane.b32.xlu0 %v792, 127
          %v799 = vpop.permute.xlu0 %798
          %800 = vrot.lane.b32.xlu0 %v793, 127
          %v801 = vpop.permute.xlu0 %800
          %802 = vrot.lane.b32.xlu0 %v794, 127
          %v803 = vpop.permute.xlu0 %802
          %v807 = vadd.f32 %v786, %v799
          %v808 = vadd.f32 %v787, %v801
          %v809 = vadd.f32 %v788, %v803
          %s810 = sadd.s32 %s474, 34
          %s811 = sld [smem:[#allocation4 + %s810]]
          %v812 = vstv %s811
          %v813 = vmul.f32 %v812, %v459
          %v814 = vmul.f32 %v812, %v460
          %v815 = vmul.f32 %v812, %v461
          %819 = vrot.lane.b32.xlu0 %v813, 126
          %v820 = vpop.permute.xlu0 %819
          %821 = vrot.lane.b32.xlu0 %v814, 126
          %v822 = vpop.permute.xlu0 %821
          %823 = vrot.lane.b32.xlu0 %v815, 126
          %v824 = vpop.permute.xlu0 %823
          %v828 = vadd.f32 %v807, %v820
          %v829 = vadd.f32 %v808, %v822
          %v830 = vadd.f32 %v809, %v824
          %s831 = sadd.s32 %s474, 50
          %s832 = sld [smem:[#allocation4 + %s831]]
          %v833 = vstv %s832
          %v834 = vmul.f32 %v833, %v465
          %v835 = vmul.f32 %v833, %v466
          %v836 = vmul.f32 %v833, %v467
          %v837 = vadd.f32 %v828, %v834
          %v838 = vadd.f32 %v829, %v835
          %v839 = vadd.f32 %v830, %v836
          %s840 = sadd.s32 %s474, 66
          %s841 = sld [smem:[#allocation4 + %s840]]
          %v842 = vstv %s841
          %v843 = vmul.f32 %v842, %v465
          %v844 = vmul.f32 %v842, %v466
          %v845 = vmul.f32 %v842, %v467
          %849 = vrot.lane.b32.xlu0 %v843, 127
          %v850 = vpop.permute.xlu0 %849
          %851 = vrot.lane.b32.xlu0 %v844, 127
          %v852 = vpop.permute.xlu0 %851
          %853 = vrot.lane.b32.xlu0 %v845, 127
          %v854 = vpop.permute.xlu0 %853
          %v858 = vadd.f32 %v837, %v850
          %v859 = vadd.f32 %v838, %v852
          %v860 = vadd.f32 %v839, %v854
          %s861 = sadd.s32 %s474, 82
          %s862 = sld [smem:[#allocation4 + %s861]]
          %v863 = vstv %s862
          %v864 = vmul.f32 %v863, %v465
          %v865 = vmul.f32 %v863, %v466
          %v866 = vmul.f32 %v863, %v467
          %870 = vrot.lane.b32.xlu0 %v864, 126
          %v871 = vpop.permute.xlu0 %870
          %872 = vrot.lane.b32.xlu0 %v865, 126
          %v873 = vpop.permute.xlu0 %872
          %874 = vrot.lane.b32.xlu0 %v866, 126
          %v875 = vpop.permute.xlu0 %874
          %v879 = vadd.f32 %v858, %v871
          %v880 = vadd.f32 %v859, %v873
          %v881 = vadd.f32 %v860, %v875
          %s882 = sadd.s32 %s474, 98
          %s883 = sld [smem:[#allocation4 + %s882]]
          %v884 = vstv %s883
          %v885 = vmul.f32 %v884, %v471
          %v886 = vmul.f32 %v884, %v472
          %v887 = vmul.f32 %v884, %v473
          %v888 = vadd.f32 %v879, %v885
          %v889 = vadd.f32 %v880, %v886
          %v890 = vadd.f32 %v881, %v887
          %s891 = sadd.s32 %s474, 114
          %s892 = sld [smem:[#allocation4 + %s891]]
          %v893 = vstv %s892
          %v894 = vmul.f32 %v893, %v471
          %v895 = vmul.f32 %v893, %v472
          %v896 = vmul.f32 %v893, %v473
          %900 = vrot.lane.b32.xlu0 %v894, 127
          %v901 = vpop.permute.xlu0 %900
          %902 = vrot.lane.b32.xlu0 %v895, 127
          %v903 = vpop.permute.xlu0 %902
          %904 = vrot.lane.b32.xlu0 %v896, 127
          %v905 = vpop.permute.xlu0 %904
          %v909 = vadd.f32 %v888, %v901
          %v910 = vadd.f32 %v889, %v903
          %v911 = vadd.f32 %v890, %v905
          %s912 = sadd.s32 %s474, 130
          %s913 = sld [smem:[#allocation4 + %s912]]
          %v914 = vstv %s913
          %v915 = vmul.f32 %v914, %v471
          %v916 = vmul.f32 %v914, %v472
          %v917 = vmul.f32 %v914, %v473
          %921 = vrot.lane.b32.xlu0 %v915, 126
          %v922 = vpop.permute.xlu0 %921
          %923 = vrot.lane.b32.xlu0 %v916, 126
          %v924 = vpop.permute.xlu0 %923
          %925 = vrot.lane.b32.xlu0 %v917, 126
          %v926 = vpop.permute.xlu0 %925
          %v930 = vadd.f32 %v909, %v922
          %v931 = vadd.f32 %v910, %v924
          %v932 = vadd.f32 %v911, %v926
          %s933 = sadd.s32 %s474, 3
          %s934 = sld [smem:[#allocation4 + %s933]]
          %v935 = vstv %s934
          %v936 = vmul.f32 %v935, %v459
          %v937 = vmul.f32 %v935, %v460
          %v938 = vmul.f32 %v935, %v461
          %v939 = vadd.f32 %v417, %v936
          %v940 = vadd.f32 %v418, %v937
          %v941 = vadd.f32 %v419, %v938
          %s942 = sadd.s32 %s474, 19
          %s943 = sld [smem:[#allocation4 + %s942]]
          %v944 = vstv %s943
          %v945 = vmul.f32 %v944, %v459
          %v946 = vmul.f32 %v944, %v460
          %v947 = vmul.f32 %v944, %v461
          %951 = vrot.lane.b32.xlu0 %v945, 127
          %v952 = vpop.permute.xlu0 %951
          %953 = vrot.lane.b32.xlu0 %v946, 127
          %v954 = vpop.permute.xlu0 %953
          %955 = vrot.lane.b32.xlu0 %v947, 127
          %v956 = vpop.permute.xlu0 %955
          %v960 = vadd.f32 %v939, %v952
          %v961 = vadd.f32 %v940, %v954
          %v962 = vadd.f32 %v941, %v956
          %s963 = sadd.s32 %s474, 35
          %s964 = sld [smem:[#allocation4 + %s963]]
          %v965 = vstv %s964
          %v966 = vmul.f32 %v965, %v459
          %v967 = vmul.f32 %v965, %v460
          %v968 = vmul.f32 %v965, %v461
          %972 = vrot.lane.b32.xlu0 %v966, 126
          %v973 = vpop.permute.xlu0 %972
          %974 = vrot.lane.b32.xlu0 %v967, 126
          %v975 = vpop.permute.xlu0 %974
          %976 = vrot.lane.b32.xlu0 %v968, 126
          %v977 = vpop.permute.xlu0 %976
          %v981 = vadd.f32 %v960, %v973
          %v982 = vadd.f32 %v961, %v975
          %v983 = vadd.f32 %v962, %v977
          %s984 = sadd.s32 %s474, 51
          %s985 = sld [smem:[#allocation4 + %s984]]
          %v986 = vstv %s985
          %v987 = vmul.f32 %v986, %v465
          %v988 = vmul.f32 %v986, %v466
          %v989 = vmul.f32 %v986, %v467
          %v990 = vadd.f32 %v981, %v987
          %v991 = vadd.f32 %v982, %v988
          %v992 = vadd.f32 %v983, %v989
          %s993 = sadd.s32 %s474, 67
          %s994 = sld [smem:[#allocation4 + %s993]]
          %v995 = vstv %s994
          %v996 = vmul.f32 %v995, %v465
          %v997 = vmul.f32 %v995, %v466
          %v998 = vmul.f32 %v995, %v467
          %1002 = vrot.lane.b32.xlu0 %v996, 127
          %v1003 = vpop.permute.xlu0 %1002
          %1004 = vrot.lane.b32.xlu0 %v997, 127
          %v1005 = vpop.permute.xlu0 %1004
          %1006 = vrot.lane.b32.xlu0 %v998, 127
          %v1007 = vpop.permute.xlu0 %1006
          %v1011 = vadd.f32 %v990, %v1003
          %v1012 = vadd.f32 %v991, %v1005
          %v1013 = vadd.f32 %v992, %v1007
          %s1014 = sadd.s32 %s474, 83
          %s1015 = sld [smem:[#allocation4 + %s1014]]
          %v1016 = vstv %s1015
          %v1017 = vmul.f32 %v1016, %v465
          %v1018 = vmul.f32 %v1016, %v466
          %v1019 = vmul.f32 %v1016, %v467
          %1023 = vrot.lane.b32.xlu0 %v1017, 126
          %v1024 = vpop.permute.xlu0 %1023
          %1025 = vrot.lane.b32.xlu0 %v1018, 126
          %v1026 = vpop.permute.xlu0 %1025
          %1027 = vrot.lane.b32.xlu0 %v1019, 126
          %v1028 = vpop.permute.xlu0 %1027
          %v1032 = vadd.f32 %v1011, %v1024
          %v1033 = vadd.f32 %v1012, %v1026
          %v1034 = vadd.f32 %v1013, %v1028
          %s1035 = sadd.s32 %s474, 99
          %s1036 = sld [smem:[#allocation4 + %s1035]]
          %v1037 = vstv %s1036
          %v1038 = vmul.f32 %v1037, %v471
          %v1039 = vmul.f32 %v1037, %v472
          %v1040 = vmul.f32 %v1037, %v473
          %v1041 = vadd.f32 %v1032, %v1038
          %v1042 = vadd.f32 %v1033, %v1039
          %v1043 = vadd.f32 %v1034, %v1040
          %s1044 = sadd.s32 %s474, 115
          %s1045 = sld [smem:[#allocation4 + %s1044]]
          %v1046 = vstv %s1045
          %v1047 = vmul.f32 %v1046, %v471
          %v1048 = vmul.f32 %v1046, %v472
          %v1049 = vmul.f32 %v1046, %v473
          %1053 = vrot.lane.b32.xlu0 %v1047, 127
          %v1054 = vpop.permute.xlu0 %1053
          %1055 = vrot.lane.b32.xlu0 %v1048, 127
          %v1056 = vpop.permute.xlu0 %1055
          %1057 = vrot.lane.b32.xlu0 %v1049, 127
          %v1058 = vpop.permute.xlu0 %1057
          %v1062 = vadd.f32 %v1041, %v1054
          %v1063 = vadd.f32 %v1042, %v1056
          %v1064 = vadd.f32 %v1043, %v1058
          %s1065 = sadd.s32 %s474, 131
          %s1066 = sld [smem:[#allocation4 + %s1065]]
          %v1067 = vstv %s1066
          %v1068 = vmul.f32 %v1067, %v471
          %v1069 = vmul.f32 %v1067, %v472
          %v1070 = vmul.f32 %v1067, %v473
          %1074 = vrot.lane.b32.xlu0 %v1068, 126
          %v1075 = vpop.permute.xlu0 %1074
          %1076 = vrot.lane.b32.xlu0 %v1069, 126
          %v1077 = vpop.permute.xlu0 %1076
          %1078 = vrot.lane.b32.xlu0 %v1070, 126
          %v1079 = vpop.permute.xlu0 %1078
          %v1083 = vadd.f32 %v1062, %v1075
          %v1084 = vadd.f32 %v1063, %v1077
          %v1085 = vadd.f32 %v1064, %v1079
          %s1086 = sadd.s32 %s474, 4
          %s1087 = sld [smem:[#allocation4 + %s1086]]
          %v1088 = vstv %s1087
          %v1089 = vmul.f32 %v1088, %v459
          %v1090 = vmul.f32 %v1088, %v460
          %v1091 = vmul.f32 %v1088, %v461
          %v1092 = vadd.f32 %v420, %v1089
          %v1093 = vadd.f32 %v421, %v1090
          %v1094 = vadd.f32 %v422, %v1091
          %s1095 = sadd.s32 %s474, 20
          %s1096 = sld [smem:[#allocation4 + %s1095]]
          %v1097 = vstv %s1096
          %v1098 = vmul.f32 %v1097, %v459
          %v1099 = vmul.f32 %v1097, %v460
          %v1100 = vmul.f32 %v1097, %v461
          %1104 = vrot.lane.b32.xlu0 %v1098, 127
          %v1105 = vpop.permute.xlu0 %1104
          %1106 = vrot.lane.b32.xlu0 %v1099, 127
          %v1107 = vpop.permute.xlu0 %1106
          %1108 = vrot.lane.b32.xlu0 %v1100, 127
          %v1109 = vpop.permute.xlu0 %1108
          %v1113 = vadd.f32 %v1092, %v1105
          %v1114 = vadd.f32 %v1093, %v1107
          %v1115 = vadd.f32 %v1094, %v1109
          %s1116 = sadd.s32 %s474, 36
          %s1117 = sld [smem:[#allocation4 + %s1116]]
          %v1118 = vstv %s1117
          %v1119 = vmul.f32 %v1118, %v459
          %v1120 = vmul.f32 %v1118, %v460
          %v1121 = vmul.f32 %v1118, %v461
          %1125 = vrot.lane.b32.xlu0 %v1119, 126
          %v1126 = vpop.permute.xlu0 %1125
          %1127 = vrot.lane.b32.xlu0 %v1120, 126
          %v1128 = vpop.permute.xlu0 %1127
          %1129 = vrot.lane.b32.xlu0 %v1121, 126
          %v1130 = vpop.permute.xlu0 %1129
          %v1134 = vadd.f32 %v1113, %v1126
          %v1135 = vadd.f32 %v1114, %v1128
          %v1136 = vadd.f32 %v1115, %v1130
          %s1137 = sadd.s32 %s474, 52
          %s1138 = sld [smem:[#allocation4 + %s1137]]
          %v1139 = vstv %s1138
          %v1140 = vmul.f32 %v1139, %v465
          %v1141 = vmul.f32 %v1139, %v466
          %v1142 = vmul.f32 %v1139, %v467
          %v1143 = vadd.f32 %v1134, %v1140
          %v1144 = vadd.f32 %v1135, %v1141
          %v1145 = vadd.f32 %v1136, %v1142
          %s1146 = sadd.s32 %s474, 68
          %s1147 = sld [smem:[#allocation4 + %s1146]]
          %v1148 = vstv %s1147
          %v1149 = vmul.f32 %v1148, %v465
          %v1150 = vmul.f32 %v1148, %v466
          %v1151 = vmul.f32 %v1148, %v467
          %1155 = vrot.lane.b32.xlu0 %v1149, 127
          %v1156 = vpop.permute.xlu0 %1155
          %1157 = vrot.lane.b32.xlu0 %v1150, 127
          %v1158 = vpop.permute.xlu0 %1157
          %1159 = vrot.lane.b32.xlu0 %v1151, 127
          %v1160 = vpop.permute.xlu0 %1159
          %v1164 = vadd.f32 %v1143, %v1156
          %v1165 = vadd.f32 %v1144, %v1158
          %v1166 = vadd.f32 %v1145, %v1160
          %s1167 = sadd.s32 %s474, 84
          %s1168 = sld [smem:[#allocation4 + %s1167]]
          %v1169 = vstv %s1168
          %v1170 = vmul.f32 %v1169, %v465
          %v1171 = vmul.f32 %v1169, %v466
          %v1172 = vmul.f32 %v1169, %v467
          %1176 = vrot.lane.b32.xlu0 %v1170, 126
          %v1177 = vpop.permute.xlu0 %1176
          %1178 = vrot.lane.b32.xlu0 %v1171, 126
          %v1179 = vpop.permute.xlu0 %1178
          %1180 = vrot.lane.b32.xlu0 %v1172, 126
          %v1181 = vpop.permute.xlu0 %1180
          %v1185 = vadd.f32 %v1164, %v1177
          %v1186 = vadd.f32 %v1165, %v1179
          %v1187 = vadd.f32 %v1166, %v1181
          %s1188 = sadd.s32 %s474, 100
          %s1189 = sld [smem:[#allocation4 + %s1188]]
          %v1190 = vstv %s1189
          %v1191 = vmul.f32 %v1190, %v471
          %v1192 = vmul.f32 %v1190, %v472
          %v1193 = vmul.f32 %v1190, %v473
          %v1194 = vadd.f32 %v1185, %v1191
          %v1195 = vadd.f32 %v1186, %v1192
          %v1196 = vadd.f32 %v1187, %v1193
          %s1197 = sadd.s32 %s474, 116
          %s1198 = sld [smem:[#allocation4 + %s1197]]
          %v1199 = vstv %s1198
          %v1200 = vmul.f32 %v1199, %v471
          %v1201 = vmul.f32 %v1199, %v472
          %v1202 = vmul.f32 %v1199, %v473
          %1206 = vrot.lane.b32.xlu0 %v1200, 127
          %v1207 = vpop.permute.xlu0 %1206
          %1208 = vrot.lane.b32.xlu0 %v1201, 127
          %v1209 = vpop.permute.xlu0 %1208
          %1210 = vrot.lane.b32.xlu0 %v1202, 127
          %v1211 = vpop.permute.xlu0 %1210
          %v1215 = vadd.f32 %v1194, %v1207
          %v1216 = vadd.f32 %v1195, %v1209
          %v1217 = vadd.f32 %v1196, %v1211
          %s1218 = sadd.s32 %s474, 132
          %s1219 = sld [smem:[#allocation4 + %s1218]]
          %v1220 = vstv %s1219
          %v1221 = vmul.f32 %v1220, %v471
          %v1222 = vmul.f32 %v1220, %v472
          %v1223 = vmul.f32 %v1220, %v473
          %1227 = vrot.lane.b32.xlu0 %v1221, 126
          %v1228 = vpop.permute.xlu0 %1227
          %1229 = vrot.lane.b32.xlu0 %v1222, 126
          %v1230 = vpop.permute.xlu0 %1229
          %1231 = vrot.lane.b32.xlu0 %v1223, 126
          %v1232 = vpop.permute.xlu0 %1231
          %v1236 = vadd.f32 %v1215, %v1228
          %v1237 = vadd.f32 %v1216, %v1230
          %v1238 = vadd.f32 %v1217, %v1232
          %s1239 = sadd.s32 %s474, 5
          %s1240 = sld [smem:[#allocation4 + %s1239]]
          %v1241 = vstv %s1240
          %v1242 = vmul.f32 %v1241, %v459
          %v1243 = vmul.f32 %v1241, %v460
          %v1244 = vmul.f32 %v1241, %v461
          %v1245 = vadd.f32 %v423, %v1242
          %v1246 = vadd.f32 %v424, %v1243
          %v1247 = vadd.f32 %v425, %v1244
          %s1248 = sadd.s32 %s474, 21
          %s1249 = sld [smem:[#allocation4 + %s1248]]
          %v1250 = vstv %s1249
          %v1251 = vmul.f32 %v1250, %v459
          %v1252 = vmul.f32 %v1250, %v460
          %v1253 = vmul.f32 %v1250, %v461
          %1257 = vrot.lane.b32.xlu0 %v1251, 127
          %v1258 = vpop.permute.xlu0 %1257
          %1259 = vrot.lane.b32.xlu0 %v1252, 127
          %v1260 = vpop.permute.xlu0 %1259
          %1261 = vrot.lane.b32.xlu0 %v1253, 127
          %v1262 = vpop.permute.xlu0 %1261
          %v1266 = vadd.f32 %v1245, %v1258
          %v1267 = vadd.f32 %v1246, %v1260
          %v1268 = vadd.f32 %v1247, %v1262
          %s1269 = sadd.s32 %s474, 37
          %s1270 = sld [smem:[#allocation4 + %s1269]]
          %v1271 = vstv %s1270
          %v1272 = vmul.f32 %v1271, %v459
          %v1273 = vmul.f32 %v1271, %v460
          %v1274 = vmul.f32 %v1271, %v461
          %1278 = vrot.lane.b32.xlu0 %v1272, 126
          %v1279 = vpop.permute.xlu0 %1278
          %1280 = vrot.lane.b32.xlu0 %v1273, 126
          %v1281 = vpop.permute.xlu0 %1280
          %1282 = vrot.lane.b32.xlu0 %v1274, 126
          %v1283 = vpop.permute.xlu0 %1282
          %v1287 = vadd.f32 %v1266, %v1279
          %v1288 = vadd.f32 %v1267, %v1281
          %v1289 = vadd.f32 %v1268, %v1283
          %s1290 = sadd.s32 %s474, 53
          %s1291 = sld [smem:[#allocation4 + %s1290]]
          %v1292 = vstv %s1291
          %v1293 = vmul.f32 %v1292, %v465
          %v1294 = vmul.f32 %v1292, %v466
          %v1295 = vmul.f32 %v1292, %v467
          %v1296 = vadd.f32 %v1287, %v1293
          %v1297 = vadd.f32 %v1288, %v1294
          %v1298 = vadd.f32 %v1289, %v1295
          %s1299 = sadd.s32 %s474, 69
          %s1300 = sld [smem:[#allocation4 + %s1299]]
          %v1301 = vstv %s1300
          %v1302 = vmul.f32 %v1301, %v465
          %v1303 = vmul.f32 %v1301, %v466
          %v1304 = vmul.f32 %v1301, %v467
          %1308 = vrot.lane.b32.xlu0 %v1302, 127
          %v1309 = vpop.permute.xlu0 %1308
          %1310 = vrot.lane.b32.xlu0 %v1303, 127
          %v1311 = vpop.permute.xlu0 %1310
          %1312 = vrot.lane.b32.xlu0 %v1304, 127
          %v1313 = vpop.permute.xlu0 %1312
          %v1317 = vadd.f32 %v1296, %v1309
          %v1318 = vadd.f32 %v1297, %v1311
          %v1319 = vadd.f32 %v1298, %v1313
          %s1320 = sadd.s32 %s474, 85
          %s1321 = sld [smem:[#allocation4 + %s1320]]
          %v1322 = vstv %s1321
          %v1323 = vmul.f32 %v1322, %v465
          %v1324 = vmul.f32 %v1322, %v466
          %v1325 = vmul.f32 %v1322, %v467
          %1329 = vrot.lane.b32.xlu0 %v1323, 126
          %v1330 = vpop.permute.xlu0 %1329
          %1331 = vrot.lane.b32.xlu0 %v1324, 126
          %v1332 = vpop.permute.xlu0 %1331
          %1333 = vrot.lane.b32.xlu0 %v1325, 126
          %v1334 = vpop.permute.xlu0 %1333
          %v1338 = vadd.f32 %v1317, %v1330
          %v1339 = vadd.f32 %v1318, %v1332
          %v1340 = vadd.f32 %v1319, %v1334
          %s1341 = sadd.s32 %s474, 101
          %s1342 = sld [smem:[#allocation4 + %s1341]]
          %v1343 = vstv %s1342
          %v1344 = vmul.f32 %v1343, %v471
          %v1345 = vmul.f32 %v1343, %v472
          %v1346 = vmul.f32 %v1343, %v473
          %v1347 = vadd.f32 %v1338, %v1344
          %v1348 = vadd.f32 %v1339, %v1345
          %v1349 = vadd.f32 %v1340, %v1346
          %s1350 = sadd.s32 %s474, 117
          %s1351 = sld [smem:[#allocation4 + %s1350]]
          %v1352 = vstv %s1351
          %v1353 = vmul.f32 %v1352, %v471
          %v1354 = vmul.f32 %v1352, %v472
          %v1355 = vmul.f32 %v1352, %v473
          %1359 = vrot.lane.b32.xlu0 %v1353, 127
          %v1360 = vpop.permute.xlu0 %1359
          %1361 = vrot.lane.b32.xlu0 %v1354, 127
          %v1362 = vpop.permute.xlu0 %1361
          %1363 = vrot.lane.b32.xlu0 %v1355, 127
          %v1364 = vpop.permute.xlu0 %1363
          %v1368 = vadd.f32 %v1347, %v1360
          %v1369 = vadd.f32 %v1348, %v1362
          %v1370 = vadd.f32 %v1349, %v1364
          %s1371 = sadd.s32 %s474, 133
          %s1372 = sld [smem:[#allocation4 + %s1371]]
          %v1373 = vstv %s1372
          %v1374 = vmul.f32 %v1373, %v471
          %v1375 = vmul.f32 %v1373, %v472
          %v1376 = vmul.f32 %v1373, %v473
          %1380 = vrot.lane.b32.xlu0 %v1374, 126
          %v1381 = vpop.permute.xlu0 %1380
          %1382 = vrot.lane.b32.xlu0 %v1375, 126
          %v1383 = vpop.permute.xlu0 %1382
          %1384 = vrot.lane.b32.xlu0 %v1376, 126
          %v1385 = vpop.permute.xlu0 %1384
          %v1389 = vadd.f32 %v1368, %v1381
          %v1390 = vadd.f32 %v1369, %v1383
          %v1391 = vadd.f32 %v1370, %v1385
          %s1392 = sadd.s32 %s474, 6
          %s1393 = sld [smem:[#allocation4 + %s1392]]
          %v1394 = vstv %s1393
          %v1395 = vmul.f32 %v1394, %v459
          %v1396 = vmul.f32 %v1394, %v460
          %v1397 = vmul.f32 %v1394, %v461
          %v1398 = vadd.f32 %v426, %v1395
          %v1399 = vadd.f32 %v427, %v1396
          %v1400 = vadd.f32 %v428, %v1397
          %s1401 = sadd.s32 %s474, 22
          %s1402 = sld [smem:[#allocation4 + %s1401]]
          %v1403 = vstv %s1402
          %v1404 = vmul.f32 %v1403, %v459
          %v1405 = vmul.f32 %v1403, %v460
          %v1406 = vmul.f32 %v1403, %v461
          %1410 = vrot.lane.b32.xlu0 %v1404, 127
          %v1411 = vpop.permute.xlu0 %1410
          %1412 = vrot.lane.b32.xlu0 %v1405, 127
          %v1413 = vpop.permute.xlu0 %1412
          %1414 = vrot.lane.b32.xlu0 %v1406, 127
          %v1415 = vpop.permute.xlu0 %1414
          %v1419 = vadd.f32 %v1398, %v1411
          %v1420 = vadd.f32 %v1399, %v1413
          %v1421 = vadd.f32 %v1400, %v1415
          %s1422 = sadd.s32 %s474, 38
          %s1423 = sld [smem:[#allocation4 + %s1422]]
          %v1424 = vstv %s1423
          %v1425 = vmul.f32 %v1424, %v459
          %v1426 = vmul.f32 %v1424, %v460
          %v1427 = vmul.f32 %v1424, %v461
          %1431 = vrot.lane.b32.xlu0 %v1425, 126
          %v1432 = vpop.permute.xlu0 %1431
          %1433 = vrot.lane.b32.xlu0 %v1426, 126
          %v1434 = vpop.permute.xlu0 %1433
          %1435 = vrot.lane.b32.xlu0 %v1427, 126
          %v1436 = vpop.permute.xlu0 %1435
          %v1440 = vadd.f32 %v1419, %v1432
          %v1441 = vadd.f32 %v1420, %v1434
          %v1442 = vadd.f32 %v1421, %v1436
          %s1443 = sadd.s32 %s474, 54
          %s1444 = sld [smem:[#allocation4 + %s1443]]
          %v1445 = vstv %s1444
          %v1446 = vmul.f32 %v1445, %v465
          %v1447 = vmul.f32 %v1445, %v466
          %v1448 = vmul.f32 %v1445, %v467
          %v1449 = vadd.f32 %v1440, %v1446
          %v1450 = vadd.f32 %v1441, %v1447
          %v1451 = vadd.f32 %v1442, %v1448
          %s1452 = sadd.s32 %s474, 70
          %s1453 = sld [smem:[#allocation4 + %s1452]]
          %v1454 = vstv %s1453
          %v1455 = vmul.f32 %v1454, %v465
          %v1456 = vmul.f32 %v1454, %v466
          %v1457 = vmul.f32 %v1454, %v467
          %1461 = vrot.lane.b32.xlu0 %v1455, 127
          %v1462 = vpop.permute.xlu0 %1461
          %1463 = vrot.lane.b32.xlu0 %v1456, 127
          %v1464 = vpop.permute.xlu0 %1463
          %1465 = vrot.lane.b32.xlu0 %v1457, 127
          %v1466 = vpop.permute.xlu0 %1465
          %v1470 = vadd.f32 %v1449, %v1462
          %v1471 = vadd.f32 %v1450, %v1464
          %v1472 = vadd.f32 %v1451, %v1466
          %s1473 = sadd.s32 %s474, 86
          %s1474 = sld [smem:[#allocation4 + %s1473]]
          %v1475 = vstv %s1474
          %v1476 = vmul.f32 %v1475, %v465
          %v1477 = vmul.f32 %v1475, %v466
          %v1478 = vmul.f32 %v1475, %v467
          %1482 = vrot.lane.b32.xlu0 %v1476, 126
          %v1483 = vpop.permute.xlu0 %1482
          %1484 = vrot.lane.b32.xlu0 %v1477, 126
          %v1485 = vpop.permute.xlu0 %1484
          %1486 = vrot.lane.b32.xlu0 %v1478, 126
          %v1487 = vpop.permute.xlu0 %1486
          %v1491 = vadd.f32 %v1470, %v1483
          %v1492 = vadd.f32 %v1471, %v1485
          %v1493 = vadd.f32 %v1472, %v1487
          %s1494 = sadd.s32 %s474, 102
          %s1495 = sld [smem:[#allocation4 + %s1494]]
          %v1496 = vstv %s1495
          %v1497 = vmul.f32 %v1496, %v471
          %v1498 = vmul.f32 %v1496, %v472
          %v1499 = vmul.f32 %v1496, %v473
          %v1500 = vadd.f32 %v1491, %v1497
          %v1501 = vadd.f32 %v1492, %v1498
          %v1502 = vadd.f32 %v1493, %v1499
          %s1503 = sadd.s32 %s474, 118
          %s1504 = sld [smem:[#allocation4 + %s1503]]
          %v1505 = vstv %s1504
          %v1506 = vmul.f32 %v1505, %v471
          %v1507 = vmul.f32 %v1505, %v472
          %v1508 = vmul.f32 %v1505, %v473
          %1512 = vrot.lane.b32.xlu0 %v1506, 127
          %v1513 = vpop.permute.xlu0 %1512
          %1514 = vrot.lane.b32.xlu0 %v1507, 127
          %v1515 = vpop.permute.xlu0 %1514
          %1516 = vrot.lane.b32.xlu0 %v1508, 127
          %v1517 = vpop.permute.xlu0 %1516
          %v1521 = vadd.f32 %v1500, %v1513
          %v1522 = vadd.f32 %v1501, %v1515
          %v1523 = vadd.f32 %v1502, %v1517
          %s1524 = sadd.s32 %s474, 134
          %s1525 = sld [smem:[#allocation4 + %s1524]]
          %v1526 = vstv %s1525
          %v1527 = vmul.f32 %v1526, %v471
          %v1528 = vmul.f32 %v1526, %v472
          %v1529 = vmul.f32 %v1526, %v473
          %1533 = vrot.lane.b32.xlu0 %v1527, 126
          %v1534 = vpop.permute.xlu0 %1533
          %1535 = vrot.lane.b32.xlu0 %v1528, 126
          %v1536 = vpop.permute.xlu0 %1535
          %1537 = vrot.lane.b32.xlu0 %v1529, 126
          %v1538 = vpop.permute.xlu0 %1537
          %v1542 = vadd.f32 %v1521, %v1534
          %v1543 = vadd.f32 %v1522, %v1536
          %v1544 = vadd.f32 %v1523, %v1538
          %s1545 = sadd.s32 %s474, 7
          %s1546 = sld [smem:[#allocation4 + %s1545]]
          %v1547 = vstv %s1546
          %v1548 = vmul.f32 %v1547, %v459
          %v1549 = vmul.f32 %v1547, %v460
          %v1550 = vmul.f32 %v1547, %v461
          %v1551 = vadd.f32 %v429, %v1548
          %v1552 = vadd.f32 %v430, %v1549
          %v1553 = vadd.f32 %v431, %v1550
          %s1554 = sadd.s32 %s474, 23
          %s1555 = sld [smem:[#allocation4 + %s1554]]
          %v1556 = vstv %s1555
          %v1557 = vmul.f32 %v1556, %v459
          %v1558 = vmul.f32 %v1556, %v460
          %v1559 = vmul.f32 %v1556, %v461
          %1563 = vrot.lane.b32.xlu0 %v1557, 127
          %v1564 = vpop.permute.xlu0 %1563
          %1565 = vrot.lane.b32.xlu0 %v1558, 127
          %v1566 = vpop.permute.xlu0 %1565
          %1567 = vrot.lane.b32.xlu0 %v1559, 127
          %v1568 = vpop.permute.xlu0 %1567
          %v1572 = vadd.f32 %v1551, %v1564
          %v1573 = vadd.f32 %v1552, %v1566
          %v1574 = vadd.f32 %v1553, %v1568
          %s1575 = sadd.s32 %s474, 39
          %s1576 = sld [smem:[#allocation4 + %s1575]]
          %v1577 = vstv %s1576
          %v1578 = vmul.f32 %v1577, %v459
          %v1579 = vmul.f32 %v1577, %v460
          %v1580 = vmul.f32 %v1577, %v461
          %1584 = vrot.lane.b32.xlu0 %v1578, 126
          %v1585 = vpop.permute.xlu0 %1584
          %1586 = vrot.lane.b32.xlu0 %v1579, 126
          %v1587 = vpop.permute.xlu0 %1586
          %1588 = vrot.lane.b32.xlu0 %v1580, 126
          %v1589 = vpop.permute.xlu0 %1588
          %v1593 = vadd.f32 %v1572, %v1585
          %v1594 = vadd.f32 %v1573, %v1587
          %v1595 = vadd.f32 %v1574, %v1589
          %s1596 = sadd.s32 %s474, 55
          %s1597 = sld [smem:[#allocation4 + %s1596]]
          %v1598 = vstv %s1597
          %v1599 = vmul.f32 %v1598, %v465
          %v1600 = vmul.f32 %v1598, %v466
          %v1601 = vmul.f32 %v1598, %v467
          %v1602 = vadd.f32 %v1593, %v1599
          %v1603 = vadd.f32 %v1594, %v1600
          %v1604 = vadd.f32 %v1595, %v1601
          %s1605 = sadd.s32 %s474, 71
          %s1606 = sld [smem:[#allocation4 + %s1605]]
          %v1607 = vstv %s1606
          %v1608 = vmul.f32 %v1607, %v465
          %v1609 = vmul.f32 %v1607, %v466
          %v1610 = vmul.f32 %v1607, %v467
          %1614 = vrot.lane.b32.xlu0 %v1608, 127
          %v1615 = vpop.permute.xlu0 %1614
          %1616 = vrot.lane.b32.xlu0 %v1609, 127
          %v1617 = vpop.permute.xlu0 %1616
          %1618 = vrot.lane.b32.xlu0 %v1610, 127
          %v1619 = vpop.permute.xlu0 %1618
          %v1623 = vadd.f32 %v1602, %v1615
          %v1624 = vadd.f32 %v1603, %v1617
          %v1625 = vadd.f32 %v1604, %v1619
          %s1626 = sadd.s32 %s474, 87
          %s1627 = sld [smem:[#allocation4 + %s1626]]
          %v1628 = vstv %s1627
          %v1629 = vmul.f32 %v1628, %v465
          %v1630 = vmul.f32 %v1628, %v466
          %v1631 = vmul.f32 %v1628, %v467
          %1635 = vrot.lane.b32.xlu0 %v1629, 126
          %v1636 = vpop.permute.xlu0 %1635
          %1637 = vrot.lane.b32.xlu0 %v1630, 126
          %v1638 = vpop.permute.xlu0 %1637
          %1639 = vrot.lane.b32.xlu0 %v1631, 126
          %v1640 = vpop.permute.xlu0 %1639
          %v1644 = vadd.f32 %v1623, %v1636
          %v1645 = vadd.f32 %v1624, %v1638
          %v1646 = vadd.f32 %v1625, %v1640
          %s1647 = sadd.s32 %s474, 103
          %s1648 = sld [smem:[#allocation4 + %s1647]]
          %v1649 = vstv %s1648
          %v1650 = vmul.f32 %v1649, %v471
          %v1651 = vmul.f32 %v1649, %v472
          %v1652 = vmul.f32 %v1649, %v473
          %v1653 = vadd.f32 %v1644, %v1650
          %v1654 = vadd.f32 %v1645, %v1651
          %v1655 = vadd.f32 %v1646, %v1652
          %s1656 = sadd.s32 %s474, 119
          %s1657 = sld [smem:[#allocation4 + %s1656]]
          %v1658 = vstv %s1657
          %v1659 = vmul.f32 %v1658, %v471
          %v1660 = vmul.f32 %v1658, %v472
          %v1661 = vmul.f32 %v1658, %v473
          %1665 = vrot.lane.b32.xlu0 %v1659, 127
          %v1666 = vpop.permute.xlu0 %1665
          %1667 = vrot.lane.b32.xlu0 %v1660, 127
          %v1668 = vpop.permute.xlu0 %1667
          %1669 = vrot.lane.b32.xlu0 %v1661, 127
          %v1670 = vpop.permute.xlu0 %1669
          %v1674 = vadd.f32 %v1653, %v1666
          %v1675 = vadd.f32 %v1654, %v1668
          %v1676 = vadd.f32 %v1655, %v1670
          %s1677 = sadd.s32 %s474, 135
          %s1678 = sld [smem:[#allocation4 + %s1677]]
          %v1679 = vstv %s1678
          %v1680 = vmul.f32 %v1679, %v471
          %v1681 = vmul.f32 %v1679, %v472
          %v1682 = vmul.f32 %v1679, %v473
          %1686 = vrot.lane.b32.xlu0 %v1680, 126
          %v1687 = vpop.permute.xlu0 %1686
          %1688 = vrot.lane.b32.xlu0 %v1681, 126
          %v1689 = vpop.permute.xlu0 %1688
          %1690 = vrot.lane.b32.xlu0 %v1682, 126
          %v1691 = vpop.permute.xlu0 %1690
          %v1695 = vadd.f32 %v1674, %v1687
          %v1696 = vadd.f32 %v1675, %v1689
          %v1697 = vadd.f32 %v1676, %v1691
          %s1698 = sadd.s32 %s474, 8
          %s1699 = sld [smem:[#allocation4 + %s1698]]
          %v1700 = vstv %s1699
          %v1701 = vmul.f32 %v1700, %v459
          %v1702 = vmul.f32 %v1700, %v460
          %v1703 = vmul.f32 %v1700, %v461
          %v1704 = vadd.f32 %v432, %v1701
          %v1705 = vadd.f32 %v433, %v1702
          %v1706 = vadd.f32 %v434, %v1703
          %s1707 = sadd.s32 %s474, 24
          %s1708 = sld [smem:[#allocation4 + %s1707]]
          %v1709 = vstv %s1708
          %v1710 = vmul.f32 %v1709, %v459
          %v1711 = vmul.f32 %v1709, %v460
          %v1712 = vmul.f32 %v1709, %v461
          %1716 = vrot.lane.b32.xlu0 %v1710, 127
          %v1717 = vpop.permute.xlu0 %1716
          %1718 = vrot.lane.b32.xlu0 %v1711, 127
          %v1719 = vpop.permute.xlu0 %1718
          %1720 = vrot.lane.b32.xlu0 %v1712, 127
          %v1721 = vpop.permute.xlu0 %1720
          %v1725 = vadd.f32 %v1704, %v1717
          %v1726 = vadd.f32 %v1705, %v1719
          %v1727 = vadd.f32 %v1706, %v1721
          %s1728 = sadd.s32 %s474, 40
          %s1729 = sld [smem:[#allocation4 + %s1728]]
          %v1730 = vstv %s1729
          %v1731 = vmul.f32 %v1730, %v459
          %v1732 = vmul.f32 %v1730, %v460
          %v1733 = vmul.f32 %v1730, %v461
          %1737 = vrot.lane.b32.xlu0 %v1731, 126
          %v1738 = vpop.permute.xlu0 %1737
          %1739 = vrot.lane.b32.xlu0 %v1732, 126
          %v1740 = vpop.permute.xlu0 %1739
          %1741 = vrot.lane.b32.xlu0 %v1733, 126
          %v1742 = vpop.permute.xlu0 %1741
          %v1746 = vadd.f32 %v1725, %v1738
          %v1747 = vadd.f32 %v1726, %v1740
          %v1748 = vadd.f32 %v1727, %v1742
          %s1749 = sadd.s32 %s474, 56
          %s1750 = sld [smem:[#allocation4 + %s1749]]
          %v1751 = vstv %s1750
          %v1752 = vmul.f32 %v1751, %v465
          %v1753 = vmul.f32 %v1751, %v466
          %v1754 = vmul.f32 %v1751, %v467
          %v1755 = vadd.f32 %v1746, %v1752
          %v1756 = vadd.f32 %v1747, %v1753
          %v1757 = vadd.f32 %v1748, %v1754
          %s1758 = sadd.s32 %s474, 72
          %s1759 = sld [smem:[#allocation4 + %s1758]]
          %v1760 = vstv %s1759
          %v1761 = vmul.f32 %v1760, %v465
          %v1762 = vmul.f32 %v1760, %v466
          %v1763 = vmul.f32 %v1760, %v467
          %1767 = vrot.lane.b32.xlu0 %v1761, 127
          %v1768 = vpop.permute.xlu0 %1767
          %1769 = vrot.lane.b32.xlu0 %v1762, 127
          %v1770 = vpop.permute.xlu0 %1769
          %1771 = vrot.lane.b32.xlu0 %v1763, 127
          %v1772 = vpop.permute.xlu0 %1771
          %v1776 = vadd.f32 %v1755, %v1768
          %v1777 = vadd.f32 %v1756, %v1770
          %v1778 = vadd.f32 %v1757, %v1772
          %s1779 = sadd.s32 %s474, 88
          %s1780 = sld [smem:[#allocation4 + %s1779]]
          %v1781 = vstv %s1780
          %v1782 = vmul.f32 %v1781, %v465
          %v1783 = vmul.f32 %v1781, %v466
          %v1784 = vmul.f32 %v1781, %v467
          %1788 = vrot.lane.b32.xlu0 %v1782, 126
          %v1789 = vpop.permute.xlu0 %1788
          %1790 = vrot.lane.b32.xlu0 %v1783, 126
          %v1791 = vpop.permute.xlu0 %1790
          %1792 = vrot.lane.b32.xlu0 %v1784, 126
          %v1793 = vpop.permute.xlu0 %1792
          %v1797 = vadd.f32 %v1776, %v1789
          %v1798 = vadd.f32 %v1777, %v1791
          %v1799 = vadd.f32 %v1778, %v1793
          %s1800 = sadd.s32 %s474, 104
          %s1801 = sld [smem:[#allocation4 + %s1800]]
          %v1802 = vstv %s1801
          %v1803 = vmul.f32 %v1802, %v471
          %v1804 = vmul.f32 %v1802, %v472
          %v1805 = vmul.f32 %v1802, %v473
          %v1806 = vadd.f32 %v1797, %v1803
          %v1807 = vadd.f32 %v1798, %v1804
          %v1808 = vadd.f32 %v1799, %v1805
          %s1809 = sadd.s32 %s474, 120
          %s1810 = sld [smem:[#allocation4 + %s1809]]
          %v1811 = vstv %s1810
          %v1812 = vmul.f32 %v1811, %v471
          %v1813 = vmul.f32 %v1811, %v472
          %v1814 = vmul.f32 %v1811, %v473
          %1818 = vrot.lane.b32.xlu0 %v1812, 127
          %v1819 = vpop.permute.xlu0 %1818
          %1820 = vrot.lane.b32.xlu0 %v1813, 127
          %v1821 = vpop.permute.xlu0 %1820
          %1822 = vrot.lane.b32.xlu0 %v1814, 127
          %v1823 = vpop.permute.xlu0 %1822
          %v1827 = vadd.f32 %v1806, %v1819
          %v1828 = vadd.f32 %v1807, %v1821
          %v1829 = vadd.f32 %v1808, %v1823
          %s1830 = sadd.s32 %s474, 136
          %s1831 = sld [smem:[#allocation4 + %s1830]]
          %v1832 = vstv %s1831
          %v1833 = vmul.f32 %v1832, %v471
          %v1834 = vmul.f32 %v1832, %v472
          %v1835 = vmul.f32 %v1832, %v473
          %1839 = vrot.lane.b32.xlu0 %v1833, 126
          %v1840 = vpop.permute.xlu0 %1839
          %1841 = vrot.lane.b32.xlu0 %v1834, 126
          %v1842 = vpop.permute.xlu0 %1841
          %1843 = vrot.lane.b32.xlu0 %v1835, 126
          %v1844 = vpop.permute.xlu0 %1843
          %v1848 = vadd.f32 %v1827, %v1840
          %v1849 = vadd.f32 %v1828, %v1842
          %v1850 = vadd.f32 %v1829, %v1844
          %s1851 = sadd.s32 %s474, 9
          %s1852 = sld [smem:[#allocation4 + %s1851]]
          %v1853 = vstv %s1852
          %v1854 = vmul.f32 %v1853, %v459
          %v1855 = vmul.f32 %v1853, %v460
          %v1856 = vmul.f32 %v1853, %v461
          %v1857 = vadd.f32 %v435, %v1854
          %v1858 = vadd.f32 %v436, %v1855
          %v1859 = vadd.f32 %v437, %v1856
          %s1860 = sadd.s32 %s474, 25
          %s1861 = sld [smem:[#allocation4 + %s1860]]
          %v1862 = vstv %s1861
          %v1863 = vmul.f32 %v1862, %v459
          %v1864 = vmul.f32 %v1862, %v460
          %v1865 = vmul.f32 %v1862, %v461
          %1869 = vrot.lane.b32.xlu0 %v1863, 127
          %v1870 = vpop.permute.xlu0 %1869
          %1871 = vrot.lane.b32.xlu0 %v1864, 127
          %v1872 = vpop.permute.xlu0 %1871
          %1873 = vrot.lane.b32.xlu0 %v1865, 127
          %v1874 = vpop.permute.xlu0 %1873
          %v1878 = vadd.f32 %v1857, %v1870
          %v1879 = vadd.f32 %v1858, %v1872
          %v1880 = vadd.f32 %v1859, %v1874
          %s1881 = sadd.s32 %s474, 41
          %s1882 = sld [smem:[#allocation4 + %s1881]]
          %v1883 = vstv %s1882
          %v1884 = vmul.f32 %v1883, %v459
          %v1885 = vmul.f32 %v1883, %v460
          %v1886 = vmul.f32 %v1883, %v461
          %1890 = vrot.lane.b32.xlu0 %v1884, 126
          %v1891 = vpop.permute.xlu0 %1890
          %1892 = vrot.lane.b32.xlu0 %v1885, 126
          %v1893 = vpop.permute.xlu0 %1892
          %1894 = vrot.lane.b32.xlu0 %v1886, 126
          %v1895 = vpop.permute.xlu0 %1894
          %v1899 = vadd.f32 %v1878, %v1891
          %v1900 = vadd.f32 %v1879, %v1893
          %v1901 = vadd.f32 %v1880, %v1895
          %s1902 = sadd.s32 %s474, 57
          %s1903 = sld [smem:[#allocation4 + %s1902]]
          %v1904 = vstv %s1903
          %v1905 = vmul.f32 %v1904, %v465
          %v1906 = vmul.f32 %v1904, %v466
          %v1907 = vmul.f32 %v1904, %v467
          %v1908 = vadd.f32 %v1899, %v1905
          %v1909 = vadd.f32 %v1900, %v1906
          %v1910 = vadd.f32 %v1901, %v1907
          %s1911 = sadd.s32 %s474, 73
          %s1912 = sld [smem:[#allocation4 + %s1911]]
          %v1913 = vstv %s1912
          %v1914 = vmul.f32 %v1913, %v465
          %v1915 = vmul.f32 %v1913, %v466
          %v1916 = vmul.f32 %v1913, %v467
          %1920 = vrot.lane.b32.xlu0 %v1914, 127
          %v1921 = vpop.permute.xlu0 %1920
          %1922 = vrot.lane.b32.xlu0 %v1915, 127
          %v1923 = vpop.permute.xlu0 %1922
          %1924 = vrot.lane.b32.xlu0 %v1916, 127
          %v1925 = vpop.permute.xlu0 %1924
          %v1929 = vadd.f32 %v1908, %v1921
          %v1930 = vadd.f32 %v1909, %v1923
          %v1931 = vadd.f32 %v1910, %v1925
          %s1932 = sadd.s32 %s474, 89
          %s1933 = sld [smem:[#allocation4 + %s1932]]
          %v1934 = vstv %s1933
          %v1935 = vmul.f32 %v1934, %v465
          %v1936 = vmul.f32 %v1934, %v466
          %v1937 = vmul.f32 %v1934, %v467
          %1941 = vrot.lane.b32.xlu0 %v1935, 126
          %v1942 = vpop.permute.xlu0 %1941
          %1943 = vrot.lane.b32.xlu0 %v1936, 126
          %v1944 = vpop.permute.xlu0 %1943
          %1945 = vrot.lane.b32.xlu0 %v1937, 126
          %v1946 = vpop.permute.xlu0 %1945
          %v1950 = vadd.f32 %v1929, %v1942
          %v1951 = vadd.f32 %v1930, %v1944
          %v1952 = vadd.f32 %v1931, %v1946
          %s1953 = sadd.s32 %s474, 105
          %s1954 = sld [smem:[#allocation4 + %s1953]]
          %v1955 = vstv %s1954
          %v1956 = vmul.f32 %v1955, %v471
          %v1957 = vmul.f32 %v1955, %v472
          %v1958 = vmul.f32 %v1955, %v473
          %v1959 = vadd.f32 %v1950, %v1956
          %v1960 = vadd.f32 %v1951, %v1957
          %v1961 = vadd.f32 %v1952, %v1958
          %s1962 = sadd.s32 %s474, 121
          %s1963 = sld [smem:[#allocation4 + %s1962]]
          %v1964 = vstv %s1963
          %v1965 = vmul.f32 %v1964, %v471
          %v1966 = vmul.f32 %v1964, %v472
          %v1967 = vmul.f32 %v1964, %v473
          %1971 = vrot.lane.b32.xlu0 %v1965, 127
          %v1972 = vpop.permute.xlu0 %1971
          %1973 = vrot.lane.b32.xlu0 %v1966, 127
          %v1974 = vpop.permute.xlu0 %1973
          %1975 = vrot.lane.b32.xlu0 %v1967, 127
          %v1976 = vpop.permute.xlu0 %1975
          %v1980 = vadd.f32 %v1959, %v1972
          %v1981 = vadd.f32 %v1960, %v1974
          %v1982 = vadd.f32 %v1961, %v1976
          %s1983 = sadd.s32 %s474, 137
          %s1984 = sld [smem:[#allocation4 + %s1983]]
          %v1985 = vstv %s1984
          %v1986 = vmul.f32 %v1985, %v471
          %v1987 = vmul.f32 %v1985, %v472
          %v1988 = vmul.f32 %v1985, %v473
          %1992 = vrot.lane.b32.xlu0 %v1986, 126
          %v1993 = vpop.permute.xlu0 %1992
          %1994 = vrot.lane.b32.xlu0 %v1987, 126
          %v1995 = vpop.permute.xlu0 %1994
          %1996 = vrot.lane.b32.xlu0 %v1988, 126
          %v1997 = vpop.permute.xlu0 %1996
          %v2001 = vadd.f32 %v1980, %v1993
          %v2002 = vadd.f32 %v1981, %v1995
          %v2003 = vadd.f32 %v1982, %v1997
          %s2004 = sadd.s32 %s474, 10
          %s2005 = sld [smem:[#allocation4 + %s2004]]
          %v2006 = vstv %s2005
          %v2007 = vmul.f32 %v2006, %v459
          %v2008 = vmul.f32 %v2006, %v460
          %v2009 = vmul.f32 %v2006, %v461
          %v2010 = vadd.f32 %v438, %v2007
          %v2011 = vadd.f32 %v439, %v2008
          %v2012 = vadd.f32 %v440, %v2009
          %s2013 = sadd.s32 %s474, 26
          %s2014 = sld [smem:[#allocation4 + %s2013]]
          %v2015 = vstv %s2014
          %v2016 = vmul.f32 %v2015, %v459
          %v2017 = vmul.f32 %v2015, %v460
          %v2018 = vmul.f32 %v2015, %v461
          %2022 = vrot.lane.b32.xlu0 %v2016, 127
          %v2023 = vpop.permute.xlu0 %2022
          %2024 = vrot.lane.b32.xlu0 %v2017, 127
          %v2025 = vpop.permute.xlu0 %2024
          %2026 = vrot.lane.b32.xlu0 %v2018, 127
          %v2027 = vpop.permute.xlu0 %2026
          %v2031 = vadd.f32 %v2010, %v2023
          %v2032 = vadd.f32 %v2011, %v2025
          %v2033 = vadd.f32 %v2012, %v2027
          %s2034 = sadd.s32 %s474, 42
          %s2035 = sld [smem:[#allocation4 + %s2034]]
          %v2036 = vstv %s2035
          %v2037 = vmul.f32 %v2036, %v459
          %v2038 = vmul.f32 %v2036, %v460
          %v2039 = vmul.f32 %v2036, %v461
          %2043 = vrot.lane.b32.xlu0 %v2037, 126
          %v2044 = vpop.permute.xlu0 %2043
          %2045 = vrot.lane.b32.xlu0 %v2038, 126
          %v2046 = vpop.permute.xlu0 %2045
          %2047 = vrot.lane.b32.xlu0 %v2039, 126
          %v2048 = vpop.permute.xlu0 %2047
          %v2052 = vadd.f32 %v2031, %v2044
          %v2053 = vadd.f32 %v2032, %v2046
          %v2054 = vadd.f32 %v2033, %v2048
          %s2055 = sadd.s32 %s474, 58
          %s2056 = sld [smem:[#allocation4 + %s2055]]
          %v2057 = vstv %s2056
          %v2058 = vmul.f32 %v2057, %v465
          %v2059 = vmul.f32 %v2057, %v466
          %v2060 = vmul.f32 %v2057, %v467
          %v2061 = vadd.f32 %v2052, %v2058
          %v2062 = vadd.f32 %v2053, %v2059
          %v2063 = vadd.f32 %v2054, %v2060
          %s2064 = sadd.s32 %s474, 74
          %s2065 = sld [smem:[#allocation4 + %s2064]]
          %v2066 = vstv %s2065
          %v2067 = vmul.f32 %v2066, %v465
          %v2068 = vmul.f32 %v2066, %v466
          %v2069 = vmul.f32 %v2066, %v467
          %2073 = vrot.lane.b32.xlu0 %v2067, 127
          %v2074 = vpop.permute.xlu0 %2073
          %2075 = vrot.lane.b32.xlu0 %v2068, 127
          %v2076 = vpop.permute.xlu0 %2075
          %2077 = vrot.lane.b32.xlu0 %v2069, 127
          %v2078 = vpop.permute.xlu0 %2077
          %v2082 = vadd.f32 %v2061, %v2074
          %v2083 = vadd.f32 %v2062, %v2076
          %v2084 = vadd.f32 %v2063, %v2078
          %s2085 = sadd.s32 %s474, 90
          %s2086 = sld [smem:[#allocation4 + %s2085]]
          %v2087 = vstv %s2086
          %v2088 = vmul.f32 %v2087, %v465
          %v2089 = vmul.f32 %v2087, %v466
          %v2090 = vmul.f32 %v2087, %v467
          %2094 = vrot.lane.b32.xlu0 %v2088, 126
          %v2095 = vpop.permute.xlu0 %2094
          %2096 = vrot.lane.b32.xlu0 %v2089, 126
          %v2097 = vpop.permute.xlu0 %2096
          %2098 = vrot.lane.b32.xlu0 %v2090, 126
          %v2099 = vpop.permute.xlu0 %2098
          %v2103 = vadd.f32 %v2082, %v2095
          %v2104 = vadd.f32 %v2083, %v2097
          %v2105 = vadd.f32 %v2084, %v2099
          %s2106 = sadd.s32 %s474, 106
          %s2107 = sld [smem:[#allocation4 + %s2106]]
          %v2108 = vstv %s2107
          %v2109 = vmul.f32 %v2108, %v471
          %v2110 = vmul.f32 %v2108, %v472
          %v2111 = vmul.f32 %v2108, %v473
          %v2112 = vadd.f32 %v2103, %v2109
          %v2113 = vadd.f32 %v2104, %v2110
          %v2114 = vadd.f32 %v2105, %v2111
          %s2115 = sadd.s32 %s474, 122
          %s2116 = sld [smem:[#allocation4 + %s2115]]
          %v2117 = vstv %s2116
          %v2118 = vmul.f32 %v2117, %v471
          %v2119 = vmul.f32 %v2117, %v472
          %v2120 = vmul.f32 %v2117, %v473
          %2124 = vrot.lane.b32.xlu0 %v2118, 127
          %v2125 = vpop.permute.xlu0 %2124
          %2126 = vrot.lane.b32.xlu0 %v2119, 127
          %v2127 = vpop.permute.xlu0 %2126
          %2128 = vrot.lane.b32.xlu0 %v2120, 127
          %v2129 = vpop.permute.xlu0 %2128
          %v2133 = vadd.f32 %v2112, %v2125
          %v2134 = vadd.f32 %v2113, %v2127
          %v2135 = vadd.f32 %v2114, %v2129
          %s2136 = sadd.s32 %s474, 138
          %s2137 = sld [smem:[#allocation4 + %s2136]]
          %v2138 = vstv %s2137
          %v2139 = vmul.f32 %v2138, %v471
          %v2140 = vmul.f32 %v2138, %v472
          %v2141 = vmul.f32 %v2138, %v473
          %2145 = vrot.lane.b32.xlu0 %v2139, 126
          %v2146 = vpop.permute.xlu0 %2145
          %2147 = vrot.lane.b32.xlu0 %v2140, 126
          %v2148 = vpop.permute.xlu0 %2147
          %2149 = vrot.lane.b32.xlu0 %v2141, 126
          %v2150 = vpop.permute.xlu0 %2149
          %v2154 = vadd.f32 %v2133, %v2146
          %v2155 = vadd.f32 %v2134, %v2148
          %v2156 = vadd.f32 %v2135, %v2150
          %s2157 = sadd.s32 %s474, 11
          %s2158 = sld [smem:[#allocation4 + %s2157]]
          %v2159 = vstv %s2158
          %v2160 = vmul.f32 %v2159, %v459
          %v2161 = vmul.f32 %v2159, %v460
          %v2162 = vmul.f32 %v2159, %v461
          %v2163 = vadd.f32 %v441, %v2160
          %v2164 = vadd.f32 %v442, %v2161
          %v2165 = vadd.f32 %v443, %v2162
          %s2166 = sadd.s32 %s474, 27
          %s2167 = sld [smem:[#allocation4 + %s2166]]
          %v2168 = vstv %s2167
          %v2169 = vmul.f32 %v2168, %v459
          %v2170 = vmul.f32 %v2168, %v460
          %v2171 = vmul.f32 %v2168, %v461
          %2175 = vrot.lane.b32.xlu0 %v2169, 127
          %v2176 = vpop.permute.xlu0 %2175
          %2177 = vrot.lane.b32.xlu0 %v2170, 127
          %v2178 = vpop.permute.xlu0 %2177
          %2179 = vrot.lane.b32.xlu0 %v2171, 127
          %v2180 = vpop.permute.xlu0 %2179
          %v2184 = vadd.f32 %v2163, %v2176
          %v2185 = vadd.f32 %v2164, %v2178
          %v2186 = vadd.f32 %v2165, %v2180
          %s2187 = sadd.s32 %s474, 43
          %s2188 = sld [smem:[#allocation4 + %s2187]]
          %v2189 = vstv %s2188
          %v2190 = vmul.f32 %v2189, %v459
          %v2191 = vmul.f32 %v2189, %v460
          %v2192 = vmul.f32 %v2189, %v461
          %2196 = vrot.lane.b32.xlu0 %v2190, 126
          %v2197 = vpop.permute.xlu0 %2196
          %2198 = vrot.lane.b32.xlu0 %v2191, 126
          %v2199 = vpop.permute.xlu0 %2198
          %2200 = vrot.lane.b32.xlu0 %v2192, 126
          %v2201 = vpop.permute.xlu0 %2200
          %v2205 = vadd.f32 %v2184, %v2197
          %v2206 = vadd.f32 %v2185, %v2199
          %v2207 = vadd.f32 %v2186, %v2201
          %s2208 = sadd.s32 %s474, 59
          %s2209 = sld [smem:[#allocation4 + %s2208]]
          %v2210 = vstv %s2209
          %v2211 = vmul.f32 %v2210, %v465
          %v2212 = vmul.f32 %v2210, %v466
          %v2213 = vmul.f32 %v2210, %v467
          %v2214 = vadd.f32 %v2205, %v2211
          %v2215 = vadd.f32 %v2206, %v2212
          %v2216 = vadd.f32 %v2207, %v2213
          %s2217 = sadd.s32 %s474, 75
          %s2218 = sld [smem:[#allocation4 + %s2217]]
          %v2219 = vstv %s2218
          %v2220 = vmul.f32 %v2219, %v465
          %v2221 = vmul.f32 %v2219, %v466
          %v2222 = vmul.f32 %v2219, %v467
          %2226 = vrot.lane.b32.xlu0 %v2220, 127
          %v2227 = vpop.permute.xlu0 %2226
          %2228 = vrot.lane.b32.xlu0 %v2221, 127
          %v2229 = vpop.permute.xlu0 %2228
          %2230 = vrot.lane.b32.xlu0 %v2222, 127
          %v2231 = vpop.permute.xlu0 %2230
          %v2235 = vadd.f32 %v2214, %v2227
          %v2236 = vadd.f32 %v2215, %v2229
          %v2237 = vadd.f32 %v2216, %v2231
          %s2238 = sadd.s32 %s474, 91
          %s2239 = sld [smem:[#allocation4 + %s2238]]
          %v2240 = vstv %s2239
          %v2241 = vmul.f32 %v2240, %v465
          %v2242 = vmul.f32 %v2240, %v466
          %v2243 = vmul.f32 %v2240, %v467
          %2247 = vrot.lane.b32.xlu0 %v2241, 126
          %v2248 = vpop.permute.xlu0 %2247
          %2249 = vrot.lane.b32.xlu0 %v2242, 126
          %v2250 = vpop.permute.xlu0 %2249
          %2251 = vrot.lane.b32.xlu0 %v2243, 126
          %v2252 = vpop.permute.xlu0 %2251
          %v2256 = vadd.f32 %v2235, %v2248
          %v2257 = vadd.f32 %v2236, %v2250
          %v2258 = vadd.f32 %v2237, %v2252
          %s2259 = sadd.s32 %s474, 107
          %s2260 = sld [smem:[#allocation4 + %s2259]]
          %v2261 = vstv %s2260
          %v2262 = vmul.f32 %v2261, %v471
          %v2263 = vmul.f32 %v2261, %v472
          %v2264 = vmul.f32 %v2261, %v473
          %v2265 = vadd.f32 %v2256, %v2262
          %v2266 = vadd.f32 %v2257, %v2263
          %v2267 = vadd.f32 %v2258, %v2264
          %s2268 = sadd.s32 %s474, 123
          %s2269 = sld [smem:[#allocation4 + %s2268]]
          %v2270 = vstv %s2269
          %v2271 = vmul.f32 %v2270, %v471
          %v2272 = vmul.f32 %v2270, %v472
          %v2273 = vmul.f32 %v2270, %v473
          %2277 = vrot.lane.b32.xlu0 %v2271, 127
          %v2278 = vpop.permute.xlu0 %2277
          %2279 = vrot.lane.b32.xlu0 %v2272, 127
          %v2280 = vpop.permute.xlu0 %2279
          %2281 = vrot.lane.b32.xlu0 %v2273, 127
          %v2282 = vpop.permute.xlu0 %2281
          %v2286 = vadd.f32 %v2265, %v2278
          %v2287 = vadd.f32 %v2266, %v2280
          %v2288 = vadd.f32 %v2267, %v2282
          %s2289 = sadd.s32 %s474, 139
          %s2290 = sld [smem:[#allocation4 + %s2289]]
          %v2291 = vstv %s2290
          %v2292 = vmul.f32 %v2291, %v471
          %v2293 = vmul.f32 %v2291, %v472
          %v2294 = vmul.f32 %v2291, %v473
          %2298 = vrot.lane.b32.xlu0 %v2292, 126
          %v2299 = vpop.permute.xlu0 %2298
          %2300 = vrot.lane.b32.xlu0 %v2293, 126
          %v2301 = vpop.permute.xlu0 %2300
          %2302 = vrot.lane.b32.xlu0 %v2294, 126
          %v2303 = vpop.permute.xlu0 %2302
          %v2307 = vadd.f32 %v2286, %v2299
          %v2308 = vadd.f32 %v2287, %v2301
          %v2309 = vadd.f32 %v2288, %v2303
          %s2310 = sadd.s32 %s474, 12
          %s2311 = sld [smem:[#allocation4 + %s2310]]
          %v2312 = vstv %s2311
          %v2313 = vmul.f32 %v2312, %v459
          %v2314 = vmul.f32 %v2312, %v460
          %v2315 = vmul.f32 %v2312, %v461
          %v2316 = vadd.f32 %v444, %v2313
          %v2317 = vadd.f32 %v445, %v2314
          %v2318 = vadd.f32 %v446, %v2315
          %s2319 = sadd.s32 %s474, 28
          %s2320 = sld [smem:[#allocation4 + %s2319]]
          %v2321 = vstv %s2320
          %v2322 = vmul.f32 %v2321, %v459
          %v2323 = vmul.f32 %v2321, %v460
          %v2324 = vmul.f32 %v2321, %v461
          %2328 = vrot.lane.b32.xlu0 %v2322, 127
          %v2329 = vpop.permute.xlu0 %2328
          %2330 = vrot.lane.b32.xlu0 %v2323, 127
          %v2331 = vpop.permute.xlu0 %2330
          %2332 = vrot.lane.b32.xlu0 %v2324, 127
          %v2333 = vpop.permute.xlu0 %2332
          %v2337 = vadd.f32 %v2316, %v2329
          %v2338 = vadd.f32 %v2317, %v2331
          %v2339 = vadd.f32 %v2318, %v2333
          %s2340 = sadd.s32 %s474, 44
          %s2341 = sld [smem:[#allocation4 + %s2340]]
          %v2342 = vstv %s2341
          %v2343 = vmul.f32 %v2342, %v459
          %v2344 = vmul.f32 %v2342, %v460
          %v2345 = vmul.f32 %v2342, %v461
          %2349 = vrot.lane.b32.xlu0 %v2343, 126
          %v2350 = vpop.permute.xlu0 %2349
          %2351 = vrot.lane.b32.xlu0 %v2344, 126
          %v2352 = vpop.permute.xlu0 %2351
          %2353 = vrot.lane.b32.xlu0 %v2345, 126
          %v2354 = vpop.permute.xlu0 %2353
          %v2358 = vadd.f32 %v2337, %v2350
          %v2359 = vadd.f32 %v2338, %v2352
          %v2360 = vadd.f32 %v2339, %v2354
          %s2361 = sadd.s32 %s474, 60
          %s2362 = sld [smem:[#allocation4 + %s2361]]
          %v2363 = vstv %s2362
          %v2364 = vmul.f32 %v2363, %v465
          %v2365 = vmul.f32 %v2363, %v466
          %v2366 = vmul.f32 %v2363, %v467
          %v2367 = vadd.f32 %v2358, %v2364
          %v2368 = vadd.f32 %v2359, %v2365
          %v2369 = vadd.f32 %v2360, %v2366
          %s2370 = sadd.s32 %s474, 76
          %s2371 = sld [smem:[#allocation4 + %s2370]]
          %v2372 = vstv %s2371
          %v2373 = vmul.f32 %v2372, %v465
          %v2374 = vmul.f32 %v2372, %v466
          %v2375 = vmul.f32 %v2372, %v467
          %2379 = vrot.lane.b32.xlu0 %v2373, 127
          %v2380 = vpop.permute.xlu0 %2379
          %2381 = vrot.lane.b32.xlu0 %v2374, 127
          %v2382 = vpop.permute.xlu0 %2381
          %2383 = vrot.lane.b32.xlu0 %v2375, 127
          %v2384 = vpop.permute.xlu0 %2383
          %v2388 = vadd.f32 %v2367, %v2380
          %v2389 = vadd.f32 %v2368, %v2382
          %v2390 = vadd.f32 %v2369, %v2384
          %s2391 = sadd.s32 %s474, 92
          %s2392 = sld [smem:[#allocation4 + %s2391]]
          %v2393 = vstv %s2392
          %v2394 = vmul.f32 %v2393, %v465
          %v2395 = vmul.f32 %v2393, %v466
          %v2396 = vmul.f32 %v2393, %v467
          %2400 = vrot.lane.b32.xlu0 %v2394, 126
          %v2401 = vpop.permute.xlu0 %2400
          %2402 = vrot.lane.b32.xlu0 %v2395, 126
          %v2403 = vpop.permute.xlu0 %2402
          %2404 = vrot.lane.b32.xlu0 %v2396, 126
          %v2405 = vpop.permute.xlu0 %2404
          %v2409 = vadd.f32 %v2388, %v2401
          %v2410 = vadd.f32 %v2389, %v2403
          %v2411 = vadd.f32 %v2390, %v2405
          %s2412 = sadd.s32 %s474, 108
          %s2413 = sld [smem:[#allocation4 + %s2412]]
          %v2414 = vstv %s2413
          %v2415 = vmul.f32 %v2414, %v471
          %v2416 = vmul.f32 %v2414, %v472
          %v2417 = vmul.f32 %v2414, %v473
          %v2418 = vadd.f32 %v2409, %v2415
          %v2419 = vadd.f32 %v2410, %v2416
          %v2420 = vadd.f32 %v2411, %v2417
          %s2421 = sadd.s32 %s474, 124
          %s2422 = sld [smem:[#allocation4 + %s2421]]
          %v2423 = vstv %s2422
          %v2424 = vmul.f32 %v2423, %v471
          %v2425 = vmul.f32 %v2423, %v472
          %v2426 = vmul.f32 %v2423, %v473
          %2430 = vrot.lane.b32.xlu0 %v2424, 127
          %v2431 = vpop.permute.xlu0 %2430
          %2432 = vrot.lane.b32.xlu0 %v2425, 127
          %v2433 = vpop.permute.xlu0 %2432
          %2434 = vrot.lane.b32.xlu0 %v2426, 127
          %v2435 = vpop.permute.xlu0 %2434
          %v2439 = vadd.f32 %v2418, %v2431
          %v2440 = vadd.f32 %v2419, %v2433
          %v2441 = vadd.f32 %v2420, %v2435
          %s2442 = sadd.s32 %s474, 140
          %s2443 = sld [smem:[#allocation4 + %s2442]]
          %v2444 = vstv %s2443
          %v2445 = vmul.f32 %v2444, %v471
          %v2446 = vmul.f32 %v2444, %v472
          %v2447 = vmul.f32 %v2444, %v473
          %2451 = vrot.lane.b32.xlu0 %v2445, 126
          %v2452 = vpop.permute.xlu0 %2451
          %2453 = vrot.lane.b32.xlu0 %v2446, 126
          %v2454 = vpop.permute.xlu0 %2453
          %2455 = vrot.lane.b32.xlu0 %v2447, 126
          %v2456 = vpop.permute.xlu0 %2455
          %v2460 = vadd.f32 %v2439, %v2452
          %v2461 = vadd.f32 %v2440, %v2454
          %v2462 = vadd.f32 %v2441, %v2456
          %s2463 = sadd.s32 %s474, 13
          %s2464 = sld [smem:[#allocation4 + %s2463]]
          %v2465 = vstv %s2464
          %v2466 = vmul.f32 %v2465, %v459
          %v2467 = vmul.f32 %v2465, %v460
          %v2468 = vmul.f32 %v2465, %v461
          %v2469 = vadd.f32 %v447, %v2466
          %v2470 = vadd.f32 %v448, %v2467
          %v2471 = vadd.f32 %v449, %v2468
          %s2472 = sadd.s32 %s474, 29
          %s2473 = sld [smem:[#allocation4 + %s2472]]
          %v2474 = vstv %s2473
          %v2475 = vmul.f32 %v2474, %v459
          %v2476 = vmul.f32 %v2474, %v460
          %v2477 = vmul.f32 %v2474, %v461
          %2481 = vrot.lane.b32.xlu0 %v2475, 127
          %v2482 = vpop.permute.xlu0 %2481
          %2483 = vrot.lane.b32.xlu0 %v2476, 127
          %v2484 = vpop.permute.xlu0 %2483
          %2485 = vrot.lane.b32.xlu0 %v2477, 127
          %v2486 = vpop.permute.xlu0 %2485
          %v2490 = vadd.f32 %v2469, %v2482
          %v2491 = vadd.f32 %v2470, %v2484
          %v2492 = vadd.f32 %v2471, %v2486
          %s2493 = sadd.s32 %s474, 45
          %s2494 = sld [smem:[#allocation4 + %s2493]]
          %v2495 = vstv %s2494
          %v2496 = vmul.f32 %v2495, %v459
          %v2497 = vmul.f32 %v2495, %v460
          %v2498 = vmul.f32 %v2495, %v461
          %2502 = vrot.lane.b32.xlu0 %v2496, 126
          %v2503 = vpop.permute.xlu0 %2502
          %2504 = vrot.lane.b32.xlu0 %v2497, 126
          %v2505 = vpop.permute.xlu0 %2504
          %2506 = vrot.lane.b32.xlu0 %v2498, 126
          %v2507 = vpop.permute.xlu0 %2506
          %v2511 = vadd.f32 %v2490, %v2503
          %v2512 = vadd.f32 %v2491, %v2505
          %v2513 = vadd.f32 %v2492, %v2507
          %s2514 = sadd.s32 %s474, 61
          %s2515 = sld [smem:[#allocation4 + %s2514]]
          %v2516 = vstv %s2515
          %v2517 = vmul.f32 %v2516, %v465
          %v2518 = vmul.f32 %v2516, %v466
          %v2519 = vmul.f32 %v2516, %v467
          %v2520 = vadd.f32 %v2511, %v2517
          %v2521 = vadd.f32 %v2512, %v2518
          %v2522 = vadd.f32 %v2513, %v2519
          %s2523 = sadd.s32 %s474, 77
          %s2524 = sld [smem:[#allocation4 + %s2523]]
          %v2525 = vstv %s2524
          %v2526 = vmul.f32 %v2525, %v465
          %v2527 = vmul.f32 %v2525, %v466
          %v2528 = vmul.f32 %v2525, %v467
          %2532 = vrot.lane.b32.xlu0 %v2526, 127
          %v2533 = vpop.permute.xlu0 %2532
          %2534 = vrot.lane.b32.xlu0 %v2527, 127
          %v2535 = vpop.permute.xlu0 %2534
          %2536 = vrot.lane.b32.xlu0 %v2528, 127
          %v2537 = vpop.permute.xlu0 %2536
          %v2541 = vadd.f32 %v2520, %v2533
          %v2542 = vadd.f32 %v2521, %v2535
          %v2543 = vadd.f32 %v2522, %v2537
          %s2544 = sadd.s32 %s474, 93
          %s2545 = sld [smem:[#allocation4 + %s2544]]
          %v2546 = vstv %s2545
          %v2547 = vmul.f32 %v2546, %v465
          %v2548 = vmul.f32 %v2546, %v466
          %v2549 = vmul.f32 %v2546, %v467
          %2553 = vrot.lane.b32.xlu0 %v2547, 126
          %v2554 = vpop.permute.xlu0 %2553
          %2555 = vrot.lane.b32.xlu0 %v2548, 126
          %v2556 = vpop.permute.xlu0 %2555
          %2557 = vrot.lane.b32.xlu0 %v2549, 126
          %v2558 = vpop.permute.xlu0 %2557
          %v2562 = vadd.f32 %v2541, %v2554
          %v2563 = vadd.f32 %v2542, %v2556
          %v2564 = vadd.f32 %v2543, %v2558
          %s2565 = sadd.s32 %s474, 109
          %s2566 = sld [smem:[#allocation4 + %s2565]]
          %v2567 = vstv %s2566
          %v2568 = vmul.f32 %v2567, %v471
          %v2569 = vmul.f32 %v2567, %v472
          %v2570 = vmul.f32 %v2567, %v473
          %v2571 = vadd.f32 %v2562, %v2568
          %v2572 = vadd.f32 %v2563, %v2569
          %v2573 = vadd.f32 %v2564, %v2570
          %s2574 = sadd.s32 %s474, 125
          %s2575 = sld [smem:[#allocation4 + %s2574]]
          %v2576 = vstv %s2575
          %v2577 = vmul.f32 %v2576, %v471
          %v2578 = vmul.f32 %v2576, %v472
          %v2579 = vmul.f32 %v2576, %v473
          %2583 = vrot.lane.b32.xlu0 %v2577, 127
          %v2584 = vpop.permute.xlu0 %2583
          %2585 = vrot.lane.b32.xlu0 %v2578, 127
          %v2586 = vpop.permute.xlu0 %2585
          %2587 = vrot.lane.b32.xlu0 %v2579, 127
          %v2588 = vpop.permute.xlu0 %2587
          %v2592 = vadd.f32 %v2571, %v2584
          %v2593 = vadd.f32 %v2572, %v2586
          %v2594 = vadd.f32 %v2573, %v2588
          %s2595 = sadd.s32 %s474, 141
          %s2596 = sld [smem:[#allocation4 + %s2595]]
          %v2597 = vstv %s2596
          %v2598 = vmul.f32 %v2597, %v471
          %v2599 = vmul.f32 %v2597, %v472
          %v2600 = vmul.f32 %v2597, %v473
          %2604 = vrot.lane.b32.xlu0 %v2598, 126
          %v2605 = vpop.permute.xlu0 %2604
          %2606 = vrot.lane.b32.xlu0 %v2599, 126
          %v2607 = vpop.permute.xlu0 %2606
          %2608 = vrot.lane.b32.xlu0 %v2600, 126
          %v2609 = vpop.permute.xlu0 %2608
          %v2613 = vadd.f32 %v2592, %v2605
          %v2614 = vadd.f32 %v2593, %v2607
          %v2615 = vadd.f32 %v2594, %v2609
          %s2616 = sadd.s32 %s474, 14
          %s2617 = sld [smem:[#allocation4 + %s2616]]
          %v2618 = vstv %s2617
          %v2619 = vmul.f32 %v2618, %v459
          %v2620 = vmul.f32 %v2618, %v460
          %v2621 = vmul.f32 %v2618, %v461
          %v2622 = vadd.f32 %v450, %v2619
          %v2623 = vadd.f32 %v451, %v2620
          %v2624 = vadd.f32 %v452, %v2621
          %s2625 = sadd.s32 %s474, 30
          %s2626 = sld [smem:[#allocation4 + %s2625]]
          %v2627 = vstv %s2626
          %v2628 = vmul.f32 %v2627, %v459
          %v2629 = vmul.f32 %v2627, %v460
          %v2630 = vmul.f32 %v2627, %v461
          %2634 = vrot.lane.b32.xlu0 %v2628, 127
          %v2635 = vpop.permute.xlu0 %2634
          %2636 = vrot.lane.b32.xlu0 %v2629, 127
          %v2637 = vpop.permute.xlu0 %2636
          %2638 = vrot.lane.b32.xlu0 %v2630, 127
          %v2639 = vpop.permute.xlu0 %2638
          %v2643 = vadd.f32 %v2622, %v2635
          %v2644 = vadd.f32 %v2623, %v2637
          %v2645 = vadd.f32 %v2624, %v2639
          %s2646 = sadd.s32 %s474, 46
          %s2647 = sld [smem:[#allocation4 + %s2646]]
          %v2648 = vstv %s2647
          %v2649 = vmul.f32 %v2648, %v459
          %v2650 = vmul.f32 %v2648, %v460
          %v2651 = vmul.f32 %v2648, %v461
          %2655 = vrot.lane.b32.xlu0 %v2649, 126
          %v2656 = vpop.permute.xlu0 %2655
          %2657 = vrot.lane.b32.xlu0 %v2650, 126
          %v2658 = vpop.permute.xlu0 %2657
          %2659 = vrot.lane.b32.xlu0 %v2651, 126
          %v2660 = vpop.permute.xlu0 %2659
          %v2664 = vadd.f32 %v2643, %v2656
          %v2665 = vadd.f32 %v2644, %v2658
          %v2666 = vadd.f32 %v2645, %v2660
          %s2667 = sadd.s32 %s474, 62
          %s2668 = sld [smem:[#allocation4 + %s2667]]
          %v2669 = vstv %s2668
          %v2670 = vmul.f32 %v2669, %v465
          %v2671 = vmul.f32 %v2669, %v466
          %v2672 = vmul.f32 %v2669, %v467
          %v2673 = vadd.f32 %v2664, %v2670
          %v2674 = vadd.f32 %v2665, %v2671
          %v2675 = vadd.f32 %v2666, %v2672
          %s2676 = sadd.s32 %s474, 78
          %s2677 = sld [smem:[#allocation4 + %s2676]]
          %v2678 = vstv %s2677
          %v2679 = vmul.f32 %v2678, %v465
          %v2680 = vmul.f32 %v2678, %v466
          %v2681 = vmul.f32 %v2678, %v467
          %2685 = vrot.lane.b32.xlu0 %v2679, 127
          %v2686 = vpop.permute.xlu0 %2685
          %2687 = vrot.lane.b32.xlu0 %v2680, 127
          %v2688 = vpop.permute.xlu0 %2687
          %2689 = vrot.lane.b32.xlu0 %v2681, 127
          %v2690 = vpop.permute.xlu0 %2689
          %v2694 = vadd.f32 %v2673, %v2686
          %v2695 = vadd.f32 %v2674, %v2688
          %v2696 = vadd.f32 %v2675, %v2690
          %s2697 = sadd.s32 %s474, 94
          %s2698 = sld [smem:[#allocation4 + %s2697]]
          %v2699 = vstv %s2698
          %v2700 = vmul.f32 %v2699, %v465
          %v2701 = vmul.f32 %v2699, %v466
          %v2702 = vmul.f32 %v2699, %v467
          %2706 = vrot.lane.b32.xlu0 %v2700, 126
          %v2707 = vpop.permute.xlu0 %2706
          %2708 = vrot.lane.b32.xlu0 %v2701, 126
          %v2709 = vpop.permute.xlu0 %2708
          %2710 = vrot.lane.b32.xlu0 %v2702, 126
          %v2711 = vpop.permute.xlu0 %2710
          %v2715 = vadd.f32 %v2694, %v2707
          %v2716 = vadd.f32 %v2695, %v2709
          %v2717 = vadd.f32 %v2696, %v2711
          %s2718 = sadd.s32 %s474, 110
          %s2719 = sld [smem:[#allocation4 + %s2718]]
          %v2720 = vstv %s2719
          %v2721 = vmul.f32 %v2720, %v471
          %v2722 = vmul.f32 %v2720, %v472
          %v2723 = vmul.f32 %v2720, %v473
          %v2724 = vadd.f32 %v2715, %v2721
          %v2725 = vadd.f32 %v2716, %v2722
          %v2726 = vadd.f32 %v2717, %v2723
          %s2727 = sadd.s32 %s474, 126
          %s2728 = sld [smem:[#allocation4 + %s2727]]
          %v2729 = vstv %s2728
          %v2730 = vmul.f32 %v2729, %v471
          %v2731 = vmul.f32 %v2729, %v472
          %v2732 = vmul.f32 %v2729, %v473
          %2736 = vrot.lane.b32.xlu0 %v2730, 127
          %v2737 = vpop.permute.xlu0 %2736
          %2738 = vrot.lane.b32.xlu0 %v2731, 127
          %v2739 = vpop.permute.xlu0 %2738
          %2740 = vrot.lane.b32.xlu0 %v2732, 127
          %v2741 = vpop.permute.xlu0 %2740
          %v2745 = vadd.f32 %v2724, %v2737
          %v2746 = vadd.f32 %v2725, %v2739
          %v2747 = vadd.f32 %v2726, %v2741
          %s2748 = sadd.s32 %s474, 142
          %s2749 = sld [smem:[#allocation4 + %s2748]]
          %v2750 = vstv %s2749
          %v2751 = vmul.f32 %v2750, %v471
          %v2752 = vmul.f32 %v2750, %v472
          %v2753 = vmul.f32 %v2750, %v473
          %2757 = vrot.lane.b32.xlu0 %v2751, 126
          %v2758 = vpop.permute.xlu0 %2757
          %2759 = vrot.lane.b32.xlu0 %v2752, 126
          %v2760 = vpop.permute.xlu0 %2759
          %2761 = vrot.lane.b32.xlu0 %v2753, 126
          %v2762 = vpop.permute.xlu0 %2761
          %v2766 = vadd.f32 %v2745, %v2758
          %v2767 = vadd.f32 %v2746, %v2760
          %v2768 = vadd.f32 %v2747, %v2762
          %s2769 = sadd.s32 %s474, 15
          %s2770 = sld [smem:[#allocation4 + %s2769]]
          %v2771 = vstv %s2770
          %v2772 = vmul.f32 %v2771, %v459
          %v2773 = vmul.f32 %v2771, %v460
          %v2774 = vmul.f32 %v2771, %v461
          %v2775 = vadd.f32 %v453, %v2772
          %v2776 = vadd.f32 %v454, %v2773
          %v2777 = vadd.f32 %v455, %v2774
          %s2778 = sadd.s32 %s474, 31
          %s2779 = sld [smem:[#allocation4 + %s2778]]
          %v2780 = vstv %s2779
          %v2781 = vmul.f32 %v2780, %v459
          %v2782 = vmul.f32 %v2780, %v460
          %v2783 = vmul.f32 %v2780, %v461
          %2787 = vrot.lane.b32.xlu0 %v2781, 127
          %v2788 = vpop.permute.xlu0 %2787
          %2789 = vrot.lane.b32.xlu0 %v2782, 127
          %v2790 = vpop.permute.xlu0 %2789
          %2791 = vrot.lane.b32.xlu0 %v2783, 127
          %v2792 = vpop.permute.xlu0 %2791
          %v2796 = vadd.f32 %v2775, %v2788
          %v2797 = vadd.f32 %v2776, %v2790
          %v2798 = vadd.f32 %v2777, %v2792
          %s2799 = sadd.s32 %s474, 47
          %s2800 = sld [smem:[#allocation4 + %s2799]]
          %v2801 = vstv %s2800
          %v2802 = vmul.f32 %v2801, %v459
          %v2803 = vmul.f32 %v2801, %v460
          %v2804 = vmul.f32 %v2801, %v461
          %2808 = vrot.lane.b32.xlu0 %v2802, 126
          %v2809 = vpop.permute.xlu0 %2808
          %2810 = vrot.lane.b32.xlu0 %v2803, 126
          %v2811 = vpop.permute.xlu0 %2810
          %2812 = vrot.lane.b32.xlu0 %v2804, 126
          %v2813 = vpop.permute.xlu0 %2812
          %v2817 = vadd.f32 %v2796, %v2809
          %v2818 = vadd.f32 %v2797, %v2811
          %v2819 = vadd.f32 %v2798, %v2813
          %s2820 = sadd.s32 %s474, 63
          %s2821 = sld [smem:[#allocation4 + %s2820]]
          %v2822 = vstv %s2821
          %v2823 = vmul.f32 %v2822, %v465
          %v2824 = vmul.f32 %v2822, %v466
          %v2825 = vmul.f32 %v2822, %v467
          %v2826 = vadd.f32 %v2817, %v2823
          %v2827 = vadd.f32 %v2818, %v2824
          %v2828 = vadd.f32 %v2819, %v2825
          %s2829 = sadd.s32 %s474, 79
          %s2830 = sld [smem:[#allocation4 + %s2829]]
          %v2831 = vstv %s2830
          %v2832 = vmul.f32 %v2831, %v465
          %v2833 = vmul.f32 %v2831, %v466
          %v2834 = vmul.f32 %v2831, %v467
          %2838 = vrot.lane.b32.xlu0 %v2832, 127
          %v2839 = vpop.permute.xlu0 %2838
          %2840 = vrot.lane.b32.xlu0 %v2833, 127
          %v2841 = vpop.permute.xlu0 %2840
          %2842 = vrot.lane.b32.xlu0 %v2834, 127
          %v2843 = vpop.permute.xlu0 %2842
          %v2847 = vadd.f32 %v2826, %v2839
          %v2848 = vadd.f32 %v2827, %v2841
          %v2849 = vadd.f32 %v2828, %v2843
          %s2850 = sadd.s32 %s474, 95
          %s2851 = sld [smem:[#allocation4 + %s2850]]
          %v2852 = vstv %s2851
          %v2853 = vmul.f32 %v2852, %v465
          %v2854 = vmul.f32 %v2852, %v466
          %v2855 = vmul.f32 %v2852, %v467
          %2859 = vrot.lane.b32.xlu0 %v2853, 126
          %v2860 = vpop.permute.xlu0 %2859
          %2861 = vrot.lane.b32.xlu0 %v2854, 126
          %v2862 = vpop.permute.xlu0 %2861
          %2863 = vrot.lane.b32.xlu0 %v2855, 126
          %v2864 = vpop.permute.xlu0 %2863
          %v2868 = vadd.f32 %v2847, %v2860
          %v2869 = vadd.f32 %v2848, %v2862
          %v2870 = vadd.f32 %v2849, %v2864
          %s2871 = sadd.s32 %s474, 111
          %s2872 = sld [smem:[#allocation4 + %s2871]]
          %v2873 = vstv %s2872
          %v2874 = vmul.f32 %v2873, %v471
          %v2875 = vmul.f32 %v2873, %v472
          %v2876 = vmul.f32 %v2873, %v473
          %v2877 = vadd.f32 %v2868, %v2874
          %v2878 = vadd.f32 %v2869, %v2875
          %v2879 = vadd.f32 %v2870, %v2876
          %s2880 = sadd.s32 %s474, 127
          %s2881 = sld [smem:[#allocation4 + %s2880]]
          %v2882 = vstv %s2881
          %v2883 = vmul.f32 %v2882, %v471
          %v2884 = vmul.f32 %v2882, %v472
          %v2885 = vmul.f32 %v2882, %v473
          %2889 = vrot.lane.b32.xlu0 %v2883, 127
          %v2890 = vpop.permute.xlu0 %2889
          %2891 = vrot.lane.b32.xlu0 %v2884, 127
          %v2892 = vpop.permute.xlu0 %2891
          %2893 = vrot.lane.b32.xlu0 %v2885, 127
          %v2894 = vpop.permute.xlu0 %2893
          %v2898 = vadd.f32 %v2877, %v2890
          %v2899 = vadd.f32 %v2878, %v2892
          %v2900 = vadd.f32 %v2879, %v2894
          %s2901 = sadd.s32 %s474, 143
          %s2902 = sld [smem:[#allocation4 + %s2901]]
          %v2903 = vstv %s2902
          %v2904 = vmul.f32 %v2903, %v471
          %v2905 = vmul.f32 %v2903, %v472
          %v2906 = vmul.f32 %v2903, %v473
          %2910 = vrot.lane.b32.xlu0 %v2904, 126
          %v2911 = vpop.permute.xlu0 %2910
          %2912 = vrot.lane.b32.xlu0 %v2905, 126
          %v2913 = vpop.permute.xlu0 %2912
          %2914 = vrot.lane.b32.xlu0 %v2906, 126
          %v2915 = vpop.permute.xlu0 %2914
          %v2919 = vadd.f32 %v2898, %v2911
          %v2920 = vadd.f32 %v2899, %v2913
          %v2921 = vadd.f32 %v2900, %v2915
        $region77: #{tpu_custom_call.1} parent=47 // loop_footer
          %s407 = sadd.s32 1, %s403
        $region78: #{tpu_custom_call.1} parent=47 // loop_footer_branch
          %402 = sbr.rel target = $region74
        $region79: #{tpu_custom_call.1} parent=47 // loop_exit
          _
        %s2922 = ssub.s32 %s369, 2
        %v2923 = vlaneseq
        %v2924 = vshrl.u32 %v2923, 7
        %v2925 = vadd.s32 %v2924, 8
        %v2926 = vadd.s32 %v2924, 16
        %v2927 = vstv %s2922
        %v2928 = vadd.s32 %v2924, %v2927
        %v2929 = vadd.s32 %v2925, %v2927
        %v2930 = vadd.s32 %v2926, %v2927
        %vm2931 = vcmp.ge.s32.totalorder %v2928, 0
        %vm2932 = vcmp.ge.s32.totalorder %v2929, 0
        %vm2933 = vcmp.ge.s32.totalorder %v2930, 0
        %vm2934 = vcmp.lt.s32.totalorder %v2928, 16
        %vm2935 = vcmp.lt.s32.totalorder %v2929, 16
        %vm2936 = vcmp.lt.s32.totalorder %v2930, 16
        %vm2937 = vmand %vm2931, %vm2934
        %vm2938 = vmand %vm2932, %vm2935
        %vm2939 = vmand %vm2933, %vm2936
        %v2940 = vmax.f32 %v408, 0.0
        %v2941 = vmax.f32 %v409, 0.0
        %v2942 = vmax.f32 %v410, 0.0
        %v2943 = vsel %vm2937, 1, 0
        %v2944 = vsel %vm2938, 1, 0
        %v2945 = vsel %vm2939, 1, 0
        %vm2946 = vcmp.eq.s32.totalorder %v2943, 1
        %vm2947 = vcmp.eq.s32.totalorder %v2944, 1
        %vm2948 = vcmp.eq.s32.totalorder %v2945, 1
        %v2949 = vsel %vm2946, %v2940, 0.0
        %v2950 = vsel %vm2947, %v2941, 0.0
        %v2951 = vsel %vm2948, %v2942, 0.0
        %2955 = vrot.lane.b32.xlu0 %v2949, 1
        %v2956 = vpop.permute.xlu0 %2955
        %2957 = vrot.lane.b32.xlu0 %v2950, 1
        %v2958 = vpop.permute.xlu0 %2957
        %2959 = vrot.lane.b32.xlu0 %v2951, 1
        %v2960 = vpop.permute.xlu0 %2959
        %vm2964 = vcmask 7168
        %v2965 = vsel %vm2964, 0.0, %v2956
        %v2966 = vsel %vm2964, 0.0, %v2958
        %v2967 = vsel %vm2964, 0.0, %v2960
        %vm2968 = vcmask 138240
        %v2969 = vsel %vm2968, %v2965, 0.0
        %v2970 = vsel %vm2968, %v2966, 0.0
        %v2971 = vsel %vm2968, %v2967, 0.0
        %vm2972 = vcmask 146432
        %2973 = vst.msk [vmem:[#allocation2] sm:$0xff] %vm2972, %v2969
        %2974 = vst.msk [vmem:[#allocation2 + $0x8] sm:$0xff] %vm2972, %v2970
        %vm2975 = vcmask 142336
        %2976 = vst.msk [vmem:[#allocation2 + $0x10] sm:$0xf] %vm2975, %v2971
        %v2977 = vmax.f32 %v411, 0.0
        %v2978 = vmax.f32 %v412, 0.0
        %v2979 = vmax.f32 %v413, 0.0
        %v2980 = vsel %vm2946, %v2977, 0.0
        %v2981 = vsel %vm2947, %v2978, 0.0
        %v2982 = vsel %vm2948, %v2979, 0.0
        %2986 = vrot.lane.b32.xlu0 %v2980, 1
        %v2987 = vpop.permute.xlu0 %2986
        %2988 = vrot.lane.b32.xlu0 %v2981, 1
        %v2989 = vpop.permute.xlu0 %2988
        %2990 = vrot.lane.b32.xlu0 %v2982, 1
        %v2991 = vpop.permute.xlu0 %2990
        %v2995 = vsel %vm2964, 0.0, %v2987
        %v2996 = vsel %vm2964, 0.0, %v2989
        %v2997 = vsel %vm2964, 0.0, %v2991
        %v2998 = vsel %vm2968, %v2995, 0.0
        %v2999 = vsel %vm2968, %v2996, 0.0
        %v3000 = vsel %vm2968, %v2997, 0.0
        %s3001 = scalar_lea.vmem [#allocation2], 24
        %3002 = vst.msk [vmem:[%s3001] sm:$0xff] %vm2972, %v2998
        %3003 = vst.msk [vmem:[%s3001 + $0x8] sm:$0xff] %vm2972, %v2999
        %3004 = vst.msk [vmem:[%s3001 + $0x10] sm:$0xf] %vm2975, %v3000
        %v3005 = vmax.f32 %v414, 0.0
        %v3006 = vmax.f32 %v415, 0.0
        %v3007 = vmax.f32 %v416, 0.0
        %v3008 = vsel %vm2946, %v3005, 0.0
        %v3009 = vsel %vm2947, %v3006, 0.0
        %v3010 = vsel %vm2948, %v3007, 0.0
        %3014 = vrot.lane.b32.xlu0 %v3008, 1
        %v3015 = vpop.permute.xlu0 %3014
        %3016 = vrot.lane.b32.xlu0 %v3009, 1
        %v3017 = vpop.permute.xlu0 %3016
        %3018 = vrot.lane.b32.xlu0 %v3010, 1
        %v3019 = vpop.permute.xlu0 %3018
        %v3023 = vsel %vm2964, 0.0, %v3015
        %v3024 = vsel %vm2964, 0.0, %v3017
        %v3025 = vsel %vm2964, 0.0, %v3019
        %v3026 = vsel %vm2968, %v3023, 0.0
        %v3027 = vsel %vm2968, %v3024, 0.0
        %v3028 = vsel %vm2968, %v3025, 0.0
        %s3029 = scalar_lea.vmem [#allocation2], 48
        %3030 = vst.msk [vmem:[%s3029] sm:$0xff] %vm2972, %v3026
        %3031 = vst.msk [vmem:[%s3029 + $0x8] sm:$0xff] %vm2972, %v3027
        %3032 = vst.msk [vmem:[%s3029 + $0x10] sm:$0xf] %vm2975, %v3028
        %v3033 = vmax.f32 %v417, 0.0
        %v3034 = vmax.f32 %v418, 0.0
        %v3035 = vmax.f32 %v419, 0.0
        %v3036 = vsel %vm2946, %v3033, 0.0
        %v3037 = vsel %vm2947, %v3034, 0.0
        %v3038 = vsel %vm2948, %v3035, 0.0
        %3042 = vrot.lane.b32.xlu0 %v3036, 1
        %v3043 = vpop.permute.xlu0 %3042
        %3044 = vrot.lane.b32.xlu0 %v3037, 1
        %v3045 = vpop.permute.xlu0 %3044
        %3046 = vrot.lane.b32.xlu0 %v3038, 1
        %v3047 = vpop.permute.xlu0 %3046
        %v3051 = vsel %vm2964, 0.0, %v3043
        %v3052 = vsel %vm2964, 0.0, %v3045
        %v3053 = vsel %vm2964, 0.0, %v3047
        %v3054 = vsel %vm2968, %v3051, 0.0
        %v3055 = vsel %vm2968, %v3052, 0.0
        %v3056 = vsel %vm2968, %v3053, 0.0
        %s3057 = scalar_lea.vmem [#allocation2], 72
        %3058 = vst.msk [vmem:[%s3057] sm:$0xff] %vm2972, %v3054
        %3059 = vst.msk [vmem:[%s3057 + $0x8] sm:$0xff] %vm2972, %v3055
        %3060 = vst.msk [vmem:[%s3057 + $0x10] sm:$0xf] %vm2975, %v3056
        %v3061 = vmax.f32 %v420, 0.0
        %v3062 = vmax.f32 %v421, 0.0
        %v3063 = vmax.f32 %v422, 0.0
        %v3064 = vsel %vm2946, %v3061, 0.0
        %v3065 = vsel %vm2947, %v3062, 0.0
        %v3066 = vsel %vm2948, %v3063, 0.0
        %3070 = vrot.lane.b32.xlu0 %v3064, 1
        %v3071 = vpop.permute.xlu0 %3070
        %3072 = vrot.lane.b32.xlu0 %v3065, 1
        %v3073 = vpop.permute.xlu0 %3072
        %3074 = vrot.lane.b32.xlu0 %v3066, 1
        %v3075 = vpop.permute.xlu0 %3074
        %v3079 = vsel %vm2964, 0.0, %v3071
        %v3080 = vsel %vm2964, 0.0, %v3073
        %v3081 = vsel %vm2964, 0.0, %v3075
        %v3082 = vsel %vm2968, %v3079, 0.0
        %v3083 = vsel %vm2968, %v3080, 0.0
        %v3084 = vsel %vm2968, %v3081, 0.0
        %s3085 = scalar_lea.vmem [#allocation2], 96
        %3086 = vst.msk [vmem:[%s3085] sm:$0xff] %vm2972, %v3082
        %3087 = vst.msk [vmem:[%s3085 + $0x8] sm:$0xff] %vm2972, %v3083
        %3088 = vst.msk [vmem:[%s3085 + $0x10] sm:$0xf] %vm2975, %v3084
        %v3089 = vmax.f32 %v423, 0.0
        %v3090 = vmax.f32 %v424, 0.0
        %v3091 = vmax.f32 %v425, 0.0
        %v3092 = vsel %vm2946, %v3089, 0.0
        %v3093 = vsel %vm2947, %v3090, 0.0
        %v3094 = vsel %vm2948, %v3091, 0.0
        %3098 = vrot.lane.b32.xlu0 %v3092, 1
        %v3099 = vpop.permute.xlu0 %3098
        %3100 = vrot.lane.b32.xlu0 %v3093, 1
        %v3101 = vpop.permute.xlu0 %3100
        %3102 = vrot.lane.b32.xlu0 %v3094, 1
        %v3103 = vpop.permute.xlu0 %3102
        %v3107 = vsel %vm2964, 0.0, %v3099
        %v3108 = vsel %vm2964, 0.0, %v3101
        %v3109 = vsel %vm2964, 0.0, %v3103
        %v3110 = vsel %vm2968, %v3107, 0.0
        %v3111 = vsel %vm2968, %v3108, 0.0
        %v3112 = vsel %vm2968, %v3109, 0.0
        %s3113 = scalar_lea.vmem [#allocation2], 120
        %3114 = vst.msk [vmem:[%s3113] sm:$0xff] %vm2972, %v3110
        %3115 = vst.msk [vmem:[%s3113 + $0x8] sm:$0xff] %vm2972, %v3111
        %3116 = vst.msk [vmem:[%s3113 + $0x10] sm:$0xf] %vm2975, %v3112
        %v3117 = vmax.f32 %v426, 0.0
        %v3118 = vmax.f32 %v427, 0.0
        %v3119 = vmax.f32 %v428, 0.0
        %v3120 = vsel %vm2946, %v3117, 0.0
        %v3121 = vsel %vm2947, %v3118, 0.0
        %v3122 = vsel %vm2948, %v3119, 0.0
        %3126 = vrot.lane.b32.xlu0 %v3120, 1
        %v3127 = vpop.permute.xlu0 %3126
        %3128 = vrot.lane.b32.xlu0 %v3121, 1
        %v3129 = vpop.permute.xlu0 %3128
        %3130 = vrot.lane.b32.xlu0 %v3122, 1
        %v3131 = vpop.permute.xlu0 %3130
        %v3135 = vsel %vm2964, 0.0, %v3127
        %v3136 = vsel %vm2964, 0.0, %v3129
        %v3137 = vsel %vm2964, 0.0, %v3131
        %v3138 = vsel %vm2968, %v3135, 0.0
        %v3139 = vsel %vm2968, %v3136, 0.0
        %v3140 = vsel %vm2968, %v3137, 0.0
        %s3141 = scalar_lea.vmem [#allocation2], 144
        %3142 = vst.msk [vmem:[%s3141] sm:$0xff] %vm2972, %v3138
        %3143 = vst.msk [vmem:[%s3141 + $0x8] sm:$0xff] %vm2972, %v3139
        %3144 = vst.msk [vmem:[%s3141 + $0x10] sm:$0xf] %vm2975, %v3140
        %v3145 = vmax.f32 %v429, 0.0
        %v3146 = vmax.f32 %v430, 0.0
        %v3147 = vmax.f32 %v431, 0.0
        %v3148 = vsel %vm2946, %v3145, 0.0
        %v3149 = vsel %vm2947, %v3146, 0.0
        %v3150 = vsel %vm2948, %v3147, 0.0
        %3154 = vrot.lane.b32.xlu0 %v3148, 1
        %v3155 = vpop.permute.xlu0 %3154
        %3156 = vrot.lane.b32.xlu0 %v3149, 1
        %v3157 = vpop.permute.xlu0 %3156
        %3158 = vrot.lane.b32.xlu0 %v3150, 1
        %v3159 = vpop.permute.xlu0 %3158
        %v3163 = vsel %vm2964, 0.0, %v3155
        %v3164 = vsel %vm2964, 0.0, %v3157
        %v3165 = vsel %vm2964, 0.0, %v3159
        %v3166 = vsel %vm2968, %v3163, 0.0
        %v3167 = vsel %vm2968, %v3164, 0.0
        %v3168 = vsel %vm2968, %v3165, 0.0
        %s3169 = scalar_lea.vmem [#allocation2], 168
        %3170 = vst.msk [vmem:[%s3169] sm:$0xff] %vm2972, %v3166
        %3171 = vst.msk [vmem:[%s3169 + $0x8] sm:$0xff] %vm2972, %v3167
        %3172 = vst.msk [vmem:[%s3169 + $0x10] sm:$0xf] %vm2975, %v3168
        %v3173 = vmax.f32 %v432, 0.0
        %v3174 = vmax.f32 %v433, 0.0
        %v3175 = vmax.f32 %v434, 0.0
        %v3176 = vsel %vm2946, %v3173, 0.0
        %v3177 = vsel %vm2947, %v3174, 0.0
        %v3178 = vsel %vm2948, %v3175, 0.0
        %3182 = vrot.lane.b32.xlu0 %v3176, 1
        %v3183 = vpop.permute.xlu0 %3182
        %3184 = vrot.lane.b32.xlu0 %v3177, 1
        %v3185 = vpop.permute.xlu0 %3184
        %3186 = vrot.lane.b32.xlu0 %v3178, 1
        %v3187 = vpop.permute.xlu0 %3186
        %v3191 = vsel %vm2964, 0.0, %v3183
        %v3192 = vsel %vm2964, 0.0, %v3185
        %v3193 = vsel %vm2964, 0.0, %v3187
        %v3194 = vsel %vm2968, %v3191, 0.0
        %v3195 = vsel %vm2968, %v3192, 0.0
        %v3196 = vsel %vm2968, %v3193, 0.0
        %s3197 = scalar_lea.vmem [#allocation2], 192
        %3198 = vst.msk [vmem:[%s3197] sm:$0xff] %vm2972, %v3194
        %3199 = vst.msk [vmem:[%s3197 + $0x8] sm:$0xff] %vm2972, %v3195
        %3200 = vst.msk [vmem:[%s3197 + $0x10] sm:$0xf] %vm2975, %v3196
        %v3201 = vmax.f32 %v435, 0.0
        %v3202 = vmax.f32 %v436, 0.0
        %v3203 = vmax.f32 %v437, 0.0
        %v3204 = vsel %vm2946, %v3201, 0.0
        %v3205 = vsel %vm2947, %v3202, 0.0
        %v3206 = vsel %vm2948, %v3203, 0.0
        %3210 = vrot.lane.b32.xlu0 %v3204, 1
        %v3211 = vpop.permute.xlu0 %3210
        %3212 = vrot.lane.b32.xlu0 %v3205, 1
        %v3213 = vpop.permute.xlu0 %3212
        %3214 = vrot.lane.b32.xlu0 %v3206, 1
        %v3215 = vpop.permute.xlu0 %3214
        %v3219 = vsel %vm2964, 0.0, %v3211
        %v3220 = vsel %vm2964, 0.0, %v3213
        %v3221 = vsel %vm2964, 0.0, %v3215
        %v3222 = vsel %vm2968, %v3219, 0.0
        %v3223 = vsel %vm2968, %v3220, 0.0
        %v3224 = vsel %vm2968, %v3221, 0.0
        %s3225 = scalar_lea.vmem [#allocation2], 216
        %3226 = vst.msk [vmem:[%s3225] sm:$0xff] %vm2972, %v3222
        %3227 = vst.msk [vmem:[%s3225 + $0x8] sm:$0xff] %vm2972, %v3223
        %3228 = vst.msk [vmem:[%s3225 + $0x10] sm:$0xf] %vm2975, %v3224
        %v3229 = vmax.f32 %v438, 0.0
        %v3230 = vmax.f32 %v439, 0.0
        %v3231 = vmax.f32 %v440, 0.0
        %v3232 = vsel %vm2946, %v3229, 0.0
        %v3233 = vsel %vm2947, %v3230, 0.0
        %v3234 = vsel %vm2948, %v3231, 0.0
        %3238 = vrot.lane.b32.xlu0 %v3232, 1
        %v3239 = vpop.permute.xlu0 %3238
        %3240 = vrot.lane.b32.xlu0 %v3233, 1
        %v3241 = vpop.permute.xlu0 %3240
        %3242 = vrot.lane.b32.xlu0 %v3234, 1
        %v3243 = vpop.permute.xlu0 %3242
        %v3247 = vsel %vm2964, 0.0, %v3239
        %v3248 = vsel %vm2964, 0.0, %v3241
        %v3249 = vsel %vm2964, 0.0, %v3243
        %v3250 = vsel %vm2968, %v3247, 0.0
        %v3251 = vsel %vm2968, %v3248, 0.0
        %v3252 = vsel %vm2968, %v3249, 0.0
        %s3253 = scalar_lea.vmem [#allocation2], 240
        %3254 = vst.msk [vmem:[%s3253] sm:$0xff] %vm2972, %v3250
        %3255 = vst.msk [vmem:[%s3253 + $0x8] sm:$0xff] %vm2972, %v3251
        %3256 = vst.msk [vmem:[%s3253 + $0x10] sm:$0xf] %vm2975, %v3252
        %v3257 = vmax.f32 %v441, 0.0
        %v3258 = vmax.f32 %v442, 0.0
        %v3259 = vmax.f32 %v443, 0.0
        %v3260 = vsel %vm2946, %v3257, 0.0
        %v3261 = vsel %vm2947, %v3258, 0.0
        %v3262 = vsel %vm2948, %v3259, 0.0
        %3266 = vrot.lane.b32.xlu0 %v3260, 1
        %v3267 = vpop.permute.xlu0 %3266
        %3268 = vrot.lane.b32.xlu0 %v3261, 1
        %v3269 = vpop.permute.xlu0 %3268
        %3270 = vrot.lane.b32.xlu0 %v3262, 1
        %v3271 = vpop.permute.xlu0 %3270
        %v3275 = vsel %vm2964, 0.0, %v3267
        %v3276 = vsel %vm2964, 0.0, %v3269
        %v3277 = vsel %vm2964, 0.0, %v3271
        %v3278 = vsel %vm2968, %v3275, 0.0
        %v3279 = vsel %vm2968, %v3276, 0.0
        %v3280 = vsel %vm2968, %v3277, 0.0
        %s3281 = scalar_lea.vmem [#allocation2], 264
        %3282 = vst.msk [vmem:[%s3281] sm:$0xff] %vm2972, %v3278
        %3283 = vst.msk [vmem:[%s3281 + $0x8] sm:$0xff] %vm2972, %v3279
        %3284 = vst.msk [vmem:[%s3281 + $0x10] sm:$0xf] %vm2975, %v3280
        %v3285 = vmax.f32 %v444, 0.0
        %v3286 = vmax.f32 %v445, 0.0
        %v3287 = vmax.f32 %v446, 0.0
        %v3288 = vsel %vm2946, %v3285, 0.0
        %v3289 = vsel %vm2947, %v3286, 0.0
        %v3290 = vsel %vm2948, %v3287, 0.0
        %3294 = vrot.lane.b32.xlu0 %v3288, 1
        %v3295 = vpop.permute.xlu0 %3294
        %3296 = vrot.lane.b32.xlu0 %v3289, 1
        %v3297 = vpop.permute.xlu0 %3296
        %3298 = vrot.lane.b32.xlu0 %v3290, 1
        %v3299 = vpop.permute.xlu0 %3298
        %v3303 = vsel %vm2964, 0.0, %v3295
        %v3304 = vsel %vm2964, 0.0, %v3297
        %v3305 = vsel %vm2964, 0.0, %v3299
        %v3306 = vsel %vm2968, %v3303, 0.0
        %v3307 = vsel %vm2968, %v3304, 0.0
        %v3308 = vsel %vm2968, %v3305, 0.0
        %s3309 = scalar_lea.vmem [#allocation2], 288
        %3310 = vst.msk [vmem:[%s3309] sm:$0xff] %vm2972, %v3306
        %3311 = vst.msk [vmem:[%s3309 + $0x8] sm:$0xff] %vm2972, %v3307
        %3312 = vst.msk [vmem:[%s3309 + $0x10] sm:$0xf] %vm2975, %v3308
        %v3313 = vmax.f32 %v447, 0.0
        %v3314 = vmax.f32 %v448, 0.0
        %v3315 = vmax.f32 %v449, 0.0
        %v3316 = vsel %vm2946, %v3313, 0.0
        %v3317 = vsel %vm2947, %v3314, 0.0
        %v3318 = vsel %vm2948, %v3315, 0.0
        %3322 = vrot.lane.b32.xlu0 %v3316, 1
        %v3323 = vpop.permute.xlu0 %3322
        %3324 = vrot.lane.b32.xlu0 %v3317, 1
        %v3325 = vpop.permute.xlu0 %3324
        %3326 = vrot.lane.b32.xlu0 %v3318, 1
        %v3327 = vpop.permute.xlu0 %3326
        %v3331 = vsel %vm2964, 0.0, %v3323
        %v3332 = vsel %vm2964, 0.0, %v3325
        %v3333 = vsel %vm2964, 0.0, %v3327
        %v3334 = vsel %vm2968, %v3331, 0.0
        %v3335 = vsel %vm2968, %v3332, 0.0
        %v3336 = vsel %vm2968, %v3333, 0.0
        %s3337 = scalar_lea.vmem [#allocation2], 312
        %3338 = vst.msk [vmem:[%s3337] sm:$0xff] %vm2972, %v3334
        %3339 = vst.msk [vmem:[%s3337 + $0x8] sm:$0xff] %vm2972, %v3335
        %3340 = vst.msk [vmem:[%s3337 + $0x10] sm:$0xf] %vm2975, %v3336
        %v3341 = vmax.f32 %v450, 0.0
        %v3342 = vmax.f32 %v451, 0.0
        %v3343 = vmax.f32 %v452, 0.0
        %v3344 = vsel %vm2946, %v3341, 0.0
        %v3345 = vsel %vm2947, %v3342, 0.0
        %v3346 = vsel %vm2948, %v3343, 0.0
        %3350 = vrot.lane.b32.xlu0 %v3344, 1
        %v3351 = vpop.permute.xlu0 %3350
        %3352 = vrot.lane.b32.xlu0 %v3345, 1
        %v3353 = vpop.permute.xlu0 %3352
        %3354 = vrot.lane.b32.xlu0 %v3346, 1
        %v3355 = vpop.permute.xlu0 %3354
        %v3359 = vsel %vm2964, 0.0, %v3351
        %v3360 = vsel %vm2964, 0.0, %v3353
        %v3361 = vsel %vm2964, 0.0, %v3355
        %v3362 = vsel %vm2968, %v3359, 0.0
        %v3363 = vsel %vm2968, %v3360, 0.0
        %v3364 = vsel %vm2968, %v3361, 0.0
        %s3365 = scalar_lea.vmem [#allocation2], 336
        %3366 = vst.msk [vmem:[%s3365] sm:$0xff] %vm2972, %v3362
        %3367 = vst.msk [vmem:[%s3365 + $0x8] sm:$0xff] %vm2972, %v3363
        %3368 = vst.msk [vmem:[%s3365 + $0x10] sm:$0xf] %vm2975, %v3364
        %v3369 = vmax.f32 %v453, 0.0
        %v3370 = vmax.f32 %v454, 0.0
        %v3371 = vmax.f32 %v455, 0.0
        %v3372 = vsel %vm2946, %v3369, 0.0
        %v3373 = vsel %vm2947, %v3370, 0.0
        %v3374 = vsel %vm2948, %v3371, 0.0
        %3378 = vrot.lane.b32.xlu0 %v3372, 1
        %v3379 = vpop.permute.xlu0 %3378
        %3380 = vrot.lane.b32.xlu0 %v3373, 1
        %v3381 = vpop.permute.xlu0 %3380
        %3382 = vrot.lane.b32.xlu0 %v3374, 1
        %v3383 = vpop.permute.xlu0 %3382
        %v3387 = vsel %vm2964, 0.0, %v3379
        %v3388 = vsel %vm2964, 0.0, %v3381
        %v3389 = vsel %vm2964, 0.0, %v3383
        %v3390 = vsel %vm2968, %v3387, 0.0
        %v3391 = vsel %vm2968, %v3388, 0.0
        %v3392 = vsel %vm2968, %v3389, 0.0
        %s3393 = scalar_lea.vmem [#allocation2], 360
        %3394 = vst.msk [vmem:[%s3393] sm:$0xff] %vm2972, %v3390
        %3395 = vst.msk [vmem:[%s3393 + $0x8] sm:$0xff] %vm2972, %v3391
        %3396 = vst.msk [vmem:[%s3393 + $0x10] sm:$0xf] %vm2975, %v3392
        %s3397 = sld [smem:[#allocation10]]
        %v3398 = vstv %s3397
        %s3399 = sld [smem:[#allocation10 + $0x1]]
        %v3400 = vstv %s3399
        %s3401 = sld [smem:[#allocation10 + $0x2]]
        %v3402 = vstv %s3401
        %s3403 = sld [smem:[#allocation10 + $0x3]]
        %v3404 = vstv %s3403
        %s3405 = sld [smem:[#allocation10 + $0x4]]
        %v3406 = vstv %s3405
        %s3407 = sld [smem:[#allocation10 + $0x5]]
        %v3408 = vstv %s3407
        %s3409 = sld [smem:[#allocation10 + $0x6]]
        %v3410 = vstv %s3409
        %s3411 = sld [smem:[#allocation10 + $0x7]]
        %v3412 = vstv %s3411
        %s3413 = sld [smem:[#allocation10 + $0x8]]
        %v3414 = vstv %s3413
        %s3415 = sld [smem:[#allocation10 + $0x9]]
        %v3416 = vstv %s3415
        %s3417 = sld [smem:[#allocation10 + $0xa]]
        %v3418 = vstv %s3417
        %s3419 = sld [smem:[#allocation10 + $0xb]]
        %v3420 = vstv %s3419
        %s3421 = sld [smem:[#allocation10 + $0xc]]
        %v3422 = vstv %s3421
        %s3423 = sld [smem:[#allocation10 + $0xd]]
        %v3424 = vstv %s3423
        %s3425 = sld [smem:[#allocation10 + $0xe]]
        %v3426 = vstv %s3425
        %s3427 = sld [smem:[#allocation10 + $0xf]]
        %v3428 = vstv %s3427
        loop: start=0, step=1, limit=16
        $region80: #{tpu_custom_call.1} parent=47 // loop_pre_header
          _
        $region81: #{tpu_custom_call.1} parent=47 // loop_header
          %s3430 = sphi 0, %s3434
          %p3431 = scmp.ge.s32.totalorder %s3430, 16
          %v3435 = vphi %v3398, %v3644
          %v3436 = vphi %v3398, %v3645
          %v3437 = vphi %v3398, %v3646
          %v3438 = vphi %v3400, %v3797
          %v3439 = vphi %v3400, %v3798
          %v3440 = vphi %v3400, %v3799
          %v3441 = vphi %v3402, %v3950
          %v3442 = vphi %v3402, %v3951
          %v3443 = vphi %v3402, %v3952
          %v3444 = vphi %v3404, %v4103
          %v3445 = vphi %v3404, %v4104
          %v3446 = vphi %v3404, %v4105
          %v3447 = vphi %v3406, %v4256
          %v3448 = vphi %v3406, %v4257
          %v3449 = vphi %v3406, %v4258
          %v3450 = vphi %v3408, %v4409
          %v3451 = vphi %v3408, %v4410
          %v3452 = vphi %v3408, %v4411
          %v3453 = vphi %v3410, %v4562
          %v3454 = vphi %v3410, %v4563
          %v3455 = vphi %v3410, %v4564
          %v3456 = vphi %v3412, %v4715
          %v3457 = vphi %v3412, %v4716
          %v3458 = vphi %v3412, %v4717
          %v3459 = vphi %v3414, %v4868
          %v3460 = vphi %v3414, %v4869
          %v3461 = vphi %v3414, %v4870
          %v3462 = vphi %v3416, %v5021
          %v3463 = vphi %v3416, %v5022
          %v3464 = vphi %v3416, %v5023
          %v3465 = vphi %v3418, %v5174
          %v3466 = vphi %v3418, %v5175
          %v3467 = vphi %v3418, %v5176
          %v3468 = vphi %v3420, %v5327
          %v3469 = vphi %v3420, %v5328
          %v3470 = vphi %v3420, %v5329
          %v3471 = vphi %v3422, %v5480
          %v3472 = vphi %v3422, %v5481
          %v3473 = vphi %v3422, %v5482
          %v3474 = vphi %v3424, %v5633
          %v3475 = vphi %v3424, %v5634
          %v3476 = vphi %v3424, %v5635
          %v3477 = vphi %v3426, %v5786
          %v3478 = vphi %v3426, %v5787
          %v3479 = vphi %v3426, %v5788
          %v3480 = vphi %v3428, %v5939
          %v3481 = vphi %v3428, %v5940
          %v3482 = vphi %v3428, %v5941
        $region82: #{tpu_custom_call.1} parent=47 // loop_header_branch
          %3433 = sbr.rel (%p3431) target = $region86
        $region83: #{tpu_custom_call.1} parent=47 // loop_body
          %s3483 = smul.u32 %s3430, 24
          %s3484 = scalar_lea.vmem [#allocation2], %s3483
          %v3485 = vld [vmem:[%s3484] sm:$0xff]
          %v3486 = vld [vmem:[%s3484 + $0x8] sm:$0xff]
          %v3487 = vld [vmem:[%s3484 + $0x10] sm:$0x3]
          %v3488 = vld [vmem:[%s3484 + $0x1] sm:$0xff]
          %v3489 = vld [vmem:[%s3484 + $0x9] sm:$0xff]
          %v3490 = vld [vmem:[%s3484 + $0x11] sm:$0x3]
          %v3491 = vld [vmem:[%s3484 + $0x2] sm:$0xff]
          %v3492 = vld [vmem:[%s3484 + $0xa] sm:$0xff]
          %v3493 = vld [vmem:[%s3484 + $0x12] sm:$0x3]
          %s3494 = smul.u32 %s3430, 144
          %s3495 = sld [smem:[#allocation9 + %s3494]]
          %v3496 = vstv %s3495
          %v3497 = vmul.f32 %v3496, %v3485
          %v3498 = vmul.f32 %v3496, %v3486
          %v3499 = vmul.f32 %v3496, %v3487
          %v3500 = vadd.f32 %v3435, %v3497
          %v3501 = vadd.f32 %v3436, %v3498
          %v3502 = vadd.f32 %v3437, %v3499
          %s3503 = sadd.s32 %s3494, 16
          %s3504 = sld [smem:[#allocation9 + %s3503]]
          %v3505 = vstv %s3504
          %v3506 = vmul.f32 %v3505, %v3485
          %v3507 = vmul.f32 %v3505, %v3486
          %v3508 = vmul.f32 %v3505, %v3487
          %3512 = vrot.lane.b32.xlu0 %v3506, 127
          %v3513 = vpop.permute.xlu0 %3512
          %3514 = vrot.lane.b32.xlu0 %v3507, 127
          %v3515 = vpop.permute.xlu0 %3514
          %3516 = vrot.lane.b32.xlu0 %v3508, 127
          %v3517 = vpop.permute.xlu0 %3516
          %v3521 = vadd.f32 %v3500, %v3513
          %v3522 = vadd.f32 %v3501, %v3515
          %v3523 = vadd.f32 %v3502, %v3517
          %s3524 = sadd.s32 %s3494, 32
          %s3525 = sld [smem:[#allocation9 + %s3524]]
          %v3526 = vstv %s3525
          %v3527 = vmul.f32 %v3526, %v3485
          %v3528 = vmul.f32 %v3526, %v3486
          %v3529 = vmul.f32 %v3526, %v3487
          %3533 = vrot.lane.b32.xlu0 %v3527, 126
          %v3534 = vpop.permute.xlu0 %3533
          %3535 = vrot.lane.b32.xlu0 %v3528, 126
          %v3536 = vpop.permute.xlu0 %3535
          %3537 = vrot.lane.b32.xlu0 %v3529, 126
          %v3538 = vpop.permute.xlu0 %3537
          %v3542 = vadd.f32 %v3521, %v3534
          %v3543 = vadd.f32 %v3522, %v3536
          %v3544 = vadd.f32 %v3523, %v3538
          %s3545 = sadd.s32 %s3494, 48
          %s3546 = sld [smem:[#allocation9 + %s3545]]
          %v3547 = vstv %s3546
          %v3548 = vmul.f32 %v3547, %v3488
          %v3549 = vmul.f32 %v3547, %v3489
          %v3550 = vmul.f32 %v3547, %v3490
          %v3551 = vadd.f32 %v3542, %v3548
          %v3552 = vadd.f32 %v3543, %v3549
          %v3553 = vadd.f32 %v3544, %v3550
          %s3554 = sadd.s32 %s3494, 64
          %s3555 = sld [smem:[#allocation9 + %s3554]]
          %v3556 = vstv %s3555
          %v3557 = vmul.f32 %v3556, %v3488
          %v3558 = vmul.f32 %v3556, %v3489
          %v3559 = vmul.f32 %v3556, %v3490
          %3563 = vrot.lane.b32.xlu0 %v3557, 127
          %v3564 = vpop.permute.xlu0 %3563
          %3565 = vrot.lane.b32.xlu0 %v3558, 127
          %v3566 = vpop.permute.xlu0 %3565
          %3567 = vrot.lane.b32.xlu0 %v3559, 127
          %v3568 = vpop.permute.xlu0 %3567
          %v3572 = vadd.f32 %v3551, %v3564
          %v3573 = vadd.f32 %v3552, %v3566
          %v3574 = vadd.f32 %v3553, %v3568
          %s3575 = sadd.s32 %s3494, 80
          %s3576 = sld [smem:[#allocation9 + %s3575]]
          %v3577 = vstv %s3576
          %v3578 = vmul.f32 %v3577, %v3488
          %v3579 = vmul.f32 %v3577, %v3489
          %v3580 = vmul.f32 %v3577, %v3490
          %3584 = vrot.lane.b32.xlu0 %v3578, 126
          %v3585 = vpop.permute.xlu0 %3584
          %3586 = vrot.lane.b32.xlu0 %v3579, 126
          %v3587 = vpop.permute.xlu0 %3586
          %3588 = vrot.lane.b32.xlu0 %v3580, 126
          %v3589 = vpop.permute.xlu0 %3588
          %v3593 = vadd.f32 %v3572, %v3585
          %v3594 = vadd.f32 %v3573, %v3587
          %v3595 = vadd.f32 %v3574, %v3589
          %s3596 = sadd.s32 %s3494, 96
          %s3597 = sld [smem:[#allocation9 + %s3596]]
          %v3598 = vstv %s3597
          %v3599 = vmul.f32 %v3598, %v3491
          %v3600 = vmul.f32 %v3598, %v3492
          %v3601 = vmul.f32 %v3598, %v3493
          %v3602 = vadd.f32 %v3593, %v3599
          %v3603 = vadd.f32 %v3594, %v3600
          %v3604 = vadd.f32 %v3595, %v3601
          %s3605 = sadd.s32 %s3494, 112
          %s3606 = sld [smem:[#allocation9 + %s3605]]
          %v3607 = vstv %s3606
          %v3608 = vmul.f32 %v3607, %v3491
          %v3609 = vmul.f32 %v3607, %v3492
          %v3610 = vmul.f32 %v3607, %v3493
          %3614 = vrot.lane.b32.xlu0 %v3608, 127
          %v3615 = vpop.permute.xlu0 %3614
          %3616 = vrot.lane.b32.xlu0 %v3609, 127
          %v3617 = vpop.permute.xlu0 %3616
          %3618 = vrot.lane.b32.xlu0 %v3610, 127
          %v3619 = vpop.permute.xlu0 %3618
          %v3623 = vadd.f32 %v3602, %v3615
          %v3624 = vadd.f32 %v3603, %v3617
          %v3625 = vadd.f32 %v3604, %v3619
          %s3626 = sadd.s32 %s3494, 128
          %s3627 = sld [smem:[#allocation9 + %s3626]]
          %v3628 = vstv %s3627
          %v3629 = vmul.f32 %v3628, %v3491
          %v3630 = vmul.f32 %v3628, %v3492
          %v3631 = vmul.f32 %v3628, %v3493
          %3635 = vrot.lane.b32.xlu0 %v3629, 126
          %v3636 = vpop.permute.xlu0 %3635
          %3637 = vrot.lane.b32.xlu0 %v3630, 126
          %v3638 = vpop.permute.xlu0 %3637
          %3639 = vrot.lane.b32.xlu0 %v3631, 126
          %v3640 = vpop.permute.xlu0 %3639
          %v3644 = vadd.f32 %v3623, %v3636
          %v3645 = vadd.f32 %v3624, %v3638
          %v3646 = vadd.f32 %v3625, %v3640
          %s3647 = sadd.s32 %s3494, 1
          %s3648 = sld [smem:[#allocation9 + %s3647]]
          %v3649 = vstv %s3648
          %v3650 = vmul.f32 %v3649, %v3485
          %v3651 = vmul.f32 %v3649, %v3486
          %v3652 = vmul.f32 %v3649, %v3487
          %v3653 = vadd.f32 %v3438, %v3650
          %v3654 = vadd.f32 %v3439, %v3651
          %v3655 = vadd.f32 %v3440, %v3652
          %s3656 = sadd.s32 %s3494, 17
          %s3657 = sld [smem:[#allocation9 + %s3656]]
          %v3658 = vstv %s3657
          %v3659 = vmul.f32 %v3658, %v3485
          %v3660 = vmul.f32 %v3658, %v3486
          %v3661 = vmul.f32 %v3658, %v3487
          %3665 = vrot.lane.b32.xlu0 %v3659, 127
          %v3666 = vpop.permute.xlu0 %3665
          %3667 = vrot.lane.b32.xlu0 %v3660, 127
          %v3668 = vpop.permute.xlu0 %3667
          %3669 = vrot.lane.b32.xlu0 %v3661, 127
          %v3670 = vpop.permute.xlu0 %3669
          %v3674 = vadd.f32 %v3653, %v3666
          %v3675 = vadd.f32 %v3654, %v3668
          %v3676 = vadd.f32 %v3655, %v3670
          %s3677 = sadd.s32 %s3494, 33
          %s3678 = sld [smem:[#allocation9 + %s3677]]
          %v3679 = vstv %s3678
          %v3680 = vmul.f32 %v3679, %v3485
          %v3681 = vmul.f32 %v3679, %v3486
          %v3682 = vmul.f32 %v3679, %v3487
          %3686 = vrot.lane.b32.xlu0 %v3680, 126
          %v3687 = vpop.permute.xlu0 %3686
          %3688 = vrot.lane.b32.xlu0 %v3681, 126
          %v3689 = vpop.permute.xlu0 %3688
          %3690 = vrot.lane.b32.xlu0 %v3682, 126
          %v3691 = vpop.permute.xlu0 %3690
          %v3695 = vadd.f32 %v3674, %v3687
          %v3696 = vadd.f32 %v3675, %v3689
          %v3697 = vadd.f32 %v3676, %v3691
          %s3698 = sadd.s32 %s3494, 49
          %s3699 = sld [smem:[#allocation9 + %s3698]]
          %v3700 = vstv %s3699
          %v3701 = vmul.f32 %v3700, %v3488
          %v3702 = vmul.f32 %v3700, %v3489
          %v3703 = vmul.f32 %v3700, %v3490
          %v3704 = vadd.f32 %v3695, %v3701
          %v3705 = vadd.f32 %v3696, %v3702
          %v3706 = vadd.f32 %v3697, %v3703
          %s3707 = sadd.s32 %s3494, 65
          %s3708 = sld [smem:[#allocation9 + %s3707]]
          %v3709 = vstv %s3708
          %v3710 = vmul.f32 %v3709, %v3488
          %v3711 = vmul.f32 %v3709, %v3489
          %v3712 = vmul.f32 %v3709, %v3490
          %3716 = vrot.lane.b32.xlu0 %v3710, 127
          %v3717 = vpop.permute.xlu0 %3716
          %3718 = vrot.lane.b32.xlu0 %v3711, 127
          %v3719 = vpop.permute.xlu0 %3718
          %3720 = vrot.lane.b32.xlu0 %v3712, 127
          %v3721 = vpop.permute.xlu0 %3720
          %v3725 = vadd.f32 %v3704, %v3717
          %v3726 = vadd.f32 %v3705, %v3719
          %v3727 = vadd.f32 %v3706, %v3721
          %s3728 = sadd.s32 %s3494, 81
          %s3729 = sld [smem:[#allocation9 + %s3728]]
          %v3730 = vstv %s3729
          %v3731 = vmul.f32 %v3730, %v3488
          %v3732 = vmul.f32 %v3730, %v3489
          %v3733 = vmul.f32 %v3730, %v3490
          %3737 = vrot.lane.b32.xlu0 %v3731, 126
          %v3738 = vpop.permute.xlu0 %3737
          %3739 = vrot.lane.b32.xlu0 %v3732, 126
          %v3740 = vpop.permute.xlu0 %3739
          %3741 = vrot.lane.b32.xlu0 %v3733, 126
          %v3742 = vpop.permute.xlu0 %3741
          %v3746 = vadd.f32 %v3725, %v3738
          %v3747 = vadd.f32 %v3726, %v3740
          %v3748 = vadd.f32 %v3727, %v3742
          %s3749 = sadd.s32 %s3494, 97
          %s3750 = sld [smem:[#allocation9 + %s3749]]
          %v3751 = vstv %s3750
          %v3752 = vmul.f32 %v3751, %v3491
          %v3753 = vmul.f32 %v3751, %v3492
          %v3754 = vmul.f32 %v3751, %v3493
          %v3755 = vadd.f32 %v3746, %v3752
          %v3756 = vadd.f32 %v3747, %v3753
          %v3757 = vadd.f32 %v3748, %v3754
          %s3758 = sadd.s32 %s3494, 113
          %s3759 = sld [smem:[#allocation9 + %s3758]]
          %v3760 = vstv %s3759
          %v3761 = vmul.f32 %v3760, %v3491
          %v3762 = vmul.f32 %v3760, %v3492
          %v3763 = vmul.f32 %v3760, %v3493
          %3767 = vrot.lane.b32.xlu0 %v3761, 127
          %v3768 = vpop.permute.xlu0 %3767
          %3769 = vrot.lane.b32.xlu0 %v3762, 127
          %v3770 = vpop.permute.xlu0 %3769
          %3771 = vrot.lane.b32.xlu0 %v3763, 127
          %v3772 = vpop.permute.xlu0 %3771
          %v3776 = vadd.f32 %v3755, %v3768
          %v3777 = vadd.f32 %v3756, %v3770
          %v3778 = vadd.f32 %v3757, %v3772
          %s3779 = sadd.s32 %s3494, 129
          %s3780 = sld [smem:[#allocation9 + %s3779]]
          %v3781 = vstv %s3780
          %v3782 = vmul.f32 %v3781, %v3491
          %v3783 = vmul.f32 %v3781, %v3492
          %v3784 = vmul.f32 %v3781, %v3493
          %3788 = vrot.lane.b32.xlu0 %v3782, 126
          %v3789 = vpop.permute.xlu0 %3788
          %3790 = vrot.lane.b32.xlu0 %v3783, 126
          %v3791 = vpop.permute.xlu0 %3790
          %3792 = vrot.lane.b32.xlu0 %v3784, 126
          %v3793 = vpop.permute.xlu0 %3792
          %v3797 = vadd.f32 %v3776, %v3789
          %v3798 = vadd.f32 %v3777, %v3791
          %v3799 = vadd.f32 %v3778, %v3793
          %s3800 = sadd.s32 %s3494, 2
          %s3801 = sld [smem:[#allocation9 + %s3800]]
          %v3802 = vstv %s3801
          %v3803 = vmul.f32 %v3802, %v3485
          %v3804 = vmul.f32 %v3802, %v3486
          %v3805 = vmul.f32 %v3802, %v3487
          %v3806 = vadd.f32 %v3441, %v3803
          %v3807 = vadd.f32 %v3442, %v3804
          %v3808 = vadd.f32 %v3443, %v3805
          %s3809 = sadd.s32 %s3494, 18
          %s3810 = sld [smem:[#allocation9 + %s3809]]
          %v3811 = vstv %s3810
          %v3812 = vmul.f32 %v3811, %v3485
          %v3813 = vmul.f32 %v3811, %v3486
          %v3814 = vmul.f32 %v3811, %v3487
          %3818 = vrot.lane.b32.xlu0 %v3812, 127
          %v3819 = vpop.permute.xlu0 %3818
          %3820 = vrot.lane.b32.xlu0 %v3813, 127
          %v3821 = vpop.permute.xlu0 %3820
          %3822 = vrot.lane.b32.xlu0 %v3814, 127
          %v3823 = vpop.permute.xlu0 %3822
          %v3827 = vadd.f32 %v3806, %v3819
          %v3828 = vadd.f32 %v3807, %v3821
          %v3829 = vadd.f32 %v3808, %v3823
          %s3830 = sadd.s32 %s3494, 34
          %s3831 = sld [smem:[#allocation9 + %s3830]]
          %v3832 = vstv %s3831
          %v3833 = vmul.f32 %v3832, %v3485
          %v3834 = vmul.f32 %v3832, %v3486
          %v3835 = vmul.f32 %v3832, %v3487
          %3839 = vrot.lane.b32.xlu0 %v3833, 126
          %v3840 = vpop.permute.xlu0 %3839
          %3841 = vrot.lane.b32.xlu0 %v3834, 126
          %v3842 = vpop.permute.xlu0 %3841
          %3843 = vrot.lane.b32.xlu0 %v3835, 126
          %v3844 = vpop.permute.xlu0 %3843
          %v3848 = vadd.f32 %v3827, %v3840
          %v3849 = vadd.f32 %v3828, %v3842
          %v3850 = vadd.f32 %v3829, %v3844
          %s3851 = sadd.s32 %s3494, 50
          %s3852 = sld [smem:[#allocation9 + %s3851]]
          %v3853 = vstv %s3852
          %v3854 = vmul.f32 %v3853, %v3488
          %v3855 = vmul.f32 %v3853, %v3489
          %v3856 = vmul.f32 %v3853, %v3490
          %v3857 = vadd.f32 %v3848, %v3854
          %v3858 = vadd.f32 %v3849, %v3855
          %v3859 = vadd.f32 %v3850, %v3856
          %s3860 = sadd.s32 %s3494, 66
          %s3861 = sld [smem:[#allocation9 + %s3860]]
          %v3862 = vstv %s3861
          %v3863 = vmul.f32 %v3862, %v3488
          %v3864 = vmul.f32 %v3862, %v3489
          %v3865 = vmul.f32 %v3862, %v3490
          %3869 = vrot.lane.b32.xlu0 %v3863, 127
          %v3870 = vpop.permute.xlu0 %3869
          %3871 = vrot.lane.b32.xlu0 %v3864, 127
          %v3872 = vpop.permute.xlu0 %3871
          %3873 = vrot.lane.b32.xlu0 %v3865, 127
          %v3874 = vpop.permute.xlu0 %3873
          %v3878 = vadd.f32 %v3857, %v3870
          %v3879 = vadd.f32 %v3858, %v3872
          %v3880 = vadd.f32 %v3859, %v3874
          %s3881 = sadd.s32 %s3494, 82
          %s3882 = sld [smem:[#allocation9 + %s3881]]
          %v3883 = vstv %s3882
          %v3884 = vmul.f32 %v3883, %v3488
          %v3885 = vmul.f32 %v3883, %v3489
          %v3886 = vmul.f32 %v3883, %v3490
          %3890 = vrot.lane.b32.xlu0 %v3884, 126
          %v3891 = vpop.permute.xlu0 %3890
          %3892 = vrot.lane.b32.xlu0 %v3885, 126
          %v3893 = vpop.permute.xlu0 %3892
          %3894 = vrot.lane.b32.xlu0 %v3886, 126
          %v3895 = vpop.permute.xlu0 %3894
          %v3899 = vadd.f32 %v3878, %v3891
          %v3900 = vadd.f32 %v3879, %v3893
          %v3901 = vadd.f32 %v3880, %v3895
          %s3902 = sadd.s32 %s3494, 98
          %s3903 = sld [smem:[#allocation9 + %s3902]]
          %v3904 = vstv %s3903
          %v3905 = vmul.f32 %v3904, %v3491
          %v3906 = vmul.f32 %v3904, %v3492
          %v3907 = vmul.f32 %v3904, %v3493
          %v3908 = vadd.f32 %v3899, %v3905
          %v3909 = vadd.f32 %v3900, %v3906
          %v3910 = vadd.f32 %v3901, %v3907
          %s3911 = sadd.s32 %s3494, 114
          %s3912 = sld [smem:[#allocation9 + %s3911]]
          %v3913 = vstv %s3912
          %v3914 = vmul.f32 %v3913, %v3491
          %v3915 = vmul.f32 %v3913, %v3492
          %v3916 = vmul.f32 %v3913, %v3493
          %3920 = vrot.lane.b32.xlu0 %v3914, 127
          %v3921 = vpop.permute.xlu0 %3920
          %3922 = vrot.lane.b32.xlu0 %v3915, 127
          %v3923 = vpop.permute.xlu0 %3922
          %3924 = vrot.lane.b32.xlu0 %v3916, 127
          %v3925 = vpop.permute.xlu0 %3924
          %v3929 = vadd.f32 %v3908, %v3921
          %v3930 = vadd.f32 %v3909, %v3923
          %v3931 = vadd.f32 %v3910, %v3925
          %s3932 = sadd.s32 %s3494, 130
          %s3933 = sld [smem:[#allocation9 + %s3932]]
          %v3934 = vstv %s3933
          %v3935 = vmul.f32 %v3934, %v3491
          %v3936 = vmul.f32 %v3934, %v3492
          %v3937 = vmul.f32 %v3934, %v3493
          %3941 = vrot.lane.b32.xlu0 %v3935, 126
          %v3942 = vpop.permute.xlu0 %3941
          %3943 = vrot.lane.b32.xlu0 %v3936, 126
          %v3944 = vpop.permute.xlu0 %3943
          %3945 = vrot.lane.b32.xlu0 %v3937, 126
          %v3946 = vpop.permute.xlu0 %3945
          %v3950 = vadd.f32 %v3929, %v3942
          %v3951 = vadd.f32 %v3930, %v3944
          %v3952 = vadd.f32 %v3931, %v3946
          %s3953 = sadd.s32 %s3494, 3
          %s3954 = sld [smem:[#allocation9 + %s3953]]
          %v3955 = vstv %s3954
          %v3956 = vmul.f32 %v3955, %v3485
          %v3957 = vmul.f32 %v3955, %v3486
          %v3958 = vmul.f32 %v3955, %v3487
          %v3959 = vadd.f32 %v3444, %v3956
          %v3960 = vadd.f32 %v3445, %v3957
          %v3961 = vadd.f32 %v3446, %v3958
          %s3962 = sadd.s32 %s3494, 19
          %s3963 = sld [smem:[#allocation9 + %s3962]]
          %v3964 = vstv %s3963
          %v3965 = vmul.f32 %v3964, %v3485
          %v3966 = vmul.f32 %v3964, %v3486
          %v3967 = vmul.f32 %v3964, %v3487
          %3971 = vrot.lane.b32.xlu0 %v3965, 127
          %v3972 = vpop.permute.xlu0 %3971
          %3973 = vrot.lane.b32.xlu0 %v3966, 127
          %v3974 = vpop.permute.xlu0 %3973
          %3975 = vrot.lane.b32.xlu0 %v3967, 127
          %v3976 = vpop.permute.xlu0 %3975
          %v3980 = vadd.f32 %v3959, %v3972
          %v3981 = vadd.f32 %v3960, %v3974
          %v3982 = vadd.f32 %v3961, %v3976
          %s3983 = sadd.s32 %s3494, 35
          %s3984 = sld [smem:[#allocation9 + %s3983]]
          %v3985 = vstv %s3984
          %v3986 = vmul.f32 %v3985, %v3485
          %v3987 = vmul.f32 %v3985, %v3486
          %v3988 = vmul.f32 %v3985, %v3487
          %3992 = vrot.lane.b32.xlu0 %v3986, 126
          %v3993 = vpop.permute.xlu0 %3992
          %3994 = vrot.lane.b32.xlu0 %v3987, 126
          %v3995 = vpop.permute.xlu0 %3994
          %3996 = vrot.lane.b32.xlu0 %v3988, 126
          %v3997 = vpop.permute.xlu0 %3996
          %v4001 = vadd.f32 %v3980, %v3993
          %v4002 = vadd.f32 %v3981, %v3995
          %v4003 = vadd.f32 %v3982, %v3997
          %s4004 = sadd.s32 %s3494, 51
          %s4005 = sld [smem:[#allocation9 + %s4004]]
          %v4006 = vstv %s4005
          %v4007 = vmul.f32 %v4006, %v3488
          %v4008 = vmul.f32 %v4006, %v3489
          %v4009 = vmul.f32 %v4006, %v3490
          %v4010 = vadd.f32 %v4001, %v4007
          %v4011 = vadd.f32 %v4002, %v4008
          %v4012 = vadd.f32 %v4003, %v4009
          %s4013 = sadd.s32 %s3494, 67
          %s4014 = sld [smem:[#allocation9 + %s4013]]
          %v4015 = vstv %s4014
          %v4016 = vmul.f32 %v4015, %v3488
          %v4017 = vmul.f32 %v4015, %v3489
          %v4018 = vmul.f32 %v4015, %v3490
          %4022 = vrot.lane.b32.xlu0 %v4016, 127
          %v4023 = vpop.permute.xlu0 %4022
          %4024 = vrot.lane.b32.xlu0 %v4017, 127
          %v4025 = vpop.permute.xlu0 %4024
          %4026 = vrot.lane.b32.xlu0 %v4018, 127
          %v4027 = vpop.permute.xlu0 %4026
          %v4031 = vadd.f32 %v4010, %v4023
          %v4032 = vadd.f32 %v4011, %v4025
          %v4033 = vadd.f32 %v4012, %v4027
          %s4034 = sadd.s32 %s3494, 83
          %s4035 = sld [smem:[#allocation9 + %s4034]]
          %v4036 = vstv %s4035
          %v4037 = vmul.f32 %v4036, %v3488
          %v4038 = vmul.f32 %v4036, %v3489
          %v4039 = vmul.f32 %v4036, %v3490
          %4043 = vrot.lane.b32.xlu0 %v4037, 126
          %v4044 = vpop.permute.xlu0 %4043
          %4045 = vrot.lane.b32.xlu0 %v4038, 126
          %v4046 = vpop.permute.xlu0 %4045
          %4047 = vrot.lane.b32.xlu0 %v4039, 126
          %v4048 = vpop.permute.xlu0 %4047
          %v4052 = vadd.f32 %v4031, %v4044
          %v4053 = vadd.f32 %v4032, %v4046
          %v4054 = vadd.f32 %v4033, %v4048
          %s4055 = sadd.s32 %s3494, 99
          %s4056 = sld [smem:[#allocation9 + %s4055]]
          %v4057 = vstv %s4056
          %v4058 = vmul.f32 %v4057, %v3491
          %v4059 = vmul.f32 %v4057, %v3492
          %v4060 = vmul.f32 %v4057, %v3493
          %v4061 = vadd.f32 %v4052, %v4058
          %v4062 = vadd.f32 %v4053, %v4059
          %v4063 = vadd.f32 %v4054, %v4060
          %s4064 = sadd.s32 %s3494, 115
          %s4065 = sld [smem:[#allocation9 + %s4064]]
          %v4066 = vstv %s4065
          %v4067 = vmul.f32 %v4066, %v3491
          %v4068 = vmul.f32 %v4066, %v3492
          %v4069 = vmul.f32 %v4066, %v3493
          %4073 = vrot.lane.b32.xlu0 %v4067, 127
          %v4074 = vpop.permute.xlu0 %4073
          %4075 = vrot.lane.b32.xlu0 %v4068, 127
          %v4076 = vpop.permute.xlu0 %4075
          %4077 = vrot.lane.b32.xlu0 %v4069, 127
          %v4078 = vpop.permute.xlu0 %4077
          %v4082 = vadd.f32 %v4061, %v4074
          %v4083 = vadd.f32 %v4062, %v4076
          %v4084 = vadd.f32 %v4063, %v4078
          %s4085 = sadd.s32 %s3494, 131
          %s4086 = sld [smem:[#allocation9 + %s4085]]
          %v4087 = vstv %s4086
          %v4088 = vmul.f32 %v4087, %v3491
          %v4089 = vmul.f32 %v4087, %v3492
          %v4090 = vmul.f32 %v4087, %v3493
          %4094 = vrot.lane.b32.xlu0 %v4088, 126
          %v4095 = vpop.permute.xlu0 %4094
          %4096 = vrot.lane.b32.xlu0 %v4089, 126
          %v4097 = vpop.permute.xlu0 %4096
          %4098 = vrot.lane.b32.xlu0 %v4090, 126
          %v4099 = vpop.permute.xlu0 %4098
          %v4103 = vadd.f32 %v4082, %v4095
          %v4104 = vadd.f32 %v4083, %v4097
          %v4105 = vadd.f32 %v4084, %v4099
          %s4106 = sadd.s32 %s3494, 4
          %s4107 = sld [smem:[#allocation9 + %s4106]]
          %v4108 = vstv %s4107
          %v4109 = vmul.f32 %v4108, %v3485
          %v4110 = vmul.f32 %v4108, %v3486
          %v4111 = vmul.f32 %v4108, %v3487
          %v4112 = vadd.f32 %v3447, %v4109
          %v4113 = vadd.f32 %v3448, %v4110
          %v4114 = vadd.f32 %v3449, %v4111
          %s4115 = sadd.s32 %s3494, 20
          %s4116 = sld [smem:[#allocation9 + %s4115]]
          %v4117 = vstv %s4116
          %v4118 = vmul.f32 %v4117, %v3485
          %v4119 = vmul.f32 %v4117, %v3486
          %v4120 = vmul.f32 %v4117, %v3487
          %4124 = vrot.lane.b32.xlu0 %v4118, 127
          %v4125 = vpop.permute.xlu0 %4124
          %4126 = vrot.lane.b32.xlu0 %v4119, 127
          %v4127 = vpop.permute.xlu0 %4126
          %4128 = vrot.lane.b32.xlu0 %v4120, 127
          %v4129 = vpop.permute.xlu0 %4128
          %v4133 = vadd.f32 %v4112, %v4125
          %v4134 = vadd.f32 %v4113, %v4127
          %v4135 = vadd.f32 %v4114, %v4129
          %s4136 = sadd.s32 %s3494, 36
          %s4137 = sld [smem:[#allocation9 + %s4136]]
          %v4138 = vstv %s4137
          %v4139 = vmul.f32 %v4138, %v3485
          %v4140 = vmul.f32 %v4138, %v3486
          %v4141 = vmul.f32 %v4138, %v3487
          %4145 = vrot.lane.b32.xlu0 %v4139, 126
          %v4146 = vpop.permute.xlu0 %4145
          %4147 = vrot.lane.b32.xlu0 %v4140, 126
          %v4148 = vpop.permute.xlu0 %4147
          %4149 = vrot.lane.b32.xlu0 %v4141, 126
          %v4150 = vpop.permute.xlu0 %4149
          %v4154 = vadd.f32 %v4133, %v4146
          %v4155 = vadd.f32 %v4134, %v4148
          %v4156 = vadd.f32 %v4135, %v4150
          %s4157 = sadd.s32 %s3494, 52
          %s4158 = sld [smem:[#allocation9 + %s4157]]
          %v4159 = vstv %s4158
          %v4160 = vmul.f32 %v4159, %v3488
          %v4161 = vmul.f32 %v4159, %v3489
          %v4162 = vmul.f32 %v4159, %v3490
          %v4163 = vadd.f32 %v4154, %v4160
          %v4164 = vadd.f32 %v4155, %v4161
          %v4165 = vadd.f32 %v4156, %v4162
          %s4166 = sadd.s32 %s3494, 68
          %s4167 = sld [smem:[#allocation9 + %s4166]]
          %v4168 = vstv %s4167
          %v4169 = vmul.f32 %v4168, %v3488
          %v4170 = vmul.f32 %v4168, %v3489
          %v4171 = vmul.f32 %v4168, %v3490
          %4175 = vrot.lane.b32.xlu0 %v4169, 127
          %v4176 = vpop.permute.xlu0 %4175
          %4177 = vrot.lane.b32.xlu0 %v4170, 127
          %v4178 = vpop.permute.xlu0 %4177
          %4179 = vrot.lane.b32.xlu0 %v4171, 127
          %v4180 = vpop.permute.xlu0 %4179
          %v4184 = vadd.f32 %v4163, %v4176
          %v4185 = vadd.f32 %v4164, %v4178
          %v4186 = vadd.f32 %v4165, %v4180
          %s4187 = sadd.s32 %s3494, 84
          %s4188 = sld [smem:[#allocation9 + %s4187]]
          %v4189 = vstv %s4188
          %v4190 = vmul.f32 %v4189, %v3488
          %v4191 = vmul.f32 %v4189, %v3489
          %v4192 = vmul.f32 %v4189, %v3490
          %4196 = vrot.lane.b32.xlu0 %v4190, 126
          %v4197 = vpop.permute.xlu0 %4196
          %4198 = vrot.lane.b32.xlu0 %v4191, 126
          %v4199 = vpop.permute.xlu0 %4198
          %4200 = vrot.lane.b32.xlu0 %v4192, 126
          %v4201 = vpop.permute.xlu0 %4200
          %v4205 = vadd.f32 %v4184, %v4197
          %v4206 = vadd.f32 %v4185, %v4199
          %v4207 = vadd.f32 %v4186, %v4201
          %s4208 = sadd.s32 %s3494, 100
          %s4209 = sld [smem:[#allocation9 + %s4208]]
          %v4210 = vstv %s4209
          %v4211 = vmul.f32 %v4210, %v3491
          %v4212 = vmul.f32 %v4210, %v3492
          %v4213 = vmul.f32 %v4210, %v3493
          %v4214 = vadd.f32 %v4205, %v4211
          %v4215 = vadd.f32 %v4206, %v4212
          %v4216 = vadd.f32 %v4207, %v4213
          %s4217 = sadd.s32 %s3494, 116
          %s4218 = sld [smem:[#allocation9 + %s4217]]
          %v4219 = vstv %s4218
          %v4220 = vmul.f32 %v4219, %v3491
          %v4221 = vmul.f32 %v4219, %v3492
          %v4222 = vmul.f32 %v4219, %v3493
          %4226 = vrot.lane.b32.xlu0 %v4220, 127
          %v4227 = vpop.permute.xlu0 %4226
          %4228 = vrot.lane.b32.xlu0 %v4221, 127
          %v4229 = vpop.permute.xlu0 %4228
          %4230 = vrot.lane.b32.xlu0 %v4222, 127
          %v4231 = vpop.permute.xlu0 %4230
          %v4235 = vadd.f32 %v4214, %v4227
          %v4236 = vadd.f32 %v4215, %v4229
          %v4237 = vadd.f32 %v4216, %v4231
          %s4238 = sadd.s32 %s3494, 132
          %s4239 = sld [smem:[#allocation9 + %s4238]]
          %v4240 = vstv %s4239
          %v4241 = vmul.f32 %v4240, %v3491
          %v4242 = vmul.f32 %v4240, %v3492
          %v4243 = vmul.f32 %v4240, %v3493
          %4247 = vrot.lane.b32.xlu0 %v4241, 126
          %v4248 = vpop.permute.xlu0 %4247
          %4249 = vrot.lane.b32.xlu0 %v4242, 126
          %v4250 = vpop.permute.xlu0 %4249
          %4251 = vrot.lane.b32.xlu0 %v4243, 126
          %v4252 = vpop.permute.xlu0 %4251
          %v4256 = vadd.f32 %v4235, %v4248
          %v4257 = vadd.f32 %v4236, %v4250
          %v4258 = vadd.f32 %v4237, %v4252
          %s4259 = sadd.s32 %s3494, 5
          %s4260 = sld [smem:[#allocation9 + %s4259]]
          %v4261 = vstv %s4260
          %v4262 = vmul.f32 %v4261, %v3485
          %v4263 = vmul.f32 %v4261, %v3486
          %v4264 = vmul.f32 %v4261, %v3487
          %v4265 = vadd.f32 %v3450, %v4262
          %v4266 = vadd.f32 %v3451, %v4263
          %v4267 = vadd.f32 %v3452, %v4264
          %s4268 = sadd.s32 %s3494, 21
          %s4269 = sld [smem:[#allocation9 + %s4268]]
          %v4270 = vstv %s4269
          %v4271 = vmul.f32 %v4270, %v3485
          %v4272 = vmul.f32 %v4270, %v3486
          %v4273 = vmul.f32 %v4270, %v3487
          %4277 = vrot.lane.b32.xlu0 %v4271, 127
          %v4278 = vpop.permute.xlu0 %4277
          %4279 = vrot.lane.b32.xlu0 %v4272, 127
          %v4280 = vpop.permute.xlu0 %4279
          %4281 = vrot.lane.b32.xlu0 %v4273, 127
          %v4282 = vpop.permute.xlu0 %4281
          %v4286 = vadd.f32 %v4265, %v4278
          %v4287 = vadd.f32 %v4266, %v4280
          %v4288 = vadd.f32 %v4267, %v4282
          %s4289 = sadd.s32 %s3494, 37
          %s4290 = sld [smem:[#allocation9 + %s4289]]
          %v4291 = vstv %s4290
          %v4292 = vmul.f32 %v4291, %v3485
          %v4293 = vmul.f32 %v4291, %v3486
          %v4294 = vmul.f32 %v4291, %v3487
          %4298 = vrot.lane.b32.xlu0 %v4292, 126
          %v4299 = vpop.permute.xlu0 %4298
          %4300 = vrot.lane.b32.xlu0 %v4293, 126
          %v4301 = vpop.permute.xlu0 %4300
          %4302 = vrot.lane.b32.xlu0 %v4294, 126
          %v4303 = vpop.permute.xlu0 %4302
          %v4307 = vadd.f32 %v4286, %v4299
          %v4308 = vadd.f32 %v4287, %v4301
          %v4309 = vadd.f32 %v4288, %v4303
          %s4310 = sadd.s32 %s3494, 53
          %s4311 = sld [smem:[#allocation9 + %s4310]]
          %v4312 = vstv %s4311
          %v4313 = vmul.f32 %v4312, %v3488
          %v4314 = vmul.f32 %v4312, %v3489
          %v4315 = vmul.f32 %v4312, %v3490
          %v4316 = vadd.f32 %v4307, %v4313
          %v4317 = vadd.f32 %v4308, %v4314
          %v4318 = vadd.f32 %v4309, %v4315
          %s4319 = sadd.s32 %s3494, 69
          %s4320 = sld [smem:[#allocation9 + %s4319]]
          %v4321 = vstv %s4320
          %v4322 = vmul.f32 %v4321, %v3488
          %v4323 = vmul.f32 %v4321, %v3489
          %v4324 = vmul.f32 %v4321, %v3490
          %4328 = vrot.lane.b32.xlu0 %v4322, 127
          %v4329 = vpop.permute.xlu0 %4328
          %4330 = vrot.lane.b32.xlu0 %v4323, 127
          %v4331 = vpop.permute.xlu0 %4330
          %4332 = vrot.lane.b32.xlu0 %v4324, 127
          %v4333 = vpop.permute.xlu0 %4332
          %v4337 = vadd.f32 %v4316, %v4329
          %v4338 = vadd.f32 %v4317, %v4331
          %v4339 = vadd.f32 %v4318, %v4333
          %s4340 = sadd.s32 %s3494, 85
          %s4341 = sld [smem:[#allocation9 + %s4340]]
          %v4342 = vstv %s4341
          %v4343 = vmul.f32 %v4342, %v3488
          %v4344 = vmul.f32 %v4342, %v3489
          %v4345 = vmul.f32 %v4342, %v3490
          %4349 = vrot.lane.b32.xlu0 %v4343, 126
          %v4350 = vpop.permute.xlu0 %4349
          %4351 = vrot.lane.b32.xlu0 %v4344, 126
          %v4352 = vpop.permute.xlu0 %4351
          %4353 = vrot.lane.b32.xlu0 %v4345, 126
          %v4354 = vpop.permute.xlu0 %4353
          %v4358 = vadd.f32 %v4337, %v4350
          %v4359 = vadd.f32 %v4338, %v4352
          %v4360 = vadd.f32 %v4339, %v4354
          %s4361 = sadd.s32 %s3494, 101
          %s4362 = sld [smem:[#allocation9 + %s4361]]
          %v4363 = vstv %s4362
          %v4364 = vmul.f32 %v4363, %v3491
          %v4365 = vmul.f32 %v4363, %v3492
          %v4366 = vmul.f32 %v4363, %v3493
          %v4367 = vadd.f32 %v4358, %v4364
          %v4368 = vadd.f32 %v4359, %v4365
          %v4369 = vadd.f32 %v4360, %v4366
          %s4370 = sadd.s32 %s3494, 117
          %s4371 = sld [smem:[#allocation9 + %s4370]]
          %v4372 = vstv %s4371
          %v4373 = vmul.f32 %v4372, %v3491
          %v4374 = vmul.f32 %v4372, %v3492
          %v4375 = vmul.f32 %v4372, %v3493
          %4379 = vrot.lane.b32.xlu0 %v4373, 127
          %v4380 = vpop.permute.xlu0 %4379
          %4381 = vrot.lane.b32.xlu0 %v4374, 127
          %v4382 = vpop.permute.xlu0 %4381
          %4383 = vrot.lane.b32.xlu0 %v4375, 127
          %v4384 = vpop.permute.xlu0 %4383
          %v4388 = vadd.f32 %v4367, %v4380
          %v4389 = vadd.f32 %v4368, %v4382
          %v4390 = vadd.f32 %v4369, %v4384
          %s4391 = sadd.s32 %s3494, 133
          %s4392 = sld [smem:[#allocation9 + %s4391]]
          %v4393 = vstv %s4392
          %v4394 = vmul.f32 %v4393, %v3491
          %v4395 = vmul.f32 %v4393, %v3492
          %v4396 = vmul.f32 %v4393, %v3493
          %4400 = vrot.lane.b32.xlu0 %v4394, 126
          %v4401 = vpop.permute.xlu0 %4400
          %4402 = vrot.lane.b32.xlu0 %v4395, 126
          %v4403 = vpop.permute.xlu0 %4402
          %4404 = vrot.lane.b32.xlu0 %v4396, 126
          %v4405 = vpop.permute.xlu0 %4404
          %v4409 = vadd.f32 %v4388, %v4401
          %v4410 = vadd.f32 %v4389, %v4403
          %v4411 = vadd.f32 %v4390, %v4405
          %s4412 = sadd.s32 %s3494, 6
          %s4413 = sld [smem:[#allocation9 + %s4412]]
          %v4414 = vstv %s4413
          %v4415 = vmul.f32 %v4414, %v3485
          %v4416 = vmul.f32 %v4414, %v3486
          %v4417 = vmul.f32 %v4414, %v3487
          %v4418 = vadd.f32 %v3453, %v4415
          %v4419 = vadd.f32 %v3454, %v4416
          %v4420 = vadd.f32 %v3455, %v4417
          %s4421 = sadd.s32 %s3494, 22
          %s4422 = sld [smem:[#allocation9 + %s4421]]
          %v4423 = vstv %s4422
          %v4424 = vmul.f32 %v4423, %v3485
          %v4425 = vmul.f32 %v4423, %v3486
          %v4426 = vmul.f32 %v4423, %v3487
          %4430 = vrot.lane.b32.xlu0 %v4424, 127
          %v4431 = vpop.permute.xlu0 %4430
          %4432 = vrot.lane.b32.xlu0 %v4425, 127
          %v4433 = vpop.permute.xlu0 %4432
          %4434 = vrot.lane.b32.xlu0 %v4426, 127
          %v4435 = vpop.permute.xlu0 %4434
          %v4439 = vadd.f32 %v4418, %v4431
          %v4440 = vadd.f32 %v4419, %v4433
          %v4441 = vadd.f32 %v4420, %v4435
          %s4442 = sadd.s32 %s3494, 38
          %s4443 = sld [smem:[#allocation9 + %s4442]]
          %v4444 = vstv %s4443
          %v4445 = vmul.f32 %v4444, %v3485
          %v4446 = vmul.f32 %v4444, %v3486
          %v4447 = vmul.f32 %v4444, %v3487
          %4451 = vrot.lane.b32.xlu0 %v4445, 126
          %v4452 = vpop.permute.xlu0 %4451
          %4453 = vrot.lane.b32.xlu0 %v4446, 126
          %v4454 = vpop.permute.xlu0 %4453
          %4455 = vrot.lane.b32.xlu0 %v4447, 126
          %v4456 = vpop.permute.xlu0 %4455
          %v4460 = vadd.f32 %v4439, %v4452
          %v4461 = vadd.f32 %v4440, %v4454
          %v4462 = vadd.f32 %v4441, %v4456
          %s4463 = sadd.s32 %s3494, 54
          %s4464 = sld [smem:[#allocation9 + %s4463]]
          %v4465 = vstv %s4464
          %v4466 = vmul.f32 %v4465, %v3488
          %v4467 = vmul.f32 %v4465, %v3489
          %v4468 = vmul.f32 %v4465, %v3490
          %v4469 = vadd.f32 %v4460, %v4466
          %v4470 = vadd.f32 %v4461, %v4467
          %v4471 = vadd.f32 %v4462, %v4468
          %s4472 = sadd.s32 %s3494, 70
          %s4473 = sld [smem:[#allocation9 + %s4472]]
          %v4474 = vstv %s4473
          %v4475 = vmul.f32 %v4474, %v3488
          %v4476 = vmul.f32 %v4474, %v3489
          %v4477 = vmul.f32 %v4474, %v3490
          %4481 = vrot.lane.b32.xlu0 %v4475, 127
          %v4482 = vpop.permute.xlu0 %4481
          %4483 = vrot.lane.b32.xlu0 %v4476, 127
          %v4484 = vpop.permute.xlu0 %4483
          %4485 = vrot.lane.b32.xlu0 %v4477, 127
          %v4486 = vpop.permute.xlu0 %4485
          %v4490 = vadd.f32 %v4469, %v4482
          %v4491 = vadd.f32 %v4470, %v4484
          %v4492 = vadd.f32 %v4471, %v4486
          %s4493 = sadd.s32 %s3494, 86
          %s4494 = sld [smem:[#allocation9 + %s4493]]
          %v4495 = vstv %s4494
          %v4496 = vmul.f32 %v4495, %v3488
          %v4497 = vmul.f32 %v4495, %v3489
          %v4498 = vmul.f32 %v4495, %v3490
          %4502 = vrot.lane.b32.xlu0 %v4496, 126
          %v4503 = vpop.permute.xlu0 %4502
          %4504 = vrot.lane.b32.xlu0 %v4497, 126
          %v4505 = vpop.permute.xlu0 %4504
          %4506 = vrot.lane.b32.xlu0 %v4498, 126
          %v4507 = vpop.permute.xlu0 %4506
          %v4511 = vadd.f32 %v4490, %v4503
          %v4512 = vadd.f32 %v4491, %v4505
          %v4513 = vadd.f32 %v4492, %v4507
          %s4514 = sadd.s32 %s3494, 102
          %s4515 = sld [smem:[#allocation9 + %s4514]]
          %v4516 = vstv %s4515
          %v4517 = vmul.f32 %v4516, %v3491
          %v4518 = vmul.f32 %v4516, %v3492
          %v4519 = vmul.f32 %v4516, %v3493
          %v4520 = vadd.f32 %v4511, %v4517
          %v4521 = vadd.f32 %v4512, %v4518
          %v4522 = vadd.f32 %v4513, %v4519
          %s4523 = sadd.s32 %s3494, 118
          %s4524 = sld [smem:[#allocation9 + %s4523]]
          %v4525 = vstv %s4524
          %v4526 = vmul.f32 %v4525, %v3491
          %v4527 = vmul.f32 %v4525, %v3492
          %v4528 = vmul.f32 %v4525, %v3493
          %4532 = vrot.lane.b32.xlu0 %v4526, 127
          %v4533 = vpop.permute.xlu0 %4532
          %4534 = vrot.lane.b32.xlu0 %v4527, 127
          %v4535 = vpop.permute.xlu0 %4534
          %4536 = vrot.lane.b32.xlu0 %v4528, 127
          %v4537 = vpop.permute.xlu0 %4536
          %v4541 = vadd.f32 %v4520, %v4533
          %v4542 = vadd.f32 %v4521, %v4535
          %v4543 = vadd.f32 %v4522, %v4537
          %s4544 = sadd.s32 %s3494, 134
          %s4545 = sld [smem:[#allocation9 + %s4544]]
          %v4546 = vstv %s4545
          %v4547 = vmul.f32 %v4546, %v3491
          %v4548 = vmul.f32 %v4546, %v3492
          %v4549 = vmul.f32 %v4546, %v3493
          %4553 = vrot.lane.b32.xlu0 %v4547, 126
          %v4554 = vpop.permute.xlu0 %4553
          %4555 = vrot.lane.b32.xlu0 %v4548, 126
          %v4556 = vpop.permute.xlu0 %4555
          %4557 = vrot.lane.b32.xlu0 %v4549, 126
          %v4558 = vpop.permute.xlu0 %4557
          %v4562 = vadd.f32 %v4541, %v4554
          %v4563 = vadd.f32 %v4542, %v4556
          %v4564 = vadd.f32 %v4543, %v4558
          %s4565 = sadd.s32 %s3494, 7
          %s4566 = sld [smem:[#allocation9 + %s4565]]
          %v4567 = vstv %s4566
          %v4568 = vmul.f32 %v4567, %v3485
          %v4569 = vmul.f32 %v4567, %v3486
          %v4570 = vmul.f32 %v4567, %v3487
          %v4571 = vadd.f32 %v3456, %v4568
          %v4572 = vadd.f32 %v3457, %v4569
          %v4573 = vadd.f32 %v3458, %v4570
          %s4574 = sadd.s32 %s3494, 23
          %s4575 = sld [smem:[#allocation9 + %s4574]]
          %v4576 = vstv %s4575
          %v4577 = vmul.f32 %v4576, %v3485
          %v4578 = vmul.f32 %v4576, %v3486
          %v4579 = vmul.f32 %v4576, %v3487
          %4583 = vrot.lane.b32.xlu0 %v4577, 127
          %v4584 = vpop.permute.xlu0 %4583
          %4585 = vrot.lane.b32.xlu0 %v4578, 127
          %v4586 = vpop.permute.xlu0 %4585
          %4587 = vrot.lane.b32.xlu0 %v4579, 127
          %v4588 = vpop.permute.xlu0 %4587
          %v4592 = vadd.f32 %v4571, %v4584
          %v4593 = vadd.f32 %v4572, %v4586
          %v4594 = vadd.f32 %v4573, %v4588
          %s4595 = sadd.s32 %s3494, 39
          %s4596 = sld [smem:[#allocation9 + %s4595]]
          %v4597 = vstv %s4596
          %v4598 = vmul.f32 %v4597, %v3485
          %v4599 = vmul.f32 %v4597, %v3486
          %v4600 = vmul.f32 %v4597, %v3487
          %4604 = vrot.lane.b32.xlu0 %v4598, 126
          %v4605 = vpop.permute.xlu0 %4604
          %4606 = vrot.lane.b32.xlu0 %v4599, 126
          %v4607 = vpop.permute.xlu0 %4606
          %4608 = vrot.lane.b32.xlu0 %v4600, 126
          %v4609 = vpop.permute.xlu0 %4608
          %v4613 = vadd.f32 %v4592, %v4605
          %v4614 = vadd.f32 %v4593, %v4607
          %v4615 = vadd.f32 %v4594, %v4609
          %s4616 = sadd.s32 %s3494, 55
          %s4617 = sld [smem:[#allocation9 + %s4616]]
          %v4618 = vstv %s4617
          %v4619 = vmul.f32 %v4618, %v3488
          %v4620 = vmul.f32 %v4618, %v3489
          %v4621 = vmul.f32 %v4618, %v3490
          %v4622 = vadd.f32 %v4613, %v4619
          %v4623 = vadd.f32 %v4614, %v4620
          %v4624 = vadd.f32 %v4615, %v4621
          %s4625 = sadd.s32 %s3494, 71
          %s4626 = sld [smem:[#allocation9 + %s4625]]
          %v4627 = vstv %s4626
          %v4628 = vmul.f32 %v4627, %v3488
          %v4629 = vmul.f32 %v4627, %v3489
          %v4630 = vmul.f32 %v4627, %v3490
          %4634 = vrot.lane.b32.xlu0 %v4628, 127
          %v4635 = vpop.permute.xlu0 %4634
          %4636 = vrot.lane.b32.xlu0 %v4629, 127
          %v4637 = vpop.permute.xlu0 %4636
          %4638 = vrot.lane.b32.xlu0 %v4630, 127
          %v4639 = vpop.permute.xlu0 %4638
          %v4643 = vadd.f32 %v4622, %v4635
          %v4644 = vadd.f32 %v4623, %v4637
          %v4645 = vadd.f32 %v4624, %v4639
          %s4646 = sadd.s32 %s3494, 87
          %s4647 = sld [smem:[#allocation9 + %s4646]]
          %v4648 = vstv %s4647
          %v4649 = vmul.f32 %v4648, %v3488
          %v4650 = vmul.f32 %v4648, %v3489
          %v4651 = vmul.f32 %v4648, %v3490
          %4655 = vrot.lane.b32.xlu0 %v4649, 126
          %v4656 = vpop.permute.xlu0 %4655
          %4657 = vrot.lane.b32.xlu0 %v4650, 126
          %v4658 = vpop.permute.xlu0 %4657
          %4659 = vrot.lane.b32.xlu0 %v4651, 126
          %v4660 = vpop.permute.xlu0 %4659
          %v4664 = vadd.f32 %v4643, %v4656
          %v4665 = vadd.f32 %v4644, %v4658
          %v4666 = vadd.f32 %v4645, %v4660
          %s4667 = sadd.s32 %s3494, 103
          %s4668 = sld [smem:[#allocation9 + %s4667]]
          %v4669 = vstv %s4668
          %v4670 = vmul.f32 %v4669, %v3491
          %v4671 = vmul.f32 %v4669, %v3492
          %v4672 = vmul.f32 %v4669, %v3493
          %v4673 = vadd.f32 %v4664, %v4670
          %v4674 = vadd.f32 %v4665, %v4671
          %v4675 = vadd.f32 %v4666, %v4672
          %s4676 = sadd.s32 %s3494, 119
          %s4677 = sld [smem:[#allocation9 + %s4676]]
          %v4678 = vstv %s4677
          %v4679 = vmul.f32 %v4678, %v3491
          %v4680 = vmul.f32 %v4678, %v3492
          %v4681 = vmul.f32 %v4678, %v3493
          %4685 = vrot.lane.b32.xlu0 %v4679, 127
          %v4686 = vpop.permute.xlu0 %4685
          %4687 = vrot.lane.b32.xlu0 %v4680, 127
          %v4688 = vpop.permute.xlu0 %4687
          %4689 = vrot.lane.b32.xlu0 %v4681, 127
          %v4690 = vpop.permute.xlu0 %4689
          %v4694 = vadd.f32 %v4673, %v4686
          %v4695 = vadd.f32 %v4674, %v4688
          %v4696 = vadd.f32 %v4675, %v4690
          %s4697 = sadd.s32 %s3494, 135
          %s4698 = sld [smem:[#allocation9 + %s4697]]
          %v4699 = vstv %s4698
          %v4700 = vmul.f32 %v4699, %v3491
          %v4701 = vmul.f32 %v4699, %v3492
          %v4702 = vmul.f32 %v4699, %v3493
          %4706 = vrot.lane.b32.xlu0 %v4700, 126
          %v4707 = vpop.permute.xlu0 %4706
          %4708 = vrot.lane.b32.xlu0 %v4701, 126
          %v4709 = vpop.permute.xlu0 %4708
          %4710 = vrot.lane.b32.xlu0 %v4702, 126
          %v4711 = vpop.permute.xlu0 %4710
          %v4715 = vadd.f32 %v4694, %v4707
          %v4716 = vadd.f32 %v4695, %v4709
          %v4717 = vadd.f32 %v4696, %v4711
          %s4718 = sadd.s32 %s3494, 8
          %s4719 = sld [smem:[#allocation9 + %s4718]]
          %v4720 = vstv %s4719
          %v4721 = vmul.f32 %v4720, %v3485
          %v4722 = vmul.f32 %v4720, %v3486
          %v4723 = vmul.f32 %v4720, %v3487
          %v4724 = vadd.f32 %v3459, %v4721
          %v4725 = vadd.f32 %v3460, %v4722
          %v4726 = vadd.f32 %v3461, %v4723
          %s4727 = sadd.s32 %s3494, 24
          %s4728 = sld [smem:[#allocation9 + %s4727]]
          %v4729 = vstv %s4728
          %v4730 = vmul.f32 %v4729, %v3485
          %v4731 = vmul.f32 %v4729, %v3486
          %v4732 = vmul.f32 %v4729, %v3487
          %4736 = vrot.lane.b32.xlu0 %v4730, 127
          %v4737 = vpop.permute.xlu0 %4736
          %4738 = vrot.lane.b32.xlu0 %v4731, 127
          %v4739 = vpop.permute.xlu0 %4738
          %4740 = vrot.lane.b32.xlu0 %v4732, 127
          %v4741 = vpop.permute.xlu0 %4740
          %v4745 = vadd.f32 %v4724, %v4737
          %v4746 = vadd.f32 %v4725, %v4739
          %v4747 = vadd.f32 %v4726, %v4741
          %s4748 = sadd.s32 %s3494, 40
          %s4749 = sld [smem:[#allocation9 + %s4748]]
          %v4750 = vstv %s4749
          %v4751 = vmul.f32 %v4750, %v3485
          %v4752 = vmul.f32 %v4750, %v3486
          %v4753 = vmul.f32 %v4750, %v3487
          %4757 = vrot.lane.b32.xlu0 %v4751, 126
          %v4758 = vpop.permute.xlu0 %4757
          %4759 = vrot.lane.b32.xlu0 %v4752, 126
          %v4760 = vpop.permute.xlu0 %4759
          %4761 = vrot.lane.b32.xlu0 %v4753, 126
          %v4762 = vpop.permute.xlu0 %4761
          %v4766 = vadd.f32 %v4745, %v4758
          %v4767 = vadd.f32 %v4746, %v4760
          %v4768 = vadd.f32 %v4747, %v4762
          %s4769 = sadd.s32 %s3494, 56
          %s4770 = sld [smem:[#allocation9 + %s4769]]
          %v4771 = vstv %s4770
          %v4772 = vmul.f32 %v4771, %v3488
          %v4773 = vmul.f32 %v4771, %v3489
          %v4774 = vmul.f32 %v4771, %v3490
          %v4775 = vadd.f32 %v4766, %v4772
          %v4776 = vadd.f32 %v4767, %v4773
          %v4777 = vadd.f32 %v4768, %v4774
          %s4778 = sadd.s32 %s3494, 72
          %s4779 = sld [smem:[#allocation9 + %s4778]]
          %v4780 = vstv %s4779
          %v4781 = vmul.f32 %v4780, %v3488
          %v4782 = vmul.f32 %v4780, %v3489
          %v4783 = vmul.f32 %v4780, %v3490
          %4787 = vrot.lane.b32.xlu0 %v4781, 127
          %v4788 = vpop.permute.xlu0 %4787
          %4789 = vrot.lane.b32.xlu0 %v4782, 127
          %v4790 = vpop.permute.xlu0 %4789
          %4791 = vrot.lane.b32.xlu0 %v4783, 127
          %v4792 = vpop.permute.xlu0 %4791
          %v4796 = vadd.f32 %v4775, %v4788
          %v4797 = vadd.f32 %v4776, %v4790
          %v4798 = vadd.f32 %v4777, %v4792
          %s4799 = sadd.s32 %s3494, 88
          %s4800 = sld [smem:[#allocation9 + %s4799]]
          %v4801 = vstv %s4800
          %v4802 = vmul.f32 %v4801, %v3488
          %v4803 = vmul.f32 %v4801, %v3489
          %v4804 = vmul.f32 %v4801, %v3490
          %4808 = vrot.lane.b32.xlu0 %v4802, 126
          %v4809 = vpop.permute.xlu0 %4808
          %4810 = vrot.lane.b32.xlu0 %v4803, 126
          %v4811 = vpop.permute.xlu0 %4810
          %4812 = vrot.lane.b32.xlu0 %v4804, 126
          %v4813 = vpop.permute.xlu0 %4812
          %v4817 = vadd.f32 %v4796, %v4809
          %v4818 = vadd.f32 %v4797, %v4811
          %v4819 = vadd.f32 %v4798, %v4813
          %s4820 = sadd.s32 %s3494, 104
          %s4821 = sld [smem:[#allocation9 + %s4820]]
          %v4822 = vstv %s4821
          %v4823 = vmul.f32 %v4822, %v3491
          %v4824 = vmul.f32 %v4822, %v3492
          %v4825 = vmul.f32 %v4822, %v3493
          %v4826 = vadd.f32 %v4817, %v4823
          %v4827 = vadd.f32 %v4818, %v4824
          %v4828 = vadd.f32 %v4819, %v4825
          %s4829 = sadd.s32 %s3494, 120
          %s4830 = sld [smem:[#allocation9 + %s4829]]
          %v4831 = vstv %s4830
          %v4832 = vmul.f32 %v4831, %v3491
          %v4833 = vmul.f32 %v4831, %v3492
          %v4834 = vmul.f32 %v4831, %v3493
          %4838 = vrot.lane.b32.xlu0 %v4832, 127
          %v4839 = vpop.permute.xlu0 %4838
          %4840 = vrot.lane.b32.xlu0 %v4833, 127
          %v4841 = vpop.permute.xlu0 %4840
          %4842 = vrot.lane.b32.xlu0 %v4834, 127
          %v4843 = vpop.permute.xlu0 %4842
          %v4847 = vadd.f32 %v4826, %v4839
          %v4848 = vadd.f32 %v4827, %v4841
          %v4849 = vadd.f32 %v4828, %v4843
          %s4850 = sadd.s32 %s3494, 136
          %s4851 = sld [smem:[#allocation9 + %s4850]]
          %v4852 = vstv %s4851
          %v4853 = vmul.f32 %v4852, %v3491
          %v4854 = vmul.f32 %v4852, %v3492
          %v4855 = vmul.f32 %v4852, %v3493
          %4859 = vrot.lane.b32.xlu0 %v4853, 126
          %v4860 = vpop.permute.xlu0 %4859
          %4861 = vrot.lane.b32.xlu0 %v4854, 126
          %v4862 = vpop.permute.xlu0 %4861
          %4863 = vrot.lane.b32.xlu0 %v4855, 126
          %v4864 = vpop.permute.xlu0 %4863
          %v4868 = vadd.f32 %v4847, %v4860
          %v4869 = vadd.f32 %v4848, %v4862
          %v4870 = vadd.f32 %v4849, %v4864
          %s4871 = sadd.s32 %s3494, 9
          %s4872 = sld [smem:[#allocation9 + %s4871]]
          %v4873 = vstv %s4872
          %v4874 = vmul.f32 %v4873, %v3485
          %v4875 = vmul.f32 %v4873, %v3486
          %v4876 = vmul.f32 %v4873, %v3487
          %v4877 = vadd.f32 %v3462, %v4874
          %v4878 = vadd.f32 %v3463, %v4875
          %v4879 = vadd.f32 %v3464, %v4876
          %s4880 = sadd.s32 %s3494, 25
          %s4881 = sld [smem:[#allocation9 + %s4880]]
          %v4882 = vstv %s4881
          %v4883 = vmul.f32 %v4882, %v3485
          %v4884 = vmul.f32 %v4882, %v3486
          %v4885 = vmul.f32 %v4882, %v3487
          %4889 = vrot.lane.b32.xlu0 %v4883, 127
          %v4890 = vpop.permute.xlu0 %4889
          %4891 = vrot.lane.b32.xlu0 %v4884, 127
          %v4892 = vpop.permute.xlu0 %4891
          %4893 = vrot.lane.b32.xlu0 %v4885, 127
          %v4894 = vpop.permute.xlu0 %4893
          %v4898 = vadd.f32 %v4877, %v4890
          %v4899 = vadd.f32 %v4878, %v4892
          %v4900 = vadd.f32 %v4879, %v4894
          %s4901 = sadd.s32 %s3494, 41
          %s4902 = sld [smem:[#allocation9 + %s4901]]
          %v4903 = vstv %s4902
          %v4904 = vmul.f32 %v4903, %v3485
          %v4905 = vmul.f32 %v4903, %v3486
          %v4906 = vmul.f32 %v4903, %v3487
          %4910 = vrot.lane.b32.xlu0 %v4904, 126
          %v4911 = vpop.permute.xlu0 %4910
          %4912 = vrot.lane.b32.xlu0 %v4905, 126
          %v4913 = vpop.permute.xlu0 %4912
          %4914 = vrot.lane.b32.xlu0 %v4906, 126
          %v4915 = vpop.permute.xlu0 %4914
          %v4919 = vadd.f32 %v4898, %v4911
          %v4920 = vadd.f32 %v4899, %v4913
          %v4921 = vadd.f32 %v4900, %v4915
          %s4922 = sadd.s32 %s3494, 57
          %s4923 = sld [smem:[#allocation9 + %s4922]]
          %v4924 = vstv %s4923
          %v4925 = vmul.f32 %v4924, %v3488
          %v4926 = vmul.f32 %v4924, %v3489
          %v4927 = vmul.f32 %v4924, %v3490
          %v4928 = vadd.f32 %v4919, %v4925
          %v4929 = vadd.f32 %v4920, %v4926
          %v4930 = vadd.f32 %v4921, %v4927
          %s4931 = sadd.s32 %s3494, 73
          %s4932 = sld [smem:[#allocation9 + %s4931]]
          %v4933 = vstv %s4932
          %v4934 = vmul.f32 %v4933, %v3488
          %v4935 = vmul.f32 %v4933, %v3489
          %v4936 = vmul.f32 %v4933, %v3490
          %4940 = vrot.lane.b32.xlu0 %v4934, 127
          %v4941 = vpop.permute.xlu0 %4940
          %4942 = vrot.lane.b32.xlu0 %v4935, 127
          %v4943 = vpop.permute.xlu0 %4942
          %4944 = vrot.lane.b32.xlu0 %v4936, 127
          %v4945 = vpop.permute.xlu0 %4944
          %v4949 = vadd.f32 %v4928, %v4941
          %v4950 = vadd.f32 %v4929, %v4943
          %v4951 = vadd.f32 %v4930, %v4945
          %s4952 = sadd.s32 %s3494, 89
          %s4953 = sld [smem:[#allocation9 + %s4952]]
          %v4954 = vstv %s4953
          %v4955 = vmul.f32 %v4954, %v3488
          %v4956 = vmul.f32 %v4954, %v3489
          %v4957 = vmul.f32 %v4954, %v3490
          %4961 = vrot.lane.b32.xlu0 %v4955, 126
          %v4962 = vpop.permute.xlu0 %4961
          %4963 = vrot.lane.b32.xlu0 %v4956, 126
          %v4964 = vpop.permute.xlu0 %4963
          %4965 = vrot.lane.b32.xlu0 %v4957, 126
          %v4966 = vpop.permute.xlu0 %4965
          %v4970 = vadd.f32 %v4949, %v4962
          %v4971 = vadd.f32 %v4950, %v4964
          %v4972 = vadd.f32 %v4951, %v4966
          %s4973 = sadd.s32 %s3494, 105
          %s4974 = sld [smem:[#allocation9 + %s4973]]
          %v4975 = vstv %s4974
          %v4976 = vmul.f32 %v4975, %v3491
          %v4977 = vmul.f32 %v4975, %v3492
          %v4978 = vmul.f32 %v4975, %v3493
          %v4979 = vadd.f32 %v4970, %v4976
          %v4980 = vadd.f32 %v4971, %v4977
          %v4981 = vadd.f32 %v4972, %v4978
          %s4982 = sadd.s32 %s3494, 121
          %s4983 = sld [smem:[#allocation9 + %s4982]]
          %v4984 = vstv %s4983
          %v4985 = vmul.f32 %v4984, %v3491
          %v4986 = vmul.f32 %v4984, %v3492
          %v4987 = vmul.f32 %v4984, %v3493
          %4991 = vrot.lane.b32.xlu0 %v4985, 127
          %v4992 = vpop.permute.xlu0 %4991
          %4993 = vrot.lane.b32.xlu0 %v4986, 127
          %v4994 = vpop.permute.xlu0 %4993
          %4995 = vrot.lane.b32.xlu0 %v4987, 127
          %v4996 = vpop.permute.xlu0 %4995
          %v5000 = vadd.f32 %v4979, %v4992
          %v5001 = vadd.f32 %v4980, %v4994
          %v5002 = vadd.f32 %v4981, %v4996
          %s5003 = sadd.s32 %s3494, 137
          %s5004 = sld [smem:[#allocation9 + %s5003]]
          %v5005 = vstv %s5004
          %v5006 = vmul.f32 %v5005, %v3491
          %v5007 = vmul.f32 %v5005, %v3492
          %v5008 = vmul.f32 %v5005, %v3493
          %5012 = vrot.lane.b32.xlu0 %v5006, 126
          %v5013 = vpop.permute.xlu0 %5012
          %5014 = vrot.lane.b32.xlu0 %v5007, 126
          %v5015 = vpop.permute.xlu0 %5014
          %5016 = vrot.lane.b32.xlu0 %v5008, 126
          %v5017 = vpop.permute.xlu0 %5016
          %v5021 = vadd.f32 %v5000, %v5013
          %v5022 = vadd.f32 %v5001, %v5015
          %v5023 = vadd.f32 %v5002, %v5017
          %s5024 = sadd.s32 %s3494, 10
          %s5025 = sld [smem:[#allocation9 + %s5024]]
          %v5026 = vstv %s5025
          %v5027 = vmul.f32 %v5026, %v3485
          %v5028 = vmul.f32 %v5026, %v3486
          %v5029 = vmul.f32 %v5026, %v3487
          %v5030 = vadd.f32 %v3465, %v5027
          %v5031 = vadd.f32 %v3466, %v5028
          %v5032 = vadd.f32 %v3467, %v5029
          %s5033 = sadd.s32 %s3494, 26
          %s5034 = sld [smem:[#allocation9 + %s5033]]
          %v5035 = vstv %s5034
          %v5036 = vmul.f32 %v5035, %v3485
          %v5037 = vmul.f32 %v5035, %v3486
          %v5038 = vmul.f32 %v5035, %v3487
          %5042 = vrot.lane.b32.xlu0 %v5036, 127
          %v5043 = vpop.permute.xlu0 %5042
          %5044 = vrot.lane.b32.xlu0 %v5037, 127
          %v5045 = vpop.permute.xlu0 %5044
          %5046 = vrot.lane.b32.xlu0 %v5038, 127
          %v5047 = vpop.permute.xlu0 %5046
          %v5051 = vadd.f32 %v5030, %v5043
          %v5052 = vadd.f32 %v5031, %v5045
          %v5053 = vadd.f32 %v5032, %v5047
          %s5054 = sadd.s32 %s3494, 42
          %s5055 = sld [smem:[#allocation9 + %s5054]]
          %v5056 = vstv %s5055
          %v5057 = vmul.f32 %v5056, %v3485
          %v5058 = vmul.f32 %v5056, %v3486
          %v5059 = vmul.f32 %v5056, %v3487
          %5063 = vrot.lane.b32.xlu0 %v5057, 126
          %v5064 = vpop.permute.xlu0 %5063
          %5065 = vrot.lane.b32.xlu0 %v5058, 126
          %v5066 = vpop.permute.xlu0 %5065
          %5067 = vrot.lane.b32.xlu0 %v5059, 126
          %v5068 = vpop.permute.xlu0 %5067
          %v5072 = vadd.f32 %v5051, %v5064
          %v5073 = vadd.f32 %v5052, %v5066
          %v5074 = vadd.f32 %v5053, %v5068
          %s5075 = sadd.s32 %s3494, 58
          %s5076 = sld [smem:[#allocation9 + %s5075]]
          %v5077 = vstv %s5076
          %v5078 = vmul.f32 %v5077, %v3488
          %v5079 = vmul.f32 %v5077, %v3489
          %v5080 = vmul.f32 %v5077, %v3490
          %v5081 = vadd.f32 %v5072, %v5078
          %v5082 = vadd.f32 %v5073, %v5079
          %v5083 = vadd.f32 %v5074, %v5080
          %s5084 = sadd.s32 %s3494, 74
          %s5085 = sld [smem:[#allocation9 + %s5084]]
          %v5086 = vstv %s5085
          %v5087 = vmul.f32 %v5086, %v3488
          %v5088 = vmul.f32 %v5086, %v3489
          %v5089 = vmul.f32 %v5086, %v3490
          %5093 = vrot.lane.b32.xlu0 %v5087, 127
          %v5094 = vpop.permute.xlu0 %5093
          %5095 = vrot.lane.b32.xlu0 %v5088, 127
          %v5096 = vpop.permute.xlu0 %5095
          %5097 = vrot.lane.b32.xlu0 %v5089, 127
          %v5098 = vpop.permute.xlu0 %5097
          %v5102 = vadd.f32 %v5081, %v5094
          %v5103 = vadd.f32 %v5082, %v5096
          %v5104 = vadd.f32 %v5083, %v5098
          %s5105 = sadd.s32 %s3494, 90
          %s5106 = sld [smem:[#allocation9 + %s5105]]
          %v5107 = vstv %s5106
          %v5108 = vmul.f32 %v5107, %v3488
          %v5109 = vmul.f32 %v5107, %v3489
          %v5110 = vmul.f32 %v5107, %v3490
          %5114 = vrot.lane.b32.xlu0 %v5108, 126
          %v5115 = vpop.permute.xlu0 %5114
          %5116 = vrot.lane.b32.xlu0 %v5109, 126
          %v5117 = vpop.permute.xlu0 %5116
          %5118 = vrot.lane.b32.xlu0 %v5110, 126
          %v5119 = vpop.permute.xlu0 %5118
          %v5123 = vadd.f32 %v5102, %v5115
          %v5124 = vadd.f32 %v5103, %v5117
          %v5125 = vadd.f32 %v5104, %v5119
          %s5126 = sadd.s32 %s3494, 106
          %s5127 = sld [smem:[#allocation9 + %s5126]]
          %v5128 = vstv %s5127
          %v5129 = vmul.f32 %v5128, %v3491
          %v5130 = vmul.f32 %v5128, %v3492
          %v5131 = vmul.f32 %v5128, %v3493
          %v5132 = vadd.f32 %v5123, %v5129
          %v5133 = vadd.f32 %v5124, %v5130
          %v5134 = vadd.f32 %v5125, %v5131
          %s5135 = sadd.s32 %s3494, 122
          %s5136 = sld [smem:[#allocation9 + %s5135]]
          %v5137 = vstv %s5136
          %v5138 = vmul.f32 %v5137, %v3491
          %v5139 = vmul.f32 %v5137, %v3492
          %v5140 = vmul.f32 %v5137, %v3493
          %5144 = vrot.lane.b32.xlu0 %v5138, 127
          %v5145 = vpop.permute.xlu0 %5144
          %5146 = vrot.lane.b32.xlu0 %v5139, 127
          %v5147 = vpop.permute.xlu0 %5146
          %5148 = vrot.lane.b32.xlu0 %v5140, 127
          %v5149 = vpop.permute.xlu0 %5148
          %v5153 = vadd.f32 %v5132, %v5145
          %v5154 = vadd.f32 %v5133, %v5147
          %v5155 = vadd.f32 %v5134, %v5149
          %s5156 = sadd.s32 %s3494, 138
          %s5157 = sld [smem:[#allocation9 + %s5156]]
          %v5158 = vstv %s5157
          %v5159 = vmul.f32 %v5158, %v3491
          %v5160 = vmul.f32 %v5158, %v3492
          %v5161 = vmul.f32 %v5158, %v3493
          %5165 = vrot.lane.b32.xlu0 %v5159, 126
          %v5166 = vpop.permute.xlu0 %5165
          %5167 = vrot.lane.b32.xlu0 %v5160, 126
          %v5168 = vpop.permute.xlu0 %5167
          %5169 = vrot.lane.b32.xlu0 %v5161, 126
          %v5170 = vpop.permute.xlu0 %5169
          %v5174 = vadd.f32 %v5153, %v5166
          %v5175 = vadd.f32 %v5154, %v5168
          %v5176 = vadd.f32 %v5155, %v5170
          %s5177 = sadd.s32 %s3494, 11
          %s5178 = sld [smem:[#allocation9 + %s5177]]
          %v5179 = vstv %s5178
          %v5180 = vmul.f32 %v5179, %v3485
          %v5181 = vmul.f32 %v5179, %v3486
          %v5182 = vmul.f32 %v5179, %v3487
          %v5183 = vadd.f32 %v3468, %v5180
          %v5184 = vadd.f32 %v3469, %v5181
          %v5185 = vadd.f32 %v3470, %v5182
          %s5186 = sadd.s32 %s3494, 27
          %s5187 = sld [smem:[#allocation9 + %s5186]]
          %v5188 = vstv %s5187
          %v5189 = vmul.f32 %v5188, %v3485
          %v5190 = vmul.f32 %v5188, %v3486
          %v5191 = vmul.f32 %v5188, %v3487
          %5195 = vrot.lane.b32.xlu0 %v5189, 127
          %v5196 = vpop.permute.xlu0 %5195
          %5197 = vrot.lane.b32.xlu0 %v5190, 127
          %v5198 = vpop.permute.xlu0 %5197
          %5199 = vrot.lane.b32.xlu0 %v5191, 127
          %v5200 = vpop.permute.xlu0 %5199
          %v5204 = vadd.f32 %v5183, %v5196
          %v5205 = vadd.f32 %v5184, %v5198
          %v5206 = vadd.f32 %v5185, %v5200
          %s5207 = sadd.s32 %s3494, 43
          %s5208 = sld [smem:[#allocation9 + %s5207]]
          %v5209 = vstv %s5208
          %v5210 = vmul.f32 %v5209, %v3485
          %v5211 = vmul.f32 %v5209, %v3486
          %v5212 = vmul.f32 %v5209, %v3487
          %5216 = vrot.lane.b32.xlu0 %v5210, 126
          %v5217 = vpop.permute.xlu0 %5216
          %5218 = vrot.lane.b32.xlu0 %v5211, 126
          %v5219 = vpop.permute.xlu0 %5218
          %5220 = vrot.lane.b32.xlu0 %v5212, 126
          %v5221 = vpop.permute.xlu0 %5220
          %v5225 = vadd.f32 %v5204, %v5217
          %v5226 = vadd.f32 %v5205, %v5219
          %v5227 = vadd.f32 %v5206, %v5221
          %s5228 = sadd.s32 %s3494, 59
          %s5229 = sld [smem:[#allocation9 + %s5228]]
          %v5230 = vstv %s5229
          %v5231 = vmul.f32 %v5230, %v3488
          %v5232 = vmul.f32 %v5230, %v3489
          %v5233 = vmul.f32 %v5230, %v3490
          %v5234 = vadd.f32 %v5225, %v5231
          %v5235 = vadd.f32 %v5226, %v5232
          %v5236 = vadd.f32 %v5227, %v5233
          %s5237 = sadd.s32 %s3494, 75
          %s5238 = sld [smem:[#allocation9 + %s5237]]
          %v5239 = vstv %s5238
          %v5240 = vmul.f32 %v5239, %v3488
          %v5241 = vmul.f32 %v5239, %v3489
          %v5242 = vmul.f32 %v5239, %v3490
          %5246 = vrot.lane.b32.xlu0 %v5240, 127
          %v5247 = vpop.permute.xlu0 %5246
          %5248 = vrot.lane.b32.xlu0 %v5241, 127
          %v5249 = vpop.permute.xlu0 %5248
          %5250 = vrot.lane.b32.xlu0 %v5242, 127
          %v5251 = vpop.permute.xlu0 %5250
          %v5255 = vadd.f32 %v5234, %v5247
          %v5256 = vadd.f32 %v5235, %v5249
          %v5257 = vadd.f32 %v5236, %v5251
          %s5258 = sadd.s32 %s3494, 91
          %s5259 = sld [smem:[#allocation9 + %s5258]]
          %v5260 = vstv %s5259
          %v5261 = vmul.f32 %v5260, %v3488
          %v5262 = vmul.f32 %v5260, %v3489
          %v5263 = vmul.f32 %v5260, %v3490
          %5267 = vrot.lane.b32.xlu0 %v5261, 126
          %v5268 = vpop.permute.xlu0 %5267
          %5269 = vrot.lane.b32.xlu0 %v5262, 126
          %v5270 = vpop.permute.xlu0 %5269
          %5271 = vrot.lane.b32.xlu0 %v5263, 126
          %v5272 = vpop.permute.xlu0 %5271
          %v5276 = vadd.f32 %v5255, %v5268
          %v5277 = vadd.f32 %v5256, %v5270
          %v5278 = vadd.f32 %v5257, %v5272
          %s5279 = sadd.s32 %s3494, 107
          %s5280 = sld [smem:[#allocation9 + %s5279]]
          %v5281 = vstv %s5280
          %v5282 = vmul.f32 %v5281, %v3491
          %v5283 = vmul.f32 %v5281, %v3492
          %v5284 = vmul.f32 %v5281, %v3493
          %v5285 = vadd.f32 %v5276, %v5282
          %v5286 = vadd.f32 %v5277, %v5283
          %v5287 = vadd.f32 %v5278, %v5284
          %s5288 = sadd.s32 %s3494, 123
          %s5289 = sld [smem:[#allocation9 + %s5288]]
          %v5290 = vstv %s5289
          %v5291 = vmul.f32 %v5290, %v3491
          %v5292 = vmul.f32 %v5290, %v3492
          %v5293 = vmul.f32 %v5290, %v3493
          %5297 = vrot.lane.b32.xlu0 %v5291, 127
          %v5298 = vpop.permute.xlu0 %5297
          %5299 = vrot.lane.b32.xlu0 %v5292, 127
          %v5300 = vpop.permute.xlu0 %5299
          %5301 = vrot.lane.b32.xlu0 %v5293, 127
          %v5302 = vpop.permute.xlu0 %5301
          %v5306 = vadd.f32 %v5285, %v5298
          %v5307 = vadd.f32 %v5286, %v5300
          %v5308 = vadd.f32 %v5287, %v5302
          %s5309 = sadd.s32 %s3494, 139
          %s5310 = sld [smem:[#allocation9 + %s5309]]
          %v5311 = vstv %s5310
          %v5312 = vmul.f32 %v5311, %v3491
          %v5313 = vmul.f32 %v5311, %v3492
          %v5314 = vmul.f32 %v5311, %v3493
          %5318 = vrot.lane.b32.xlu0 %v5312, 126
          %v5319 = vpop.permute.xlu0 %5318
          %5320 = vrot.lane.b32.xlu0 %v5313, 126
          %v5321 = vpop.permute.xlu0 %5320
          %5322 = vrot.lane.b32.xlu0 %v5314, 126
          %v5323 = vpop.permute.xlu0 %5322
          %v5327 = vadd.f32 %v5306, %v5319
          %v5328 = vadd.f32 %v5307, %v5321
          %v5329 = vadd.f32 %v5308, %v5323
          %s5330 = sadd.s32 %s3494, 12
          %s5331 = sld [smem:[#allocation9 + %s5330]]
          %v5332 = vstv %s5331
          %v5333 = vmul.f32 %v5332, %v3485
          %v5334 = vmul.f32 %v5332, %v3486
          %v5335 = vmul.f32 %v5332, %v3487
          %v5336 = vadd.f32 %v3471, %v5333
          %v5337 = vadd.f32 %v3472, %v5334
          %v5338 = vadd.f32 %v3473, %v5335
          %s5339 = sadd.s32 %s3494, 28
          %s5340 = sld [smem:[#allocation9 + %s5339]]
          %v5341 = vstv %s5340
          %v5342 = vmul.f32 %v5341, %v3485
          %v5343 = vmul.f32 %v5341, %v3486
          %v5344 = vmul.f32 %v5341, %v3487
          %5348 = vrot.lane.b32.xlu0 %v5342, 127
          %v5349 = vpop.permute.xlu0 %5348
          %5350 = vrot.lane.b32.xlu0 %v5343, 127
          %v5351 = vpop.permute.xlu0 %5350
          %5352 = vrot.lane.b32.xlu0 %v5344, 127
          %v5353 = vpop.permute.xlu0 %5352
          %v5357 = vadd.f32 %v5336, %v5349
          %v5358 = vadd.f32 %v5337, %v5351
          %v5359 = vadd.f32 %v5338, %v5353
          %s5360 = sadd.s32 %s3494, 44
          %s5361 = sld [smem:[#allocation9 + %s5360]]
          %v5362 = vstv %s5361
          %v5363 = vmul.f32 %v5362, %v3485
          %v5364 = vmul.f32 %v5362, %v3486
          %v5365 = vmul.f32 %v5362, %v3487
          %5369 = vrot.lane.b32.xlu0 %v5363, 126
          %v5370 = vpop.permute.xlu0 %5369
          %5371 = vrot.lane.b32.xlu0 %v5364, 126
          %v5372 = vpop.permute.xlu0 %5371
          %5373 = vrot.lane.b32.xlu0 %v5365, 126
          %v5374 = vpop.permute.xlu0 %5373
          %v5378 = vadd.f32 %v5357, %v5370
          %v5379 = vadd.f32 %v5358, %v5372
          %v5380 = vadd.f32 %v5359, %v5374
          %s5381 = sadd.s32 %s3494, 60
          %s5382 = sld [smem:[#allocation9 + %s5381]]
          %v5383 = vstv %s5382
          %v5384 = vmul.f32 %v5383, %v3488
          %v5385 = vmul.f32 %v5383, %v3489
          %v5386 = vmul.f32 %v5383, %v3490
          %v5387 = vadd.f32 %v5378, %v5384
          %v5388 = vadd.f32 %v5379, %v5385
          %v5389 = vadd.f32 %v5380, %v5386
          %s5390 = sadd.s32 %s3494, 76
          %s5391 = sld [smem:[#allocation9 + %s5390]]
          %v5392 = vstv %s5391
          %v5393 = vmul.f32 %v5392, %v3488
          %v5394 = vmul.f32 %v5392, %v3489
          %v5395 = vmul.f32 %v5392, %v3490
          %5399 = vrot.lane.b32.xlu0 %v5393, 127
          %v5400 = vpop.permute.xlu0 %5399
          %5401 = vrot.lane.b32.xlu0 %v5394, 127
          %v5402 = vpop.permute.xlu0 %5401
          %5403 = vrot.lane.b32.xlu0 %v5395, 127
          %v5404 = vpop.permute.xlu0 %5403
          %v5408 = vadd.f32 %v5387, %v5400
          %v5409 = vadd.f32 %v5388, %v5402
          %v5410 = vadd.f32 %v5389, %v5404
          %s5411 = sadd.s32 %s3494, 92
          %s5412 = sld [smem:[#allocation9 + %s5411]]
          %v5413 = vstv %s5412
          %v5414 = vmul.f32 %v5413, %v3488
          %v5415 = vmul.f32 %v5413, %v3489
          %v5416 = vmul.f32 %v5413, %v3490
          %5420 = vrot.lane.b32.xlu0 %v5414, 126
          %v5421 = vpop.permute.xlu0 %5420
          %5422 = vrot.lane.b32.xlu0 %v5415, 126
          %v5423 = vpop.permute.xlu0 %5422
          %5424 = vrot.lane.b32.xlu0 %v5416, 126
          %v5425 = vpop.permute.xlu0 %5424
          %v5429 = vadd.f32 %v5408, %v5421
          %v5430 = vadd.f32 %v5409, %v5423
          %v5431 = vadd.f32 %v5410, %v5425
          %s5432 = sadd.s32 %s3494, 108
          %s5433 = sld [smem:[#allocation9 + %s5432]]
          %v5434 = vstv %s5433
          %v5435 = vmul.f32 %v5434, %v3491
          %v5436 = vmul.f32 %v5434, %v3492
          %v5437 = vmul.f32 %v5434, %v3493
          %v5438 = vadd.f32 %v5429, %v5435
          %v5439 = vadd.f32 %v5430, %v5436
          %v5440 = vadd.f32 %v5431, %v5437
          %s5441 = sadd.s32 %s3494, 124
          %s5442 = sld [smem:[#allocation9 + %s5441]]
          %v5443 = vstv %s5442
          %v5444 = vmul.f32 %v5443, %v3491
          %v5445 = vmul.f32 %v5443, %v3492
          %v5446 = vmul.f32 %v5443, %v3493
          %5450 = vrot.lane.b32.xlu0 %v5444, 127
          %v5451 = vpop.permute.xlu0 %5450
          %5452 = vrot.lane.b32.xlu0 %v5445, 127
          %v5453 = vpop.permute.xlu0 %5452
          %5454 = vrot.lane.b32.xlu0 %v5446, 127
          %v5455 = vpop.permute.xlu0 %5454
          %v5459 = vadd.f32 %v5438, %v5451
          %v5460 = vadd.f32 %v5439, %v5453
          %v5461 = vadd.f32 %v5440, %v5455
          %s5462 = sadd.s32 %s3494, 140
          %s5463 = sld [smem:[#allocation9 + %s5462]]
          %v5464 = vstv %s5463
          %v5465 = vmul.f32 %v5464, %v3491
          %v5466 = vmul.f32 %v5464, %v3492
          %v5467 = vmul.f32 %v5464, %v3493
          %5471 = vrot.lane.b32.xlu0 %v5465, 126
          %v5472 = vpop.permute.xlu0 %5471
          %5473 = vrot.lane.b32.xlu0 %v5466, 126
          %v5474 = vpop.permute.xlu0 %5473
          %5475 = vrot.lane.b32.xlu0 %v5467, 126
          %v5476 = vpop.permute.xlu0 %5475
          %v5480 = vadd.f32 %v5459, %v5472
          %v5481 = vadd.f32 %v5460, %v5474
          %v5482 = vadd.f32 %v5461, %v5476
          %s5483 = sadd.s32 %s3494, 13
          %s5484 = sld [smem:[#allocation9 + %s5483]]
          %v5485 = vstv %s5484
          %v5486 = vmul.f32 %v5485, %v3485
          %v5487 = vmul.f32 %v5485, %v3486
          %v5488 = vmul.f32 %v5485, %v3487
          %v5489 = vadd.f32 %v3474, %v5486
          %v5490 = vadd.f32 %v3475, %v5487
          %v5491 = vadd.f32 %v3476, %v5488
          %s5492 = sadd.s32 %s3494, 29
          %s5493 = sld [smem:[#allocation9 + %s5492]]
          %v5494 = vstv %s5493
          %v5495 = vmul.f32 %v5494, %v3485
          %v5496 = vmul.f32 %v5494, %v3486
          %v5497 = vmul.f32 %v5494, %v3487
          %5501 = vrot.lane.b32.xlu0 %v5495, 127
          %v5502 = vpop.permute.xlu0 %5501
          %5503 = vrot.lane.b32.xlu0 %v5496, 127
          %v5504 = vpop.permute.xlu0 %5503
          %5505 = vrot.lane.b32.xlu0 %v5497, 127
          %v5506 = vpop.permute.xlu0 %5505
          %v5510 = vadd.f32 %v5489, %v5502
          %v5511 = vadd.f32 %v5490, %v5504
          %v5512 = vadd.f32 %v5491, %v5506
          %s5513 = sadd.s32 %s3494, 45
          %s5514 = sld [smem:[#allocation9 + %s5513]]
          %v5515 = vstv %s5514
          %v5516 = vmul.f32 %v5515, %v3485
          %v5517 = vmul.f32 %v5515, %v3486
          %v5518 = vmul.f32 %v5515, %v3487
          %5522 = vrot.lane.b32.xlu0 %v5516, 126
          %v5523 = vpop.permute.xlu0 %5522
          %5524 = vrot.lane.b32.xlu0 %v5517, 126
          %v5525 = vpop.permute.xlu0 %5524
          %5526 = vrot.lane.b32.xlu0 %v5518, 126
          %v5527 = vpop.permute.xlu0 %5526
          %v5531 = vadd.f32 %v5510, %v5523
          %v5532 = vadd.f32 %v5511, %v5525
          %v5533 = vadd.f32 %v5512, %v5527
          %s5534 = sadd.s32 %s3494, 61
          %s5535 = sld [smem:[#allocation9 + %s5534]]
          %v5536 = vstv %s5535
          %v5537 = vmul.f32 %v5536, %v3488
          %v5538 = vmul.f32 %v5536, %v3489
          %v5539 = vmul.f32 %v5536, %v3490
          %v5540 = vadd.f32 %v5531, %v5537
          %v5541 = vadd.f32 %v5532, %v5538
          %v5542 = vadd.f32 %v5533, %v5539
          %s5543 = sadd.s32 %s3494, 77
          %s5544 = sld [smem:[#allocation9 + %s5543]]
          %v5545 = vstv %s5544
          %v5546 = vmul.f32 %v5545, %v3488
          %v5547 = vmul.f32 %v5545, %v3489
          %v5548 = vmul.f32 %v5545, %v3490
          %5552 = vrot.lane.b32.xlu0 %v5546, 127
          %v5553 = vpop.permute.xlu0 %5552
          %5554 = vrot.lane.b32.xlu0 %v5547, 127
          %v5555 = vpop.permute.xlu0 %5554
          %5556 = vrot.lane.b32.xlu0 %v5548, 127
          %v5557 = vpop.permute.xlu0 %5556
          %v5561 = vadd.f32 %v5540, %v5553
          %v5562 = vadd.f32 %v5541, %v5555
          %v5563 = vadd.f32 %v5542, %v5557
          %s5564 = sadd.s32 %s3494, 93
          %s5565 = sld [smem:[#allocation9 + %s5564]]
          %v5566 = vstv %s5565
          %v5567 = vmul.f32 %v5566, %v3488
          %v5568 = vmul.f32 %v5566, %v3489
          %v5569 = vmul.f32 %v5566, %v3490
          %5573 = vrot.lane.b32.xlu0 %v5567, 126
          %v5574 = vpop.permute.xlu0 %5573
          %5575 = vrot.lane.b32.xlu0 %v5568, 126
          %v5576 = vpop.permute.xlu0 %5575
          %5577 = vrot.lane.b32.xlu0 %v5569, 126
          %v5578 = vpop.permute.xlu0 %5577
          %v5582 = vadd.f32 %v5561, %v5574
          %v5583 = vadd.f32 %v5562, %v5576
          %v5584 = vadd.f32 %v5563, %v5578
          %s5585 = sadd.s32 %s3494, 109
          %s5586 = sld [smem:[#allocation9 + %s5585]]
          %v5587 = vstv %s5586
          %v5588 = vmul.f32 %v5587, %v3491
          %v5589 = vmul.f32 %v5587, %v3492
          %v5590 = vmul.f32 %v5587, %v3493
          %v5591 = vadd.f32 %v5582, %v5588
          %v5592 = vadd.f32 %v5583, %v5589
          %v5593 = vadd.f32 %v5584, %v5590
          %s5594 = sadd.s32 %s3494, 125
          %s5595 = sld [smem:[#allocation9 + %s5594]]
          %v5596 = vstv %s5595
          %v5597 = vmul.f32 %v5596, %v3491
          %v5598 = vmul.f32 %v5596, %v3492
          %v5599 = vmul.f32 %v5596, %v3493
          %5603 = vrot.lane.b32.xlu0 %v5597, 127
          %v5604 = vpop.permute.xlu0 %5603
          %5605 = vrot.lane.b32.xlu0 %v5598, 127
          %v5606 = vpop.permute.xlu0 %5605
          %5607 = vrot.lane.b32.xlu0 %v5599, 127
          %v5608 = vpop.permute.xlu0 %5607
          %v5612 = vadd.f32 %v5591, %v5604
          %v5613 = vadd.f32 %v5592, %v5606
          %v5614 = vadd.f32 %v5593, %v5608
          %s5615 = sadd.s32 %s3494, 141
          %s5616 = sld [smem:[#allocation9 + %s5615]]
          %v5617 = vstv %s5616
          %v5618 = vmul.f32 %v5617, %v3491
          %v5619 = vmul.f32 %v5617, %v3492
          %v5620 = vmul.f32 %v5617, %v3493
          %5624 = vrot.lane.b32.xlu0 %v5618, 126
          %v5625 = vpop.permute.xlu0 %5624
          %5626 = vrot.lane.b32.xlu0 %v5619, 126
          %v5627 = vpop.permute.xlu0 %5626
          %5628 = vrot.lane.b32.xlu0 %v5620, 126
          %v5629 = vpop.permute.xlu0 %5628
          %v5633 = vadd.f32 %v5612, %v5625
          %v5634 = vadd.f32 %v5613, %v5627
          %v5635 = vadd.f32 %v5614, %v5629
          %s5636 = sadd.s32 %s3494, 14
          %s5637 = sld [smem:[#allocation9 + %s5636]]
          %v5638 = vstv %s5637
          %v5639 = vmul.f32 %v5638, %v3485
          %v5640 = vmul.f32 %v5638, %v3486
          %v5641 = vmul.f32 %v5638, %v3487
          %v5642 = vadd.f32 %v3477, %v5639
          %v5643 = vadd.f32 %v3478, %v5640
          %v5644 = vadd.f32 %v3479, %v5641
          %s5645 = sadd.s32 %s3494, 30
          %s5646 = sld [smem:[#allocation9 + %s5645]]
          %v5647 = vstv %s5646
          %v5648 = vmul.f32 %v5647, %v3485
          %v5649 = vmul.f32 %v5647, %v3486
          %v5650 = vmul.f32 %v5647, %v3487
          %5654 = vrot.lane.b32.xlu0 %v5648, 127
          %v5655 = vpop.permute.xlu0 %5654
          %5656 = vrot.lane.b32.xlu0 %v5649, 127
          %v5657 = vpop.permute.xlu0 %5656
          %5658 = vrot.lane.b32.xlu0 %v5650, 127
          %v5659 = vpop.permute.xlu0 %5658
          %v5663 = vadd.f32 %v5642, %v5655
          %v5664 = vadd.f32 %v5643, %v5657
          %v5665 = vadd.f32 %v5644, %v5659
          %s5666 = sadd.s32 %s3494, 46
          %s5667 = sld [smem:[#allocation9 + %s5666]]
          %v5668 = vstv %s5667
          %v5669 = vmul.f32 %v5668, %v3485
          %v5670 = vmul.f32 %v5668, %v3486
          %v5671 = vmul.f32 %v5668, %v3487
          %5675 = vrot.lane.b32.xlu0 %v5669, 126
          %v5676 = vpop.permute.xlu0 %5675
          %5677 = vrot.lane.b32.xlu0 %v5670, 126
          %v5678 = vpop.permute.xlu0 %5677
          %5679 = vrot.lane.b32.xlu0 %v5671, 126
          %v5680 = vpop.permute.xlu0 %5679
          %v5684 = vadd.f32 %v5663, %v5676
          %v5685 = vadd.f32 %v5664, %v5678
          %v5686 = vadd.f32 %v5665, %v5680
          %s5687 = sadd.s32 %s3494, 62
          %s5688 = sld [smem:[#allocation9 + %s5687]]
          %v5689 = vstv %s5688
          %v5690 = vmul.f32 %v5689, %v3488
          %v5691 = vmul.f32 %v5689, %v3489
          %v5692 = vmul.f32 %v5689, %v3490
          %v5693 = vadd.f32 %v5684, %v5690
          %v5694 = vadd.f32 %v5685, %v5691
          %v5695 = vadd.f32 %v5686, %v5692
          %s5696 = sadd.s32 %s3494, 78
          %s5697 = sld [smem:[#allocation9 + %s5696]]
          %v5698 = vstv %s5697
          %v5699 = vmul.f32 %v5698, %v3488
          %v5700 = vmul.f32 %v5698, %v3489
          %v5701 = vmul.f32 %v5698, %v3490
          %5705 = vrot.lane.b32.xlu0 %v5699, 127
          %v5706 = vpop.permute.xlu0 %5705
          %5707 = vrot.lane.b32.xlu0 %v5700, 127
          %v5708 = vpop.permute.xlu0 %5707
          %5709 = vrot.lane.b32.xlu0 %v5701, 127
          %v5710 = vpop.permute.xlu0 %5709
          %v5714 = vadd.f32 %v5693, %v5706
          %v5715 = vadd.f32 %v5694, %v5708
          %v5716 = vadd.f32 %v5695, %v5710
          %s5717 = sadd.s32 %s3494, 94
          %s5718 = sld [smem:[#allocation9 + %s5717]]
          %v5719 = vstv %s5718
          %v5720 = vmul.f32 %v5719, %v3488
          %v5721 = vmul.f32 %v5719, %v3489
          %v5722 = vmul.f32 %v5719, %v3490
          %5726 = vrot.lane.b32.xlu0 %v5720, 126
          %v5727 = vpop.permute.xlu0 %5726
          %5728 = vrot.lane.b32.xlu0 %v5721, 126
          %v5729 = vpop.permute.xlu0 %5728
          %5730 = vrot.lane.b32.xlu0 %v5722, 126
          %v5731 = vpop.permute.xlu0 %5730
          %v5735 = vadd.f32 %v5714, %v5727
          %v5736 = vadd.f32 %v5715, %v5729
          %v5737 = vadd.f32 %v5716, %v5731
          %s5738 = sadd.s32 %s3494, 110
          %s5739 = sld [smem:[#allocation9 + %s5738]]
          %v5740 = vstv %s5739
          %v5741 = vmul.f32 %v5740, %v3491
          %v5742 = vmul.f32 %v5740, %v3492
          %v5743 = vmul.f32 %v5740, %v3493
          %v5744 = vadd.f32 %v5735, %v5741
          %v5745 = vadd.f32 %v5736, %v5742
          %v5746 = vadd.f32 %v5737, %v5743
          %s5747 = sadd.s32 %s3494, 126
          %s5748 = sld [smem:[#allocation9 + %s5747]]
          %v5749 = vstv %s5748
          %v5750 = vmul.f32 %v5749, %v3491
          %v5751 = vmul.f32 %v5749, %v3492
          %v5752 = vmul.f32 %v5749, %v3493
          %5756 = vrot.lane.b32.xlu0 %v5750, 127
          %v5757 = vpop.permute.xlu0 %5756
          %5758 = vrot.lane.b32.xlu0 %v5751, 127
          %v5759 = vpop.permute.xlu0 %5758
          %5760 = vrot.lane.b32.xlu0 %v5752, 127
          %v5761 = vpop.permute.xlu0 %5760
          %v5765 = vadd.f32 %v5744, %v5757
          %v5766 = vadd.f32 %v5745, %v5759
          %v5767 = vadd.f32 %v5746, %v5761
          %s5768 = sadd.s32 %s3494, 142
          %s5769 = sld [smem:[#allocation9 + %s5768]]
          %v5770 = vstv %s5769
          %v5771 = vmul.f32 %v5770, %v3491
          %v5772 = vmul.f32 %v5770, %v3492
          %v5773 = vmul.f32 %v5770, %v3493
          %5777 = vrot.lane.b32.xlu0 %v5771, 126
          %v5778 = vpop.permute.xlu0 %5777
          %5779 = vrot.lane.b32.xlu0 %v5772, 126
          %v5780 = vpop.permute.xlu0 %5779
          %5781 = vrot.lane.b32.xlu0 %v5773, 126
          %v5782 = vpop.permute.xlu0 %5781
          %v5786 = vadd.f32 %v5765, %v5778
          %v5787 = vadd.f32 %v5766, %v5780
          %v5788 = vadd.f32 %v5767, %v5782
          %s5789 = sadd.s32 %s3494, 15
          %s5790 = sld [smem:[#allocation9 + %s5789]]
          %v5791 = vstv %s5790
          %v5792 = vmul.f32 %v5791, %v3485
          %v5793 = vmul.f32 %v5791, %v3486
          %v5794 = vmul.f32 %v5791, %v3487
          %v5795 = vadd.f32 %v3480, %v5792
          %v5796 = vadd.f32 %v3481, %v5793
          %v5797 = vadd.f32 %v3482, %v5794
          %s5798 = sadd.s32 %s3494, 31
          %s5799 = sld [smem:[#allocation9 + %s5798]]
          %v5800 = vstv %s5799
          %v5801 = vmul.f32 %v5800, %v3485
          %v5802 = vmul.f32 %v5800, %v3486
          %v5803 = vmul.f32 %v5800, %v3487
          %5807 = vrot.lane.b32.xlu0 %v5801, 127
          %v5808 = vpop.permute.xlu0 %5807
          %5809 = vrot.lane.b32.xlu0 %v5802, 127
          %v5810 = vpop.permute.xlu0 %5809
          %5811 = vrot.lane.b32.xlu0 %v5803, 127
          %v5812 = vpop.permute.xlu0 %5811
          %v5816 = vadd.f32 %v5795, %v5808
          %v5817 = vadd.f32 %v5796, %v5810
          %v5818 = vadd.f32 %v5797, %v5812
          %s5819 = sadd.s32 %s3494, 47
          %s5820 = sld [smem:[#allocation9 + %s5819]]
          %v5821 = vstv %s5820
          %v5822 = vmul.f32 %v5821, %v3485
          %v5823 = vmul.f32 %v5821, %v3486
          %v5824 = vmul.f32 %v5821, %v3487
          %5828 = vrot.lane.b32.xlu0 %v5822, 126
          %v5829 = vpop.permute.xlu0 %5828
          %5830 = vrot.lane.b32.xlu0 %v5823, 126
          %v5831 = vpop.permute.xlu0 %5830
          %5832 = vrot.lane.b32.xlu0 %v5824, 126
          %v5833 = vpop.permute.xlu0 %5832
          %v5837 = vadd.f32 %v5816, %v5829
          %v5838 = vadd.f32 %v5817, %v5831
          %v5839 = vadd.f32 %v5818, %v5833
          %s5840 = sadd.s32 %s3494, 63
          %s5841 = sld [smem:[#allocation9 + %s5840]]
          %v5842 = vstv %s5841
          %v5843 = vmul.f32 %v5842, %v3488
          %v5844 = vmul.f32 %v5842, %v3489
          %v5845 = vmul.f32 %v5842, %v3490
          %v5846 = vadd.f32 %v5837, %v5843
          %v5847 = vadd.f32 %v5838, %v5844
          %v5848 = vadd.f32 %v5839, %v5845
          %s5849 = sadd.s32 %s3494, 79
          %s5850 = sld [smem:[#allocation9 + %s5849]]
          %v5851 = vstv %s5850
          %v5852 = vmul.f32 %v5851, %v3488
          %v5853 = vmul.f32 %v5851, %v3489
          %v5854 = vmul.f32 %v5851, %v3490
          %5858 = vrot.lane.b32.xlu0 %v5852, 127
          %v5859 = vpop.permute.xlu0 %5858
          %5860 = vrot.lane.b32.xlu0 %v5853, 127
          %v5861 = vpop.permute.xlu0 %5860
          %5862 = vrot.lane.b32.xlu0 %v5854, 127
          %v5863 = vpop.permute.xlu0 %5862
          %v5867 = vadd.f32 %v5846, %v5859
          %v5868 = vadd.f32 %v5847, %v5861
          %v5869 = vadd.f32 %v5848, %v5863
          %s5870 = sadd.s32 %s3494, 95
          %s5871 = sld [smem:[#allocation9 + %s5870]]
          %v5872 = vstv %s5871
          %v5873 = vmul.f32 %v5872, %v3488
          %v5874 = vmul.f32 %v5872, %v3489
          %v5875 = vmul.f32 %v5872, %v3490
          %5879 = vrot.lane.b32.xlu0 %v5873, 126
          %v5880 = vpop.permute.xlu0 %5879
          %5881 = vrot.lane.b32.xlu0 %v5874, 126
          %v5882 = vpop.permute.xlu0 %5881
          %5883 = vrot.lane.b32.xlu0 %v5875, 126
          %v5884 = vpop.permute.xlu0 %5883
          %v5888 = vadd.f32 %v5867, %v5880
          %v5889 = vadd.f32 %v5868, %v5882
          %v5890 = vadd.f32 %v5869, %v5884
          %s5891 = sadd.s32 %s3494, 111
          %s5892 = sld [smem:[#allocation9 + %s5891]]
          %v5893 = vstv %s5892
          %v5894 = vmul.f32 %v5893, %v3491
          %v5895 = vmul.f32 %v5893, %v3492
          %v5896 = vmul.f32 %v5893, %v3493
          %v5897 = vadd.f32 %v5888, %v5894
          %v5898 = vadd.f32 %v5889, %v5895
          %v5899 = vadd.f32 %v5890, %v5896
          %s5900 = sadd.s32 %s3494, 127
          %s5901 = sld [smem:[#allocation9 + %s5900]]
          %v5902 = vstv %s5901
          %v5903 = vmul.f32 %v5902, %v3491
          %v5904 = vmul.f32 %v5902, %v3492
          %v5905 = vmul.f32 %v5902, %v3493
          %5909 = vrot.lane.b32.xlu0 %v5903, 127
          %v5910 = vpop.permute.xlu0 %5909
          %5911 = vrot.lane.b32.xlu0 %v5904, 127
          %v5912 = vpop.permute.xlu0 %5911
          %5913 = vrot.lane.b32.xlu0 %v5905, 127
          %v5914 = vpop.permute.xlu0 %5913
          %v5918 = vadd.f32 %v5897, %v5910
          %v5919 = vadd.f32 %v5898, %v5912
          %v5920 = vadd.f32 %v5899, %v5914
          %s5921 = sadd.s32 %s3494, 143
          %s5922 = sld [smem:[#allocation9 + %s5921]]
          %v5923 = vstv %s5922
          %v5924 = vmul.f32 %v5923, %v3491
          %v5925 = vmul.f32 %v5923, %v3492
          %v5926 = vmul.f32 %v5923, %v3493
          %5930 = vrot.lane.b32.xlu0 %v5924, 126
          %v5931 = vpop.permute.xlu0 %5930
          %5932 = vrot.lane.b32.xlu0 %v5925, 126
          %v5933 = vpop.permute.xlu0 %5932
          %5934 = vrot.lane.b32.xlu0 %v5926, 126
          %v5935 = vpop.permute.xlu0 %5934
          %v5939 = vadd.f32 %v5918, %v5931
          %v5940 = vadd.f32 %v5919, %v5933
          %v5941 = vadd.f32 %v5920, %v5935
        $region84: #{tpu_custom_call.1} parent=47 // loop_footer
          %s3434 = sadd.s32 1, %s3430
        $region85: #{tpu_custom_call.1} parent=47 // loop_footer_branch
          %3429 = sbr.rel target = $region81
        $region86: #{tpu_custom_call.1} parent=47 // loop_exit
          _
        %s5942 = ssub.s32 %s369, 1
        %v5943 = vstv %s5942
        %v5944 = vadd.s32 %v2924, %v5943
        %v5945 = vadd.s32 %v2925, %v5943
        %v5946 = vadd.s32 %v2926, %v5943
        %vm5947 = vcmp.ge.s32.totalorder %v5944, 0
        %vm5948 = vcmp.ge.s32.totalorder %v5945, 0
        %vm5949 = vcmp.ge.s32.totalorder %v5946, 0
        %vm5950 = vcmp.lt.s32.totalorder %v5944, 16
        %vm5951 = vcmp.lt.s32.totalorder %v5945, 16
        %vm5952 = vcmp.lt.s32.totalorder %v5946, 16
        %vm5953 = vmand %vm5947, %vm5950
        %vm5954 = vmand %vm5948, %vm5951
        %vm5955 = vmand %vm5949, %vm5952
        %v5956 = vmax.f32 %v3435, 0.0
        %v5957 = vmax.f32 %v3436, 0.0
        %v5958 = vmax.f32 %v3437, 0.0
        %v5959 = vsel %vm5953, 1, 0
        %v5960 = vsel %vm5954, 1, 0
        %v5961 = vsel %vm5955, 1, 0
        %vm5962 = vcmp.eq.s32.totalorder %v5959, 1
        %vm5963 = vcmp.eq.s32.totalorder %v5960, 1
        %vm5964 = vcmp.eq.s32.totalorder %v5961, 1
        %v5965 = vsel %vm5962, %v5956, 0.0
        %v5966 = vsel %vm5963, %v5957, 0.0
        %v5967 = vsel %vm5964, %v5958, 0.0
        %5971 = vrot.lane.b32.xlu0 %v5965, 1
        %v5972 = vpop.permute.xlu0 %5971
        %5973 = vrot.lane.b32.xlu0 %v5966, 1
        %v5974 = vpop.permute.xlu0 %5973
        %5975 = vrot.lane.b32.xlu0 %v5967, 1
        %v5976 = vpop.permute.xlu0 %5975
        %v5980 = vsel %vm2964, 0.0, %v5972
        %v5981 = vsel %vm2964, 0.0, %v5974
        %v5982 = vsel %vm2964, 0.0, %v5976
        %v5983 = vsel %vm2968, %v5980, 0.0
        %v5984 = vsel %vm2968, %v5981, 0.0
        %v5985 = vsel %vm2968, %v5982, 0.0
        %5986 = vst.msk [vmem:[#allocation3] sm:$0xff] %vm2972, %v5983
        %5987 = vst.msk [vmem:[#allocation3 + $0x8] sm:$0xff] %vm2972, %v5984
        %vm5988 = vcmask 140288
        %5989 = vst.msk [vmem:[#allocation3 + $0x10] sm:$0x3] %vm5988, %v5985
        %v5990 = vmax.f32 %v3438, 0.0
        %v5991 = vmax.f32 %v3439, 0.0
        %v5992 = vmax.f32 %v3440, 0.0
        %v5993 = vsel %vm5962, %v5990, 0.0
        %v5994 = vsel %vm5963, %v5991, 0.0
        %v5995 = vsel %vm5964, %v5992, 0.0
        %5999 = vrot.lane.b32.xlu0 %v5993, 1
        %v6000 = vpop.permute.xlu0 %5999
        %6001 = vrot.lane.b32.xlu0 %v5994, 1
        %v6002 = vpop.permute.xlu0 %6001
        %6003 = vrot.lane.b32.xlu0 %v5995, 1
        %v6004 = vpop.permute.xlu0 %6003
        %v6008 = vsel %vm2964, 0.0, %v6000
        %v6009 = vsel %vm2964, 0.0, %v6002
        %v6010 = vsel %vm2964, 0.0, %v6004
        %v6011 = vsel %vm2968, %v6008, 0.0
        %v6012 = vsel %vm2968, %v6009, 0.0
        %v6013 = vsel %vm2968, %v6010, 0.0
        %s6014 = scalar_lea.vmem [#allocation3], 24
        %6015 = vst.msk [vmem:[%s6014] sm:$0xff] %vm2972, %v6011
        %6016 = vst.msk [vmem:[%s6014 + $0x8] sm:$0xff] %vm2972, %v6012
        %6017 = vst.msk [vmem:[%s6014 + $0x10] sm:$0x3] %vm5988, %v6013
        %v6018 = vmax.f32 %v3441, 0.0
        %v6019 = vmax.f32 %v3442, 0.0
        %v6020 = vmax.f32 %v3443, 0.0
        %v6021 = vsel %vm5962, %v6018, 0.0
        %v6022 = vsel %vm5963, %v6019, 0.0
        %v6023 = vsel %vm5964, %v6020, 0.0
        %6027 = vrot.lane.b32.xlu0 %v6021, 1
        %v6028 = vpop.permute.xlu0 %6027
        %6029 = vrot.lane.b32.xlu0 %v6022, 1
        %v6030 = vpop.permute.xlu0 %6029
        %6031 = vrot.lane.b32.xlu0 %v6023, 1
        %v6032 = vpop.permute.xlu0 %6031
        %v6036 = vsel %vm2964, 0.0, %v6028
        %v6037 = vsel %vm2964, 0.0, %v6030
        %v6038 = vsel %vm2964, 0.0, %v6032
        %v6039 = vsel %vm2968, %v6036, 0.0
        %v6040 = vsel %vm2968, %v6037, 0.0
        %v6041 = vsel %vm2968, %v6038, 0.0
        %s6042 = scalar_lea.vmem [#allocation3], 48
        %6043 = vst.msk [vmem:[%s6042] sm:$0xff] %vm2972, %v6039
        %6044 = vst.msk [vmem:[%s6042 + $0x8] sm:$0xff] %vm2972, %v6040
        %6045 = vst.msk [vmem:[%s6042 + $0x10] sm:$0x3] %vm5988, %v6041
        %v6046 = vmax.f32 %v3444, 0.0
        %v6047 = vmax.f32 %v3445, 0.0
        %v6048 = vmax.f32 %v3446, 0.0
        %v6049 = vsel %vm5962, %v6046, 0.0
        %v6050 = vsel %vm5963, %v6047, 0.0
        %v6051 = vsel %vm5964, %v6048, 0.0
        %6055 = vrot.lane.b32.xlu0 %v6049, 1
        %v6056 = vpop.permute.xlu0 %6055
        %6057 = vrot.lane.b32.xlu0 %v6050, 1
        %v6058 = vpop.permute.xlu0 %6057
        %6059 = vrot.lane.b32.xlu0 %v6051, 1
        %v6060 = vpop.permute.xlu0 %6059
        %v6064 = vsel %vm2964, 0.0, %v6056
        %v6065 = vsel %vm2964, 0.0, %v6058
        %v6066 = vsel %vm2964, 0.0, %v6060
        %v6067 = vsel %vm2968, %v6064, 0.0
        %v6068 = vsel %vm2968, %v6065, 0.0
        %v6069 = vsel %vm2968, %v6066, 0.0
        %s6070 = scalar_lea.vmem [#allocation3], 72
        %6071 = vst.msk [vmem:[%s6070] sm:$0xff] %vm2972, %v6067
        %6072 = vst.msk [vmem:[%s6070 + $0x8] sm:$0xff] %vm2972, %v6068
        %6073 = vst.msk [vmem:[%s6070 + $0x10] sm:$0x3] %vm5988, %v6069
        %v6074 = vmax.f32 %v3447, 0.0
        %v6075 = vmax.f32 %v3448, 0.0
        %v6076 = vmax.f32 %v3449, 0.0
        %v6077 = vsel %vm5962, %v6074, 0.0
        %v6078 = vsel %vm5963, %v6075, 0.0
        %v6079 = vsel %vm5964, %v6076, 0.0
        %6083 = vrot.lane.b32.xlu0 %v6077, 1
        %v6084 = vpop.permute.xlu0 %6083
        %6085 = vrot.lane.b32.xlu0 %v6078, 1
        %v6086 = vpop.permute.xlu0 %6085
        %6087 = vrot.lane.b32.xlu0 %v6079, 1
        %v6088 = vpop.permute.xlu0 %6087
        %v6092 = vsel %vm2964, 0.0, %v6084
        %v6093 = vsel %vm2964, 0.0, %v6086
        %v6094 = vsel %vm2964, 0.0, %v6088
        %v6095 = vsel %vm2968, %v6092, 0.0
        %v6096 = vsel %vm2968, %v6093, 0.0
        %v6097 = vsel %vm2968, %v6094, 0.0
        %s6098 = scalar_lea.vmem [#allocation3], 96
        %6099 = vst.msk [vmem:[%s6098] sm:$0xff] %vm2972, %v6095
        %6100 = vst.msk [vmem:[%s6098 + $0x8] sm:$0xff] %vm2972, %v6096
        %6101 = vst.msk [vmem:[%s6098 + $0x10] sm:$0x3] %vm5988, %v6097
        %v6102 = vmax.f32 %v3450, 0.0
        %v6103 = vmax.f32 %v3451, 0.0
        %v6104 = vmax.f32 %v3452, 0.0
        %v6105 = vsel %vm5962, %v6102, 0.0
        %v6106 = vsel %vm5963, %v6103, 0.0
        %v6107 = vsel %vm5964, %v6104, 0.0
        %6111 = vrot.lane.b32.xlu0 %v6105, 1
        %v6112 = vpop.permute.xlu0 %6111
        %6113 = vrot.lane.b32.xlu0 %v6106, 1
        %v6114 = vpop.permute.xlu0 %6113
        %6115 = vrot.lane.b32.xlu0 %v6107, 1
        %v6116 = vpop.permute.xlu0 %6115
        %v6120 = vsel %vm2964, 0.0, %v6112
        %v6121 = vsel %vm2964, 0.0, %v6114
        %v6122 = vsel %vm2964, 0.0, %v6116
        %v6123 = vsel %vm2968, %v6120, 0.0
        %v6124 = vsel %vm2968, %v6121, 0.0
        %v6125 = vsel %vm2968, %v6122, 0.0
        %s6126 = scalar_lea.vmem [#allocation3], 120
        %6127 = vst.msk [vmem:[%s6126] sm:$0xff] %vm2972, %v6123
        %6128 = vst.msk [vmem:[%s6126 + $0x8] sm:$0xff] %vm2972, %v6124
        %6129 = vst.msk [vmem:[%s6126 + $0x10] sm:$0x3] %vm5988, %v6125
        %v6130 = vmax.f32 %v3453, 0.0
        %v6131 = vmax.f32 %v3454, 0.0
        %v6132 = vmax.f32 %v3455, 0.0
        %v6133 = vsel %vm5962, %v6130, 0.0
        %v6134 = vsel %vm5963, %v6131, 0.0
        %v6135 = vsel %vm5964, %v6132, 0.0
        %6139 = vrot.lane.b32.xlu0 %v6133, 1
        %v6140 = vpop.permute.xlu0 %6139
        %6141 = vrot.lane.b32.xlu0 %v6134, 1
        %v6142 = vpop.permute.xlu0 %6141
        %6143 = vrot.lane.b32.xlu0 %v6135, 1
        %v6144 = vpop.permute.xlu0 %6143
        %v6148 = vsel %vm2964, 0.0, %v6140
        %v6149 = vsel %vm2964, 0.0, %v6142
        %v6150 = vsel %vm2964, 0.0, %v6144
        %v6151 = vsel %vm2968, %v6148, 0.0
        %v6152 = vsel %vm2968, %v6149, 0.0
        %v6153 = vsel %vm2968, %v6150, 0.0
        %s6154 = scalar_lea.vmem [#allocation3], 144
        %6155 = vst.msk [vmem:[%s6154] sm:$0xff] %vm2972, %v6151
        %6156 = vst.msk [vmem:[%s6154 + $0x8] sm:$0xff] %vm2972, %v6152
        %6157 = vst.msk [vmem:[%s6154 + $0x10] sm:$0x3] %vm5988, %v6153
        %v6158 = vmax.f32 %v3456, 0.0
        %v6159 = vmax.f32 %v3457, 0.0
        %v6160 = vmax.f32 %v3458, 0.0
        %v6161 = vsel %vm5962, %v6158, 0.0
        %v6162 = vsel %vm5963, %v6159, 0.0
        %v6163 = vsel %vm5964, %v6160, 0.0
        %6167 = vrot.lane.b32.xlu0 %v6161, 1
        %v6168 = vpop.permute.xlu0 %6167
        %6169 = vrot.lane.b32.xlu0 %v6162, 1
        %v6170 = vpop.permute.xlu0 %6169
        %6171 = vrot.lane.b32.xlu0 %v6163, 1
        %v6172 = vpop.permute.xlu0 %6171
        %v6176 = vsel %vm2964, 0.0, %v6168
        %v6177 = vsel %vm2964, 0.0, %v6170
        %v6178 = vsel %vm2964, 0.0, %v6172
        %v6179 = vsel %vm2968, %v6176, 0.0
        %v6180 = vsel %vm2968, %v6177, 0.0
        %v6181 = vsel %vm2968, %v6178, 0.0
        %s6182 = scalar_lea.vmem [#allocation3], 168
        %6183 = vst.msk [vmem:[%s6182] sm:$0xff] %vm2972, %v6179
        %6184 = vst.msk [vmem:[%s6182 + $0x8] sm:$0xff] %vm2972, %v6180
        %6185 = vst.msk [vmem:[%s6182 + $0x10] sm:$0x3] %vm5988, %v6181
        %v6186 = vmax.f32 %v3459, 0.0
        %v6187 = vmax.f32 %v3460, 0.0
        %v6188 = vmax.f32 %v3461, 0.0
        %v6189 = vsel %vm5962, %v6186, 0.0
        %v6190 = vsel %vm5963, %v6187, 0.0
        %v6191 = vsel %vm5964, %v6188, 0.0
        %6195 = vrot.lane.b32.xlu0 %v6189, 1
        %v6196 = vpop.permute.xlu0 %6195
        %6197 = vrot.lane.b32.xlu0 %v6190, 1
        %v6198 = vpop.permute.xlu0 %6197
        %6199 = vrot.lane.b32.xlu0 %v6191, 1
        %v6200 = vpop.permute.xlu0 %6199
        %v6204 = vsel %vm2964, 0.0, %v6196
        %v6205 = vsel %vm2964, 0.0, %v6198
        %v6206 = vsel %vm2964, 0.0, %v6200
        %v6207 = vsel %vm2968, %v6204, 0.0
        %v6208 = vsel %vm2968, %v6205, 0.0
        %v6209 = vsel %vm2968, %v6206, 0.0
        %s6210 = scalar_lea.vmem [#allocation3], 192
        %6211 = vst.msk [vmem:[%s6210] sm:$0xff] %vm2972, %v6207
        %6212 = vst.msk [vmem:[%s6210 + $0x8] sm:$0xff] %vm2972, %v6208
        %6213 = vst.msk [vmem:[%s6210 + $0x10] sm:$0x3] %vm5988, %v6209
        %v6214 = vmax.f32 %v3462, 0.0
        %v6215 = vmax.f32 %v3463, 0.0
        %v6216 = vmax.f32 %v3464, 0.0
        %v6217 = vsel %vm5962, %v6214, 0.0
        %v6218 = vsel %vm5963, %v6215, 0.0
        %v6219 = vsel %vm5964, %v6216, 0.0
        %6223 = vrot.lane.b32.xlu0 %v6217, 1
        %v6224 = vpop.permute.xlu0 %6223
        %6225 = vrot.lane.b32.xlu0 %v6218, 1
        %v6226 = vpop.permute.xlu0 %6225
        %6227 = vrot.lane.b32.xlu0 %v6219, 1
        %v6228 = vpop.permute.xlu0 %6227
        %v6232 = vsel %vm2964, 0.0, %v6224
        %v6233 = vsel %vm2964, 0.0, %v6226
        %v6234 = vsel %vm2964, 0.0, %v6228
        %v6235 = vsel %vm2968, %v6232, 0.0
        %v6236 = vsel %vm2968, %v6233, 0.0
        %v6237 = vsel %vm2968, %v6234, 0.0
        %s6238 = scalar_lea.vmem [#allocation3], 216
        %6239 = vst.msk [vmem:[%s6238] sm:$0xff] %vm2972, %v6235
        %6240 = vst.msk [vmem:[%s6238 + $0x8] sm:$0xff] %vm2972, %v6236
        %6241 = vst.msk [vmem:[%s6238 + $0x10] sm:$0x3] %vm5988, %v6237
        %v6242 = vmax.f32 %v3465, 0.0
        %v6243 = vmax.f32 %v3466, 0.0
        %v6244 = vmax.f32 %v3467, 0.0
        %v6245 = vsel %vm5962, %v6242, 0.0
        %v6246 = vsel %vm5963, %v6243, 0.0
        %v6247 = vsel %vm5964, %v6244, 0.0
        %6251 = vrot.lane.b32.xlu0 %v6245, 1
        %v6252 = vpop.permute.xlu0 %6251
        %6253 = vrot.lane.b32.xlu0 %v6246, 1
        %v6254 = vpop.permute.xlu0 %6253
        %6255 = vrot.lane.b32.xlu0 %v6247, 1
        %v6256 = vpop.permute.xlu0 %6255
        %v6260 = vsel %vm2964, 0.0, %v6252
        %v6261 = vsel %vm2964, 0.0, %v6254
        %v6262 = vsel %vm2964, 0.0, %v6256
        %v6263 = vsel %vm2968, %v6260, 0.0
        %v6264 = vsel %vm2968, %v6261, 0.0
        %v6265 = vsel %vm2968, %v6262, 0.0
        %s6266 = scalar_lea.vmem [#allocation3], 240
        %6267 = vst.msk [vmem:[%s6266] sm:$0xff] %vm2972, %v6263
        %6268 = vst.msk [vmem:[%s6266 + $0x8] sm:$0xff] %vm2972, %v6264
        %6269 = vst.msk [vmem:[%s6266 + $0x10] sm:$0x3] %vm5988, %v6265
        %v6270 = vmax.f32 %v3468, 0.0
        %v6271 = vmax.f32 %v3469, 0.0
        %v6272 = vmax.f32 %v3470, 0.0
        %v6273 = vsel %vm5962, %v6270, 0.0
        %v6274 = vsel %vm5963, %v6271, 0.0
        %v6275 = vsel %vm5964, %v6272, 0.0
        %6279 = vrot.lane.b32.xlu0 %v6273, 1
        %v6280 = vpop.permute.xlu0 %6279
        %6281 = vrot.lane.b32.xlu0 %v6274, 1
        %v6282 = vpop.permute.xlu0 %6281
        %6283 = vrot.lane.b32.xlu0 %v6275, 1
        %v6284 = vpop.permute.xlu0 %6283
        %v6288 = vsel %vm2964, 0.0, %v6280
        %v6289 = vsel %vm2964, 0.0, %v6282
        %v6290 = vsel %vm2964, 0.0, %v6284
        %v6291 = vsel %vm2968, %v6288, 0.0
        %v6292 = vsel %vm2968, %v6289, 0.0
        %v6293 = vsel %vm2968, %v6290, 0.0
        %s6294 = scalar_lea.vmem [#allocation3], 264
        %6295 = vst.msk [vmem:[%s6294] sm:$0xff] %vm2972, %v6291
        %6296 = vst.msk [vmem:[%s6294 + $0x8] sm:$0xff] %vm2972, %v6292
        %6297 = vst.msk [vmem:[%s6294 + $0x10] sm:$0x3] %vm5988, %v6293
        %v6298 = vmax.f32 %v3471, 0.0
        %v6299 = vmax.f32 %v3472, 0.0
        %v6300 = vmax.f32 %v3473, 0.0
        %v6301 = vsel %vm5962, %v6298, 0.0
        %v6302 = vsel %vm5963, %v6299, 0.0
        %v6303 = vsel %vm5964, %v6300, 0.0
        %6307 = vrot.lane.b32.xlu0 %v6301, 1
        %v6308 = vpop.permute.xlu0 %6307
        %6309 = vrot.lane.b32.xlu0 %v6302, 1
        %v6310 = vpop.permute.xlu0 %6309
        %6311 = vrot.lane.b32.xlu0 %v6303, 1
        %v6312 = vpop.permute.xlu0 %6311
        %v6316 = vsel %vm2964, 0.0, %v6308
        %v6317 = vsel %vm2964, 0.0, %v6310
        %v6318 = vsel %vm2964, 0.0, %v6312
        %v6319 = vsel %vm2968, %v6316, 0.0
        %v6320 = vsel %vm2968, %v6317, 0.0
        %v6321 = vsel %vm2968, %v6318, 0.0
        %s6322 = scalar_lea.vmem [#allocation3], 288
        %6323 = vst.msk [vmem:[%s6322] sm:$0xff] %vm2972, %v6319
        %6324 = vst.msk [vmem:[%s6322 + $0x8] sm:$0xff] %vm2972, %v6320
        %6325 = vst.msk [vmem:[%s6322 + $0x10] sm:$0x3] %vm5988, %v6321
        %v6326 = vmax.f32 %v3474, 0.0
        %v6327 = vmax.f32 %v3475, 0.0
        %v6328 = vmax.f32 %v3476, 0.0
        %v6329 = vsel %vm5962, %v6326, 0.0
        %v6330 = vsel %vm5963, %v6327, 0.0
        %v6331 = vsel %vm5964, %v6328, 0.0
        %6335 = vrot.lane.b32.xlu0 %v6329, 1
        %v6336 = vpop.permute.xlu0 %6335
        %6337 = vrot.lane.b32.xlu0 %v6330, 1
        %v6338 = vpop.permute.xlu0 %6337
        %6339 = vrot.lane.b32.xlu0 %v6331, 1
        %v6340 = vpop.permute.xlu0 %6339
        %v6344 = vsel %vm2964, 0.0, %v6336
        %v6345 = vsel %vm2964, 0.0, %v6338
        %v6346 = vsel %vm2964, 0.0, %v6340
        %v6347 = vsel %vm2968, %v6344, 0.0
        %v6348 = vsel %vm2968, %v6345, 0.0
        %v6349 = vsel %vm2968, %v6346, 0.0
        %s6350 = scalar_lea.vmem [#allocation3], 312
        %6351 = vst.msk [vmem:[%s6350] sm:$0xff] %vm2972, %v6347
        %6352 = vst.msk [vmem:[%s6350 + $0x8] sm:$0xff] %vm2972, %v6348
        %6353 = vst.msk [vmem:[%s6350 + $0x10] sm:$0x3] %vm5988, %v6349
        %v6354 = vmax.f32 %v3477, 0.0
        %v6355 = vmax.f32 %v3478, 0.0
        %v6356 = vmax.f32 %v3479, 0.0
        %v6357 = vsel %vm5962, %v6354, 0.0
        %v6358 = vsel %vm5963, %v6355, 0.0
        %v6359 = vsel %vm5964, %v6356, 0.0
        %6363 = vrot.lane.b32.xlu0 %v6357, 1
        %v6364 = vpop.permute.xlu0 %6363
        %6365 = vrot.lane.b32.xlu0 %v6358, 1
        %v6366 = vpop.permute.xlu0 %6365
        %6367 = vrot.lane.b32.xlu0 %v6359, 1
        %v6368 = vpop.permute.xlu0 %6367
        %v6372 = vsel %vm2964, 0.0, %v6364
        %v6373 = vsel %vm2964, 0.0, %v6366
        %v6374 = vsel %vm2964, 0.0, %v6368
        %v6375 = vsel %vm2968, %v6372, 0.0
        %v6376 = vsel %vm2968, %v6373, 0.0
        %v6377 = vsel %vm2968, %v6374, 0.0
        %s6378 = scalar_lea.vmem [#allocation3], 336
        %6379 = vst.msk [vmem:[%s6378] sm:$0xff] %vm2972, %v6375
        %6380 = vst.msk [vmem:[%s6378 + $0x8] sm:$0xff] %vm2972, %v6376
        %6381 = vst.msk [vmem:[%s6378 + $0x10] sm:$0x3] %vm5988, %v6377
        %v6382 = vmax.f32 %v3480, 0.0
        %v6383 = vmax.f32 %v3481, 0.0
        %v6384 = vmax.f32 %v3482, 0.0
        %v6385 = vsel %vm5962, %v6382, 0.0
        %v6386 = vsel %vm5963, %v6383, 0.0
        %v6387 = vsel %vm5964, %v6384, 0.0
        %6391 = vrot.lane.b32.xlu0 %v6385, 1
        %v6392 = vpop.permute.xlu0 %6391
        %6393 = vrot.lane.b32.xlu0 %v6386, 1
        %v6394 = vpop.permute.xlu0 %6393
        %6395 = vrot.lane.b32.xlu0 %v6387, 1
        %v6396 = vpop.permute.xlu0 %6395
        %v6400 = vsel %vm2964, 0.0, %v6392
        %v6401 = vsel %vm2964, 0.0, %v6394
        %v6402 = vsel %vm2964, 0.0, %v6396
        %v6403 = vsel %vm2968, %v6400, 0.0
        %v6404 = vsel %vm2968, %v6401, 0.0
        %v6405 = vsel %vm2968, %v6402, 0.0
        %s6406 = scalar_lea.vmem [#allocation3], 360
        %6407 = vst.msk [vmem:[%s6406] sm:$0xff] %vm2972, %v6403
        %6408 = vst.msk [vmem:[%s6406 + $0x8] sm:$0xff] %vm2972, %v6404
        %6409 = vst.msk [vmem:[%s6406 + $0x10] sm:$0x3] %vm5988, %v6405
        %s6410 = sld [smem:[#allocation13]]
        %v6411 = vstv %s6410
        %s6412 = sld [smem:[#allocation13 + $0x1]]
        %v6413 = vstv %s6412
        %s6414 = sld [smem:[#allocation13 + $0x2]]
        %v6415 = vstv %s6414
        loop: start=0, step=1, limit=16
        $region87: #{tpu_custom_call.1} parent=47 // loop_pre_header
          _
        $region88: #{tpu_custom_call.1} parent=47 // loop_header
          %s6417 = sphi 0, %s6421
          %p6418 = scmp.ge.s32.totalorder %s6417, 16
          %v6422 = vphi %v6411, %v6545
          %v6423 = vphi %v6411, %v6546
          %v6424 = vphi %v6413, %v6656
          %v6425 = vphi %v6413, %v6657
          %v6426 = vphi %v6415, %v6767
          %v6427 = vphi %v6415, %v6768
        $region89: #{tpu_custom_call.1} parent=47 // loop_header_branch
          %6420 = sbr.rel (%p6418) target = $region93
        $region90: #{tpu_custom_call.1} parent=47 // loop_body
          %s6428 = smul.u32 %s6417, 24
          %s6429 = scalar_lea.vmem [#allocation3], %s6428
          %v6430 = vld [vmem:[%s6429] sm:$0xff]
          %v6431 = vld [vmem:[%s6429 + $0x8] sm:$0xff]
          %v6432 = vld [vmem:[%s6429 + $0x1] sm:$0xff]
          %v6433 = vld [vmem:[%s6429 + $0x9] sm:$0xff]
          %v6434 = vld [vmem:[%s6429 + $0x2] sm:$0xff]
          %v6435 = vld [vmem:[%s6429 + $0xa] sm:$0xff]
          %s6436 = smul.u32 %s6417, 27
          %s6437 = sld [smem:[#allocation12 + %s6436]]
          %v6438 = vstv %s6437
          %v6439 = vmul.f32 %v6438, %v6430
          %v6440 = vmul.f32 %v6438, %v6431
          %v6441 = vadd.f32 %v6422, %v6439
          %v6442 = vadd.f32 %v6423, %v6440
          %s6443 = sadd.s32 %s6436, 3
          %s6444 = sld [smem:[#allocation12 + %s6443]]
          %v6445 = vstv %s6444
          %v6446 = vmul.f32 %v6445, %v6430
          %v6447 = vmul.f32 %v6445, %v6431
          %6450 = vrot.lane.b32.xlu0 %v6446, 127
          %v6451 = vpop.permute.xlu0 %6450
          %6452 = vrot.lane.b32.xlu0 %v6447, 127
          %v6453 = vpop.permute.xlu0 %6452
          %v6456 = vadd.f32 %v6441, %v6451
          %v6457 = vadd.f32 %v6442, %v6453
          %s6458 = sadd.s32 %s6436, 6
          %s6459 = sld [smem:[#allocation12 + %s6458]]
          %v6460 = vstv %s6459
          %v6461 = vmul.f32 %v6460, %v6430
          %v6462 = vmul.f32 %v6460, %v6431
          %6465 = vrot.lane.b32.xlu0 %v6461, 126
          %v6466 = vpop.permute.xlu0 %6465
          %6467 = vrot.lane.b32.xlu0 %v6462, 126
          %v6468 = vpop.permute.xlu0 %6467
          %v6471 = vadd.f32 %v6456, %v6466
          %v6472 = vadd.f32 %v6457, %v6468
          %s6473 = sadd.s32 %s6436, 9
          %s6474 = sld [smem:[#allocation12 + %s6473]]
          %v6475 = vstv %s6474
          %v6476 = vmul.f32 %v6475, %v6432
          %v6477 = vmul.f32 %v6475, %v6433
          %v6478 = vadd.f32 %v6471, %v6476
          %v6479 = vadd.f32 %v6472, %v6477
          %s6480 = sadd.s32 %s6436, 12
          %s6481 = sld [smem:[#allocation12 + %s6480]]
          %v6482 = vstv %s6481
          %v6483 = vmul.f32 %v6482, %v6432
          %v6484 = vmul.f32 %v6482, %v6433
          %6487 = vrot.lane.b32.xlu0 %v6483, 127
          %v6488 = vpop.permute.xlu0 %6487
          %6489 = vrot.lane.b32.xlu0 %v6484, 127
          %v6490 = vpop.permute.xlu0 %6489
          %v6493 = vadd.f32 %v6478, %v6488
          %v6494 = vadd.f32 %v6479, %v6490
          %s6495 = sadd.s32 %s6436, 15
          %s6496 = sld [smem:[#allocation12 + %s6495]]
          %v6497 = vstv %s6496
          %v6498 = vmul.f32 %v6497, %v6432
          %v6499 = vmul.f32 %v6497, %v6433
          %6502 = vrot.lane.b32.xlu0 %v6498, 126
          %v6503 = vpop.permute.xlu0 %6502
          %6504 = vrot.lane.b32.xlu0 %v6499, 126
          %v6505 = vpop.permute.xlu0 %6504
          %v6508 = vadd.f32 %v6493, %v6503
          %v6509 = vadd.f32 %v6494, %v6505
          %s6510 = sadd.s32 %s6436, 18
          %s6511 = sld [smem:[#allocation12 + %s6510]]
          %v6512 = vstv %s6511
          %v6513 = vmul.f32 %v6512, %v6434
          %v6514 = vmul.f32 %v6512, %v6435
          %v6515 = vadd.f32 %v6508, %v6513
          %v6516 = vadd.f32 %v6509, %v6514
          %s6517 = sadd.s32 %s6436, 21
          %s6518 = sld [smem:[#allocation12 + %s6517]]
          %v6519 = vstv %s6518
          %v6520 = vmul.f32 %v6519, %v6434
          %v6521 = vmul.f32 %v6519, %v6435
          %6524 = vrot.lane.b32.xlu0 %v6520, 127
          %v6525 = vpop.permute.xlu0 %6524
          %6526 = vrot.lane.b32.xlu0 %v6521, 127
          %v6527 = vpop.permute.xlu0 %6526
          %v6530 = vadd.f32 %v6515, %v6525
          %v6531 = vadd.f32 %v6516, %v6527
          %s6532 = sadd.s32 %s6436, 24
          %s6533 = sld [smem:[#allocation12 + %s6532]]
          %v6534 = vstv %s6533
          %v6535 = vmul.f32 %v6534, %v6434
          %v6536 = vmul.f32 %v6534, %v6435
          %6539 = vrot.lane.b32.xlu0 %v6535, 126
          %v6540 = vpop.permute.xlu0 %6539
          %6541 = vrot.lane.b32.xlu0 %v6536, 126
          %v6542 = vpop.permute.xlu0 %6541
          %v6545 = vadd.f32 %v6530, %v6540
          %v6546 = vadd.f32 %v6531, %v6542
          %s6547 = sadd.s32 %s6436, 1
          %s6548 = sld [smem:[#allocation12 + %s6547]]
          %v6549 = vstv %s6548
          %v6550 = vmul.f32 %v6549, %v6430
          %v6551 = vmul.f32 %v6549, %v6431
          %v6552 = vadd.f32 %v6424, %v6550
          %v6553 = vadd.f32 %v6425, %v6551
          %s6554 = sadd.s32 %s6436, 4
          %s6555 = sld [smem:[#allocation12 + %s6554]]
          %v6556 = vstv %s6555
          %v6557 = vmul.f32 %v6556, %v6430
          %v6558 = vmul.f32 %v6556, %v6431
          %6561 = vrot.lane.b32.xlu0 %v6557, 127
          %v6562 = vpop.permute.xlu0 %6561
          %6563 = vrot.lane.b32.xlu0 %v6558, 127
          %v6564 = vpop.permute.xlu0 %6563
          %v6567 = vadd.f32 %v6552, %v6562
          %v6568 = vadd.f32 %v6553, %v6564
          %s6569 = sadd.s32 %s6436, 7
          %s6570 = sld [smem:[#allocation12 + %s6569]]
          %v6571 = vstv %s6570
          %v6572 = vmul.f32 %v6571, %v6430
          %v6573 = vmul.f32 %v6571, %v6431
          %6576 = vrot.lane.b32.xlu0 %v6572, 126
          %v6577 = vpop.permute.xlu0 %6576
          %6578 = vrot.lane.b32.xlu0 %v6573, 126
          %v6579 = vpop.permute.xlu0 %6578
          %v6582 = vadd.f32 %v6567, %v6577
          %v6583 = vadd.f32 %v6568, %v6579
          %s6584 = sadd.s32 %s6436, 10
          %s6585 = sld [smem:[#allocation12 + %s6584]]
          %v6586 = vstv %s6585
          %v6587 = vmul.f32 %v6586, %v6432
          %v6588 = vmul.f32 %v6586, %v6433
          %v6589 = vadd.f32 %v6582, %v6587
          %v6590 = vadd.f32 %v6583, %v6588
          %s6591 = sadd.s32 %s6436, 13
          %s6592 = sld [smem:[#allocation12 + %s6591]]
          %v6593 = vstv %s6592
          %v6594 = vmul.f32 %v6593, %v6432
          %v6595 = vmul.f32 %v6593, %v6433
          %6598 = vrot.lane.b32.xlu0 %v6594, 127
          %v6599 = vpop.permute.xlu0 %6598
          %6600 = vrot.lane.b32.xlu0 %v6595, 127
          %v6601 = vpop.permute.xlu0 %6600
          %v6604 = vadd.f32 %v6589, %v6599
          %v6605 = vadd.f32 %v6590, %v6601
          %s6606 = sadd.s32 %s6436, 16
          %s6607 = sld [smem:[#allocation12 + %s6606]]
          %v6608 = vstv %s6607
          %v6609 = vmul.f32 %v6608, %v6432
          %v6610 = vmul.f32 %v6608, %v6433
          %6613 = vrot.lane.b32.xlu0 %v6609, 126
          %v6614 = vpop.permute.xlu0 %6613
          %6615 = vrot.lane.b32.xlu0 %v6610, 126
          %v6616 = vpop.permute.xlu0 %6615
          %v6619 = vadd.f32 %v6604, %v6614
          %v6620 = vadd.f32 %v6605, %v6616
          %s6621 = sadd.s32 %s6436, 19
          %s6622 = sld [smem:[#allocation12 + %s6621]]
          %v6623 = vstv %s6622
          %v6624 = vmul.f32 %v6623, %v6434
          %v6625 = vmul.f32 %v6623, %v6435
          %v6626 = vadd.f32 %v6619, %v6624
          %v6627 = vadd.f32 %v6620, %v6625
          %s6628 = sadd.s32 %s6436, 22
          %s6629 = sld [smem:[#allocation12 + %s6628]]
          %v6630 = vstv %s6629
          %v6631 = vmul.f32 %v6630, %v6434
          %v6632 = vmul.f32 %v6630, %v6435
          %6635 = vrot.lane.b32.xlu0 %v6631, 127
          %v6636 = vpop.permute.xlu0 %6635
          %6637 = vrot.lane.b32.xlu0 %v6632, 127
          %v6638 = vpop.permute.xlu0 %6637
          %v6641 = vadd.f32 %v6626, %v6636
          %v6642 = vadd.f32 %v6627, %v6638
          %s6643 = sadd.s32 %s6436, 25
          %s6644 = sld [smem:[#allocation12 + %s6643]]
          %v6645 = vstv %s6644
          %v6646 = vmul.f32 %v6645, %v6434
          %v6647 = vmul.f32 %v6645, %v6435
          %6650 = vrot.lane.b32.xlu0 %v6646, 126
          %v6651 = vpop.permute.xlu0 %6650
          %6652 = vrot.lane.b32.xlu0 %v6647, 126
          %v6653 = vpop.permute.xlu0 %6652
          %v6656 = vadd.f32 %v6641, %v6651
          %v6657 = vadd.f32 %v6642, %v6653
          %s6658 = sadd.s32 %s6436, 2
          %s6659 = sld [smem:[#allocation12 + %s6658]]
          %v6660 = vstv %s6659
          %v6661 = vmul.f32 %v6660, %v6430
          %v6662 = vmul.f32 %v6660, %v6431
          %v6663 = vadd.f32 %v6426, %v6661
          %v6664 = vadd.f32 %v6427, %v6662
          %s6665 = sadd.s32 %s6436, 5
          %s6666 = sld [smem:[#allocation12 + %s6665]]
          %v6667 = vstv %s6666
          %v6668 = vmul.f32 %v6667, %v6430
          %v6669 = vmul.f32 %v6667, %v6431
          %6672 = vrot.lane.b32.xlu0 %v6668, 127
          %v6673 = vpop.permute.xlu0 %6672
          %6674 = vrot.lane.b32.xlu0 %v6669, 127
          %v6675 = vpop.permute.xlu0 %6674
          %v6678 = vadd.f32 %v6663, %v6673
          %v6679 = vadd.f32 %v6664, %v6675
          %s6680 = sadd.s32 %s6436, 8
          %s6681 = sld [smem:[#allocation12 + %s6680]]
          %v6682 = vstv %s6681
          %v6683 = vmul.f32 %v6682, %v6430
          %v6684 = vmul.f32 %v6682, %v6431
          %6687 = vrot.lane.b32.xlu0 %v6683, 126
          %v6688 = vpop.permute.xlu0 %6687
          %6689 = vrot.lane.b32.xlu0 %v6684, 126
          %v6690 = vpop.permute.xlu0 %6689
          %v6693 = vadd.f32 %v6678, %v6688
          %v6694 = vadd.f32 %v6679, %v6690
          %s6695 = sadd.s32 %s6436, 11
          %s6696 = sld [smem:[#allocation12 + %s6695]]
          %v6697 = vstv %s6696
          %v6698 = vmul.f32 %v6697, %v6432
          %v6699 = vmul.f32 %v6697, %v6433
          %v6700 = vadd.f32 %v6693, %v6698
          %v6701 = vadd.f32 %v6694, %v6699
          %s6702 = sadd.s32 %s6436, 14
          %s6703 = sld [smem:[#allocation12 + %s6702]]
          %v6704 = vstv %s6703
          %v6705 = vmul.f32 %v6704, %v6432
          %v6706 = vmul.f32 %v6704, %v6433
          %6709 = vrot.lane.b32.xlu0 %v6705, 127
          %v6710 = vpop.permute.xlu0 %6709
          %6711 = vrot.lane.b32.xlu0 %v6706, 127
          %v6712 = vpop.permute.xlu0 %6711
          %v6715 = vadd.f32 %v6700, %v6710
          %v6716 = vadd.f32 %v6701, %v6712
          %s6717 = sadd.s32 %s6436, 17
          %s6718 = sld [smem:[#allocation12 + %s6717]]
          %v6719 = vstv %s6718
          %v6720 = vmul.f32 %v6719, %v6432
          %v6721 = vmul.f32 %v6719, %v6433
          %6724 = vrot.lane.b32.xlu0 %v6720, 126
          %v6725 = vpop.permute.xlu0 %6724
          %6726 = vrot.lane.b32.xlu0 %v6721, 126
          %v6727 = vpop.permute.xlu0 %6726
          %v6730 = vadd.f32 %v6715, %v6725
          %v6731 = vadd.f32 %v6716, %v6727
          %s6732 = sadd.s32 %s6436, 20
          %s6733 = sld [smem:[#allocation12 + %s6732]]
          %v6734 = vstv %s6733
          %v6735 = vmul.f32 %v6734, %v6434
          %v6736 = vmul.f32 %v6734, %v6435
          %v6737 = vadd.f32 %v6730, %v6735
          %v6738 = vadd.f32 %v6731, %v6736
          %s6739 = sadd.s32 %s6436, 23
          %s6740 = sld [smem:[#allocation12 + %s6739]]
          %v6741 = vstv %s6740
          %v6742 = vmul.f32 %v6741, %v6434
          %v6743 = vmul.f32 %v6741, %v6435
          %6746 = vrot.lane.b32.xlu0 %v6742, 127
          %v6747 = vpop.permute.xlu0 %6746
          %6748 = vrot.lane.b32.xlu0 %v6743, 127
          %v6749 = vpop.permute.xlu0 %6748
          %v6752 = vadd.f32 %v6737, %v6747
          %v6753 = vadd.f32 %v6738, %v6749
          %s6754 = sadd.s32 %s6436, 26
          %s6755 = sld [smem:[#allocation12 + %s6754]]
          %v6756 = vstv %s6755
          %v6757 = vmul.f32 %v6756, %v6434
          %v6758 = vmul.f32 %v6756, %v6435
          %6761 = vrot.lane.b32.xlu0 %v6757, 126
          %v6762 = vpop.permute.xlu0 %6761
          %6763 = vrot.lane.b32.xlu0 %v6758, 126
          %v6764 = vpop.permute.xlu0 %6763
          %v6767 = vadd.f32 %v6752, %v6762
          %v6768 = vadd.f32 %v6753, %v6764
        $region91: #{tpu_custom_call.1} parent=47 // loop_footer
          %s6421 = sadd.s32 1, %s6417
        $region92: #{tpu_custom_call.1} parent=47 // loop_footer_branch
          %6416 = sbr.rel target = $region88
        $region93: #{tpu_custom_call.1} parent=47 // loop_exit
          _
        %vm6769 = vcmask 130048
        %6770 = vst.msk [vmem:[%s362] sm:$0xff] %vm6769, %v6422
        %6771 = vst.msk [vmem:[%s362 + $0x8] sm:$0xff] %vm6769, %v6423
        %6772 = vst.msk [vmem:[%s362 + $0x10] sm:$0xff] %vm6769, %v6424
        %6773 = vst.msk [vmem:[%s362 + $0x18] sm:$0xff] %vm6769, %v6425
        %6774 = vst.msk [vmem:[%s362 + $0x20] sm:$0xff] %vm6769, %v6426
        %6775 = vst.msk [vmem:[%s362 + $0x28] sm:$0xff] %vm6769, %v6427
        %s6776 = sand.u32 %s199, 1
        %s6777 = scalar_lea.sflag [#allocation5], %s6776
        %s6778 = sand.u32 %s199, 1
        %s6779 = smul.addr %s6778, 48
        %s6780 = scalar_lea.vmem [#allocation15], %s6779
        // Predicated region
        $region94: #{tpu_custom_call.1} parent=47 // pred_check
          %p6781 = pneg %p209
        $region95: #{tpu_custom_call.1} parent=47 // pred_check_branch
          %6783 = sbr.rel (%p6781) target = $region97
        $region96: #{tpu_custom_call.1} parent=47 // pred_region
          %s6784 = smul.u32 2, %s30
          %6786 = vsyncadd %s6777, 0
          %s6787 = smul.addr %s29, 6
          %s6788 = sadd.s32 %s6784, %s6787
          %s6789 = smul.addr %s6788, 8
          %s6790 = scalar_lea.hbm %s7, %s6789
          %s6791 = sshll.u32 %s6780, 4
          %s6792 = int_to_ptr.vmem [resolvable:$true] %s6791
          %s6793 = sshll.u32 %s6790, 4
          %s6794 = int_to_ptr.hbm [resolvable:$true] %s6793
          %6799 = dma.vmem_to_hbm [thread:$0]  %s6792, 768, %s6794, %s6777, 128, 128, 8
        $region97: #{tpu_custom_call.1} parent=47 // pred_fallthru
          _
      $region48: #{tpu_custom_call.1} parent=5 // pred_fallthru
        _
      %p6800 = scmp.le.s32.totalorder 2, %s20
      // Predicated region
      $region98: #{tpu_custom_call.1} parent=5 // pred_check
        %p6801 = pneg %p6800
      $region99: #{tpu_custom_call.1} parent=5 // pred_check_branch
        %6803 = sbr.rel (%p6801) target = $region101
      $region100: #{tpu_custom_call.1} parent=5 // pred_region
        %s6804 = ssub.s32 %s20, 2
        // Predicated region
        $region102: #{tpu_custom_call.1} parent=100 // pred_check
          %p6805 = pneg %p215
        $region103: #{tpu_custom_call.1} parent=100 // pred_check_branch
          %6807 = sbr.rel (%p6805) target = $region105
        $region104: #{tpu_custom_call.1} parent=100 // pred_region
          %s6808 = sand.u32 %s200, 1
          %s6809 = scalar_lea.sflag [#allocation5], %s6808
          %s6810 = sand.u32 %s200, 1
          %s6811 = smul.addr %s6810, 48
          %s6812 = scalar_lea.vmem [#allocation15], %s6811
          %6814 = dma.done %s6809, 768
        $region105: #{tpu_custom_call.1} parent=100 // pred_fallthru
          _
      $region101: #{tpu_custom_call.1} parent=5 // pred_fallthru
        _
    $region6: #{tpu_custom_call.1} parent=1 // loop_footer
      %s24 = sadd.s32 1, %s20
    $region7: #{tpu_custom_call.1} parent=1 // loop_footer_branch
      %19 = sbr.rel target = $region3
    $region8: #{tpu_custom_call.1} parent=1 // loop_exit
      _
    %6815 = vsyncpa [#allocation5], 1
    %s6816 = scalar_lea.sflag [#allocation5], 1
    %6817 = vsyncpa %s6816, 1
    %6818 = vsyncpa [#allocation6], 1
    %s6819 = scalar_lea.sflag [#allocation6], 1
    %6820 = vsyncpa %s6819, 1
    %6821 = vsyncpa [#allocation8], 1
    %6822 = vsyncpa [#allocation11], 1
    %6823 = vsyncpa [#allocation14], 1

</llo_original>
